<compile_context>
chip_gen: v7x
topology: tpu7x:2x2x1
jax: 0.10.0
libtpu: 0.0.40
codegen_flags: <defaults>
</compile_context>

<pallas_src>
import jax
import jax.numpy as jnp
from jax.experimental import pallas as pl
from jax.experimental.pallas import tpu as pltpu


LANE = 128      # lane width of the (padded) output tile -> lane-dense stores
TB_MAX = 512    # default max batch tile (per-step overhead ~0.35us becomes negligible)


def _round_up(a, b):
    return (a + b - 1) // b * b


def mlp_kernel(x_ref, w1_ref, w2_ref, w3_ref, o_ref):
    # In-kernel bf16 cast of the activation tile (no-op if x is already bf16);
    # all matmuls run bf16 x bf16 -> f32 accumulation on the MXU.
    x = x_ref[...].astype(jnp.bfloat16)
    # fc1 + ReLU
    h1 = jnp.maximum(
        jnp.dot(x, w1_ref[...], preferred_element_type=jnp.float32), 0.0)
    # fc3 + ReLU
    h2 = jnp.maximum(
        jnp.dot(h1.astype(jnp.bfloat16), w2_ref[...],
                preferred_element_type=jnp.float32), 0.0)
    # fc6 (no activation); N is padded to 128 lanes for a lane-dense writeback
    out = jnp.dot(h2.astype(jnp.bfloat16), w3_ref[...],
                  preferred_element_type=jnp.float32)
    o_ref[...] = out.astype(o_ref.dtype)


def prepare_weights(w1, w2, w3):
    """One-time weight conversion (hoist out of the hot path / cache per model):
    bf16 cast + lane-pad the last layer's output dim to 128."""
    n_pad = _round_up(max(w3.shape[1], LANE), LANE)
    w1_b = w1.astype(jnp.bfloat16)
    w2_b = w2.astype(jnp.bfloat16)
    w3_b = jnp.pad(w3, ((0, 0), (0, n_pad - w3.shape[1]))).astype(jnp.bfloat16)
    return w1_b, w2_b, w3_b, w3.shape[1]


def _pick_tb(B):
    # Aim for >= 2 grid steps when the batch is big enough to split (v7x has 2 TCs
    # and "parallel" can only shard grid steps), otherwise one tile covering B.
    if B <= 2 * TB_MAX:
        tb = min(TB_MAX, _round_up(pl.cdiv(B, 2), 16))
    else:
        tb = TB_MAX
    # Don't allocate a tile larger than the (sublane-rounded) batch.
    return max(8, min(tb, _round_up(B, 8)))


def mlp_p(x, w1_b, w2_b, w3_b, d_out, *, tb=None):
    """x: [B, 2048] (f32 or bf16); prepared weights from prepare_weights(); -> [B, d_out]."""
    B, d_in = x.shape
    d_h1 = w1_b.shape[1]
    d_h2 = w2_b.shape[1]
    n_pad = w3_b.shape[1]

    if tb is None:
        tb = _pick_tb(B)
    if tb % 8 != 0:
        raise ValueError(f"tb must be a multiple of 8, got {tb}")

    n_steps = pl.cdiv(B, tb)          # partial last block handled by Pallas (masked writeback)
    out_dtype = jnp.float32 if x.dtype == jnp.float32 else x.dtype

    # VMEM budget: double-buffered x / out tiles, (conservatively) double-buffered bf16
    # weights, f32+bf16 intermediates, ~1.5x headroom + 8 MiB; clamped under v7x's 64 MiB
    # physical VMEM (v5e/v6e have 128 MiB, so the cap is harmless there).
    x_bytes = 2 * tb * d_in * jnp.dtype(x.dtype).itemsize
    w_bytes = 2 * (d_in * d_h1 + d_h1 * d_h2 + d_h2 * n_pad) * 2
    o_bytes = 2 * tb * n_pad * jnp.dtype(out_dtype).itemsize
    h_bytes = tb * (d_h1 + d_h2) * (4 + 2)
    vmem_limit = int(1.5 * (x_bytes + w_bytes + o_bytes + h_bytes)) + (8 << 20)
    vmem_limit = max(32 << 20, min(vmem_limit, 48 << 20))

    out = pl.pallas_call(
        mlp_kernel,
        out_shape=jax.ShapeDtypeStruct((B, n_pad), out_dtype),
        grid_spec=pltpu.PrefetchScalarGridSpec(
            num_scalar_prefetch=0,
            grid=(n_steps,),
            in_specs=[
                pl.BlockSpec((tb, d_in), lambda i: (i, 0)),   # x tile (pipelined)
                pl.BlockSpec((d_in, d_h1), lambda i: (0, 0)),  # W1 (grid-invariant)
                pl.BlockSpec((d_h1, d_h2), lambda i: (0, 0)),  # W2 (grid-invariant)
                pl.BlockSpec((d_h2, n_pad), lambda i: (0, 0)),  # W3, lane-padded
            ],
            out_specs=pl.BlockSpec((tb, n_pad), lambda i: (i, 0)),
        ),
        compiler_params=pltpu.CompilerParams(
            dimension_semantics=("parallel",),   # shards grid steps across TCs on v7x
            vmem_limit_bytes=vmem_limit,
        ),
    )(x, w1_b, w2_b, w3_b)

    # Only the first d_out of the 128 padded lanes are real.
    return out[:, :d_out]


def mlp_p_reference_bf16(x, w1, w2, w3):
    """Same bf16-operand / f32-accumulation recipe as the kernel (apples-to-apples)."""
    xb = x.astype(jnp.bfloat16)
    h1 = jnp.maximum(jnp.dot(xb, w1.astype(jnp.bfloat16),
                             preferred_element_type=jnp.float32), 0.0)
    h2 = jnp.maximum(jnp.dot(h1.astype(jnp.bfloat16), w2.astype(jnp.bfloat16),
                             preferred_element_type=jnp.float32), 0.0)
    return jnp.dot(h2.astype(jnp.bfloat16), w3.astype(jnp.bfloat16),
                   preferred_element_type=jnp.float32)


if __name__ == "__main__":
    key = jax.random.PRNGKey(0)
    k_x, k1, k2, k3 = jax.random.split(key, 4)

    # Small example batch; feature dims are fixed by the module (2048 -> 1024 -> 256 -> 4).
    B = 8
    x = jax.random.normal(k_x, (B, 2048), dtype=jnp.float32)
    w1 = jax.random.normal(k1, (2048, 1024), dtype=jnp.float32) * (1.0 / 2048 ** 0.5)
    w2 = jax.random.normal(k2, (1024, 256), dtype=jnp.float32) * (1.0 / 1024 ** 0.5)
    w3 = jax.random.normal(k3, (256, 4), dtype=jnp.float32) * (1.0 / 256 ** 0.5)

    # One-time weight prep (bf16 cast + W3 lane padding), hoisted out of the call path.
    w1_b, w2_b, w3_b, d_out = prepare_weights(w1, w2, w3)

    out = jax.block_until_ready(mlp_p(x, w1_b, w2_b, w3_b, d_out))
    assert out.shape == (B, 4), out.shape

    ref = mlp_p_reference_bf16(x, w1, w2, w3)
    assert jnp.allclose(out, ref.astype(out.dtype), atol=2e-2, rtol=2e-2), \
        "mismatch vs reference"

    print("KERNEL_OK")
</pallas_src>

<mosaic_0001>
module attributes {stable_mosaic.version = 11 : i64} {
  func.func @mlp_kernel(%arg0: i32, %arg1: memref<8x2048xf32, #tpu.memory_space<vmem>>, %arg2: memref<2048x1024xbf16, #tpu.memory_space<vmem>>, %arg3: memref<1024x256xbf16, #tpu.memory_space<vmem>>, %arg4: memref<256x128xbf16, #tpu.memory_space<vmem>>, %arg5: memref<8x128xf32, #tpu.memory_space<vmem>>) attributes {dimension_semantics = [#tpu.dimension_semantics<parallel>], iteration_bounds = array<i64: 1>, scalar_prefetch = 0 : i64, scratch_operands = 0 : i64, tpu.core_type = #tpu.core_type<tc>, window_params = [{transform_indices = @transform_0, window_bounds = array<i64: 8, 2048>}, {pipeline_mode = #tpu.pipeline_mode<synchronous>, transform_indices = @transform_1, window_bounds = array<i64: 2048, 1024>}, {pipeline_mode = #tpu.pipeline_mode<synchronous>, transform_indices = @transform_2, window_bounds = array<i64: 1024, 256>}, {pipeline_mode = #tpu.pipeline_mode<synchronous>, transform_indices = @transform_3, window_bounds = array<i64: 256, 128>}, {transform_indices = @transform_4, window_bounds = array<i64: 8, 128>}]} {
    %c0 = arith.constant 0 : index
    %c0_0 = arith.constant 0 : index
    %0 = vector.load %arg1[%c0, %c0_0] : memref<8x2048xf32, #tpu.memory_space<vmem>>, vector<8x2048xf32>
    %1 = arith.truncf %0 : vector<8x2048xf32> to vector<8x2048xbf16>
    %c0_1 = arith.constant 0 : index
    %c0_2 = arith.constant 0 : index
    %2 = vector.load %arg2[%c0_1, %c0_2] : memref<2048x1024xbf16, #tpu.memory_space<vmem>>, vector<2048x1024xbf16>
    %cst = arith.constant dense<0.000000e+00> : vector<8x1024xf32>
    %3 = tpu.matmul %1, %2, %cst {dimension_numbers = #tpu.dot_dimension_numbers<[1], [0], [0], [1], [0, 0, 1, 1], [], []>} : vector<8x2048xbf16>, vector<2048x1024xbf16>, vector<8x1024xf32> -> vector<8x1024xf32>
    %cst_3 = arith.constant 0.000000e+00 : f32
    %4 = vector.broadcast %cst_3 : f32 to vector<8x1024xf32>
    %5 = arith.maximumf %3, %4 : vector<8x1024xf32>
    %6 = arith.truncf %5 : vector<8x1024xf32> to vector<8x1024xbf16>
    %c0_4 = arith.constant 0 : index
    %c0_5 = arith.constant 0 : index
    %7 = vector.load %arg3[%c0_4, %c0_5] : memref<1024x256xbf16, #tpu.memory_space<vmem>>, vector<1024x256xbf16>
    %cst_6 = arith.constant dense<0.000000e+00> : vector<8x256xf32>
    %8 = tpu.matmul %6, %7, %cst_6 {dimension_numbers = #tpu.dot_dimension_numbers<[1], [0], [0], [1], [0, 0, 1, 1], [], []>} : vector<8x1024xbf16>, vector<1024x256xbf16>, vector<8x256xf32> -> vector<8x256xf32>
    %cst_7 = arith.constant 0.000000e+00 : f32
    %9 = vector.broadcast %cst_7 : f32 to vector<8x256xf32>
    %10 = arith.maximumf %8, %9 : vector<8x256xf32>
    %11 = arith.truncf %10 : vector<8x256xf32> to vector<8x256xbf16>
    %c0_8 = arith.constant 0 : index
    %c0_9 = arith.constant 0 : index
    %12 = vector.load %arg4[%c0_8, %c0_9] : memref<256x128xbf16, #tpu.memory_space<vmem>>, vector<256x128xbf16>
    %cst_10 = arith.constant dense<0.000000e+00> : vector<8x128xf32>
    %13 = tpu.matmul %11, %12, %cst_10 {dimension_numbers = #tpu.dot_dimension_numbers<[1], [0], [0], [1], [0, 0, 1, 1], [], []>} : vector<8x256xbf16>, vector<256x128xbf16>, vector<8x128xf32> -> vector<8x128xf32>
    %c0_11 = arith.constant 0 : index
    %c0_12 = arith.constant 0 : index
    %14 = vector.load %arg5[%c0_11, %c0_12] : memref<8x128xf32, #tpu.memory_space<vmem>>, vector<8x128xf32>
    tpu.vector_store %arg5[%c0_11, %c0_12], %13 {strides = array<i32>} : memref<8x128xf32, #tpu.memory_space<vmem>>, vector<8x128xf32>,
    return
  }
  func.func @transform_0(%arg0: i32) -> (i32, i32) {
    %c0_i32 = arith.constant 0 : i32
    %c0_i32_0 = arith.constant 0 : i32
    return %arg0, %c0_i32 : i32, i32
  }
  func.func @transform_1(%arg0: i32) -> (i32, i32) {
    %c0_i32 = arith.constant 0 : i32
    %c0_i32_0 = arith.constant 0 : i32
    %c0_i32_1 = arith.constant 0 : i32
    return %c0_i32, %c0_i32_0 : i32, i32
  }
  func.func @transform_2(%arg0: i32) -> (i32, i32) {
    %c0_i32 = arith.constant 0 : i32
    %c0_i32_0 = arith.constant 0 : i32
    %c0_i32_1 = arith.constant 0 : i32
    return %c0_i32, %c0_i32_0 : i32, i32
  }
  func.func @transform_3(%arg0: i32) -> (i32, i32) {
    %c0_i32 = arith.constant 0 : i32
    %c0_i32_0 = arith.constant 0 : i32
    %c0_i32_1 = arith.constant 0 : i32
    return %c0_i32, %c0_i32_0 : i32, i32
  }
  func.func @transform_4(%arg0: i32) -> (i32, i32) {
    %c0_i32 = arith.constant 0 : i32
    %c0_i32_0 = arith.constant 0 : i32
    return %arg0, %c0_i32 : i32, i32
  }
}

</mosaic_0001>

<llo_original>
// kernel: tpu_custom_call.1
$region0: #{tpu_custom_call.1}
  #allocation0 [shape = 'u32[]', space=smem, size = 0x4, offset = 0x4, fixed_abs, tag = 'smem constant byte address 0x4 - core index']
  #allocation1 [shape = 'u32[144,128]{1,0:T(1,128)}', space=vmem, size = 0x12000, scoped, tag = 'internal scratch']
  %s0 = inlined_call_operand.hbm [shape: f32[8,2048], index: 0, kind: input, shape index: {}]
  %s1 = inlined_call_operand.hbm [shape: bf16[2048,1024], index: 1, kind: input, shape index: {}]
  %s2 = inlined_call_operand.hbm [shape: bf16[1024,256], index: 2, kind: input, shape index: {}]
  %s3 = inlined_call_operand.hbm [shape: bf16[256,128], index: 3, kind: input, shape index: {}]
  %s4 = inlined_call_operand.hbm [shape: f32[8,128], index: 4, kind: output, shape index: {}]
  %s5 = sld [smem:[#allocation0]]
  $region42: #{tpu_custom_call.1} parent=0
    _
  %s7 = ssub.s32 1, %s5
  %s8 = scalar_select 0, %s7, %s5
  $region1: #{tpu_custom_call.1} parent=0
    #allocation2 [shape = 'u8[65536]{0}', space=vmem, size = 0x10000, scoped, tag = 'input window, operand 0, single buffered']
    #allocation3 [shape = 's32[1]{0}', space=sflag, size = 0x4, scoped, tag = 'scoped memory for tpu_custom_call.1']
    #allocation4 [shape = 's32[1]{0}', space=sflag, size = 0x4, scoped, tag = 'scoped memory for tpu_custom_call.1']
    #allocation5 [shape = 'u8[4194304]{0}', space=vmem, size = 0x400000, scoped, tag = 'input window, operand 1, single buffered']
    #allocation6 [shape = 's32[1]{0}', space=sflag, size = 0x4, scoped, tag = 'scoped memory for tpu_custom_call.1']
    #allocation7 [shape = 'u8[524288]{0}', space=vmem, size = 0x80000, scoped, tag = 'input window, operand 2, single buffered']
    #allocation8 [shape = 'u8[65536]{0}', space=vmem, size = 0x10000, scoped, tag = 'input window, operand 3, single buffered']
    #allocation9 [shape = 's32[1]{0}', space=sflag, size = 0x4, scoped, tag = 'scoped memory for tpu_custom_call.1']
    #allocation10 [shape = 'u8[4096]{0}', space=vmem, size = 0x1000, scoped, tag = 'output window, operand 0, single buffered']
    %9 = vsyncpa [#allocation3], 0
    %10 = vsyncpa [#allocation6], 0
    %11 = vsyncpa [#allocation9], 0
    %12 = vsyncpa [#allocation4], 0
    // Predicated region
    $region2: #{tpu_custom_call.1} parent=1 // pred_check
      _
    $region3: #{tpu_custom_call.1} parent=1 // pred_check_branch
      %14 = sbr.rel (0) target = $region5
    $region4: #{tpu_custom_call.1} parent=1 // pred_region
      %s16 = ssub.s32 2048, 2048
      %17 = vsyncadd [#allocation3], %s16
      %s19 = sshll.u32 [#allocation2], 4
      %s20 = int_to_ptr.vmem [resolvable:$true] %s19
      %22 = dma.hbm_to_vmem [thread:$0]  %s0, 2048, %s20, [#allocation3]
    $region5: #{tpu_custom_call.1} parent=1 // pred_fallthru
      _
    // Predicated region
    $region6: #{tpu_custom_call.1} parent=1 // pred_check
      _
    $region7: #{tpu_custom_call.1} parent=1 // pred_check_branch
      %24 = sbr.rel (0) target = $region9
    $region8: #{tpu_custom_call.1} parent=1 // pred_region
      %s26 = ssub.s32 131072, 131072
      %27 = vsyncadd [#allocation6], %s26
      %s28 = sshll.u32 [#allocation5], 4
      %s29 = int_to_ptr.vmem [resolvable:$true] %s28
      %34 = dma.hbm_to_vmem [thread:$0]  %s1, 131072, %s29, [#allocation6], 512, 512, 32
    $region9: #{tpu_custom_call.1} parent=1 // pred_fallthru
      _
    // Predicated region
    $region10: #{tpu_custom_call.1} parent=1 // pred_check
      _
    $region11: #{tpu_custom_call.1} parent=1 // pred_check_branch
      %36 = sbr.rel (0) target = $region13
    $region12: #{tpu_custom_call.1} parent=1 // pred_region
      %s38 = ssub.s32 16384, 16384
      %39 = vsyncadd [#allocation6], %s38
      %s40 = sshll.u32 [#allocation7], 4
      %s41 = int_to_ptr.vmem [resolvable:$true] %s40
      %46 = dma.hbm_to_vmem [thread:$0]  %s2, 16384, %s41, [#allocation6], 128, 128, 8
    $region13: #{tpu_custom_call.1} parent=1 // pred_fallthru
      _
    // Predicated region
    $region14: #{tpu_custom_call.1} parent=1 // pred_check
      _
    $region15: #{tpu_custom_call.1} parent=1 // pred_check_branch
      %48 = sbr.rel (0) target = $region17
    $region16: #{tpu_custom_call.1} parent=1 // pred_region
      %s50 = ssub.s32 2048, 2048
      %51 = vsyncadd [#allocation9], %s50
      %s52 = sshll.u32 [#allocation8], 4
      %s53 = int_to_ptr.vmem [resolvable:$true] %s52
      %58 = dma.hbm_to_vmem [thread:$0]  %s3, 2048, %s53, [#allocation9], 64, 64, 4
    $region17: #{tpu_custom_call.1} parent=1 // pred_fallthru
      _
    // Predicated region
    $region18: #{tpu_custom_call.1} parent=1 // pred_check
      _
    $region19: #{tpu_custom_call.1} parent=1 // pred_check_branch
      %60 = sbr.rel (0) target = $region21
    $region20: #{tpu_custom_call.1} parent=1 // pred_region
      %61 = dma.done [#allocation3], 2048
    $region21: #{tpu_custom_call.1} parent=1 // pred_fallthru
      _
    // Predicated region
    $region22: #{tpu_custom_call.1} parent=1 // pred_check
      _
    $region23: #{tpu_custom_call.1} parent=1 // pred_check_branch
      %63 = sbr.rel (0) target = $region25
    $region24: #{tpu_custom_call.1} parent=1 // pred_region
      %64 = dma.done [#allocation6], 131072
    $region25: #{tpu_custom_call.1} parent=1 // pred_fallthru
      _
    // Predicated region
    $region26: #{tpu_custom_call.1} parent=1 // pred_check
      _
    $region27: #{tpu_custom_call.1} parent=1 // pred_check_branch
      %66 = sbr.rel (0) target = $region29
    $region28: #{tpu_custom_call.1} parent=1 // pred_region
      %67 = dma.done [#allocation6], 16384
    $region29: #{tpu_custom_call.1} parent=1 // pred_fallthru
      _
    // Predicated region
    $region30: #{tpu_custom_call.1} parent=1 // pred_check
      _
    $region31: #{tpu_custom_call.1} parent=1 // pred_check_branch
      %69 = sbr.rel (0) target = $region33
    $region32: #{tpu_custom_call.1} parent=1 // pred_region
      %70 = dma.done [#allocation9], 2048
    $region33: #{tpu_custom_call.1} parent=1 // pred_fallthru
      _
    %v72 = vld [vmem:[#allocation2] sm:$0xff]
    %v73 = vld [vmem:[#allocation2 + $0x8] sm:$0xff]
    %v74 = vld [vmem:[#allocation2 + $0x10] sm:$0xff]
    %v75 = vld [vmem:[#allocation2 + $0x18] sm:$0xff]
    %v76 = vld [vmem:[#allocation2 + $0x20] sm:$0xff]
    %v77 = vld [vmem:[#allocation2 + $0x28] sm:$0xff]
    %v78 = vld [vmem:[#allocation2 + $0x30] sm:$0xff]
    %v79 = vld [vmem:[#allocation2 + $0x38] sm:$0xff]
    %v80 = vld [vmem:[#allocation2 + $0x40] sm:$0xff]
    %v81 = vld [vmem:[#allocation2 + $0x48] sm:$0xff]
    %v82 = vld [vmem:[#allocation2 + $0x50] sm:$0xff]
    %v83 = vld [vmem:[#allocation2 + $0x58] sm:$0xff]
    %v84 = vld [vmem:[#allocation2 + $0x60] sm:$0xff]
    %v85 = vld [vmem:[#allocation2 + $0x68] sm:$0xff]
    %v86 = vld [vmem:[#allocation2 + $0x70] sm:$0xff]
    %v87 = vld [vmem:[#allocation2 + $0x78] sm:$0xff]
    %v88 = vpack.c.bf16 %v72, %v72
    %v89 = vpack.c.bf16 %v73, %v73
    %v90 = vpack.c.bf16 %v74, %v74
    %v91 = vpack.c.bf16 %v75, %v75
    %v92 = vpack.c.bf16 %v76, %v76
    %v93 = vpack.c.bf16 %v77, %v77
    %v94 = vpack.c.bf16 %v78, %v78
    %v95 = vpack.c.bf16 %v79, %v79
    %v96 = vpack.c.bf16 %v80, %v80
    %v97 = vpack.c.bf16 %v81, %v81
    %v98 = vpack.c.bf16 %v82, %v82
    %v99 = vpack.c.bf16 %v83, %v83
    %v100 = vpack.c.bf16 %v84, %v84
    %v101 = vpack.c.bf16 %v85, %v85
    %v102 = vpack.c.bf16 %v86, %v86
    %v103 = vpack.c.bf16 %v87, %v87
    %v104 = vld [vmem:[#allocation5] sm:$0xff]
    %v105 = vld [vmem:[#allocation5 + $0x8] sm:$0xff]
    %v106 = vld [vmem:[#allocation5 + $0x10] sm:$0xff]
    %v107 = vld [vmem:[#allocation5 + $0x18] sm:$0xff]
    %v108 = vld [vmem:[#allocation5 + $0x20] sm:$0xff]
    %v109 = vld [vmem:[#allocation5 + $0x28] sm:$0xff]
    %v110 = vld [vmem:[#allocation5 + $0x30] sm:$0xff]
    %v111 = vld [vmem:[#allocation5 + $0x38] sm:$0xff]
    %v112 = vld [vmem:[#allocation5 + $0x40] sm:$0xff]
    %v113 = vld [vmem:[#allocation5 + $0x48] sm:$0xff]
    %v114 = vld [vmem:[#allocation5 + $0x50] sm:$0xff]
    %v115 = vld [vmem:[#allocation5 + $0x58] sm:$0xff]
    %v116 = vld [vmem:[#allocation5 + $0x60] sm:$0xff]
    %v117 = vld [vmem:[#allocation5 + $0x68] sm:$0xff]
    %v118 = vld [vmem:[#allocation5 + $0x70] sm:$0xff]
    %v119 = vld [vmem:[#allocation5 + $0x78] sm:$0xff]
    %v120 = vld [vmem:[#allocation5 + $0x80] sm:$0xff]
    %v121 = vld [vmem:[#allocation5 + $0x88] sm:$0xff]
    %v122 = vld [vmem:[#allocation5 + $0x90] sm:$0xff]
    %v123 = vld [vmem:[#allocation5 + $0x98] sm:$0xff]
    %v124 = vld [vmem:[#allocation5 + $0xa0] sm:$0xff]
    %v125 = vld [vmem:[#allocation5 + $0xa8] sm:$0xff]
    %v126 = vld [vmem:[#allocation5 + $0xb0] sm:$0xff]
    %v127 = vld [vmem:[#allocation5 + $0xb8] sm:$0xff]
    %v128 = vld [vmem:[#allocation5 + $0xc0] sm:$0xff]
    %v129 = vld [vmem:[#allocation5 + $0xc8] sm:$0xff]
    %v130 = vld [vmem:[#allocation5 + $0xd0] sm:$0xff]
    %v131 = vld [vmem:[#allocation5 + $0xd8] sm:$0xff]
    %v132 = vld [vmem:[#allocation5 + $0xe0] sm:$0xff]
    %v133 = vld [vmem:[#allocation5 + $0xe8] sm:$0xff]
    %v134 = vld [vmem:[#allocation5 + $0xf0] sm:$0xff]
    %v135 = vld [vmem:[#allocation5 + $0xf8] sm:$0xff]
    %v136 = vld [vmem:[#allocation5 + $0x100] sm:$0xff]
    %v137 = vld [vmem:[#allocation5 + $0x108] sm:$0xff]
    %v138 = vld [vmem:[#allocation5 + $0x110] sm:$0xff]
    %v139 = vld [vmem:[#allocation5 + $0x118] sm:$0xff]
    %v140 = vld [vmem:[#allocation5 + $0x120] sm:$0xff]
    %v141 = vld [vmem:[#allocation5 + $0x128] sm:$0xff]
    %v142 = vld [vmem:[#allocation5 + $0x130] sm:$0xff]
    %v143 = vld [vmem:[#allocation5 + $0x138] sm:$0xff]
    %v144 = vld [vmem:[#allocation5 + $0x140] sm:$0xff]
    %v145 = vld [vmem:[#allocation5 + $0x148] sm:$0xff]
    %v146 = vld [vmem:[#allocation5 + $0x150] sm:$0xff]
    %v147 = vld [vmem:[#allocation5 + $0x158] sm:$0xff]
    %v148 = vld [vmem:[#allocation5 + $0x160] sm:$0xff]
    %v149 = vld [vmem:[#allocation5 + $0x168] sm:$0xff]
    %v150 = vld [vmem:[#allocation5 + $0x170] sm:$0xff]
    %v151 = vld [vmem:[#allocation5 + $0x178] sm:$0xff]
    %v152 = vld [vmem:[#allocation5 + $0x180] sm:$0xff]
    %v153 = vld [vmem:[#allocation5 + $0x188] sm:$0xff]
    %v154 = vld [vmem:[#allocation5 + $0x190] sm:$0xff]
    %v155 = vld [vmem:[#allocation5 + $0x198] sm:$0xff]
    %v156 = vld [vmem:[#allocation5 + $0x1a0] sm:$0xff]
    %v157 = vld [vmem:[#allocation5 + $0x1a8] sm:$0xff]
    %v158 = vld [vmem:[#allocation5 + $0x1b0] sm:$0xff]
    %v159 = vld [vmem:[#allocation5 + $0x1b8] sm:$0xff]
    %v160 = vld [vmem:[#allocation5 + $0x1c0] sm:$0xff]
    %v161 = vld [vmem:[#allocation5 + $0x1c8] sm:$0xff]
    %v162 = vld [vmem:[#allocation5 + $0x1d0] sm:$0xff]
    %v163 = vld [vmem:[#allocation5 + $0x1d8] sm:$0xff]
    %v164 = vld [vmem:[#allocation5 + $0x1e0] sm:$0xff]
    %v165 = vld [vmem:[#allocation5 + $0x1e8] sm:$0xff]
    %v166 = vld [vmem:[#allocation5 + $0x1f0] sm:$0xff]
    %v167 = vld [vmem:[#allocation5 + $0x1f8] sm:$0xff]
    %v168 = vld [vmem:[#allocation5 + $0x200] sm:$0xff]
    %v169 = vld [vmem:[#allocation5 + $0x208] sm:$0xff]
    %v170 = vld [vmem:[#allocation5 + $0x210] sm:$0xff]
    %v171 = vld [vmem:[#allocation5 + $0x218] sm:$0xff]
    %v172 = vld [vmem:[#allocation5 + $0x220] sm:$0xff]
    %v173 = vld [vmem:[#allocation5 + $0x228] sm:$0xff]
    %v174 = vld [vmem:[#allocation5 + $0x230] sm:$0xff]
    %v175 = vld [vmem:[#allocation5 + $0x238] sm:$0xff]
    %v176 = vld [vmem:[#allocation5 + $0x240] sm:$0xff]
    %v177 = vld [vmem:[#allocation5 + $0x248] sm:$0xff]
    %v178 = vld [vmem:[#allocation5 + $0x250] sm:$0xff]
    %v179 = vld [vmem:[#allocation5 + $0x258] sm:$0xff]
    %v180 = vld [vmem:[#allocation5 + $0x260] sm:$0xff]
    %v181 = vld [vmem:[#allocation5 + $0x268] sm:$0xff]
    %v182 = vld [vmem:[#allocation5 + $0x270] sm:$0xff]
    %v183 = vld [vmem:[#allocation5 + $0x278] sm:$0xff]
    %v184 = vld [vmem:[#allocation5 + $0x280] sm:$0xff]
    %v185 = vld [vmem:[#allocation5 + $0x288] sm:$0xff]
    %v186 = vld [vmem:[#allocation5 + $0x290] sm:$0xff]
    %v187 = vld [vmem:[#allocation5 + $0x298] sm:$0xff]
    %v188 = vld [vmem:[#allocation5 + $0x2a0] sm:$0xff]
    %v189 = vld [vmem:[#allocation5 + $0x2a8] sm:$0xff]
    %v190 = vld [vmem:[#allocation5 + $0x2b0] sm:$0xff]
    %v191 = vld [vmem:[#allocation5 + $0x2b8] sm:$0xff]
    %v192 = vld [vmem:[#allocation5 + $0x2c0] sm:$0xff]
    %v193 = vld [vmem:[#allocation5 + $0x2c8] sm:$0xff]
    %v194 = vld [vmem:[#allocation5 + $0x2d0] sm:$0xff]
    %v195 = vld [vmem:[#allocation5 + $0x2d8] sm:$0xff]
    %v196 = vld [vmem:[#allocation5 + $0x2e0] sm:$0xff]
    %v197 = vld [vmem:[#allocation5 + $0x2e8] sm:$0xff]
    %v198 = vld [vmem:[#allocation5 + $0x2f0] sm:$0xff]
    %v199 = vld [vmem:[#allocation5 + $0x2f8] sm:$0xff]
    %v200 = vld [vmem:[#allocation5 + $0x300] sm:$0xff]
    %v201 = vld [vmem:[#allocation5 + $0x308] sm:$0xff]
    %v202 = vld [vmem:[#allocation5 + $0x310] sm:$0xff]
    %v203 = vld [vmem:[#allocation5 + $0x318] sm:$0xff]
    %v204 = vld [vmem:[#allocation5 + $0x320] sm:$0xff]
    %v205 = vld [vmem:[#allocation5 + $0x328] sm:$0xff]
    %v206 = vld [vmem:[#allocation5 + $0x330] sm:$0xff]
    %v207 = vld [vmem:[#allocation5 + $0x338] sm:$0xff]
    %v208 = vld [vmem:[#allocation5 + $0x340] sm:$0xff]
    %v209 = vld [vmem:[#allocation5 + $0x348] sm:$0xff]
    %v210 = vld [vmem:[#allocation5 + $0x350] sm:$0xff]
    %v211 = vld [vmem:[#allocation5 + $0x358] sm:$0xff]
    %v212 = vld [vmem:[#allocation5 + $0x360] sm:$0xff]
    %v213 = vld [vmem:[#allocation5 + $0x368] sm:$0xff]
    %v214 = vld [vmem:[#allocation5 + $0x370] sm:$0xff]
    %v215 = vld [vmem:[#allocation5 + $0x378] sm:$0xff]
    %v216 = vld [vmem:[#allocation5 + $0x380] sm:$0xff]
    %v217 = vld [vmem:[#allocation5 + $0x388] sm:$0xff]
    %v218 = vld [vmem:[#allocation5 + $0x390] sm:$0xff]
    %v219 = vld [vmem:[#allocation5 + $0x398] sm:$0xff]
    %v220 = vld [vmem:[#allocation5 + $0x3a0] sm:$0xff]
    %v221 = vld [vmem:[#allocation5 + $0x3a8] sm:$0xff]
    %v222 = vld [vmem:[#allocation5 + $0x3b0] sm:$0xff]
    %v223 = vld [vmem:[#allocation5 + $0x3b8] sm:$0xff]
    %v224 = vld [vmem:[#allocation5 + $0x3c0] sm:$0xff]
    %v225 = vld [vmem:[#allocation5 + $0x3c8] sm:$0xff]
    %v226 = vld [vmem:[#allocation5 + $0x3d0] sm:$0xff]
    %v227 = vld [vmem:[#allocation5 + $0x3d8] sm:$0xff]
    %v228 = vld [vmem:[#allocation5 + $0x3e0] sm:$0xff]
    %v229 = vld [vmem:[#allocation5 + $0x3e8] sm:$0xff]
    %v230 = vld [vmem:[#allocation5 + $0x3f0] sm:$0xff]
    %v231 = vld [vmem:[#allocation5 + $0x3f8] sm:$0xff]
    %v232 = vld [vmem:[#allocation5 + $0x400] sm:$0xff]
    %v233 = vld [vmem:[#allocation5 + $0x408] sm:$0xff]
    %v234 = vld [vmem:[#allocation5 + $0x410] sm:$0xff]
    %v235 = vld [vmem:[#allocation5 + $0x418] sm:$0xff]
    %v236 = vld [vmem:[#allocation5 + $0x420] sm:$0xff]
    %v237 = vld [vmem:[#allocation5 + $0x428] sm:$0xff]
    %v238 = vld [vmem:[#allocation5 + $0x430] sm:$0xff]
    %v239 = vld [vmem:[#allocation5 + $0x438] sm:$0xff]
    %v240 = vld [vmem:[#allocation5 + $0x440] sm:$0xff]
    %v241 = vld [vmem:[#allocation5 + $0x448] sm:$0xff]
    %v242 = vld [vmem:[#allocation5 + $0x450] sm:$0xff]
    %v243 = vld [vmem:[#allocation5 + $0x458] sm:$0xff]
    %v244 = vld [vmem:[#allocation5 + $0x460] sm:$0xff]
    %v245 = vld [vmem:[#allocation5 + $0x468] sm:$0xff]
    %v246 = vld [vmem:[#allocation5 + $0x470] sm:$0xff]
    %v247 = vld [vmem:[#allocation5 + $0x478] sm:$0xff]
    %v248 = vld [vmem:[#allocation5 + $0x480] sm:$0xff]
    %v249 = vld [vmem:[#allocation5 + $0x488] sm:$0xff]
    %v250 = vld [vmem:[#allocation5 + $0x490] sm:$0xff]
    %v251 = vld [vmem:[#allocation5 + $0x498] sm:$0xff]
    %v252 = vld [vmem:[#allocation5 + $0x4a0] sm:$0xff]
    %v253 = vld [vmem:[#allocation5 + $0x4a8] sm:$0xff]
    %v254 = vld [vmem:[#allocation5 + $0x4b0] sm:$0xff]
    %v255 = vld [vmem:[#allocation5 + $0x4b8] sm:$0xff]
    %v256 = vld [vmem:[#allocation5 + $0x4c0] sm:$0xff]
    %v257 = vld [vmem:[#allocation5 + $0x4c8] sm:$0xff]
    %v258 = vld [vmem:[#allocation5 + $0x4d0] sm:$0xff]
    %v259 = vld [vmem:[#allocation5 + $0x4d8] sm:$0xff]
    %v260 = vld [vmem:[#allocation5 + $0x4e0] sm:$0xff]
    %v261 = vld [vmem:[#allocation5 + $0x4e8] sm:$0xff]
    %v262 = vld [vmem:[#allocation5 + $0x4f0] sm:$0xff]
    %v263 = vld [vmem:[#allocation5 + $0x4f8] sm:$0xff]
    %v264 = vld [vmem:[#allocation5 + $0x500] sm:$0xff]
    %v265 = vld [vmem:[#allocation5 + $0x508] sm:$0xff]
    %v266 = vld [vmem:[#allocation5 + $0x510] sm:$0xff]
    %v267 = vld [vmem:[#allocation5 + $0x518] sm:$0xff]
    %v268 = vld [vmem:[#allocation5 + $0x520] sm:$0xff]
    %v269 = vld [vmem:[#allocation5 + $0x528] sm:$0xff]
    %v270 = vld [vmem:[#allocation5 + $0x530] sm:$0xff]
    %v271 = vld [vmem:[#allocation5 + $0x538] sm:$0xff]
    %v272 = vld [vmem:[#allocation5 + $0x540] sm:$0xff]
    %v273 = vld [vmem:[#allocation5 + $0x548] sm:$0xff]
    %v274 = vld [vmem:[#allocation5 + $0x550] sm:$0xff]
    %v275 = vld [vmem:[#allocation5 + $0x558] sm:$0xff]
    %v276 = vld [vmem:[#allocation5 + $0x560] sm:$0xff]
    %v277 = vld [vmem:[#allocation5 + $0x568] sm:$0xff]
    %v278 = vld [vmem:[#allocation5 + $0x570] sm:$0xff]
    %v279 = vld [vmem:[#allocation5 + $0x578] sm:$0xff]
    %v280 = vld [vmem:[#allocation5 + $0x580] sm:$0xff]
    %v281 = vld [vmem:[#allocation5 + $0x588] sm:$0xff]
    %v282 = vld [vmem:[#allocation5 + $0x590] sm:$0xff]
    %v283 = vld [vmem:[#allocation5 + $0x598] sm:$0xff]
    %v284 = vld [vmem:[#allocation5 + $0x5a0] sm:$0xff]
    %v285 = vld [vmem:[#allocation5 + $0x5a8] sm:$0xff]
    %v286 = vld [vmem:[#allocation5 + $0x5b0] sm:$0xff]
    %v287 = vld [vmem:[#allocation5 + $0x5b8] sm:$0xff]
    %v288 = vld [vmem:[#allocation5 + $0x5c0] sm:$0xff]
    %v289 = vld [vmem:[#allocation5 + $0x5c8] sm:$0xff]
    %v290 = vld [vmem:[#allocation5 + $0x5d0] sm:$0xff]
    %v291 = vld [vmem:[#allocation5 + $0x5d8] sm:$0xff]
    %v292 = vld [vmem:[#allocation5 + $0x5e0] sm:$0xff]
    %v293 = vld [vmem:[#allocation5 + $0x5e8] sm:$0xff]
    %v294 = vld [vmem:[#allocation5 + $0x5f0] sm:$0xff]
    %v295 = vld [vmem:[#allocation5 + $0x5f8] sm:$0xff]
    %v296 = vld [vmem:[#allocation5 + $0x600] sm:$0xff]
    %v297 = vld [vmem:[#allocation5 + $0x608] sm:$0xff]
    %v298 = vld [vmem:[#allocation5 + $0x610] sm:$0xff]
    %v299 = vld [vmem:[#allocation5 + $0x618] sm:$0xff]
    %v300 = vld [vmem:[#allocation5 + $0x620] sm:$0xff]
    %v301 = vld [vmem:[#allocation5 + $0x628] sm:$0xff]
    %v302 = vld [vmem:[#allocation5 + $0x630] sm:$0xff]
    %v303 = vld [vmem:[#allocation5 + $0x638] sm:$0xff]
    %v304 = vld [vmem:[#allocation5 + $0x640] sm:$0xff]
    %v305 = vld [vmem:[#allocation5 + $0x648] sm:$0xff]
    %v306 = vld [vmem:[#allocation5 + $0x650] sm:$0xff]
    %v307 = vld [vmem:[#allocation5 + $0x658] sm:$0xff]
    %v308 = vld [vmem:[#allocation5 + $0x660] sm:$0xff]
    %v309 = vld [vmem:[#allocation5 + $0x668] sm:$0xff]
    %v310 = vld [vmem:[#allocation5 + $0x670] sm:$0xff]
    %v311 = vld [vmem:[#allocation5 + $0x678] sm:$0xff]
    %v312 = vld [vmem:[#allocation5 + $0x680] sm:$0xff]
    %v313 = vld [vmem:[#allocation5 + $0x688] sm:$0xff]
    %v314 = vld [vmem:[#allocation5 + $0x690] sm:$0xff]
    %v315 = vld [vmem:[#allocation5 + $0x698] sm:$0xff]
    %v316 = vld [vmem:[#allocation5 + $0x6a0] sm:$0xff]
    %v317 = vld [vmem:[#allocation5 + $0x6a8] sm:$0xff]
    %v318 = vld [vmem:[#allocation5 + $0x6b0] sm:$0xff]
    %v319 = vld [vmem:[#allocation5 + $0x6b8] sm:$0xff]
    %v320 = vld [vmem:[#allocation5 + $0x6c0] sm:$0xff]
    %v321 = vld [vmem:[#allocation5 + $0x6c8] sm:$0xff]
    %v322 = vld [vmem:[#allocation5 + $0x6d0] sm:$0xff]
    %v323 = vld [vmem:[#allocation5 + $0x6d8] sm:$0xff]
    %v324 = vld [vmem:[#allocation5 + $0x6e0] sm:$0xff]
    %v325 = vld [vmem:[#allocation5 + $0x6e8] sm:$0xff]
    %v326 = vld [vmem:[#allocation5 + $0x6f0] sm:$0xff]
    %v327 = vld [vmem:[#allocation5 + $0x6f8] sm:$0xff]
    %v328 = vld [vmem:[#allocation5 + $0x700] sm:$0xff]
    %v329 = vld [vmem:[#allocation5 + $0x708] sm:$0xff]
    %v330 = vld [vmem:[#allocation5 + $0x710] sm:$0xff]
    %v331 = vld [vmem:[#allocation5 + $0x718] sm:$0xff]
    %v332 = vld [vmem:[#allocation5 + $0x720] sm:$0xff]
    %v333 = vld [vmem:[#allocation5 + $0x728] sm:$0xff]
    %v334 = vld [vmem:[#allocation5 + $0x730] sm:$0xff]
    %v335 = vld [vmem:[#allocation5 + $0x738] sm:$0xff]
    %v336 = vld [vmem:[#allocation5 + $0x740] sm:$0xff]
    %v337 = vld [vmem:[#allocation5 + $0x748] sm:$0xff]
    %v338 = vld [vmem:[#allocation5 + $0x750] sm:$0xff]
    %v339 = vld [vmem:[#allocation5 + $0x758] sm:$0xff]
    %v340 = vld [vmem:[#allocation5 + $0x760] sm:$0xff]
    %v341 = vld [vmem:[#allocation5 + $0x768] sm:$0xff]
    %v342 = vld [vmem:[#allocation5 + $0x770] sm:$0xff]
    %v343 = vld [vmem:[#allocation5 + $0x778] sm:$0xff]
    %v344 = vld [vmem:[#allocation5 + $0x780] sm:$0xff]
    %v345 = vld [vmem:[#allocation5 + $0x788] sm:$0xff]
    %v346 = vld [vmem:[#allocation5 + $0x790] sm:$0xff]
    %v347 = vld [vmem:[#allocation5 + $0x798] sm:$0xff]
    %v348 = vld [vmem:[#allocation5 + $0x7a0] sm:$0xff]
    %v349 = vld [vmem:[#allocation5 + $0x7a8] sm:$0xff]
    %v350 = vld [vmem:[#allocation5 + $0x7b0] sm:$0xff]
    %v351 = vld [vmem:[#allocation5 + $0x7b8] sm:$0xff]
    %v352 = vld [vmem:[#allocation5 + $0x7c0] sm:$0xff]
    %v353 = vld [vmem:[#allocation5 + $0x7c8] sm:$0xff]
    %v354 = vld [vmem:[#allocation5 + $0x7d0] sm:$0xff]
    %v355 = vld [vmem:[#allocation5 + $0x7d8] sm:$0xff]
    %v356 = vld [vmem:[#allocation5 + $0x7e0] sm:$0xff]
    %v357 = vld [vmem:[#allocation5 + $0x7e8] sm:$0xff]
    %v358 = vld [vmem:[#allocation5 + $0x7f0] sm:$0xff]
    %v359 = vld [vmem:[#allocation5 + $0x7f8] sm:$0xff]
    %v360 = vld [vmem:[#allocation5 + $0x800] sm:$0xff]
    %v361 = vld [vmem:[#allocation5 + $0x808] sm:$0xff]
    %v362 = vld [vmem:[#allocation5 + $0x810] sm:$0xff]
    %v363 = vld [vmem:[#allocation5 + $0x818] sm:$0xff]
    %v364 = vld [vmem:[#allocation5 + $0x820] sm:$0xff]
    %v365 = vld [vmem:[#allocation5 + $0x828] sm:$0xff]
    %v366 = vld [vmem:[#allocation5 + $0x830] sm:$0xff]
    %v367 = vld [vmem:[#allocation5 + $0x838] sm:$0xff]
    %v368 = vld [vmem:[#allocation5 + $0x840] sm:$0xff]
    %v369 = vld [vmem:[#allocation5 + $0x848] sm:$0xff]
    %v370 = vld [vmem:[#allocation5 + $0x850] sm:$0xff]
    %v371 = vld [vmem:[#allocation5 + $0x858] sm:$0xff]
    %v372 = vld [vmem:[#allocation5 + $0x860] sm:$0xff]
    %v373 = vld [vmem:[#allocation5 + $0x868] sm:$0xff]
    %v374 = vld [vmem:[#allocation5 + $0x870] sm:$0xff]
    %v375 = vld [vmem:[#allocation5 + $0x878] sm:$0xff]
    %v376 = vld [vmem:[#allocation5 + $0x880] sm:$0xff]
    %v377 = vld [vmem:[#allocation5 + $0x888] sm:$0xff]
    %v378 = vld [vmem:[#allocation5 + $0x890] sm:$0xff]
    %v379 = vld [vmem:[#allocation5 + $0x898] sm:$0xff]
    %v380 = vld [vmem:[#allocation5 + $0x8a0] sm:$0xff]
    %v381 = vld [vmem:[#allocation5 + $0x8a8] sm:$0xff]
    %v382 = vld [vmem:[#allocation5 + $0x8b0] sm:$0xff]
    %v383 = vld [vmem:[#allocation5 + $0x8b8] sm:$0xff]
    %v384 = vld [vmem:[#allocation5 + $0x8c0] sm:$0xff]
    %v385 = vld [vmem:[#allocation5 + $0x8c8] sm:$0xff]
    %v386 = vld [vmem:[#allocation5 + $0x8d0] sm:$0xff]
    %v387 = vld [vmem:[#allocation5 + $0x8d8] sm:$0xff]
    %v388 = vld [vmem:[#allocation5 + $0x8e0] sm:$0xff]
    %v389 = vld [vmem:[#allocation5 + $0x8e8] sm:$0xff]
    %v390 = vld [vmem:[#allocation5 + $0x8f0] sm:$0xff]
    %v391 = vld [vmem:[#allocation5 + $0x8f8] sm:$0xff]
    %v392 = vld [vmem:[#allocation5 + $0x900] sm:$0xff]
    %v393 = vld [vmem:[#allocation5 + $0x908] sm:$0xff]
    %v394 = vld [vmem:[#allocation5 + $0x910] sm:$0xff]
    %v395 = vld [vmem:[#allocation5 + $0x918] sm:$0xff]
    %v396 = vld [vmem:[#allocation5 + $0x920] sm:$0xff]
    %v397 = vld [vmem:[#allocation5 + $0x928] sm:$0xff]
    %v398 = vld [vmem:[#allocation5 + $0x930] sm:$0xff]
    %v399 = vld [vmem:[#allocation5 + $0x938] sm:$0xff]
    %v400 = vld [vmem:[#allocation5 + $0x940] sm:$0xff]
    %v401 = vld [vmem:[#allocation5 + $0x948] sm:$0xff]
    %v402 = vld [vmem:[#allocation5 + $0x950] sm:$0xff]
    %v403 = vld [vmem:[#allocation5 + $0x958] sm:$0xff]
    %v404 = vld [vmem:[#allocation5 + $0x960] sm:$0xff]
    %v405 = vld [vmem:[#allocation5 + $0x968] sm:$0xff]
    %v406 = vld [vmem:[#allocation5 + $0x970] sm:$0xff]
    %v407 = vld [vmem:[#allocation5 + $0x978] sm:$0xff]
    %v408 = vld [vmem:[#allocation5 + $0x980] sm:$0xff]
    %v409 = vld [vmem:[#allocation5 + $0x988] sm:$0xff]
    %v410 = vld [vmem:[#allocation5 + $0x990] sm:$0xff]
    %v411 = vld [vmem:[#allocation5 + $0x998] sm:$0xff]
    %v412 = vld [vmem:[#allocation5 + $0x9a0] sm:$0xff]
    %v413 = vld [vmem:[#allocation5 + $0x9a8] sm:$0xff]
    %v414 = vld [vmem:[#allocation5 + $0x9b0] sm:$0xff]
    %v415 = vld [vmem:[#allocation5 + $0x9b8] sm:$0xff]
    %v416 = vld [vmem:[#allocation5 + $0x9c0] sm:$0xff]
    %v417 = vld [vmem:[#allocation5 + $0x9c8] sm:$0xff]
    %v418 = vld [vmem:[#allocation5 + $0x9d0] sm:$0xff]
    %v419 = vld [vmem:[#allocation5 + $0x9d8] sm:$0xff]
    %v420 = vld [vmem:[#allocation5 + $0x9e0] sm:$0xff]
    %v421 = vld [vmem:[#allocation5 + $0x9e8] sm:$0xff]
    %v422 = vld [vmem:[#allocation5 + $0x9f0] sm:$0xff]
    %v423 = vld [vmem:[#allocation5 + $0x9f8] sm:$0xff]
    %v424 = vld [vmem:[#allocation5 + $0xa00] sm:$0xff]
    %v425 = vld [vmem:[#allocation5 + $0xa08] sm:$0xff]
    %v426 = vld [vmem:[#allocation5 + $0xa10] sm:$0xff]
    %v427 = vld [vmem:[#allocation5 + $0xa18] sm:$0xff]
    %v428 = vld [vmem:[#allocation5 + $0xa20] sm:$0xff]
    %v429 = vld [vmem:[#allocation5 + $0xa28] sm:$0xff]
    %v430 = vld [vmem:[#allocation5 + $0xa30] sm:$0xff]
    %v431 = vld [vmem:[#allocation5 + $0xa38] sm:$0xff]
    %v432 = vld [vmem:[#allocation5 + $0xa40] sm:$0xff]
    %v433 = vld [vmem:[#allocation5 + $0xa48] sm:$0xff]
    %v434 = vld [vmem:[#allocation5 + $0xa50] sm:$0xff]
    %v435 = vld [vmem:[#allocation5 + $0xa58] sm:$0xff]
    %v436 = vld [vmem:[#allocation5 + $0xa60] sm:$0xff]
    %v437 = vld [vmem:[#allocation5 + $0xa68] sm:$0xff]
    %v438 = vld [vmem:[#allocation5 + $0xa70] sm:$0xff]
    %v439 = vld [vmem:[#allocation5 + $0xa78] sm:$0xff]
    %v440 = vld [vmem:[#allocation5 + $0xa80] sm:$0xff]
    %v441 = vld [vmem:[#allocation5 + $0xa88] sm:$0xff]
    %v442 = vld [vmem:[#allocation5 + $0xa90] sm:$0xff]
    %v443 = vld [vmem:[#allocation5 + $0xa98] sm:$0xff]
    %v444 = vld [vmem:[#allocation5 + $0xaa0] sm:$0xff]
    %v445 = vld [vmem:[#allocation5 + $0xaa8] sm:$0xff]
    %v446 = vld [vmem:[#allocation5 + $0xab0] sm:$0xff]
    %v447 = vld [vmem:[#allocation5 + $0xab8] sm:$0xff]
    %v448 = vld [vmem:[#allocation5 + $0xac0] sm:$0xff]
    %v449 = vld [vmem:[#allocation5 + $0xac8] sm:$0xff]
    %v450 = vld [vmem:[#allocation5 + $0xad0] sm:$0xff]
    %v451 = vld [vmem:[#allocation5 + $0xad8] sm:$0xff]
    %v452 = vld [vmem:[#allocation5 + $0xae0] sm:$0xff]
    %v453 = vld [vmem:[#allocation5 + $0xae8] sm:$0xff]
    %v454 = vld [vmem:[#allocation5 + $0xaf0] sm:$0xff]
    %v455 = vld [vmem:[#allocation5 + $0xaf8] sm:$0xff]
    %v456 = vld [vmem:[#allocation5 + $0xb00] sm:$0xff]
    %v457 = vld [vmem:[#allocation5 + $0xb08] sm:$0xff]
    %v458 = vld [vmem:[#allocation5 + $0xb10] sm:$0xff]
    %v459 = vld [vmem:[#allocation5 + $0xb18] sm:$0xff]
    %v460 = vld [vmem:[#allocation5 + $0xb20] sm:$0xff]
    %v461 = vld [vmem:[#allocation5 + $0xb28] sm:$0xff]
    %v462 = vld [vmem:[#allocation5 + $0xb30] sm:$0xff]
    %v463 = vld [vmem:[#allocation5 + $0xb38] sm:$0xff]
    %v464 = vld [vmem:[#allocation5 + $0xb40] sm:$0xff]
    %v465 = vld [vmem:[#allocation5 + $0xb48] sm:$0xff]
    %v466 = vld [vmem:[#allocation5 + $0xb50] sm:$0xff]
    %v467 = vld [vmem:[#allocation5 + $0xb58] sm:$0xff]
    %v468 = vld [vmem:[#allocation5 + $0xb60] sm:$0xff]
    %v469 = vld [vmem:[#allocation5 + $0xb68] sm:$0xff]
    %v470 = vld [vmem:[#allocation5 + $0xb70] sm:$0xff]
    %v471 = vld [vmem:[#allocation5 + $0xb78] sm:$0xff]
    %v472 = vld [vmem:[#allocation5 + $0xb80] sm:$0xff]
    %v473 = vld [vmem:[#allocation5 + $0xb88] sm:$0xff]
    %v474 = vld [vmem:[#allocation5 + $0xb90] sm:$0xff]
    %v475 = vld [vmem:[#allocation5 + $0xb98] sm:$0xff]
    %v476 = vld [vmem:[#allocation5 + $0xba0] sm:$0xff]
    %v477 = vld [vmem:[#allocation5 + $0xba8] sm:$0xff]
    %v478 = vld [vmem:[#allocation5 + $0xbb0] sm:$0xff]
    %v479 = vld [vmem:[#allocation5 + $0xbb8] sm:$0xff]
    %v480 = vld [vmem:[#allocation5 + $0xbc0] sm:$0xff]
    %v481 = vld [vmem:[#allocation5 + $0xbc8] sm:$0xff]
    %v482 = vld [vmem:[#allocation5 + $0xbd0] sm:$0xff]
    %v483 = vld [vmem:[#allocation5 + $0xbd8] sm:$0xff]
    %v484 = vld [vmem:[#allocation5 + $0xbe0] sm:$0xff]
    %v485 = vld [vmem:[#allocation5 + $0xbe8] sm:$0xff]
    %v486 = vld [vmem:[#allocation5 + $0xbf0] sm:$0xff]
    %v487 = vld [vmem:[#allocation5 + $0xbf8] sm:$0xff]
    %v488 = vld [vmem:[#allocation5 + $0xc00] sm:$0xff]
    %v489 = vld [vmem:[#allocation5 + $0xc08] sm:$0xff]
    %v490 = vld [vmem:[#allocation5 + $0xc10] sm:$0xff]
    %v491 = vld [vmem:[#allocation5 + $0xc18] sm:$0xff]
    %v492 = vld [vmem:[#allocation5 + $0xc20] sm:$0xff]
    %v493 = vld [vmem:[#allocation5 + $0xc28] sm:$0xff]
    %v494 = vld [vmem:[#allocation5 + $0xc30] sm:$0xff]
    %v495 = vld [vmem:[#allocation5 + $0xc38] sm:$0xff]
    %v496 = vld [vmem:[#allocation5 + $0xc40] sm:$0xff]
    %v497 = vld [vmem:[#allocation5 + $0xc48] sm:$0xff]
    %v498 = vld [vmem:[#allocation5 + $0xc50] sm:$0xff]
    %v499 = vld [vmem:[#allocation5 + $0xc58] sm:$0xff]
    %v500 = vld [vmem:[#allocation5 + $0xc60] sm:$0xff]
    %v501 = vld [vmem:[#allocation5 + $0xc68] sm:$0xff]
    %v502 = vld [vmem:[#allocation5 + $0xc70] sm:$0xff]
    %v503 = vld [vmem:[#allocation5 + $0xc78] sm:$0xff]
    %v504 = vld [vmem:[#allocation5 + $0xc80] sm:$0xff]
    %v505 = vld [vmem:[#allocation5 + $0xc88] sm:$0xff]
    %v506 = vld [vmem:[#allocation5 + $0xc90] sm:$0xff]
    %v507 = vld [vmem:[#allocation5 + $0xc98] sm:$0xff]
    %v508 = vld [vmem:[#allocation5 + $0xca0] sm:$0xff]
    %v509 = vld [vmem:[#allocation5 + $0xca8] sm:$0xff]
    %v510 = vld [vmem:[#allocation5 + $0xcb0] sm:$0xff]
    %v511 = vld [vmem:[#allocation5 + $0xcb8] sm:$0xff]
    %v512 = vld [vmem:[#allocation5 + $0xcc0] sm:$0xff]
    %v513 = vld [vmem:[#allocation5 + $0xcc8] sm:$0xff]
    %v514 = vld [vmem:[#allocation5 + $0xcd0] sm:$0xff]
    %v515 = vld [vmem:[#allocation5 + $0xcd8] sm:$0xff]
    %v516 = vld [vmem:[#allocation5 + $0xce0] sm:$0xff]
    %v517 = vld [vmem:[#allocation5 + $0xce8] sm:$0xff]
    %v518 = vld [vmem:[#allocation5 + $0xcf0] sm:$0xff]
    %v519 = vld [vmem:[#allocation5 + $0xcf8] sm:$0xff]
    %v520 = vld [vmem:[#allocation5 + $0xd00] sm:$0xff]
    %v521 = vld [vmem:[#allocation5 + $0xd08] sm:$0xff]
    %v522 = vld [vmem:[#allocation5 + $0xd10] sm:$0xff]
    %v523 = vld [vmem:[#allocation5 + $0xd18] sm:$0xff]
    %v524 = vld [vmem:[#allocation5 + $0xd20] sm:$0xff]
    %v525 = vld [vmem:[#allocation5 + $0xd28] sm:$0xff]
    %v526 = vld [vmem:[#allocation5 + $0xd30] sm:$0xff]
    %v527 = vld [vmem:[#allocation5 + $0xd38] sm:$0xff]
    %v528 = vld [vmem:[#allocation5 + $0xd40] sm:$0xff]
    %v529 = vld [vmem:[#allocation5 + $0xd48] sm:$0xff]
    %v530 = vld [vmem:[#allocation5 + $0xd50] sm:$0xff]
    %v531 = vld [vmem:[#allocation5 + $0xd58] sm:$0xff]
    %v532 = vld [vmem:[#allocation5 + $0xd60] sm:$0xff]
    %v533 = vld [vmem:[#allocation5 + $0xd68] sm:$0xff]
    %v534 = vld [vmem:[#allocation5 + $0xd70] sm:$0xff]
    %v535 = vld [vmem:[#allocation5 + $0xd78] sm:$0xff]
    %v536 = vld [vmem:[#allocation5 + $0xd80] sm:$0xff]
    %v537 = vld [vmem:[#allocation5 + $0xd88] sm:$0xff]
    %v538 = vld [vmem:[#allocation5 + $0xd90] sm:$0xff]
    %v539 = vld [vmem:[#allocation5 + $0xd98] sm:$0xff]
    %v540 = vld [vmem:[#allocation5 + $0xda0] sm:$0xff]
    %v541 = vld [vmem:[#allocation5 + $0xda8] sm:$0xff]
    %v542 = vld [vmem:[#allocation5 + $0xdb0] sm:$0xff]
    %v543 = vld [vmem:[#allocation5 + $0xdb8] sm:$0xff]
    %v544 = vld [vmem:[#allocation5 + $0xdc0] sm:$0xff]
    %v545 = vld [vmem:[#allocation5 + $0xdc8] sm:$0xff]
    %v546 = vld [vmem:[#allocation5 + $0xdd0] sm:$0xff]
    %v547 = vld [vmem:[#allocation5 + $0xdd8] sm:$0xff]
    %v548 = vld [vmem:[#allocation5 + $0xde0] sm:$0xff]
    %v549 = vld [vmem:[#allocation5 + $0xde8] sm:$0xff]
    %v550 = vld [vmem:[#allocation5 + $0xdf0] sm:$0xff]
    %v551 = vld [vmem:[#allocation5 + $0xdf8] sm:$0xff]
    %v552 = vld [vmem:[#allocation5 + $0xe00] sm:$0xff]
    %v553 = vld [vmem:[#allocation5 + $0xe08] sm:$0xff]
    %v554 = vld [vmem:[#allocation5 + $0xe10] sm:$0xff]
    %v555 = vld [vmem:[#allocation5 + $0xe18] sm:$0xff]
    %v556 = vld [vmem:[#allocation5 + $0xe20] sm:$0xff]
    %v557 = vld [vmem:[#allocation5 + $0xe28] sm:$0xff]
    %v558 = vld [vmem:[#allocation5 + $0xe30] sm:$0xff]
    %v559 = vld [vmem:[#allocation5 + $0xe38] sm:$0xff]
    %v560 = vld [vmem:[#allocation5 + $0xe40] sm:$0xff]
    %v561 = vld [vmem:[#allocation5 + $0xe48] sm:$0xff]
    %v562 = vld [vmem:[#allocation5 + $0xe50] sm:$0xff]
    %v563 = vld [vmem:[#allocation5 + $0xe58] sm:$0xff]
    %v564 = vld [vmem:[#allocation5 + $0xe60] sm:$0xff]
    %v565 = vld [vmem:[#allocation5 + $0xe68] sm:$0xff]
    %v566 = vld [vmem:[#allocation5 + $0xe70] sm:$0xff]
    %v567 = vld [vmem:[#allocation5 + $0xe78] sm:$0xff]
    %v568 = vld [vmem:[#allocation5 + $0xe80] sm:$0xff]
    %v569 = vld [vmem:[#allocation5 + $0xe88] sm:$0xff]
    %v570 = vld [vmem:[#allocation5 + $0xe90] sm:$0xff]
    %v571 = vld [vmem:[#allocation5 + $0xe98] sm:$0xff]
    %v572 = vld [vmem:[#allocation5 + $0xea0] sm:$0xff]
    %v573 = vld [vmem:[#allocation5 + $0xea8] sm:$0xff]
    %v574 = vld [vmem:[#allocation5 + $0xeb0] sm:$0xff]
    %v575 = vld [vmem:[#allocation5 + $0xeb8] sm:$0xff]
    %v576 = vld [vmem:[#allocation5 + $0xec0] sm:$0xff]
    %v577 = vld [vmem:[#allocation5 + $0xec8] sm:$0xff]
    %v578 = vld [vmem:[#allocation5 + $0xed0] sm:$0xff]
    %v579 = vld [vmem:[#allocation5 + $0xed8] sm:$0xff]
    %v580 = vld [vmem:[#allocation5 + $0xee0] sm:$0xff]
    %v581 = vld [vmem:[#allocation5 + $0xee8] sm:$0xff]
    %v582 = vld [vmem:[#allocation5 + $0xef0] sm:$0xff]
    %v583 = vld [vmem:[#allocation5 + $0xef8] sm:$0xff]
    %v584 = vld [vmem:[#allocation5 + $0xf00] sm:$0xff]
    %v585 = vld [vmem:[#allocation5 + $0xf08] sm:$0xff]
    %v586 = vld [vmem:[#allocation5 + $0xf10] sm:$0xff]
    %v587 = vld [vmem:[#allocation5 + $0xf18] sm:$0xff]
    %v588 = vld [vmem:[#allocation5 + $0xf20] sm:$0xff]
    %v589 = vld [vmem:[#allocation5 + $0xf28] sm:$0xff]
    %v590 = vld [vmem:[#allocation5 + $0xf30] sm:$0xff]
    %v591 = vld [vmem:[#allocation5 + $0xf38] sm:$0xff]
    %v592 = vld [vmem:[#allocation5 + $0xf40] sm:$0xff]
    %v593 = vld [vmem:[#allocation5 + $0xf48] sm:$0xff]
    %v594 = vld [vmem:[#allocation5 + $0xf50] sm:$0xff]
    %v595 = vld [vmem:[#allocation5 + $0xf58] sm:$0xff]
    %v596 = vld [vmem:[#allocation5 + $0xf60] sm:$0xff]
    %v597 = vld [vmem:[#allocation5 + $0xf68] sm:$0xff]
    %v598 = vld [vmem:[#allocation5 + $0xf70] sm:$0xff]
    %v599 = vld [vmem:[#allocation5 + $0xf78] sm:$0xff]
    %v600 = vld [vmem:[#allocation5 + $0xf80] sm:$0xff]
    %v601 = vld [vmem:[#allocation5 + $0xf88] sm:$0xff]
    %v602 = vld [vmem:[#allocation5 + $0xf90] sm:$0xff]
    %v603 = vld [vmem:[#allocation5 + $0xf98] sm:$0xff]
    %v604 = vld [vmem:[#allocation5 + $0xfa0] sm:$0xff]
    %v605 = vld [vmem:[#allocation5 + $0xfa8] sm:$0xff]
    %v606 = vld [vmem:[#allocation5 + $0xfb0] sm:$0xff]
    %v607 = vld [vmem:[#allocation5 + $0xfb8] sm:$0xff]
    %v608 = vld [vmem:[#allocation5 + $0xfc0] sm:$0xff]
    %v609 = vld [vmem:[#allocation5 + $0xfc8] sm:$0xff]
    %v610 = vld [vmem:[#allocation5 + $0xfd0] sm:$0xff]
    %v611 = vld [vmem:[#allocation5 + $0xfd8] sm:$0xff]
    %v612 = vld [vmem:[#allocation5 + $0xfe0] sm:$0xff]
    %v613 = vld [vmem:[#allocation5 + $0xfe8] sm:$0xff]
    %v614 = vld [vmem:[#allocation5 + $0xff0] sm:$0xff]
    %v615 = vld [vmem:[#allocation5 + $0xff8] sm:$0xff]
    %v616 = vld [vmem:[#allocation5 + $0x1000] sm:$0xff]
    %v617 = vld [vmem:[#allocation5 + $0x1008] sm:$0xff]
    %v618 = vld [vmem:[#allocation5 + $0x1010] sm:$0xff]
    %v619 = vld [vmem:[#allocation5 + $0x1018] sm:$0xff]
    %v620 = vld [vmem:[#allocation5 + $0x1020] sm:$0xff]
    %v621 = vld [vmem:[#allocation5 + $0x1028] sm:$0xff]
    %v622 = vld [vmem:[#allocation5 + $0x1030] sm:$0xff]
    %v623 = vld [vmem:[#allocation5 + $0x1038] sm:$0xff]
    %v624 = vld [vmem:[#allocation5 + $0x1040] sm:$0xff]
    %v625 = vld [vmem:[#allocation5 + $0x1048] sm:$0xff]
    %v626 = vld [vmem:[#allocation5 + $0x1050] sm:$0xff]
    %v627 = vld [vmem:[#allocation5 + $0x1058] sm:$0xff]
    %v628 = vld [vmem:[#allocation5 + $0x1060] sm:$0xff]
    %v629 = vld [vmem:[#allocation5 + $0x1068] sm:$0xff]
    %v630 = vld [vmem:[#allocation5 + $0x1070] sm:$0xff]
    %v631 = vld [vmem:[#allocation5 + $0x1078] sm:$0xff]
    %v632 = vld [vmem:[#allocation5 + $0x1080] sm:$0xff]
    %v633 = vld [vmem:[#allocation5 + $0x1088] sm:$0xff]
    %v634 = vld [vmem:[#allocation5 + $0x1090] sm:$0xff]
    %v635 = vld [vmem:[#allocation5 + $0x1098] sm:$0xff]
    %v636 = vld [vmem:[#allocation5 + $0x10a0] sm:$0xff]
    %v637 = vld [vmem:[#allocation5 + $0x10a8] sm:$0xff]
    %v638 = vld [vmem:[#allocation5 + $0x10b0] sm:$0xff]
    %v639 = vld [vmem:[#allocation5 + $0x10b8] sm:$0xff]
    %v640 = vld [vmem:[#allocation5 + $0x10c0] sm:$0xff]
    %v641 = vld [vmem:[#allocation5 + $0x10c8] sm:$0xff]
    %v642 = vld [vmem:[#allocation5 + $0x10d0] sm:$0xff]
    %v643 = vld [vmem:[#allocation5 + $0x10d8] sm:$0xff]
    %v644 = vld [vmem:[#allocation5 + $0x10e0] sm:$0xff]
    %v645 = vld [vmem:[#allocation5 + $0x10e8] sm:$0xff]
    %v646 = vld [vmem:[#allocation5 + $0x10f0] sm:$0xff]
    %v647 = vld [vmem:[#allocation5 + $0x10f8] sm:$0xff]
    %v648 = vld [vmem:[#allocation5 + $0x1100] sm:$0xff]
    %v649 = vld [vmem:[#allocation5 + $0x1108] sm:$0xff]
    %v650 = vld [vmem:[#allocation5 + $0x1110] sm:$0xff]
    %v651 = vld [vmem:[#allocation5 + $0x1118] sm:$0xff]
    %v652 = vld [vmem:[#allocation5 + $0x1120] sm:$0xff]
    %v653 = vld [vmem:[#allocation5 + $0x1128] sm:$0xff]
    %v654 = vld [vmem:[#allocation5 + $0x1130] sm:$0xff]
    %v655 = vld [vmem:[#allocation5 + $0x1138] sm:$0xff]
    %v656 = vld [vmem:[#allocation5 + $0x1140] sm:$0xff]
    %v657 = vld [vmem:[#allocation5 + $0x1148] sm:$0xff]
    %v658 = vld [vmem:[#allocation5 + $0x1150] sm:$0xff]
    %v659 = vld [vmem:[#allocation5 + $0x1158] sm:$0xff]
    %v660 = vld [vmem:[#allocation5 + $0x1160] sm:$0xff]
    %v661 = vld [vmem:[#allocation5 + $0x1168] sm:$0xff]
    %v662 = vld [vmem:[#allocation5 + $0x1170] sm:$0xff]
    %v663 = vld [vmem:[#allocation5 + $0x1178] sm:$0xff]
    %v664 = vld [vmem:[#allocation5 + $0x1180] sm:$0xff]
    %v665 = vld [vmem:[#allocation5 + $0x1188] sm:$0xff]
    %v666 = vld [vmem:[#allocation5 + $0x1190] sm:$0xff]
    %v667 = vld [vmem:[#allocation5 + $0x1198] sm:$0xff]
    %v668 = vld [vmem:[#allocation5 + $0x11a0] sm:$0xff]
    %v669 = vld [vmem:[#allocation5 + $0x11a8] sm:$0xff]
    %v670 = vld [vmem:[#allocation5 + $0x11b0] sm:$0xff]
    %v671 = vld [vmem:[#allocation5 + $0x11b8] sm:$0xff]
    %v672 = vld [vmem:[#allocation5 + $0x11c0] sm:$0xff]
    %v673 = vld [vmem:[#allocation5 + $0x11c8] sm:$0xff]
    %v674 = vld [vmem:[#allocation5 + $0x11d0] sm:$0xff]
    %v675 = vld [vmem:[#allocation5 + $0x11d8] sm:$0xff]
    %v676 = vld [vmem:[#allocation5 + $0x11e0] sm:$0xff]
    %v677 = vld [vmem:[#allocation5 + $0x11e8] sm:$0xff]
    %v678 = vld [vmem:[#allocation5 + $0x11f0] sm:$0xff]
    %v679 = vld [vmem:[#allocation5 + $0x11f8] sm:$0xff]
    %v680 = vld [vmem:[#allocation5 + $0x1200] sm:$0xff]
    %v681 = vld [vmem:[#allocation5 + $0x1208] sm:$0xff]
    %v682 = vld [vmem:[#allocation5 + $0x1210] sm:$0xff]
    %v683 = vld [vmem:[#allocation5 + $0x1218] sm:$0xff]
    %v684 = vld [vmem:[#allocation5 + $0x1220] sm:$0xff]
    %v685 = vld [vmem:[#allocation5 + $0x1228] sm:$0xff]
    %v686 = vld [vmem:[#allocation5 + $0x1230] sm:$0xff]
    %v687 = vld [vmem:[#allocation5 + $0x1238] sm:$0xff]
    %v688 = vld [vmem:[#allocation5 + $0x1240] sm:$0xff]
    %v689 = vld [vmem:[#allocation5 + $0x1248] sm:$0xff]
    %v690 = vld [vmem:[#allocation5 + $0x1250] sm:$0xff]
    %v691 = vld [vmem:[#allocation5 + $0x1258] sm:$0xff]
    %v692 = vld [vmem:[#allocation5 + $0x1260] sm:$0xff]
    %v693 = vld [vmem:[#allocation5 + $0x1268] sm:$0xff]
    %v694 = vld [vmem:[#allocation5 + $0x1270] sm:$0xff]
    %v695 = vld [vmem:[#allocation5 + $0x1278] sm:$0xff]
    %v696 = vld [vmem:[#allocation5 + $0x1280] sm:$0xff]
    %v697 = vld [vmem:[#allocation5 + $0x1288] sm:$0xff]
    %v698 = vld [vmem:[#allocation5 + $0x1290] sm:$0xff]
    %v699 = vld [vmem:[#allocation5 + $0x1298] sm:$0xff]
    %v700 = vld [vmem:[#allocation5 + $0x12a0] sm:$0xff]
    %v701 = vld [vmem:[#allocation5 + $0x12a8] sm:$0xff]
    %v702 = vld [vmem:[#allocation5 + $0x12b0] sm:$0xff]
    %v703 = vld [vmem:[#allocation5 + $0x12b8] sm:$0xff]
    %v704 = vld [vmem:[#allocation5 + $0x12c0] sm:$0xff]
    %v705 = vld [vmem:[#allocation5 + $0x12c8] sm:$0xff]
    %v706 = vld [vmem:[#allocation5 + $0x12d0] sm:$0xff]
    %v707 = vld [vmem:[#allocation5 + $0x12d8] sm:$0xff]
    %v708 = vld [vmem:[#allocation5 + $0x12e0] sm:$0xff]
    %v709 = vld [vmem:[#allocation5 + $0x12e8] sm:$0xff]
    %v710 = vld [vmem:[#allocation5 + $0x12f0] sm:$0xff]
    %v711 = vld [vmem:[#allocation5 + $0x12f8] sm:$0xff]
    %v712 = vld [vmem:[#allocation5 + $0x1300] sm:$0xff]
    %v713 = vld [vmem:[#allocation5 + $0x1308] sm:$0xff]
    %v714 = vld [vmem:[#allocation5 + $0x1310] sm:$0xff]
    %v715 = vld [vmem:[#allocation5 + $0x1318] sm:$0xff]
    %v716 = vld [vmem:[#allocation5 + $0x1320] sm:$0xff]
    %v717 = vld [vmem:[#allocation5 + $0x1328] sm:$0xff]
    %v718 = vld [vmem:[#allocation5 + $0x1330] sm:$0xff]
    %v719 = vld [vmem:[#allocation5 + $0x1338] sm:$0xff]
    %v720 = vld [vmem:[#allocation5 + $0x1340] sm:$0xff]
    %v721 = vld [vmem:[#allocation5 + $0x1348] sm:$0xff]
    %v722 = vld [vmem:[#allocation5 + $0x1350] sm:$0xff]
    %v723 = vld [vmem:[#allocation5 + $0x1358] sm:$0xff]
    %v724 = vld [vmem:[#allocation5 + $0x1360] sm:$0xff]
    %v725 = vld [vmem:[#allocation5 + $0x1368] sm:$0xff]
    %v726 = vld [vmem:[#allocation5 + $0x1370] sm:$0xff]
    %v727 = vld [vmem:[#allocation5 + $0x1378] sm:$0xff]
    %v728 = vld [vmem:[#allocation5 + $0x1380] sm:$0xff]
    %v729 = vld [vmem:[#allocation5 + $0x1388] sm:$0xff]
    %v730 = vld [vmem:[#allocation5 + $0x1390] sm:$0xff]
    %v731 = vld [vmem:[#allocation5 + $0x1398] sm:$0xff]
    %v732 = vld [vmem:[#allocation5 + $0x13a0] sm:$0xff]
    %v733 = vld [vmem:[#allocation5 + $0x13a8] sm:$0xff]
    %v734 = vld [vmem:[#allocation5 + $0x13b0] sm:$0xff]
    %v735 = vld [vmem:[#allocation5 + $0x13b8] sm:$0xff]
    %v736 = vld [vmem:[#allocation5 + $0x13c0] sm:$0xff]
    %v737 = vld [vmem:[#allocation5 + $0x13c8] sm:$0xff]
    %v738 = vld [vmem:[#allocation5 + $0x13d0] sm:$0xff]
    %v739 = vld [vmem:[#allocation5 + $0x13d8] sm:$0xff]
    %v740 = vld [vmem:[#allocation5 + $0x13e0] sm:$0xff]
    %v741 = vld [vmem:[#allocation5 + $0x13e8] sm:$0xff]
    %v742 = vld [vmem:[#allocation5 + $0x13f0] sm:$0xff]
    %v743 = vld [vmem:[#allocation5 + $0x13f8] sm:$0xff]
    %v744 = vld [vmem:[#allocation5 + $0x1400] sm:$0xff]
    %v745 = vld [vmem:[#allocation5 + $0x1408] sm:$0xff]
    %v746 = vld [vmem:[#allocation5 + $0x1410] sm:$0xff]
    %v747 = vld [vmem:[#allocation5 + $0x1418] sm:$0xff]
    %v748 = vld [vmem:[#allocation5 + $0x1420] sm:$0xff]
    %v749 = vld [vmem:[#allocation5 + $0x1428] sm:$0xff]
    %v750 = vld [vmem:[#allocation5 + $0x1430] sm:$0xff]
    %v751 = vld [vmem:[#allocation5 + $0x1438] sm:$0xff]
    %v752 = vld [vmem:[#allocation5 + $0x1440] sm:$0xff]
    %v753 = vld [vmem:[#allocation5 + $0x1448] sm:$0xff]
    %v754 = vld [vmem:[#allocation5 + $0x1450] sm:$0xff]
    %v755 = vld [vmem:[#allocation5 + $0x1458] sm:$0xff]
    %v756 = vld [vmem:[#allocation5 + $0x1460] sm:$0xff]
    %v757 = vld [vmem:[#allocation5 + $0x1468] sm:$0xff]
    %v758 = vld [vmem:[#allocation5 + $0x1470] sm:$0xff]
    %v759 = vld [vmem:[#allocation5 + $0x1478] sm:$0xff]
    %v760 = vld [vmem:[#allocation5 + $0x1480] sm:$0xff]
    %v761 = vld [vmem:[#allocation5 + $0x1488] sm:$0xff]
    %v762 = vld [vmem:[#allocation5 + $0x1490] sm:$0xff]
    %v763 = vld [vmem:[#allocation5 + $0x1498] sm:$0xff]
    %v764 = vld [vmem:[#allocation5 + $0x14a0] sm:$0xff]
    %v765 = vld [vmem:[#allocation5 + $0x14a8] sm:$0xff]
    %v766 = vld [vmem:[#allocation5 + $0x14b0] sm:$0xff]
    %v767 = vld [vmem:[#allocation5 + $0x14b8] sm:$0xff]
    %v768 = vld [vmem:[#allocation5 + $0x14c0] sm:$0xff]
    %v769 = vld [vmem:[#allocation5 + $0x14c8] sm:$0xff]
    %v770 = vld [vmem:[#allocation5 + $0x14d0] sm:$0xff]
    %v771 = vld [vmem:[#allocation5 + $0x14d8] sm:$0xff]
    %v772 = vld [vmem:[#allocation5 + $0x14e0] sm:$0xff]
    %v773 = vld [vmem:[#allocation5 + $0x14e8] sm:$0xff]
    %v774 = vld [vmem:[#allocation5 + $0x14f0] sm:$0xff]
    %v775 = vld [vmem:[#allocation5 + $0x14f8] sm:$0xff]
    %v776 = vld [vmem:[#allocation5 + $0x1500] sm:$0xff]
    %v777 = vld [vmem:[#allocation5 + $0x1508] sm:$0xff]
    %v778 = vld [vmem:[#allocation5 + $0x1510] sm:$0xff]
    %v779 = vld [vmem:[#allocation5 + $0x1518] sm:$0xff]
    %v780 = vld [vmem:[#allocation5 + $0x1520] sm:$0xff]
    %v781 = vld [vmem:[#allocation5 + $0x1528] sm:$0xff]
    %v782 = vld [vmem:[#allocation5 + $0x1530] sm:$0xff]
    %v783 = vld [vmem:[#allocation5 + $0x1538] sm:$0xff]
    %v784 = vld [vmem:[#allocation5 + $0x1540] sm:$0xff]
    %v785 = vld [vmem:[#allocation5 + $0x1548] sm:$0xff]
    %v786 = vld [vmem:[#allocation5 + $0x1550] sm:$0xff]
    %v787 = vld [vmem:[#allocation5 + $0x1558] sm:$0xff]
    %v788 = vld [vmem:[#allocation5 + $0x1560] sm:$0xff]
    %v789 = vld [vmem:[#allocation5 + $0x1568] sm:$0xff]
    %v790 = vld [vmem:[#allocation5 + $0x1570] sm:$0xff]
    %v791 = vld [vmem:[#allocation5 + $0x1578] sm:$0xff]
    %v792 = vld [vmem:[#allocation5 + $0x1580] sm:$0xff]
    %v793 = vld [vmem:[#allocation5 + $0x1588] sm:$0xff]
    %v794 = vld [vmem:[#allocation5 + $0x1590] sm:$0xff]
    %v795 = vld [vmem:[#allocation5 + $0x1598] sm:$0xff]
    %v796 = vld [vmem:[#allocation5 + $0x15a0] sm:$0xff]
    %v797 = vld [vmem:[#allocation5 + $0x15a8] sm:$0xff]
    %v798 = vld [vmem:[#allocation5 + $0x15b0] sm:$0xff]
    %v799 = vld [vmem:[#allocation5 + $0x15b8] sm:$0xff]
    %v800 = vld [vmem:[#allocation5 + $0x15c0] sm:$0xff]
    %v801 = vld [vmem:[#allocation5 + $0x15c8] sm:$0xff]
    %v802 = vld [vmem:[#allocation5 + $0x15d0] sm:$0xff]
    %v803 = vld [vmem:[#allocation5 + $0x15d8] sm:$0xff]
    %v804 = vld [vmem:[#allocation5 + $0x15e0] sm:$0xff]
    %v805 = vld [vmem:[#allocation5 + $0x15e8] sm:$0xff]
    %v806 = vld [vmem:[#allocation5 + $0x15f0] sm:$0xff]
    %v807 = vld [vmem:[#allocation5 + $0x15f8] sm:$0xff]
    %v808 = vld [vmem:[#allocation5 + $0x1600] sm:$0xff]
    %v809 = vld [vmem:[#allocation5 + $0x1608] sm:$0xff]
    %v810 = vld [vmem:[#allocation5 + $0x1610] sm:$0xff]
    %v811 = vld [vmem:[#allocation5 + $0x1618] sm:$0xff]
    %v812 = vld [vmem:[#allocation5 + $0x1620] sm:$0xff]
    %v813 = vld [vmem:[#allocation5 + $0x1628] sm:$0xff]
    %v814 = vld [vmem:[#allocation5 + $0x1630] sm:$0xff]
    %v815 = vld [vmem:[#allocation5 + $0x1638] sm:$0xff]
    %v816 = vld [vmem:[#allocation5 + $0x1640] sm:$0xff]
    %v817 = vld [vmem:[#allocation5 + $0x1648] sm:$0xff]
    %v818 = vld [vmem:[#allocation5 + $0x1650] sm:$0xff]
    %v819 = vld [vmem:[#allocation5 + $0x1658] sm:$0xff]
    %v820 = vld [vmem:[#allocation5 + $0x1660] sm:$0xff]
    %v821 = vld [vmem:[#allocation5 + $0x1668] sm:$0xff]
    %v822 = vld [vmem:[#allocation5 + $0x1670] sm:$0xff]
    %v823 = vld [vmem:[#allocation5 + $0x1678] sm:$0xff]
    %v824 = vld [vmem:[#allocation5 + $0x1680] sm:$0xff]
    %v825 = vld [vmem:[#allocation5 + $0x1688] sm:$0xff]
    %v826 = vld [vmem:[#allocation5 + $0x1690] sm:$0xff]
    %v827 = vld [vmem:[#allocation5 + $0x1698] sm:$0xff]
    %v828 = vld [vmem:[#allocation5 + $0x16a0] sm:$0xff]
    %v829 = vld [vmem:[#allocation5 + $0x16a8] sm:$0xff]
    %v830 = vld [vmem:[#allocation5 + $0x16b0] sm:$0xff]
    %v831 = vld [vmem:[#allocation5 + $0x16b8] sm:$0xff]
    %v832 = vld [vmem:[#allocation5 + $0x16c0] sm:$0xff]
    %v833 = vld [vmem:[#allocation5 + $0x16c8] sm:$0xff]
    %v834 = vld [vmem:[#allocation5 + $0x16d0] sm:$0xff]
    %v835 = vld [vmem:[#allocation5 + $0x16d8] sm:$0xff]
    %v836 = vld [vmem:[#allocation5 + $0x16e0] sm:$0xff]
    %v837 = vld [vmem:[#allocation5 + $0x16e8] sm:$0xff]
    %v838 = vld [vmem:[#allocation5 + $0x16f0] sm:$0xff]
    %v839 = vld [vmem:[#allocation5 + $0x16f8] sm:$0xff]
    %v840 = vld [vmem:[#allocation5 + $0x1700] sm:$0xff]
    %v841 = vld [vmem:[#allocation5 + $0x1708] sm:$0xff]
    %v842 = vld [vmem:[#allocation5 + $0x1710] sm:$0xff]
    %v843 = vld [vmem:[#allocation5 + $0x1718] sm:$0xff]
    %v844 = vld [vmem:[#allocation5 + $0x1720] sm:$0xff]
    %v845 = vld [vmem:[#allocation5 + $0x1728] sm:$0xff]
    %v846 = vld [vmem:[#allocation5 + $0x1730] sm:$0xff]
    %v847 = vld [vmem:[#allocation5 + $0x1738] sm:$0xff]
    %v848 = vld [vmem:[#allocation5 + $0x1740] sm:$0xff]
    %v849 = vld [vmem:[#allocation5 + $0x1748] sm:$0xff]
    %v850 = vld [vmem:[#allocation5 + $0x1750] sm:$0xff]
    %v851 = vld [vmem:[#allocation5 + $0x1758] sm:$0xff]
    %v852 = vld [vmem:[#allocation5 + $0x1760] sm:$0xff]
    %v853 = vld [vmem:[#allocation5 + $0x1768] sm:$0xff]
    %v854 = vld [vmem:[#allocation5 + $0x1770] sm:$0xff]
    %v855 = vld [vmem:[#allocation5 + $0x1778] sm:$0xff]
    %v856 = vld [vmem:[#allocation5 + $0x1780] sm:$0xff]
    %v857 = vld [vmem:[#allocation5 + $0x1788] sm:$0xff]
    %v858 = vld [vmem:[#allocation5 + $0x1790] sm:$0xff]
    %v859 = vld [vmem:[#allocation5 + $0x1798] sm:$0xff]
    %v860 = vld [vmem:[#allocation5 + $0x17a0] sm:$0xff]
    %v861 = vld [vmem:[#allocation5 + $0x17a8] sm:$0xff]
    %v862 = vld [vmem:[#allocation5 + $0x17b0] sm:$0xff]
    %v863 = vld [vmem:[#allocation5 + $0x17b8] sm:$0xff]
    %v864 = vld [vmem:[#allocation5 + $0x17c0] sm:$0xff]
    %v865 = vld [vmem:[#allocation5 + $0x17c8] sm:$0xff]
    %v866 = vld [vmem:[#allocation5 + $0x17d0] sm:$0xff]
    %v867 = vld [vmem:[#allocation5 + $0x17d8] sm:$0xff]
    %v868 = vld [vmem:[#allocation5 + $0x17e0] sm:$0xff]
    %v869 = vld [vmem:[#allocation5 + $0x17e8] sm:$0xff]
    %v870 = vld [vmem:[#allocation5 + $0x17f0] sm:$0xff]
    %v871 = vld [vmem:[#allocation5 + $0x17f8] sm:$0xff]
    %v872 = vld [vmem:[#allocation5 + $0x1800] sm:$0xff]
    %v873 = vld [vmem:[#allocation5 + $0x1808] sm:$0xff]
    %v874 = vld [vmem:[#allocation5 + $0x1810] sm:$0xff]
    %v875 = vld [vmem:[#allocation5 + $0x1818] sm:$0xff]
    %v876 = vld [vmem:[#allocation5 + $0x1820] sm:$0xff]
    %v877 = vld [vmem:[#allocation5 + $0x1828] sm:$0xff]
    %v878 = vld [vmem:[#allocation5 + $0x1830] sm:$0xff]
    %v879 = vld [vmem:[#allocation5 + $0x1838] sm:$0xff]
    %v880 = vld [vmem:[#allocation5 + $0x1840] sm:$0xff]
    %v881 = vld [vmem:[#allocation5 + $0x1848] sm:$0xff]
    %v882 = vld [vmem:[#allocation5 + $0x1850] sm:$0xff]
    %v883 = vld [vmem:[#allocation5 + $0x1858] sm:$0xff]
    %v884 = vld [vmem:[#allocation5 + $0x1860] sm:$0xff]
    %v885 = vld [vmem:[#allocation5 + $0x1868] sm:$0xff]
    %v886 = vld [vmem:[#allocation5 + $0x1870] sm:$0xff]
    %v887 = vld [vmem:[#allocation5 + $0x1878] sm:$0xff]
    %v888 = vld [vmem:[#allocation5 + $0x1880] sm:$0xff]
    %v889 = vld [vmem:[#allocation5 + $0x1888] sm:$0xff]
    %v890 = vld [vmem:[#allocation5 + $0x1890] sm:$0xff]
    %v891 = vld [vmem:[#allocation5 + $0x1898] sm:$0xff]
    %v892 = vld [vmem:[#allocation5 + $0x18a0] sm:$0xff]
    %v893 = vld [vmem:[#allocation5 + $0x18a8] sm:$0xff]
    %v894 = vld [vmem:[#allocation5 + $0x18b0] sm:$0xff]
    %v895 = vld [vmem:[#allocation5 + $0x18b8] sm:$0xff]
    %v896 = vld [vmem:[#allocation5 + $0x18c0] sm:$0xff]
    %v897 = vld [vmem:[#allocation5 + $0x18c8] sm:$0xff]
    %v898 = vld [vmem:[#allocation5 + $0x18d0] sm:$0xff]
    %v899 = vld [vmem:[#allocation5 + $0x18d8] sm:$0xff]
    %v900 = vld [vmem:[#allocation5 + $0x18e0] sm:$0xff]
    %v901 = vld [vmem:[#allocation5 + $0x18e8] sm:$0xff]
    %v902 = vld [vmem:[#allocation5 + $0x18f0] sm:$0xff]
    %v903 = vld [vmem:[#allocation5 + $0x18f8] sm:$0xff]
    %v904 = vld [vmem:[#allocation5 + $0x1900] sm:$0xff]
    %v905 = vld [vmem:[#allocation5 + $0x1908] sm:$0xff]
    %v906 = vld [vmem:[#allocation5 + $0x1910] sm:$0xff]
    %v907 = vld [vmem:[#allocation5 + $0x1918] sm:$0xff]
    %v908 = vld [vmem:[#allocation5 + $0x1920] sm:$0xff]
    %v909 = vld [vmem:[#allocation5 + $0x1928] sm:$0xff]
    %v910 = vld [vmem:[#allocation5 + $0x1930] sm:$0xff]
    %v911 = vld [vmem:[#allocation5 + $0x1938] sm:$0xff]
    %v912 = vld [vmem:[#allocation5 + $0x1940] sm:$0xff]
    %v913 = vld [vmem:[#allocation5 + $0x1948] sm:$0xff]
    %v914 = vld [vmem:[#allocation5 + $0x1950] sm:$0xff]
    %v915 = vld [vmem:[#allocation5 + $0x1958] sm:$0xff]
    %v916 = vld [vmem:[#allocation5 + $0x1960] sm:$0xff]
    %v917 = vld [vmem:[#allocation5 + $0x1968] sm:$0xff]
    %v918 = vld [vmem:[#allocation5 + $0x1970] sm:$0xff]
    %v919 = vld [vmem:[#allocation5 + $0x1978] sm:$0xff]
    %v920 = vld [vmem:[#allocation5 + $0x1980] sm:$0xff]
    %v921 = vld [vmem:[#allocation5 + $0x1988] sm:$0xff]
    %v922 = vld [vmem:[#allocation5 + $0x1990] sm:$0xff]
    %v923 = vld [vmem:[#allocation5 + $0x1998] sm:$0xff]
    %v924 = vld [vmem:[#allocation5 + $0x19a0] sm:$0xff]
    %v925 = vld [vmem:[#allocation5 + $0x19a8] sm:$0xff]
    %v926 = vld [vmem:[#allocation5 + $0x19b0] sm:$0xff]
    %v927 = vld [vmem:[#allocation5 + $0x19b8] sm:$0xff]
    %v928 = vld [vmem:[#allocation5 + $0x19c0] sm:$0xff]
    %v929 = vld [vmem:[#allocation5 + $0x19c8] sm:$0xff]
    %v930 = vld [vmem:[#allocation5 + $0x19d0] sm:$0xff]
    %v931 = vld [vmem:[#allocation5 + $0x19d8] sm:$0xff]
    %v932 = vld [vmem:[#allocation5 + $0x19e0] sm:$0xff]
    %v933 = vld [vmem:[#allocation5 + $0x19e8] sm:$0xff]
    %v934 = vld [vmem:[#allocation5 + $0x19f0] sm:$0xff]
    %v935 = vld [vmem:[#allocation5 + $0x19f8] sm:$0xff]
    %v936 = vld [vmem:[#allocation5 + $0x1a00] sm:$0xff]
    %v937 = vld [vmem:[#allocation5 + $0x1a08] sm:$0xff]
    %v938 = vld [vmem:[#allocation5 + $0x1a10] sm:$0xff]
    %v939 = vld [vmem:[#allocation5 + $0x1a18] sm:$0xff]
    %v940 = vld [vmem:[#allocation5 + $0x1a20] sm:$0xff]
    %v941 = vld [vmem:[#allocation5 + $0x1a28] sm:$0xff]
    %v942 = vld [vmem:[#allocation5 + $0x1a30] sm:$0xff]
    %v943 = vld [vmem:[#allocation5 + $0x1a38] sm:$0xff]
    %v944 = vld [vmem:[#allocation5 + $0x1a40] sm:$0xff]
    %v945 = vld [vmem:[#allocation5 + $0x1a48] sm:$0xff]
    %v946 = vld [vmem:[#allocation5 + $0x1a50] sm:$0xff]
    %v947 = vld [vmem:[#allocation5 + $0x1a58] sm:$0xff]
    %v948 = vld [vmem:[#allocation5 + $0x1a60] sm:$0xff]
    %v949 = vld [vmem:[#allocation5 + $0x1a68] sm:$0xff]
    %v950 = vld [vmem:[#allocation5 + $0x1a70] sm:$0xff]
    %v951 = vld [vmem:[#allocation5 + $0x1a78] sm:$0xff]
    %v952 = vld [vmem:[#allocation5 + $0x1a80] sm:$0xff]
    %v953 = vld [vmem:[#allocation5 + $0x1a88] sm:$0xff]
    %v954 = vld [vmem:[#allocation5 + $0x1a90] sm:$0xff]
    %v955 = vld [vmem:[#allocation5 + $0x1a98] sm:$0xff]
    %v956 = vld [vmem:[#allocation5 + $0x1aa0] sm:$0xff]
    %v957 = vld [vmem:[#allocation5 + $0x1aa8] sm:$0xff]
    %v958 = vld [vmem:[#allocation5 + $0x1ab0] sm:$0xff]
    %v959 = vld [vmem:[#allocation5 + $0x1ab8] sm:$0xff]
    %v960 = vld [vmem:[#allocation5 + $0x1ac0] sm:$0xff]
    %v961 = vld [vmem:[#allocation5 + $0x1ac8] sm:$0xff]
    %v962 = vld [vmem:[#allocation5 + $0x1ad0] sm:$0xff]
    %v963 = vld [vmem:[#allocation5 + $0x1ad8] sm:$0xff]
    %v964 = vld [vmem:[#allocation5 + $0x1ae0] sm:$0xff]
    %v965 = vld [vmem:[#allocation5 + $0x1ae8] sm:$0xff]
    %v966 = vld [vmem:[#allocation5 + $0x1af0] sm:$0xff]
    %v967 = vld [vmem:[#allocation5 + $0x1af8] sm:$0xff]
    %v968 = vld [vmem:[#allocation5 + $0x1b00] sm:$0xff]
    %v969 = vld [vmem:[#allocation5 + $0x1b08] sm:$0xff]
    %v970 = vld [vmem:[#allocation5 + $0x1b10] sm:$0xff]
    %v971 = vld [vmem:[#allocation5 + $0x1b18] sm:$0xff]
    %v972 = vld [vmem:[#allocation5 + $0x1b20] sm:$0xff]
    %v973 = vld [vmem:[#allocation5 + $0x1b28] sm:$0xff]
    %v974 = vld [vmem:[#allocation5 + $0x1b30] sm:$0xff]
    %v975 = vld [vmem:[#allocation5 + $0x1b38] sm:$0xff]
    %v976 = vld [vmem:[#allocation5 + $0x1b40] sm:$0xff]
    %v977 = vld [vmem:[#allocation5 + $0x1b48] sm:$0xff]
    %v978 = vld [vmem:[#allocation5 + $0x1b50] sm:$0xff]
    %v979 = vld [vmem:[#allocation5 + $0x1b58] sm:$0xff]
    %v980 = vld [vmem:[#allocation5 + $0x1b60] sm:$0xff]
    %v981 = vld [vmem:[#allocation5 + $0x1b68] sm:$0xff]
    %v982 = vld [vmem:[#allocation5 + $0x1b70] sm:$0xff]
    %v983 = vld [vmem:[#allocation5 + $0x1b78] sm:$0xff]
    %v984 = vld [vmem:[#allocation5 + $0x1b80] sm:$0xff]
    %v985 = vld [vmem:[#allocation5 + $0x1b88] sm:$0xff]
    %v986 = vld [vmem:[#allocation5 + $0x1b90] sm:$0xff]
    %v987 = vld [vmem:[#allocation5 + $0x1b98] sm:$0xff]
    %v988 = vld [vmem:[#allocation5 + $0x1ba0] sm:$0xff]
    %v989 = vld [vmem:[#allocation5 + $0x1ba8] sm:$0xff]
    %v990 = vld [vmem:[#allocation5 + $0x1bb0] sm:$0xff]
    %v991 = vld [vmem:[#allocation5 + $0x1bb8] sm:$0xff]
    %v992 = vld [vmem:[#allocation5 + $0x1bc0] sm:$0xff]
    %v993 = vld [vmem:[#allocation5 + $0x1bc8] sm:$0xff]
    %v994 = vld [vmem:[#allocation5 + $0x1bd0] sm:$0xff]
    %v995 = vld [vmem:[#allocation5 + $0x1bd8] sm:$0xff]
    %v996 = vld [vmem:[#allocation5 + $0x1be0] sm:$0xff]
    %v997 = vld [vmem:[#allocation5 + $0x1be8] sm:$0xff]
    %v998 = vld [vmem:[#allocation5 + $0x1bf0] sm:$0xff]
    %v999 = vld [vmem:[#allocation5 + $0x1bf8] sm:$0xff]
    %v1000 = vld [vmem:[#allocation5 + $0x1c00] sm:$0xff]
    %v1001 = vld [vmem:[#allocation5 + $0x1c08] sm:$0xff]
    %v1002 = vld [vmem:[#allocation5 + $0x1c10] sm:$0xff]
    %v1003 = vld [vmem:[#allocation5 + $0x1c18] sm:$0xff]
    %v1004 = vld [vmem:[#allocation5 + $0x1c20] sm:$0xff]
    %v1005 = vld [vmem:[#allocation5 + $0x1c28] sm:$0xff]
    %v1006 = vld [vmem:[#allocation5 + $0x1c30] sm:$0xff]
    %v1007 = vld [vmem:[#allocation5 + $0x1c38] sm:$0xff]
    %v1008 = vld [vmem:[#allocation5 + $0x1c40] sm:$0xff]
    %v1009 = vld [vmem:[#allocation5 + $0x1c48] sm:$0xff]
    %v1010 = vld [vmem:[#allocation5 + $0x1c50] sm:$0xff]
    %v1011 = vld [vmem:[#allocation5 + $0x1c58] sm:$0xff]
    %v1012 = vld [vmem:[#allocation5 + $0x1c60] sm:$0xff]
    %v1013 = vld [vmem:[#allocation5 + $0x1c68] sm:$0xff]
    %v1014 = vld [vmem:[#allocation5 + $0x1c70] sm:$0xff]
    %v1015 = vld [vmem:[#allocation5 + $0x1c78] sm:$0xff]
    %v1016 = vld [vmem:[#allocation5 + $0x1c80] sm:$0xff]
    %v1017 = vld [vmem:[#allocation5 + $0x1c88] sm:$0xff]
    %v1018 = vld [vmem:[#allocation5 + $0x1c90] sm:$0xff]
    %v1019 = vld [vmem:[#allocation5 + $0x1c98] sm:$0xff]
    %v1020 = vld [vmem:[#allocation5 + $0x1ca0] sm:$0xff]
    %v1021 = vld [vmem:[#allocation5 + $0x1ca8] sm:$0xff]
    %v1022 = vld [vmem:[#allocation5 + $0x1cb0] sm:$0xff]
    %v1023 = vld [vmem:[#allocation5 + $0x1cb8] sm:$0xff]
    %v1024 = vld [vmem:[#allocation5 + $0x1cc0] sm:$0xff]
    %v1025 = vld [vmem:[#allocation5 + $0x1cc8] sm:$0xff]
    %v1026 = vld [vmem:[#allocation5 + $0x1cd0] sm:$0xff]
    %v1027 = vld [vmem:[#allocation5 + $0x1cd8] sm:$0xff]
    %v1028 = vld [vmem:[#allocation5 + $0x1ce0] sm:$0xff]
    %v1029 = vld [vmem:[#allocation5 + $0x1ce8] sm:$0xff]
    %v1030 = vld [vmem:[#allocation5 + $0x1cf0] sm:$0xff]
    %v1031 = vld [vmem:[#allocation5 + $0x1cf8] sm:$0xff]
    %v1032 = vld [vmem:[#allocation5 + $0x1d00] sm:$0xff]
    %v1033 = vld [vmem:[#allocation5 + $0x1d08] sm:$0xff]
    %v1034 = vld [vmem:[#allocation5 + $0x1d10] sm:$0xff]
    %v1035 = vld [vmem:[#allocation5 + $0x1d18] sm:$0xff]
    %v1036 = vld [vmem:[#allocation5 + $0x1d20] sm:$0xff]
    %v1037 = vld [vmem:[#allocation5 + $0x1d28] sm:$0xff]
    %v1038 = vld [vmem:[#allocation5 + $0x1d30] sm:$0xff]
    %v1039 = vld [vmem:[#allocation5 + $0x1d38] sm:$0xff]
    %v1040 = vld [vmem:[#allocation5 + $0x1d40] sm:$0xff]
    %v1041 = vld [vmem:[#allocation5 + $0x1d48] sm:$0xff]
    %v1042 = vld [vmem:[#allocation5 + $0x1d50] sm:$0xff]
    %v1043 = vld [vmem:[#allocation5 + $0x1d58] sm:$0xff]
    %v1044 = vld [vmem:[#allocation5 + $0x1d60] sm:$0xff]
    %v1045 = vld [vmem:[#allocation5 + $0x1d68] sm:$0xff]
    %v1046 = vld [vmem:[#allocation5 + $0x1d70] sm:$0xff]
    %v1047 = vld [vmem:[#allocation5 + $0x1d78] sm:$0xff]
    %v1048 = vld [vmem:[#allocation5 + $0x1d80] sm:$0xff]
    %v1049 = vld [vmem:[#allocation5 + $0x1d88] sm:$0xff]
    %v1050 = vld [vmem:[#allocation5 + $0x1d90] sm:$0xff]
    %v1051 = vld [vmem:[#allocation5 + $0x1d98] sm:$0xff]
    %v1052 = vld [vmem:[#allocation5 + $0x1da0] sm:$0xff]
    %v1053 = vld [vmem:[#allocation5 + $0x1da8] sm:$0xff]
    %v1054 = vld [vmem:[#allocation5 + $0x1db0] sm:$0xff]
    %v1055 = vld [vmem:[#allocation5 + $0x1db8] sm:$0xff]
    %v1056 = vld [vmem:[#allocation5 + $0x1dc0] sm:$0xff]
    %v1057 = vld [vmem:[#allocation5 + $0x1dc8] sm:$0xff]
    %v1058 = vld [vmem:[#allocation5 + $0x1dd0] sm:$0xff]
    %v1059 = vld [vmem:[#allocation5 + $0x1dd8] sm:$0xff]
    %v1060 = vld [vmem:[#allocation5 + $0x1de0] sm:$0xff]
    %v1061 = vld [vmem:[#allocation5 + $0x1de8] sm:$0xff]
    %v1062 = vld [vmem:[#allocation5 + $0x1df0] sm:$0xff]
    %v1063 = vld [vmem:[#allocation5 + $0x1df8] sm:$0xff]
    %v1064 = vld [vmem:[#allocation5 + $0x1e00] sm:$0xff]
    %v1065 = vld [vmem:[#allocation5 + $0x1e08] sm:$0xff]
    %v1066 = vld [vmem:[#allocation5 + $0x1e10] sm:$0xff]
    %v1067 = vld [vmem:[#allocation5 + $0x1e18] sm:$0xff]
    %v1068 = vld [vmem:[#allocation5 + $0x1e20] sm:$0xff]
    %v1069 = vld [vmem:[#allocation5 + $0x1e28] sm:$0xff]
    %v1070 = vld [vmem:[#allocation5 + $0x1e30] sm:$0xff]
    %v1071 = vld [vmem:[#allocation5 + $0x1e38] sm:$0xff]
    %v1072 = vld [vmem:[#allocation5 + $0x1e40] sm:$0xff]
    %v1073 = vld [vmem:[#allocation5 + $0x1e48] sm:$0xff]
    %v1074 = vld [vmem:[#allocation5 + $0x1e50] sm:$0xff]
    %v1075 = vld [vmem:[#allocation5 + $0x1e58] sm:$0xff]
    %v1076 = vld [vmem:[#allocation5 + $0x1e60] sm:$0xff]
    %v1077 = vld [vmem:[#allocation5 + $0x1e68] sm:$0xff]
    %v1078 = vld [vmem:[#allocation5 + $0x1e70] sm:$0xff]
    %v1079 = vld [vmem:[#allocation5 + $0x1e78] sm:$0xff]
    %v1080 = vld [vmem:[#allocation5 + $0x1e80] sm:$0xff]
    %v1081 = vld [vmem:[#allocation5 + $0x1e88] sm:$0xff]
    %v1082 = vld [vmem:[#allocation5 + $0x1e90] sm:$0xff]
    %v1083 = vld [vmem:[#allocation5 + $0x1e98] sm:$0xff]
    %v1084 = vld [vmem:[#allocation5 + $0x1ea0] sm:$0xff]
    %v1085 = vld [vmem:[#allocation5 + $0x1ea8] sm:$0xff]
    %v1086 = vld [vmem:[#allocation5 + $0x1eb0] sm:$0xff]
    %v1087 = vld [vmem:[#allocation5 + $0x1eb8] sm:$0xff]
    %v1088 = vld [vmem:[#allocation5 + $0x1ec0] sm:$0xff]
    %v1089 = vld [vmem:[#allocation5 + $0x1ec8] sm:$0xff]
    %v1090 = vld [vmem:[#allocation5 + $0x1ed0] sm:$0xff]
    %v1091 = vld [vmem:[#allocation5 + $0x1ed8] sm:$0xff]
    %v1092 = vld [vmem:[#allocation5 + $0x1ee0] sm:$0xff]
    %v1093 = vld [vmem:[#allocation5 + $0x1ee8] sm:$0xff]
    %v1094 = vld [vmem:[#allocation5 + $0x1ef0] sm:$0xff]
    %v1095 = vld [vmem:[#allocation5 + $0x1ef8] sm:$0xff]
    %v1096 = vld [vmem:[#allocation5 + $0x1f00] sm:$0xff]
    %v1097 = vld [vmem:[#allocation5 + $0x1f08] sm:$0xff]
    %v1098 = vld [vmem:[#allocation5 + $0x1f10] sm:$0xff]
    %v1099 = vld [vmem:[#allocation5 + $0x1f18] sm:$0xff]
    %v1100 = vld [vmem:[#allocation5 + $0x1f20] sm:$0xff]
    %v1101 = vld [vmem:[#allocation5 + $0x1f28] sm:$0xff]
    %v1102 = vld [vmem:[#allocation5 + $0x1f30] sm:$0xff]
    %v1103 = vld [vmem:[#allocation5 + $0x1f38] sm:$0xff]
    %v1104 = vld [vmem:[#allocation5 + $0x1f40] sm:$0xff]
    %v1105 = vld [vmem:[#allocation5 + $0x1f48] sm:$0xff]
    %v1106 = vld [vmem:[#allocation5 + $0x1f50] sm:$0xff]
    %v1107 = vld [vmem:[#allocation5 + $0x1f58] sm:$0xff]
    %v1108 = vld [vmem:[#allocation5 + $0x1f60] sm:$0xff]
    %v1109 = vld [vmem:[#allocation5 + $0x1f68] sm:$0xff]
    %v1110 = vld [vmem:[#allocation5 + $0x1f70] sm:$0xff]
    %v1111 = vld [vmem:[#allocation5 + $0x1f78] sm:$0xff]
    %v1112 = vld [vmem:[#allocation5 + $0x1f80] sm:$0xff]
    %v1113 = vld [vmem:[#allocation5 + $0x1f88] sm:$0xff]
    %v1114 = vld [vmem:[#allocation5 + $0x1f90] sm:$0xff]
    %v1115 = vld [vmem:[#allocation5 + $0x1f98] sm:$0xff]
    %v1116 = vld [vmem:[#allocation5 + $0x1fa0] sm:$0xff]
    %v1117 = vld [vmem:[#allocation5 + $0x1fa8] sm:$0xff]
    %v1118 = vld [vmem:[#allocation5 + $0x1fb0] sm:$0xff]
    %v1119 = vld [vmem:[#allocation5 + $0x1fb8] sm:$0xff]
    %v1120 = vld [vmem:[#allocation5 + $0x1fc0] sm:$0xff]
    %v1121 = vld [vmem:[#allocation5 + $0x1fc8] sm:$0xff]
    %v1122 = vld [vmem:[#allocation5 + $0x1fd0] sm:$0xff]
    %v1123 = vld [vmem:[#allocation5 + $0x1fd8] sm:$0xff]
    %v1124 = vld [vmem:[#allocation5 + $0x1fe0] sm:$0xff]
    %v1125 = vld [vmem:[#allocation5 + $0x1fe8] sm:$0xff]
    %v1126 = vld [vmem:[#allocation5 + $0x1ff0] sm:$0xff]
    %v1127 = vld [vmem:[#allocation5 + $0x1ff8] sm:$0xff]
    %v2152 = vunpack.c.l.b16 %v104
    %v2153 = vunpack.c.h.b16 %v104
    %v2154 = vunpack.c.l.b16 %v105
    %v2155 = vunpack.c.h.b16 %v105
    %v2156 = vunpack.c.l.b16 %v106
    %v2157 = vunpack.c.h.b16 %v106
    %v2158 = vunpack.c.l.b16 %v107
    %v2159 = vunpack.c.h.b16 %v107
    %v2160 = vunpack.c.l.b16 %v108
    %v2161 = vunpack.c.h.b16 %v108
    %v2162 = vunpack.c.l.b16 %v109
    %v2163 = vunpack.c.h.b16 %v109
    %v2164 = vunpack.c.l.b16 %v110
    %v2165 = vunpack.c.h.b16 %v110
    %v2166 = vunpack.c.l.b16 %v111
    %v2167 = vunpack.c.h.b16 %v111
    %v2168 = vunpack.c.l.b16 %v112
    %v2169 = vunpack.c.h.b16 %v112
    %v2170 = vunpack.c.l.b16 %v113
    %v2171 = vunpack.c.h.b16 %v113
    %v2172 = vunpack.c.l.b16 %v114
    %v2173 = vunpack.c.h.b16 %v114
    %v2174 = vunpack.c.l.b16 %v115
    %v2175 = vunpack.c.h.b16 %v115
    %v2176 = vunpack.c.l.b16 %v116
    %v2177 = vunpack.c.h.b16 %v116
    %v2178 = vunpack.c.l.b16 %v117
    %v2179 = vunpack.c.h.b16 %v117
    %v2180 = vunpack.c.l.b16 %v118
    %v2181 = vunpack.c.h.b16 %v118
    %v2182 = vunpack.c.l.b16 %v119
    %v2183 = vunpack.c.h.b16 %v119
    %v2184 = vunpack.c.l.b16 %v120
    %v2185 = vunpack.c.h.b16 %v120
    %v2186 = vunpack.c.l.b16 %v121
    %v2187 = vunpack.c.h.b16 %v121
    %v2188 = vunpack.c.l.b16 %v122
    %v2189 = vunpack.c.h.b16 %v122
    %v2190 = vunpack.c.l.b16 %v123
    %v2191 = vunpack.c.h.b16 %v123
    %v2192 = vunpack.c.l.b16 %v124
    %v2193 = vunpack.c.h.b16 %v124
    %v2194 = vunpack.c.l.b16 %v125
    %v2195 = vunpack.c.h.b16 %v125
    %v2196 = vunpack.c.l.b16 %v126
    %v2197 = vunpack.c.h.b16 %v126
    %v2198 = vunpack.c.l.b16 %v127
    %v2199 = vunpack.c.h.b16 %v127
    %v2200 = vunpack.c.l.b16 %v128
    %v2201 = vunpack.c.h.b16 %v128
    %v2202 = vunpack.c.l.b16 %v129
    %v2203 = vunpack.c.h.b16 %v129
    %v2204 = vunpack.c.l.b16 %v130
    %v2205 = vunpack.c.h.b16 %v130
    %v2206 = vunpack.c.l.b16 %v131
    %v2207 = vunpack.c.h.b16 %v131
    %v2208 = vunpack.c.l.b16 %v132
    %v2209 = vunpack.c.h.b16 %v132
    %v2210 = vunpack.c.l.b16 %v133
    %v2211 = vunpack.c.h.b16 %v133
    %v2212 = vunpack.c.l.b16 %v134
    %v2213 = vunpack.c.h.b16 %v134
    %v2214 = vunpack.c.l.b16 %v135
    %v2215 = vunpack.c.h.b16 %v135
    %v2216 = vunpack.c.l.b16 %v136
    %v2217 = vunpack.c.h.b16 %v136
    %v2218 = vunpack.c.l.b16 %v137
    %v2219 = vunpack.c.h.b16 %v137
    %v2220 = vunpack.c.l.b16 %v138
    %v2221 = vunpack.c.h.b16 %v138
    %v2222 = vunpack.c.l.b16 %v139
    %v2223 = vunpack.c.h.b16 %v139
    %v2224 = vunpack.c.l.b16 %v140
    %v2225 = vunpack.c.h.b16 %v140
    %v2226 = vunpack.c.l.b16 %v141
    %v2227 = vunpack.c.h.b16 %v141
    %v2228 = vunpack.c.l.b16 %v142
    %v2229 = vunpack.c.h.b16 %v142
    %v2230 = vunpack.c.l.b16 %v143
    %v2231 = vunpack.c.h.b16 %v143
    %v2232 = vunpack.c.l.b16 %v144
    %v2233 = vunpack.c.h.b16 %v144
    %v2234 = vunpack.c.l.b16 %v145
    %v2235 = vunpack.c.h.b16 %v145
    %v2236 = vunpack.c.l.b16 %v146
    %v2237 = vunpack.c.h.b16 %v146
    %v2238 = vunpack.c.l.b16 %v147
    %v2239 = vunpack.c.h.b16 %v147
    %v2240 = vunpack.c.l.b16 %v148
    %v2241 = vunpack.c.h.b16 %v148
    %v2242 = vunpack.c.l.b16 %v149
    %v2243 = vunpack.c.h.b16 %v149
    %v2244 = vunpack.c.l.b16 %v150
    %v2245 = vunpack.c.h.b16 %v150
    %v2246 = vunpack.c.l.b16 %v151
    %v2247 = vunpack.c.h.b16 %v151
    %v2248 = vunpack.c.l.b16 %v152
    %v2249 = vunpack.c.h.b16 %v152
    %v2250 = vunpack.c.l.b16 %v153
    %v2251 = vunpack.c.h.b16 %v153
    %v2252 = vunpack.c.l.b16 %v154
    %v2253 = vunpack.c.h.b16 %v154
    %v2254 = vunpack.c.l.b16 %v155
    %v2255 = vunpack.c.h.b16 %v155
    %v2256 = vunpack.c.l.b16 %v156
    %v2257 = vunpack.c.h.b16 %v156
    %v2258 = vunpack.c.l.b16 %v157
    %v2259 = vunpack.c.h.b16 %v157
    %v2260 = vunpack.c.l.b16 %v158
    %v2261 = vunpack.c.h.b16 %v158
    %v2262 = vunpack.c.l.b16 %v159
    %v2263 = vunpack.c.h.b16 %v159
    %v2264 = vunpack.c.l.b16 %v160
    %v2265 = vunpack.c.h.b16 %v160
    %v2266 = vunpack.c.l.b16 %v161
    %v2267 = vunpack.c.h.b16 %v161
    %v2268 = vunpack.c.l.b16 %v162
    %v2269 = vunpack.c.h.b16 %v162
    %v2270 = vunpack.c.l.b16 %v163
    %v2271 = vunpack.c.h.b16 %v163
    %v2272 = vunpack.c.l.b16 %v164
    %v2273 = vunpack.c.h.b16 %v164
    %v2274 = vunpack.c.l.b16 %v165
    %v2275 = vunpack.c.h.b16 %v165
    %v2276 = vunpack.c.l.b16 %v166
    %v2277 = vunpack.c.h.b16 %v166
    %v2278 = vunpack.c.l.b16 %v167
    %v2279 = vunpack.c.h.b16 %v167
    %v2280 = vunpack.c.l.b16 %v168
    %v2281 = vunpack.c.h.b16 %v168
    %v2282 = vunpack.c.l.b16 %v169
    %v2283 = vunpack.c.h.b16 %v169
    %v2284 = vunpack.c.l.b16 %v170
    %v2285 = vunpack.c.h.b16 %v170
    %v2286 = vunpack.c.l.b16 %v171
    %v2287 = vunpack.c.h.b16 %v171
    %v2288 = vunpack.c.l.b16 %v172
    %v2289 = vunpack.c.h.b16 %v172
    %v2290 = vunpack.c.l.b16 %v173
    %v2291 = vunpack.c.h.b16 %v173
    %v2292 = vunpack.c.l.b16 %v174
    %v2293 = vunpack.c.h.b16 %v174
    %v2294 = vunpack.c.l.b16 %v175
    %v2295 = vunpack.c.h.b16 %v175
    %v2296 = vunpack.c.l.b16 %v176
    %v2297 = vunpack.c.h.b16 %v176
    %v2298 = vunpack.c.l.b16 %v177
    %v2299 = vunpack.c.h.b16 %v177
    %v2300 = vunpack.c.l.b16 %v178
    %v2301 = vunpack.c.h.b16 %v178
    %v2302 = vunpack.c.l.b16 %v179
    %v2303 = vunpack.c.h.b16 %v179
    %v2304 = vunpack.c.l.b16 %v180
    %v2305 = vunpack.c.h.b16 %v180
    %v2306 = vunpack.c.l.b16 %v181
    %v2307 = vunpack.c.h.b16 %v181
    %v2308 = vunpack.c.l.b16 %v182
    %v2309 = vunpack.c.h.b16 %v182
    %v2310 = vunpack.c.l.b16 %v183
    %v2311 = vunpack.c.h.b16 %v183
    %v2312 = vunpack.c.l.b16 %v184
    %v2313 = vunpack.c.h.b16 %v184
    %v2314 = vunpack.c.l.b16 %v185
    %v2315 = vunpack.c.h.b16 %v185
    %v2316 = vunpack.c.l.b16 %v186
    %v2317 = vunpack.c.h.b16 %v186
    %v2318 = vunpack.c.l.b16 %v187
    %v2319 = vunpack.c.h.b16 %v187
    %v2320 = vunpack.c.l.b16 %v188
    %v2321 = vunpack.c.h.b16 %v188
    %v2322 = vunpack.c.l.b16 %v189
    %v2323 = vunpack.c.h.b16 %v189
    %v2324 = vunpack.c.l.b16 %v190
    %v2325 = vunpack.c.h.b16 %v190
    %v2326 = vunpack.c.l.b16 %v191
    %v2327 = vunpack.c.h.b16 %v191
    %v2328 = vunpack.c.l.b16 %v192
    %v2329 = vunpack.c.h.b16 %v192
    %v2330 = vunpack.c.l.b16 %v193
    %v2331 = vunpack.c.h.b16 %v193
    %v2332 = vunpack.c.l.b16 %v194
    %v2333 = vunpack.c.h.b16 %v194
    %v2334 = vunpack.c.l.b16 %v195
    %v2335 = vunpack.c.h.b16 %v195
    %v2336 = vunpack.c.l.b16 %v196
    %v2337 = vunpack.c.h.b16 %v196
    %v2338 = vunpack.c.l.b16 %v197
    %v2339 = vunpack.c.h.b16 %v197
    %v2340 = vunpack.c.l.b16 %v198
    %v2341 = vunpack.c.h.b16 %v198
    %v2342 = vunpack.c.l.b16 %v199
    %v2343 = vunpack.c.h.b16 %v199
    %v2344 = vunpack.c.l.b16 %v200
    %v2345 = vunpack.c.h.b16 %v200
    %v2346 = vunpack.c.l.b16 %v201
    %v2347 = vunpack.c.h.b16 %v201
    %v2348 = vunpack.c.l.b16 %v202
    %v2349 = vunpack.c.h.b16 %v202
    %v2350 = vunpack.c.l.b16 %v203
    %v2351 = vunpack.c.h.b16 %v203
    %v2352 = vunpack.c.l.b16 %v204
    %v2353 = vunpack.c.h.b16 %v204
    %v2354 = vunpack.c.l.b16 %v205
    %v2355 = vunpack.c.h.b16 %v205
    %v2356 = vunpack.c.l.b16 %v206
    %v2357 = vunpack.c.h.b16 %v206
    %v2358 = vunpack.c.l.b16 %v207
    %v2359 = vunpack.c.h.b16 %v207
    %v2360 = vunpack.c.l.b16 %v208
    %v2361 = vunpack.c.h.b16 %v208
    %v2362 = vunpack.c.l.b16 %v209
    %v2363 = vunpack.c.h.b16 %v209
    %v2364 = vunpack.c.l.b16 %v210
    %v2365 = vunpack.c.h.b16 %v210
    %v2366 = vunpack.c.l.b16 %v211
    %v2367 = vunpack.c.h.b16 %v211
    %v2368 = vunpack.c.l.b16 %v212
    %v2369 = vunpack.c.h.b16 %v212
    %v2370 = vunpack.c.l.b16 %v213
    %v2371 = vunpack.c.h.b16 %v213
    %v2372 = vunpack.c.l.b16 %v214
    %v2373 = vunpack.c.h.b16 %v214
    %v2374 = vunpack.c.l.b16 %v215
    %v2375 = vunpack.c.h.b16 %v215
    %v2376 = vunpack.c.l.b16 %v216
    %v2377 = vunpack.c.h.b16 %v216
    %v2378 = vunpack.c.l.b16 %v217
    %v2379 = vunpack.c.h.b16 %v217
    %v2380 = vunpack.c.l.b16 %v218
    %v2381 = vunpack.c.h.b16 %v218
    %v2382 = vunpack.c.l.b16 %v219
    %v2383 = vunpack.c.h.b16 %v219
    %v2384 = vunpack.c.l.b16 %v220
    %v2385 = vunpack.c.h.b16 %v220
    %v2386 = vunpack.c.l.b16 %v221
    %v2387 = vunpack.c.h.b16 %v221
    %v2388 = vunpack.c.l.b16 %v222
    %v2389 = vunpack.c.h.b16 %v222
    %v2390 = vunpack.c.l.b16 %v223
    %v2391 = vunpack.c.h.b16 %v223
    %v2392 = vunpack.c.l.b16 %v224
    %v2393 = vunpack.c.h.b16 %v224
    %v2394 = vunpack.c.l.b16 %v225
    %v2395 = vunpack.c.h.b16 %v225
    %v2396 = vunpack.c.l.b16 %v226
    %v2397 = vunpack.c.h.b16 %v226
    %v2398 = vunpack.c.l.b16 %v227
    %v2399 = vunpack.c.h.b16 %v227
    %v2400 = vunpack.c.l.b16 %v228
    %v2401 = vunpack.c.h.b16 %v228
    %v2402 = vunpack.c.l.b16 %v229
    %v2403 = vunpack.c.h.b16 %v229
    %v2404 = vunpack.c.l.b16 %v230
    %v2405 = vunpack.c.h.b16 %v230
    %v2406 = vunpack.c.l.b16 %v231
    %v2407 = vunpack.c.h.b16 %v231
    %v2408 = vunpack.c.l.b16 %v232
    %v2409 = vunpack.c.h.b16 %v232
    %v2410 = vunpack.c.l.b16 %v233
    %v2411 = vunpack.c.h.b16 %v233
    %v2412 = vunpack.c.l.b16 %v234
    %v2413 = vunpack.c.h.b16 %v234
    %v2414 = vunpack.c.l.b16 %v235
    %v2415 = vunpack.c.h.b16 %v235
    %v2416 = vunpack.c.l.b16 %v236
    %v2417 = vunpack.c.h.b16 %v236
    %v2418 = vunpack.c.l.b16 %v237
    %v2419 = vunpack.c.h.b16 %v237
    %v2420 = vunpack.c.l.b16 %v238
    %v2421 = vunpack.c.h.b16 %v238
    %v2422 = vunpack.c.l.b16 %v239
    %v2423 = vunpack.c.h.b16 %v239
    %v2424 = vunpack.c.l.b16 %v240
    %v2425 = vunpack.c.h.b16 %v240
    %v2426 = vunpack.c.l.b16 %v241
    %v2427 = vunpack.c.h.b16 %v241
    %v2428 = vunpack.c.l.b16 %v242
    %v2429 = vunpack.c.h.b16 %v242
    %v2430 = vunpack.c.l.b16 %v243
    %v2431 = vunpack.c.h.b16 %v243
    %v2432 = vunpack.c.l.b16 %v244
    %v2433 = vunpack.c.h.b16 %v244
    %v2434 = vunpack.c.l.b16 %v245
    %v2435 = vunpack.c.h.b16 %v245
    %v2436 = vunpack.c.l.b16 %v246
    %v2437 = vunpack.c.h.b16 %v246
    %v2438 = vunpack.c.l.b16 %v247
    %v2439 = vunpack.c.h.b16 %v247
    %v2440 = vunpack.c.l.b16 %v248
    %v2441 = vunpack.c.h.b16 %v248
    %v2442 = vunpack.c.l.b16 %v249
    %v2443 = vunpack.c.h.b16 %v249
    %v2444 = vunpack.c.l.b16 %v250
    %v2445 = vunpack.c.h.b16 %v250
    %v2446 = vunpack.c.l.b16 %v251
    %v2447 = vunpack.c.h.b16 %v251
    %v2448 = vunpack.c.l.b16 %v252
    %v2449 = vunpack.c.h.b16 %v252
    %v2450 = vunpack.c.l.b16 %v253
    %v2451 = vunpack.c.h.b16 %v253
    %v2452 = vunpack.c.l.b16 %v254
    %v2453 = vunpack.c.h.b16 %v254
    %v2454 = vunpack.c.l.b16 %v255
    %v2455 = vunpack.c.h.b16 %v255
    %v2456 = vunpack.c.l.b16 %v256
    %v2457 = vunpack.c.h.b16 %v256
    %v2458 = vunpack.c.l.b16 %v257
    %v2459 = vunpack.c.h.b16 %v257
    %v2460 = vunpack.c.l.b16 %v258
    %v2461 = vunpack.c.h.b16 %v258
    %v2462 = vunpack.c.l.b16 %v259
    %v2463 = vunpack.c.h.b16 %v259
    %v2464 = vunpack.c.l.b16 %v260
    %v2465 = vunpack.c.h.b16 %v260
    %v2466 = vunpack.c.l.b16 %v261
    %v2467 = vunpack.c.h.b16 %v261
    %v2468 = vunpack.c.l.b16 %v262
    %v2469 = vunpack.c.h.b16 %v262
    %v2470 = vunpack.c.l.b16 %v263
    %v2471 = vunpack.c.h.b16 %v263
    %v2472 = vunpack.c.l.b16 %v264
    %v2473 = vunpack.c.h.b16 %v264
    %v2474 = vunpack.c.l.b16 %v265
    %v2475 = vunpack.c.h.b16 %v265
    %v2476 = vunpack.c.l.b16 %v266
    %v2477 = vunpack.c.h.b16 %v266
    %v2478 = vunpack.c.l.b16 %v267
    %v2479 = vunpack.c.h.b16 %v267
    %v2480 = vunpack.c.l.b16 %v268
    %v2481 = vunpack.c.h.b16 %v268
    %v2482 = vunpack.c.l.b16 %v269
    %v2483 = vunpack.c.h.b16 %v269
    %v2484 = vunpack.c.l.b16 %v270
    %v2485 = vunpack.c.h.b16 %v270
    %v2486 = vunpack.c.l.b16 %v271
    %v2487 = vunpack.c.h.b16 %v271
    %v2488 = vunpack.c.l.b16 %v272
    %v2489 = vunpack.c.h.b16 %v272
    %v2490 = vunpack.c.l.b16 %v273
    %v2491 = vunpack.c.h.b16 %v273
    %v2492 = vunpack.c.l.b16 %v274
    %v2493 = vunpack.c.h.b16 %v274
    %v2494 = vunpack.c.l.b16 %v275
    %v2495 = vunpack.c.h.b16 %v275
    %v2496 = vunpack.c.l.b16 %v276
    %v2497 = vunpack.c.h.b16 %v276
    %v2498 = vunpack.c.l.b16 %v277
    %v2499 = vunpack.c.h.b16 %v277
    %v2500 = vunpack.c.l.b16 %v278
    %v2501 = vunpack.c.h.b16 %v278
    %v2502 = vunpack.c.l.b16 %v279
    %v2503 = vunpack.c.h.b16 %v279
    %v2504 = vunpack.c.l.b16 %v280
    %v2505 = vunpack.c.h.b16 %v280
    %v2506 = vunpack.c.l.b16 %v281
    %v2507 = vunpack.c.h.b16 %v281
    %v2508 = vunpack.c.l.b16 %v282
    %v2509 = vunpack.c.h.b16 %v282
    %v2510 = vunpack.c.l.b16 %v283
    %v2511 = vunpack.c.h.b16 %v283
    %v2512 = vunpack.c.l.b16 %v284
    %v2513 = vunpack.c.h.b16 %v284
    %v2514 = vunpack.c.l.b16 %v285
    %v2515 = vunpack.c.h.b16 %v285
    %v2516 = vunpack.c.l.b16 %v286
    %v2517 = vunpack.c.h.b16 %v286
    %v2518 = vunpack.c.l.b16 %v287
    %v2519 = vunpack.c.h.b16 %v287
    %v2520 = vunpack.c.l.b16 %v288
    %v2521 = vunpack.c.h.b16 %v288
    %v2522 = vunpack.c.l.b16 %v289
    %v2523 = vunpack.c.h.b16 %v289
    %v2524 = vunpack.c.l.b16 %v290
    %v2525 = vunpack.c.h.b16 %v290
    %v2526 = vunpack.c.l.b16 %v291
    %v2527 = vunpack.c.h.b16 %v291
    %v2528 = vunpack.c.l.b16 %v292
    %v2529 = vunpack.c.h.b16 %v292
    %v2530 = vunpack.c.l.b16 %v293
    %v2531 = vunpack.c.h.b16 %v293
    %v2532 = vunpack.c.l.b16 %v294
    %v2533 = vunpack.c.h.b16 %v294
    %v2534 = vunpack.c.l.b16 %v295
    %v2535 = vunpack.c.h.b16 %v295
    %v2536 = vunpack.c.l.b16 %v296
    %v2537 = vunpack.c.h.b16 %v296
    %v2538 = vunpack.c.l.b16 %v297
    %v2539 = vunpack.c.h.b16 %v297
    %v2540 = vunpack.c.l.b16 %v298
    %v2541 = vunpack.c.h.b16 %v298
    %v2542 = vunpack.c.l.b16 %v299
    %v2543 = vunpack.c.h.b16 %v299
    %v2544 = vunpack.c.l.b16 %v300
    %v2545 = vunpack.c.h.b16 %v300
    %v2546 = vunpack.c.l.b16 %v301
    %v2547 = vunpack.c.h.b16 %v301
    %v2548 = vunpack.c.l.b16 %v302
    %v2549 = vunpack.c.h.b16 %v302
    %v2550 = vunpack.c.l.b16 %v303
    %v2551 = vunpack.c.h.b16 %v303
    %v2552 = vunpack.c.l.b16 %v304
    %v2553 = vunpack.c.h.b16 %v304
    %v2554 = vunpack.c.l.b16 %v305
    %v2555 = vunpack.c.h.b16 %v305
    %v2556 = vunpack.c.l.b16 %v306
    %v2557 = vunpack.c.h.b16 %v306
    %v2558 = vunpack.c.l.b16 %v307
    %v2559 = vunpack.c.h.b16 %v307
    %v2560 = vunpack.c.l.b16 %v308
    %v2561 = vunpack.c.h.b16 %v308
    %v2562 = vunpack.c.l.b16 %v309
    %v2563 = vunpack.c.h.b16 %v309
    %v2564 = vunpack.c.l.b16 %v310
    %v2565 = vunpack.c.h.b16 %v310
    %v2566 = vunpack.c.l.b16 %v311
    %v2567 = vunpack.c.h.b16 %v311
    %v2568 = vunpack.c.l.b16 %v312
    %v2569 = vunpack.c.h.b16 %v312
    %v2570 = vunpack.c.l.b16 %v313
    %v2571 = vunpack.c.h.b16 %v313
    %v2572 = vunpack.c.l.b16 %v314
    %v2573 = vunpack.c.h.b16 %v314
    %v2574 = vunpack.c.l.b16 %v315
    %v2575 = vunpack.c.h.b16 %v315
    %v2576 = vunpack.c.l.b16 %v316
    %v2577 = vunpack.c.h.b16 %v316
    %v2578 = vunpack.c.l.b16 %v317
    %v2579 = vunpack.c.h.b16 %v317
    %v2580 = vunpack.c.l.b16 %v318
    %v2581 = vunpack.c.h.b16 %v318
    %v2582 = vunpack.c.l.b16 %v319
    %v2583 = vunpack.c.h.b16 %v319
    %v2584 = vunpack.c.l.b16 %v320
    %v2585 = vunpack.c.h.b16 %v320
    %v2586 = vunpack.c.l.b16 %v321
    %v2587 = vunpack.c.h.b16 %v321
    %v2588 = vunpack.c.l.b16 %v322
    %v2589 = vunpack.c.h.b16 %v322
    %v2590 = vunpack.c.l.b16 %v323
    %v2591 = vunpack.c.h.b16 %v323
    %v2592 = vunpack.c.l.b16 %v324
    %v2593 = vunpack.c.h.b16 %v324
    %v2594 = vunpack.c.l.b16 %v325
    %v2595 = vunpack.c.h.b16 %v325
    %v2596 = vunpack.c.l.b16 %v326
    %v2597 = vunpack.c.h.b16 %v326
    %v2598 = vunpack.c.l.b16 %v327
    %v2599 = vunpack.c.h.b16 %v327
    %v2600 = vunpack.c.l.b16 %v328
    %v2601 = vunpack.c.h.b16 %v328
    %v2602 = vunpack.c.l.b16 %v329
    %v2603 = vunpack.c.h.b16 %v329
    %v2604 = vunpack.c.l.b16 %v330
    %v2605 = vunpack.c.h.b16 %v330
    %v2606 = vunpack.c.l.b16 %v331
    %v2607 = vunpack.c.h.b16 %v331
    %v2608 = vunpack.c.l.b16 %v332
    %v2609 = vunpack.c.h.b16 %v332
    %v2610 = vunpack.c.l.b16 %v333
    %v2611 = vunpack.c.h.b16 %v333
    %v2612 = vunpack.c.l.b16 %v334
    %v2613 = vunpack.c.h.b16 %v334
    %v2614 = vunpack.c.l.b16 %v335
    %v2615 = vunpack.c.h.b16 %v335
    %v2616 = vunpack.c.l.b16 %v336
    %v2617 = vunpack.c.h.b16 %v336
    %v2618 = vunpack.c.l.b16 %v337
    %v2619 = vunpack.c.h.b16 %v337
    %v2620 = vunpack.c.l.b16 %v338
    %v2621 = vunpack.c.h.b16 %v338
    %v2622 = vunpack.c.l.b16 %v339
    %v2623 = vunpack.c.h.b16 %v339
    %v2624 = vunpack.c.l.b16 %v340
    %v2625 = vunpack.c.h.b16 %v340
    %v2626 = vunpack.c.l.b16 %v341
    %v2627 = vunpack.c.h.b16 %v341
    %v2628 = vunpack.c.l.b16 %v342
    %v2629 = vunpack.c.h.b16 %v342
    %v2630 = vunpack.c.l.b16 %v343
    %v2631 = vunpack.c.h.b16 %v343
    %v2632 = vunpack.c.l.b16 %v344
    %v2633 = vunpack.c.h.b16 %v344
    %v2634 = vunpack.c.l.b16 %v345
    %v2635 = vunpack.c.h.b16 %v345
    %v2636 = vunpack.c.l.b16 %v346
    %v2637 = vunpack.c.h.b16 %v346
    %v2638 = vunpack.c.l.b16 %v347
    %v2639 = vunpack.c.h.b16 %v347
    %v2640 = vunpack.c.l.b16 %v348
    %v2641 = vunpack.c.h.b16 %v348
    %v2642 = vunpack.c.l.b16 %v349
    %v2643 = vunpack.c.h.b16 %v349
    %v2644 = vunpack.c.l.b16 %v350
    %v2645 = vunpack.c.h.b16 %v350
    %v2646 = vunpack.c.l.b16 %v351
    %v2647 = vunpack.c.h.b16 %v351
    %v2648 = vunpack.c.l.b16 %v352
    %v2649 = vunpack.c.h.b16 %v352
    %v2650 = vunpack.c.l.b16 %v353
    %v2651 = vunpack.c.h.b16 %v353
    %v2652 = vunpack.c.l.b16 %v354
    %v2653 = vunpack.c.h.b16 %v354
    %v2654 = vunpack.c.l.b16 %v355
    %v2655 = vunpack.c.h.b16 %v355
    %v2656 = vunpack.c.l.b16 %v356
    %v2657 = vunpack.c.h.b16 %v356
    %v2658 = vunpack.c.l.b16 %v357
    %v2659 = vunpack.c.h.b16 %v357
    %v2660 = vunpack.c.l.b16 %v358
    %v2661 = vunpack.c.h.b16 %v358
    %v2662 = vunpack.c.l.b16 %v359
    %v2663 = vunpack.c.h.b16 %v359
    %v2664 = vunpack.c.l.b16 %v360
    %v2665 = vunpack.c.h.b16 %v360
    %v2666 = vunpack.c.l.b16 %v361
    %v2667 = vunpack.c.h.b16 %v361
    %v2668 = vunpack.c.l.b16 %v362
    %v2669 = vunpack.c.h.b16 %v362
    %v2670 = vunpack.c.l.b16 %v363
    %v2671 = vunpack.c.h.b16 %v363
    %v2672 = vunpack.c.l.b16 %v364
    %v2673 = vunpack.c.h.b16 %v364
    %v2674 = vunpack.c.l.b16 %v365
    %v2675 = vunpack.c.h.b16 %v365
    %v2676 = vunpack.c.l.b16 %v366
    %v2677 = vunpack.c.h.b16 %v366
    %v2678 = vunpack.c.l.b16 %v367
    %v2679 = vunpack.c.h.b16 %v367
    %v2680 = vunpack.c.l.b16 %v368
    %v2681 = vunpack.c.h.b16 %v368
    %v2682 = vunpack.c.l.b16 %v369
    %v2683 = vunpack.c.h.b16 %v369
    %v2684 = vunpack.c.l.b16 %v370
    %v2685 = vunpack.c.h.b16 %v370
    %v2686 = vunpack.c.l.b16 %v371
    %v2687 = vunpack.c.h.b16 %v371
    %v2688 = vunpack.c.l.b16 %v372
    %v2689 = vunpack.c.h.b16 %v372
    %v2690 = vunpack.c.l.b16 %v373
    %v2691 = vunpack.c.h.b16 %v373
    %v2692 = vunpack.c.l.b16 %v374
    %v2693 = vunpack.c.h.b16 %v374
    %v2694 = vunpack.c.l.b16 %v375
    %v2695 = vunpack.c.h.b16 %v375
    %v2696 = vunpack.c.l.b16 %v376
    %v2697 = vunpack.c.h.b16 %v376
    %v2698 = vunpack.c.l.b16 %v377
    %v2699 = vunpack.c.h.b16 %v377
    %v2700 = vunpack.c.l.b16 %v378
    %v2701 = vunpack.c.h.b16 %v378
    %v2702 = vunpack.c.l.b16 %v379
    %v2703 = vunpack.c.h.b16 %v379
    %v2704 = vunpack.c.l.b16 %v380
    %v2705 = vunpack.c.h.b16 %v380
    %v2706 = vunpack.c.l.b16 %v381
    %v2707 = vunpack.c.h.b16 %v381
    %v2708 = vunpack.c.l.b16 %v382
    %v2709 = vunpack.c.h.b16 %v382
    %v2710 = vunpack.c.l.b16 %v383
    %v2711 = vunpack.c.h.b16 %v383
    %v2712 = vunpack.c.l.b16 %v384
    %v2713 = vunpack.c.h.b16 %v384
    %v2714 = vunpack.c.l.b16 %v385
    %v2715 = vunpack.c.h.b16 %v385
    %v2716 = vunpack.c.l.b16 %v386
    %v2717 = vunpack.c.h.b16 %v386
    %v2718 = vunpack.c.l.b16 %v387
    %v2719 = vunpack.c.h.b16 %v387
    %v2720 = vunpack.c.l.b16 %v388
    %v2721 = vunpack.c.h.b16 %v388
    %v2722 = vunpack.c.l.b16 %v389
    %v2723 = vunpack.c.h.b16 %v389
    %v2724 = vunpack.c.l.b16 %v390
    %v2725 = vunpack.c.h.b16 %v390
    %v2726 = vunpack.c.l.b16 %v391
    %v2727 = vunpack.c.h.b16 %v391
    %v2728 = vunpack.c.l.b16 %v392
    %v2729 = vunpack.c.h.b16 %v392
    %v2730 = vunpack.c.l.b16 %v393
    %v2731 = vunpack.c.h.b16 %v393
    %v2732 = vunpack.c.l.b16 %v394
    %v2733 = vunpack.c.h.b16 %v394
    %v2734 = vunpack.c.l.b16 %v395
    %v2735 = vunpack.c.h.b16 %v395
    %v2736 = vunpack.c.l.b16 %v396
    %v2737 = vunpack.c.h.b16 %v396
    %v2738 = vunpack.c.l.b16 %v397
    %v2739 = vunpack.c.h.b16 %v397
    %v2740 = vunpack.c.l.b16 %v398
    %v2741 = vunpack.c.h.b16 %v398
    %v2742 = vunpack.c.l.b16 %v399
    %v2743 = vunpack.c.h.b16 %v399
    %v2744 = vunpack.c.l.b16 %v400
    %v2745 = vunpack.c.h.b16 %v400
    %v2746 = vunpack.c.l.b16 %v401
    %v2747 = vunpack.c.h.b16 %v401
    %v2748 = vunpack.c.l.b16 %v402
    %v2749 = vunpack.c.h.b16 %v402
    %v2750 = vunpack.c.l.b16 %v403
    %v2751 = vunpack.c.h.b16 %v403
    %v2752 = vunpack.c.l.b16 %v404
    %v2753 = vunpack.c.h.b16 %v404
    %v2754 = vunpack.c.l.b16 %v405
    %v2755 = vunpack.c.h.b16 %v405
    %v2756 = vunpack.c.l.b16 %v406
    %v2757 = vunpack.c.h.b16 %v406
    %v2758 = vunpack.c.l.b16 %v407
    %v2759 = vunpack.c.h.b16 %v407
    %v2760 = vunpack.c.l.b16 %v408
    %v2761 = vunpack.c.h.b16 %v408
    %v2762 = vunpack.c.l.b16 %v409
    %v2763 = vunpack.c.h.b16 %v409
    %v2764 = vunpack.c.l.b16 %v410
    %v2765 = vunpack.c.h.b16 %v410
    %v2766 = vunpack.c.l.b16 %v411
    %v2767 = vunpack.c.h.b16 %v411
    %v2768 = vunpack.c.l.b16 %v412
    %v2769 = vunpack.c.h.b16 %v412
    %v2770 = vunpack.c.l.b16 %v413
    %v2771 = vunpack.c.h.b16 %v413
    %v2772 = vunpack.c.l.b16 %v414
    %v2773 = vunpack.c.h.b16 %v414
    %v2774 = vunpack.c.l.b16 %v415
    %v2775 = vunpack.c.h.b16 %v415
    %v2776 = vunpack.c.l.b16 %v416
    %v2777 = vunpack.c.h.b16 %v416
    %v2778 = vunpack.c.l.b16 %v417
    %v2779 = vunpack.c.h.b16 %v417
    %v2780 = vunpack.c.l.b16 %v418
    %v2781 = vunpack.c.h.b16 %v418
    %v2782 = vunpack.c.l.b16 %v419
    %v2783 = vunpack.c.h.b16 %v419
    %v2784 = vunpack.c.l.b16 %v420
    %v2785 = vunpack.c.h.b16 %v420
    %v2786 = vunpack.c.l.b16 %v421
    %v2787 = vunpack.c.h.b16 %v421
    %v2788 = vunpack.c.l.b16 %v422
    %v2789 = vunpack.c.h.b16 %v422
    %v2790 = vunpack.c.l.b16 %v423
    %v2791 = vunpack.c.h.b16 %v423
    %v2792 = vunpack.c.l.b16 %v424
    %v2793 = vunpack.c.h.b16 %v424
    %v2794 = vunpack.c.l.b16 %v425
    %v2795 = vunpack.c.h.b16 %v425
    %v2796 = vunpack.c.l.b16 %v426
    %v2797 = vunpack.c.h.b16 %v426
    %v2798 = vunpack.c.l.b16 %v427
    %v2799 = vunpack.c.h.b16 %v427
    %v2800 = vunpack.c.l.b16 %v428
    %v2801 = vunpack.c.h.b16 %v428
    %v2802 = vunpack.c.l.b16 %v429
    %v2803 = vunpack.c.h.b16 %v429
    %v2804 = vunpack.c.l.b16 %v430
    %v2805 = vunpack.c.h.b16 %v430
    %v2806 = vunpack.c.l.b16 %v431
    %v2807 = vunpack.c.h.b16 %v431
    %v2808 = vunpack.c.l.b16 %v432
    %v2809 = vunpack.c.h.b16 %v432
    %v2810 = vunpack.c.l.b16 %v433
    %v2811 = vunpack.c.h.b16 %v433
    %v2812 = vunpack.c.l.b16 %v434
    %v2813 = vunpack.c.h.b16 %v434
    %v2814 = vunpack.c.l.b16 %v435
    %v2815 = vunpack.c.h.b16 %v435
    %v2816 = vunpack.c.l.b16 %v436
    %v2817 = vunpack.c.h.b16 %v436
    %v2818 = vunpack.c.l.b16 %v437
    %v2819 = vunpack.c.h.b16 %v437
    %v2820 = vunpack.c.l.b16 %v438
    %v2821 = vunpack.c.h.b16 %v438
    %v2822 = vunpack.c.l.b16 %v439
    %v2823 = vunpack.c.h.b16 %v439
    %v2824 = vunpack.c.l.b16 %v440
    %v2825 = vunpack.c.h.b16 %v440
    %v2826 = vunpack.c.l.b16 %v441
    %v2827 = vunpack.c.h.b16 %v441
    %v2828 = vunpack.c.l.b16 %v442
    %v2829 = vunpack.c.h.b16 %v442
    %v2830 = vunpack.c.l.b16 %v443
    %v2831 = vunpack.c.h.b16 %v443
    %v2832 = vunpack.c.l.b16 %v444
    %v2833 = vunpack.c.h.b16 %v444
    %v2834 = vunpack.c.l.b16 %v445
    %v2835 = vunpack.c.h.b16 %v445
    %v2836 = vunpack.c.l.b16 %v446
    %v2837 = vunpack.c.h.b16 %v446
    %v2838 = vunpack.c.l.b16 %v447
    %v2839 = vunpack.c.h.b16 %v447
    %v2840 = vunpack.c.l.b16 %v448
    %v2841 = vunpack.c.h.b16 %v448
    %v2842 = vunpack.c.l.b16 %v449
    %v2843 = vunpack.c.h.b16 %v449
    %v2844 = vunpack.c.l.b16 %v450
    %v2845 = vunpack.c.h.b16 %v450
    %v2846 = vunpack.c.l.b16 %v451
    %v2847 = vunpack.c.h.b16 %v451
    %v2848 = vunpack.c.l.b16 %v452
    %v2849 = vunpack.c.h.b16 %v452
    %v2850 = vunpack.c.l.b16 %v453
    %v2851 = vunpack.c.h.b16 %v453
    %v2852 = vunpack.c.l.b16 %v454
    %v2853 = vunpack.c.h.b16 %v454
    %v2854 = vunpack.c.l.b16 %v455
    %v2855 = vunpack.c.h.b16 %v455
    %v2856 = vunpack.c.l.b16 %v456
    %v2857 = vunpack.c.h.b16 %v456
    %v2858 = vunpack.c.l.b16 %v457
    %v2859 = vunpack.c.h.b16 %v457
    %v2860 = vunpack.c.l.b16 %v458
    %v2861 = vunpack.c.h.b16 %v458
    %v2862 = vunpack.c.l.b16 %v459
    %v2863 = vunpack.c.h.b16 %v459
    %v2864 = vunpack.c.l.b16 %v460
    %v2865 = vunpack.c.h.b16 %v460
    %v2866 = vunpack.c.l.b16 %v461
    %v2867 = vunpack.c.h.b16 %v461
    %v2868 = vunpack.c.l.b16 %v462
    %v2869 = vunpack.c.h.b16 %v462
    %v2870 = vunpack.c.l.b16 %v463
    %v2871 = vunpack.c.h.b16 %v463
    %v2872 = vunpack.c.l.b16 %v464
    %v2873 = vunpack.c.h.b16 %v464
    %v2874 = vunpack.c.l.b16 %v465
    %v2875 = vunpack.c.h.b16 %v465
    %v2876 = vunpack.c.l.b16 %v466
    %v2877 = vunpack.c.h.b16 %v466
    %v2878 = vunpack.c.l.b16 %v467
    %v2879 = vunpack.c.h.b16 %v467
    %v2880 = vunpack.c.l.b16 %v468
    %v2881 = vunpack.c.h.b16 %v468
    %v2882 = vunpack.c.l.b16 %v469
    %v2883 = vunpack.c.h.b16 %v469
    %v2884 = vunpack.c.l.b16 %v470
    %v2885 = vunpack.c.h.b16 %v470
    %v2886 = vunpack.c.l.b16 %v471
    %v2887 = vunpack.c.h.b16 %v471
    %v2888 = vunpack.c.l.b16 %v472
    %v2889 = vunpack.c.h.b16 %v472
    %v2890 = vunpack.c.l.b16 %v473
    %v2891 = vunpack.c.h.b16 %v473
    %v2892 = vunpack.c.l.b16 %v474
    %v2893 = vunpack.c.h.b16 %v474
    %v2894 = vunpack.c.l.b16 %v475
    %v2895 = vunpack.c.h.b16 %v475
    %v2896 = vunpack.c.l.b16 %v476
    %v2897 = vunpack.c.h.b16 %v476
    %v2898 = vunpack.c.l.b16 %v477
    %v2899 = vunpack.c.h.b16 %v477
    %v2900 = vunpack.c.l.b16 %v478
    %v2901 = vunpack.c.h.b16 %v478
    %v2902 = vunpack.c.l.b16 %v479
    %v2903 = vunpack.c.h.b16 %v479
    %v2904 = vunpack.c.l.b16 %v480
    %v2905 = vunpack.c.h.b16 %v480
    %v2906 = vunpack.c.l.b16 %v481
    %v2907 = vunpack.c.h.b16 %v481
    %v2908 = vunpack.c.l.b16 %v482
    %v2909 = vunpack.c.h.b16 %v482
    %v2910 = vunpack.c.l.b16 %v483
    %v2911 = vunpack.c.h.b16 %v483
    %v2912 = vunpack.c.l.b16 %v484
    %v2913 = vunpack.c.h.b16 %v484
    %v2914 = vunpack.c.l.b16 %v485
    %v2915 = vunpack.c.h.b16 %v485
    %v2916 = vunpack.c.l.b16 %v486
    %v2917 = vunpack.c.h.b16 %v486
    %v2918 = vunpack.c.l.b16 %v487
    %v2919 = vunpack.c.h.b16 %v487
    %v2920 = vunpack.c.l.b16 %v488
    %v2921 = vunpack.c.h.b16 %v488
    %v2922 = vunpack.c.l.b16 %v489
    %v2923 = vunpack.c.h.b16 %v489
    %v2924 = vunpack.c.l.b16 %v490
    %v2925 = vunpack.c.h.b16 %v490
    %v2926 = vunpack.c.l.b16 %v491
    %v2927 = vunpack.c.h.b16 %v491
    %v2928 = vunpack.c.l.b16 %v492
    %v2929 = vunpack.c.h.b16 %v492
    %v2930 = vunpack.c.l.b16 %v493
    %v2931 = vunpack.c.h.b16 %v493
    %v2932 = vunpack.c.l.b16 %v494
    %v2933 = vunpack.c.h.b16 %v494
    %v2934 = vunpack.c.l.b16 %v495
    %v2935 = vunpack.c.h.b16 %v495
    %v2936 = vunpack.c.l.b16 %v496
    %v2937 = vunpack.c.h.b16 %v496
    %v2938 = vunpack.c.l.b16 %v497
    %v2939 = vunpack.c.h.b16 %v497
    %v2940 = vunpack.c.l.b16 %v498
    %v2941 = vunpack.c.h.b16 %v498
    %v2942 = vunpack.c.l.b16 %v499
    %v2943 = vunpack.c.h.b16 %v499
    %v2944 = vunpack.c.l.b16 %v500
    %v2945 = vunpack.c.h.b16 %v500
    %v2946 = vunpack.c.l.b16 %v501
    %v2947 = vunpack.c.h.b16 %v501
    %v2948 = vunpack.c.l.b16 %v502
    %v2949 = vunpack.c.h.b16 %v502
    %v2950 = vunpack.c.l.b16 %v503
    %v2951 = vunpack.c.h.b16 %v503
    %v2952 = vunpack.c.l.b16 %v504
    %v2953 = vunpack.c.h.b16 %v504
    %v2954 = vunpack.c.l.b16 %v505
    %v2955 = vunpack.c.h.b16 %v505
    %v2956 = vunpack.c.l.b16 %v506
    %v2957 = vunpack.c.h.b16 %v506
    %v2958 = vunpack.c.l.b16 %v507
    %v2959 = vunpack.c.h.b16 %v507
    %v2960 = vunpack.c.l.b16 %v508
    %v2961 = vunpack.c.h.b16 %v508
    %v2962 = vunpack.c.l.b16 %v509
    %v2963 = vunpack.c.h.b16 %v509
    %v2964 = vunpack.c.l.b16 %v510
    %v2965 = vunpack.c.h.b16 %v510
    %v2966 = vunpack.c.l.b16 %v511
    %v2967 = vunpack.c.h.b16 %v511
    %v2968 = vunpack.c.l.b16 %v512
    %v2969 = vunpack.c.h.b16 %v512
    %v2970 = vunpack.c.l.b16 %v513
    %v2971 = vunpack.c.h.b16 %v513
    %v2972 = vunpack.c.l.b16 %v514
    %v2973 = vunpack.c.h.b16 %v514
    %v2974 = vunpack.c.l.b16 %v515
    %v2975 = vunpack.c.h.b16 %v515
    %v2976 = vunpack.c.l.b16 %v516
    %v2977 = vunpack.c.h.b16 %v516
    %v2978 = vunpack.c.l.b16 %v517
    %v2979 = vunpack.c.h.b16 %v517
    %v2980 = vunpack.c.l.b16 %v518
    %v2981 = vunpack.c.h.b16 %v518
    %v2982 = vunpack.c.l.b16 %v519
    %v2983 = vunpack.c.h.b16 %v519
    %v2984 = vunpack.c.l.b16 %v520
    %v2985 = vunpack.c.h.b16 %v520
    %v2986 = vunpack.c.l.b16 %v521
    %v2987 = vunpack.c.h.b16 %v521
    %v2988 = vunpack.c.l.b16 %v522
    %v2989 = vunpack.c.h.b16 %v522
    %v2990 = vunpack.c.l.b16 %v523
    %v2991 = vunpack.c.h.b16 %v523
    %v2992 = vunpack.c.l.b16 %v524
    %v2993 = vunpack.c.h.b16 %v524
    %v2994 = vunpack.c.l.b16 %v525
    %v2995 = vunpack.c.h.b16 %v525
    %v2996 = vunpack.c.l.b16 %v526
    %v2997 = vunpack.c.h.b16 %v526
    %v2998 = vunpack.c.l.b16 %v527
    %v2999 = vunpack.c.h.b16 %v527
    %v3000 = vunpack.c.l.b16 %v528
    %v3001 = vunpack.c.h.b16 %v528
    %v3002 = vunpack.c.l.b16 %v529
    %v3003 = vunpack.c.h.b16 %v529
    %v3004 = vunpack.c.l.b16 %v530
    %v3005 = vunpack.c.h.b16 %v530
    %v3006 = vunpack.c.l.b16 %v531
    %v3007 = vunpack.c.h.b16 %v531
    %v3008 = vunpack.c.l.b16 %v532
    %v3009 = vunpack.c.h.b16 %v532
    %v3010 = vunpack.c.l.b16 %v533
    %v3011 = vunpack.c.h.b16 %v533
    %v3012 = vunpack.c.l.b16 %v534
    %v3013 = vunpack.c.h.b16 %v534
    %v3014 = vunpack.c.l.b16 %v535
    %v3015 = vunpack.c.h.b16 %v535
    %v3016 = vunpack.c.l.b16 %v536
    %v3017 = vunpack.c.h.b16 %v536
    %v3018 = vunpack.c.l.b16 %v537
    %v3019 = vunpack.c.h.b16 %v537
    %v3020 = vunpack.c.l.b16 %v538
    %v3021 = vunpack.c.h.b16 %v538
    %v3022 = vunpack.c.l.b16 %v539
    %v3023 = vunpack.c.h.b16 %v539
    %v3024 = vunpack.c.l.b16 %v540
    %v3025 = vunpack.c.h.b16 %v540
    %v3026 = vunpack.c.l.b16 %v541
    %v3027 = vunpack.c.h.b16 %v541
    %v3028 = vunpack.c.l.b16 %v542
    %v3029 = vunpack.c.h.b16 %v542
    %v3030 = vunpack.c.l.b16 %v543
    %v3031 = vunpack.c.h.b16 %v543
    %v3032 = vunpack.c.l.b16 %v544
    %v3033 = vunpack.c.h.b16 %v544
    %v3034 = vunpack.c.l.b16 %v545
    %v3035 = vunpack.c.h.b16 %v545
    %v3036 = vunpack.c.l.b16 %v546
    %v3037 = vunpack.c.h.b16 %v546
    %v3038 = vunpack.c.l.b16 %v547
    %v3039 = vunpack.c.h.b16 %v547
    %v3040 = vunpack.c.l.b16 %v548
    %v3041 = vunpack.c.h.b16 %v548
    %v3042 = vunpack.c.l.b16 %v549
    %v3043 = vunpack.c.h.b16 %v549
    %v3044 = vunpack.c.l.b16 %v550
    %v3045 = vunpack.c.h.b16 %v550
    %v3046 = vunpack.c.l.b16 %v551
    %v3047 = vunpack.c.h.b16 %v551
    %v3048 = vunpack.c.l.b16 %v552
    %v3049 = vunpack.c.h.b16 %v552
    %v3050 = vunpack.c.l.b16 %v553
    %v3051 = vunpack.c.h.b16 %v553
    %v3052 = vunpack.c.l.b16 %v554
    %v3053 = vunpack.c.h.b16 %v554
    %v3054 = vunpack.c.l.b16 %v555
    %v3055 = vunpack.c.h.b16 %v555
    %v3056 = vunpack.c.l.b16 %v556
    %v3057 = vunpack.c.h.b16 %v556
    %v3058 = vunpack.c.l.b16 %v557
    %v3059 = vunpack.c.h.b16 %v557
    %v3060 = vunpack.c.l.b16 %v558
    %v3061 = vunpack.c.h.b16 %v558
    %v3062 = vunpack.c.l.b16 %v559
    %v3063 = vunpack.c.h.b16 %v559
    %v3064 = vunpack.c.l.b16 %v560
    %v3065 = vunpack.c.h.b16 %v560
    %v3066 = vunpack.c.l.b16 %v561
    %v3067 = vunpack.c.h.b16 %v561
    %v3068 = vunpack.c.l.b16 %v562
    %v3069 = vunpack.c.h.b16 %v562
    %v3070 = vunpack.c.l.b16 %v563
    %v3071 = vunpack.c.h.b16 %v563
    %v3072 = vunpack.c.l.b16 %v564
    %v3073 = vunpack.c.h.b16 %v564
    %v3074 = vunpack.c.l.b16 %v565
    %v3075 = vunpack.c.h.b16 %v565
    %v3076 = vunpack.c.l.b16 %v566
    %v3077 = vunpack.c.h.b16 %v566
    %v3078 = vunpack.c.l.b16 %v567
    %v3079 = vunpack.c.h.b16 %v567
    %v3080 = vunpack.c.l.b16 %v568
    %v3081 = vunpack.c.h.b16 %v568
    %v3082 = vunpack.c.l.b16 %v569
    %v3083 = vunpack.c.h.b16 %v569
    %v3084 = vunpack.c.l.b16 %v570
    %v3085 = vunpack.c.h.b16 %v570
    %v3086 = vunpack.c.l.b16 %v571
    %v3087 = vunpack.c.h.b16 %v571
    %v3088 = vunpack.c.l.b16 %v572
    %v3089 = vunpack.c.h.b16 %v572
    %v3090 = vunpack.c.l.b16 %v573
    %v3091 = vunpack.c.h.b16 %v573
    %v3092 = vunpack.c.l.b16 %v574
    %v3093 = vunpack.c.h.b16 %v574
    %v3094 = vunpack.c.l.b16 %v575
    %v3095 = vunpack.c.h.b16 %v575
    %v3096 = vunpack.c.l.b16 %v576
    %v3097 = vunpack.c.h.b16 %v576
    %v3098 = vunpack.c.l.b16 %v577
    %v3099 = vunpack.c.h.b16 %v577
    %v3100 = vunpack.c.l.b16 %v578
    %v3101 = vunpack.c.h.b16 %v578
    %v3102 = vunpack.c.l.b16 %v579
    %v3103 = vunpack.c.h.b16 %v579
    %v3104 = vunpack.c.l.b16 %v580
    %v3105 = vunpack.c.h.b16 %v580
    %v3106 = vunpack.c.l.b16 %v581
    %v3107 = vunpack.c.h.b16 %v581
    %v3108 = vunpack.c.l.b16 %v582
    %v3109 = vunpack.c.h.b16 %v582
    %v3110 = vunpack.c.l.b16 %v583
    %v3111 = vunpack.c.h.b16 %v583
    %v3112 = vunpack.c.l.b16 %v584
    %v3113 = vunpack.c.h.b16 %v584
    %v3114 = vunpack.c.l.b16 %v585
    %v3115 = vunpack.c.h.b16 %v585
    %v3116 = vunpack.c.l.b16 %v586
    %v3117 = vunpack.c.h.b16 %v586
    %v3118 = vunpack.c.l.b16 %v587
    %v3119 = vunpack.c.h.b16 %v587
    %v3120 = vunpack.c.l.b16 %v588
    %v3121 = vunpack.c.h.b16 %v588
    %v3122 = vunpack.c.l.b16 %v589
    %v3123 = vunpack.c.h.b16 %v589
    %v3124 = vunpack.c.l.b16 %v590
    %v3125 = vunpack.c.h.b16 %v590
    %v3126 = vunpack.c.l.b16 %v591
    %v3127 = vunpack.c.h.b16 %v591
    %v3128 = vunpack.c.l.b16 %v592
    %v3129 = vunpack.c.h.b16 %v592
    %v3130 = vunpack.c.l.b16 %v593
    %v3131 = vunpack.c.h.b16 %v593
    %v3132 = vunpack.c.l.b16 %v594
    %v3133 = vunpack.c.h.b16 %v594
    %v3134 = vunpack.c.l.b16 %v595
    %v3135 = vunpack.c.h.b16 %v595
    %v3136 = vunpack.c.l.b16 %v596
    %v3137 = vunpack.c.h.b16 %v596
    %v3138 = vunpack.c.l.b16 %v597
    %v3139 = vunpack.c.h.b16 %v597
    %v3140 = vunpack.c.l.b16 %v598
    %v3141 = vunpack.c.h.b16 %v598
    %v3142 = vunpack.c.l.b16 %v599
    %v3143 = vunpack.c.h.b16 %v599
    %v3144 = vunpack.c.l.b16 %v600
    %v3145 = vunpack.c.h.b16 %v600
    %v3146 = vunpack.c.l.b16 %v601
    %v3147 = vunpack.c.h.b16 %v601
    %v3148 = vunpack.c.l.b16 %v602
    %v3149 = vunpack.c.h.b16 %v602
    %v3150 = vunpack.c.l.b16 %v603
    %v3151 = vunpack.c.h.b16 %v603
    %v3152 = vunpack.c.l.b16 %v604
    %v3153 = vunpack.c.h.b16 %v604
    %v3154 = vunpack.c.l.b16 %v605
    %v3155 = vunpack.c.h.b16 %v605
    %v3156 = vunpack.c.l.b16 %v606
    %v3157 = vunpack.c.h.b16 %v606
    %v3158 = vunpack.c.l.b16 %v607
    %v3159 = vunpack.c.h.b16 %v607
    %v3160 = vunpack.c.l.b16 %v608
    %v3161 = vunpack.c.h.b16 %v608
    %v3162 = vunpack.c.l.b16 %v609
    %v3163 = vunpack.c.h.b16 %v609
    %v3164 = vunpack.c.l.b16 %v610
    %v3165 = vunpack.c.h.b16 %v610
    %v3166 = vunpack.c.l.b16 %v611
    %v3167 = vunpack.c.h.b16 %v611
    %v3168 = vunpack.c.l.b16 %v612
    %v3169 = vunpack.c.h.b16 %v612
    %v3170 = vunpack.c.l.b16 %v613
    %v3171 = vunpack.c.h.b16 %v613
    %v3172 = vunpack.c.l.b16 %v614
    %v3173 = vunpack.c.h.b16 %v614
    %v3174 = vunpack.c.l.b16 %v615
    %v3175 = vunpack.c.h.b16 %v615
    %v3176 = vunpack.c.l.b16 %v616
    %v3177 = vunpack.c.h.b16 %v616
    %v3178 = vunpack.c.l.b16 %v617
    %v3179 = vunpack.c.h.b16 %v617
    %v3180 = vunpack.c.l.b16 %v618
    %v3181 = vunpack.c.h.b16 %v618
    %v3182 = vunpack.c.l.b16 %v619
    %v3183 = vunpack.c.h.b16 %v619
    %v3184 = vunpack.c.l.b16 %v620
    %v3185 = vunpack.c.h.b16 %v620
    %v3186 = vunpack.c.l.b16 %v621
    %v3187 = vunpack.c.h.b16 %v621
    %v3188 = vunpack.c.l.b16 %v622
    %v3189 = vunpack.c.h.b16 %v622
    %v3190 = vunpack.c.l.b16 %v623
    %v3191 = vunpack.c.h.b16 %v623
    %v3192 = vunpack.c.l.b16 %v624
    %v3193 = vunpack.c.h.b16 %v624
    %v3194 = vunpack.c.l.b16 %v625
    %v3195 = vunpack.c.h.b16 %v625
    %v3196 = vunpack.c.l.b16 %v626
    %v3197 = vunpack.c.h.b16 %v626
    %v3198 = vunpack.c.l.b16 %v627
    %v3199 = vunpack.c.h.b16 %v627
    %v3200 = vunpack.c.l.b16 %v628
    %v3201 = vunpack.c.h.b16 %v628
    %v3202 = vunpack.c.l.b16 %v629
    %v3203 = vunpack.c.h.b16 %v629
    %v3204 = vunpack.c.l.b16 %v630
    %v3205 = vunpack.c.h.b16 %v630
    %v3206 = vunpack.c.l.b16 %v631
    %v3207 = vunpack.c.h.b16 %v631
    %v3208 = vunpack.c.l.b16 %v632
    %v3209 = vunpack.c.h.b16 %v632
    %v3210 = vunpack.c.l.b16 %v633
    %v3211 = vunpack.c.h.b16 %v633
    %v3212 = vunpack.c.l.b16 %v634
    %v3213 = vunpack.c.h.b16 %v634
    %v3214 = vunpack.c.l.b16 %v635
    %v3215 = vunpack.c.h.b16 %v635
    %v3216 = vunpack.c.l.b16 %v636
    %v3217 = vunpack.c.h.b16 %v636
    %v3218 = vunpack.c.l.b16 %v637
    %v3219 = vunpack.c.h.b16 %v637
    %v3220 = vunpack.c.l.b16 %v638
    %v3221 = vunpack.c.h.b16 %v638
    %v3222 = vunpack.c.l.b16 %v639
    %v3223 = vunpack.c.h.b16 %v639
    %v3224 = vunpack.c.l.b16 %v640
    %v3225 = vunpack.c.h.b16 %v640
    %v3226 = vunpack.c.l.b16 %v641
    %v3227 = vunpack.c.h.b16 %v641
    %v3228 = vunpack.c.l.b16 %v642
    %v3229 = vunpack.c.h.b16 %v642
    %v3230 = vunpack.c.l.b16 %v643
    %v3231 = vunpack.c.h.b16 %v643
    %v3232 = vunpack.c.l.b16 %v644
    %v3233 = vunpack.c.h.b16 %v644
    %v3234 = vunpack.c.l.b16 %v645
    %v3235 = vunpack.c.h.b16 %v645
    %v3236 = vunpack.c.l.b16 %v646
    %v3237 = vunpack.c.h.b16 %v646
    %v3238 = vunpack.c.l.b16 %v647
    %v3239 = vunpack.c.h.b16 %v647
    %v3240 = vunpack.c.l.b16 %v648
    %v3241 = vunpack.c.h.b16 %v648
    %v3242 = vunpack.c.l.b16 %v649
    %v3243 = vunpack.c.h.b16 %v649
    %v3244 = vunpack.c.l.b16 %v650
    %v3245 = vunpack.c.h.b16 %v650
    %v3246 = vunpack.c.l.b16 %v651
    %v3247 = vunpack.c.h.b16 %v651
    %v3248 = vunpack.c.l.b16 %v652
    %v3249 = vunpack.c.h.b16 %v652
    %v3250 = vunpack.c.l.b16 %v653
    %v3251 = vunpack.c.h.b16 %v653
    %v3252 = vunpack.c.l.b16 %v654
    %v3253 = vunpack.c.h.b16 %v654
    %v3254 = vunpack.c.l.b16 %v655
    %v3255 = vunpack.c.h.b16 %v655
    %v3256 = vunpack.c.l.b16 %v656
    %v3257 = vunpack.c.h.b16 %v656
    %v3258 = vunpack.c.l.b16 %v657
    %v3259 = vunpack.c.h.b16 %v657
    %v3260 = vunpack.c.l.b16 %v658
    %v3261 = vunpack.c.h.b16 %v658
    %v3262 = vunpack.c.l.b16 %v659
    %v3263 = vunpack.c.h.b16 %v659
    %v3264 = vunpack.c.l.b16 %v660
    %v3265 = vunpack.c.h.b16 %v660
    %v3266 = vunpack.c.l.b16 %v661
    %v3267 = vunpack.c.h.b16 %v661
    %v3268 = vunpack.c.l.b16 %v662
    %v3269 = vunpack.c.h.b16 %v662
    %v3270 = vunpack.c.l.b16 %v663
    %v3271 = vunpack.c.h.b16 %v663
    %v3272 = vunpack.c.l.b16 %v664
    %v3273 = vunpack.c.h.b16 %v664
    %v3274 = vunpack.c.l.b16 %v665
    %v3275 = vunpack.c.h.b16 %v665
    %v3276 = vunpack.c.l.b16 %v666
    %v3277 = vunpack.c.h.b16 %v666
    %v3278 = vunpack.c.l.b16 %v667
    %v3279 = vunpack.c.h.b16 %v667
    %v3280 = vunpack.c.l.b16 %v668
    %v3281 = vunpack.c.h.b16 %v668
    %v3282 = vunpack.c.l.b16 %v669
    %v3283 = vunpack.c.h.b16 %v669
    %v3284 = vunpack.c.l.b16 %v670
    %v3285 = vunpack.c.h.b16 %v670
    %v3286 = vunpack.c.l.b16 %v671
    %v3287 = vunpack.c.h.b16 %v671
    %v3288 = vunpack.c.l.b16 %v672
    %v3289 = vunpack.c.h.b16 %v672
    %v3290 = vunpack.c.l.b16 %v673
    %v3291 = vunpack.c.h.b16 %v673
    %v3292 = vunpack.c.l.b16 %v674
    %v3293 = vunpack.c.h.b16 %v674
    %v3294 = vunpack.c.l.b16 %v675
    %v3295 = vunpack.c.h.b16 %v675
    %v3296 = vunpack.c.l.b16 %v676
    %v3297 = vunpack.c.h.b16 %v676
    %v3298 = vunpack.c.l.b16 %v677
    %v3299 = vunpack.c.h.b16 %v677
    %v3300 = vunpack.c.l.b16 %v678
    %v3301 = vunpack.c.h.b16 %v678
    %v3302 = vunpack.c.l.b16 %v679
    %v3303 = vunpack.c.h.b16 %v679
    %v3304 = vunpack.c.l.b16 %v680
    %v3305 = vunpack.c.h.b16 %v680
    %v3306 = vunpack.c.l.b16 %v681
    %v3307 = vunpack.c.h.b16 %v681
    %v3308 = vunpack.c.l.b16 %v682
    %v3309 = vunpack.c.h.b16 %v682
    %v3310 = vunpack.c.l.b16 %v683
    %v3311 = vunpack.c.h.b16 %v683
    %v3312 = vunpack.c.l.b16 %v684
    %v3313 = vunpack.c.h.b16 %v684
    %v3314 = vunpack.c.l.b16 %v685
    %v3315 = vunpack.c.h.b16 %v685
    %v3316 = vunpack.c.l.b16 %v686
    %v3317 = vunpack.c.h.b16 %v686
    %v3318 = vunpack.c.l.b16 %v687
    %v3319 = vunpack.c.h.b16 %v687
    %v3320 = vunpack.c.l.b16 %v688
    %v3321 = vunpack.c.h.b16 %v688
    %v3322 = vunpack.c.l.b16 %v689
    %v3323 = vunpack.c.h.b16 %v689
    %v3324 = vunpack.c.l.b16 %v690
    %v3325 = vunpack.c.h.b16 %v690
    %v3326 = vunpack.c.l.b16 %v691
    %v3327 = vunpack.c.h.b16 %v691
    %v3328 = vunpack.c.l.b16 %v692
    %v3329 = vunpack.c.h.b16 %v692
    %v3330 = vunpack.c.l.b16 %v693
    %v3331 = vunpack.c.h.b16 %v693
    %v3332 = vunpack.c.l.b16 %v694
    %v3333 = vunpack.c.h.b16 %v694
    %v3334 = vunpack.c.l.b16 %v695
    %v3335 = vunpack.c.h.b16 %v695
    %v3336 = vunpack.c.l.b16 %v696
    %v3337 = vunpack.c.h.b16 %v696
    %v3338 = vunpack.c.l.b16 %v697
    %v3339 = vunpack.c.h.b16 %v697
    %v3340 = vunpack.c.l.b16 %v698
    %v3341 = vunpack.c.h.b16 %v698
    %v3342 = vunpack.c.l.b16 %v699
    %v3343 = vunpack.c.h.b16 %v699
    %v3344 = vunpack.c.l.b16 %v700
    %v3345 = vunpack.c.h.b16 %v700
    %v3346 = vunpack.c.l.b16 %v701
    %v3347 = vunpack.c.h.b16 %v701
    %v3348 = vunpack.c.l.b16 %v702
    %v3349 = vunpack.c.h.b16 %v702
    %v3350 = vunpack.c.l.b16 %v703
    %v3351 = vunpack.c.h.b16 %v703
    %v3352 = vunpack.c.l.b16 %v704
    %v3353 = vunpack.c.h.b16 %v704
    %v3354 = vunpack.c.l.b16 %v705
    %v3355 = vunpack.c.h.b16 %v705
    %v3356 = vunpack.c.l.b16 %v706
    %v3357 = vunpack.c.h.b16 %v706
    %v3358 = vunpack.c.l.b16 %v707
    %v3359 = vunpack.c.h.b16 %v707
    %v3360 = vunpack.c.l.b16 %v708
    %v3361 = vunpack.c.h.b16 %v708
    %v3362 = vunpack.c.l.b16 %v709
    %v3363 = vunpack.c.h.b16 %v709
    %v3364 = vunpack.c.l.b16 %v710
    %v3365 = vunpack.c.h.b16 %v710
    %v3366 = vunpack.c.l.b16 %v711
    %v3367 = vunpack.c.h.b16 %v711
    %v3368 = vunpack.c.l.b16 %v712
    %v3369 = vunpack.c.h.b16 %v712
    %v3370 = vunpack.c.l.b16 %v713
    %v3371 = vunpack.c.h.b16 %v713
    %v3372 = vunpack.c.l.b16 %v714
    %v3373 = vunpack.c.h.b16 %v714
    %v3374 = vunpack.c.l.b16 %v715
    %v3375 = vunpack.c.h.b16 %v715
    %v3376 = vunpack.c.l.b16 %v716
    %v3377 = vunpack.c.h.b16 %v716
    %v3378 = vunpack.c.l.b16 %v717
    %v3379 = vunpack.c.h.b16 %v717
    %v3380 = vunpack.c.l.b16 %v718
    %v3381 = vunpack.c.h.b16 %v718
    %v3382 = vunpack.c.l.b16 %v719
    %v3383 = vunpack.c.h.b16 %v719
    %v3384 = vunpack.c.l.b16 %v720
    %v3385 = vunpack.c.h.b16 %v720
    %v3386 = vunpack.c.l.b16 %v721
    %v3387 = vunpack.c.h.b16 %v721
    %v3388 = vunpack.c.l.b16 %v722
    %v3389 = vunpack.c.h.b16 %v722
    %v3390 = vunpack.c.l.b16 %v723
    %v3391 = vunpack.c.h.b16 %v723
    %v3392 = vunpack.c.l.b16 %v724
    %v3393 = vunpack.c.h.b16 %v724
    %v3394 = vunpack.c.l.b16 %v725
    %v3395 = vunpack.c.h.b16 %v725
    %v3396 = vunpack.c.l.b16 %v726
    %v3397 = vunpack.c.h.b16 %v726
    %v3398 = vunpack.c.l.b16 %v727
    %v3399 = vunpack.c.h.b16 %v727
    %v3400 = vunpack.c.l.b16 %v728
    %v3401 = vunpack.c.h.b16 %v728
    %v3402 = vunpack.c.l.b16 %v729
    %v3403 = vunpack.c.h.b16 %v729
    %v3404 = vunpack.c.l.b16 %v730
    %v3405 = vunpack.c.h.b16 %v730
    %v3406 = vunpack.c.l.b16 %v731
    %v3407 = vunpack.c.h.b16 %v731
    %v3408 = vunpack.c.l.b16 %v732
    %v3409 = vunpack.c.h.b16 %v732
    %v3410 = vunpack.c.l.b16 %v733
    %v3411 = vunpack.c.h.b16 %v733
    %v3412 = vunpack.c.l.b16 %v734
    %v3413 = vunpack.c.h.b16 %v734
    %v3414 = vunpack.c.l.b16 %v735
    %v3415 = vunpack.c.h.b16 %v735
    %v3416 = vunpack.c.l.b16 %v736
    %v3417 = vunpack.c.h.b16 %v736
    %v3418 = vunpack.c.l.b16 %v737
    %v3419 = vunpack.c.h.b16 %v737
    %v3420 = vunpack.c.l.b16 %v738
    %v3421 = vunpack.c.h.b16 %v738
    %v3422 = vunpack.c.l.b16 %v739
    %v3423 = vunpack.c.h.b16 %v739
    %v3424 = vunpack.c.l.b16 %v740
    %v3425 = vunpack.c.h.b16 %v740
    %v3426 = vunpack.c.l.b16 %v741
    %v3427 = vunpack.c.h.b16 %v741
    %v3428 = vunpack.c.l.b16 %v742
    %v3429 = vunpack.c.h.b16 %v742
    %v3430 = vunpack.c.l.b16 %v743
    %v3431 = vunpack.c.h.b16 %v743
    %v3432 = vunpack.c.l.b16 %v744
    %v3433 = vunpack.c.h.b16 %v744
    %v3434 = vunpack.c.l.b16 %v745
    %v3435 = vunpack.c.h.b16 %v745
    %v3436 = vunpack.c.l.b16 %v746
    %v3437 = vunpack.c.h.b16 %v746
    %v3438 = vunpack.c.l.b16 %v747
    %v3439 = vunpack.c.h.b16 %v747
    %v3440 = vunpack.c.l.b16 %v748
    %v3441 = vunpack.c.h.b16 %v748
    %v3442 = vunpack.c.l.b16 %v749
    %v3443 = vunpack.c.h.b16 %v749
    %v3444 = vunpack.c.l.b16 %v750
    %v3445 = vunpack.c.h.b16 %v750
    %v3446 = vunpack.c.l.b16 %v751
    %v3447 = vunpack.c.h.b16 %v751
    %v3448 = vunpack.c.l.b16 %v752
    %v3449 = vunpack.c.h.b16 %v752
    %v3450 = vunpack.c.l.b16 %v753
    %v3451 = vunpack.c.h.b16 %v753
    %v3452 = vunpack.c.l.b16 %v754
    %v3453 = vunpack.c.h.b16 %v754
    %v3454 = vunpack.c.l.b16 %v755
    %v3455 = vunpack.c.h.b16 %v755
    %v3456 = vunpack.c.l.b16 %v756
    %v3457 = vunpack.c.h.b16 %v756
    %v3458 = vunpack.c.l.b16 %v757
    %v3459 = vunpack.c.h.b16 %v757
    %v3460 = vunpack.c.l.b16 %v758
    %v3461 = vunpack.c.h.b16 %v758
    %v3462 = vunpack.c.l.b16 %v759
    %v3463 = vunpack.c.h.b16 %v759
    %v3464 = vunpack.c.l.b16 %v760
    %v3465 = vunpack.c.h.b16 %v760
    %v3466 = vunpack.c.l.b16 %v761
    %v3467 = vunpack.c.h.b16 %v761
    %v3468 = vunpack.c.l.b16 %v762
    %v3469 = vunpack.c.h.b16 %v762
    %v3470 = vunpack.c.l.b16 %v763
    %v3471 = vunpack.c.h.b16 %v763
    %v3472 = vunpack.c.l.b16 %v764
    %v3473 = vunpack.c.h.b16 %v764
    %v3474 = vunpack.c.l.b16 %v765
    %v3475 = vunpack.c.h.b16 %v765
    %v3476 = vunpack.c.l.b16 %v766
    %v3477 = vunpack.c.h.b16 %v766
    %v3478 = vunpack.c.l.b16 %v767
    %v3479 = vunpack.c.h.b16 %v767
    %v3480 = vunpack.c.l.b16 %v768
    %v3481 = vunpack.c.h.b16 %v768
    %v3482 = vunpack.c.l.b16 %v769
    %v3483 = vunpack.c.h.b16 %v769
    %v3484 = vunpack.c.l.b16 %v770
    %v3485 = vunpack.c.h.b16 %v770
    %v3486 = vunpack.c.l.b16 %v771
    %v3487 = vunpack.c.h.b16 %v771
    %v3488 = vunpack.c.l.b16 %v772
    %v3489 = vunpack.c.h.b16 %v772
    %v3490 = vunpack.c.l.b16 %v773
    %v3491 = vunpack.c.h.b16 %v773
    %v3492 = vunpack.c.l.b16 %v774
    %v3493 = vunpack.c.h.b16 %v774
    %v3494 = vunpack.c.l.b16 %v775
    %v3495 = vunpack.c.h.b16 %v775
    %v3496 = vunpack.c.l.b16 %v776
    %v3497 = vunpack.c.h.b16 %v776
    %v3498 = vunpack.c.l.b16 %v777
    %v3499 = vunpack.c.h.b16 %v777
    %v3500 = vunpack.c.l.b16 %v778
    %v3501 = vunpack.c.h.b16 %v778
    %v3502 = vunpack.c.l.b16 %v779
    %v3503 = vunpack.c.h.b16 %v779
    %v3504 = vunpack.c.l.b16 %v780
    %v3505 = vunpack.c.h.b16 %v780
    %v3506 = vunpack.c.l.b16 %v781
    %v3507 = vunpack.c.h.b16 %v781
    %v3508 = vunpack.c.l.b16 %v782
    %v3509 = vunpack.c.h.b16 %v782
    %v3510 = vunpack.c.l.b16 %v783
    %v3511 = vunpack.c.h.b16 %v783
    %v3512 = vunpack.c.l.b16 %v784
    %v3513 = vunpack.c.h.b16 %v784
    %v3514 = vunpack.c.l.b16 %v785
    %v3515 = vunpack.c.h.b16 %v785
    %v3516 = vunpack.c.l.b16 %v786
    %v3517 = vunpack.c.h.b16 %v786
    %v3518 = vunpack.c.l.b16 %v787
    %v3519 = vunpack.c.h.b16 %v787
    %v3520 = vunpack.c.l.b16 %v788
    %v3521 = vunpack.c.h.b16 %v788
    %v3522 = vunpack.c.l.b16 %v789
    %v3523 = vunpack.c.h.b16 %v789
    %v3524 = vunpack.c.l.b16 %v790
    %v3525 = vunpack.c.h.b16 %v790
    %v3526 = vunpack.c.l.b16 %v791
    %v3527 = vunpack.c.h.b16 %v791
    %v3528 = vunpack.c.l.b16 %v792
    %v3529 = vunpack.c.h.b16 %v792
    %v3530 = vunpack.c.l.b16 %v793
    %v3531 = vunpack.c.h.b16 %v793
    %v3532 = vunpack.c.l.b16 %v794
    %v3533 = vunpack.c.h.b16 %v794
    %v3534 = vunpack.c.l.b16 %v795
    %v3535 = vunpack.c.h.b16 %v795
    %v3536 = vunpack.c.l.b16 %v796
    %v3537 = vunpack.c.h.b16 %v796
    %v3538 = vunpack.c.l.b16 %v797
    %v3539 = vunpack.c.h.b16 %v797
    %v3540 = vunpack.c.l.b16 %v798
    %v3541 = vunpack.c.h.b16 %v798
    %v3542 = vunpack.c.l.b16 %v799
    %v3543 = vunpack.c.h.b16 %v799
    %v3544 = vunpack.c.l.b16 %v800
    %v3545 = vunpack.c.h.b16 %v800
    %v3546 = vunpack.c.l.b16 %v801
    %v3547 = vunpack.c.h.b16 %v801
    %v3548 = vunpack.c.l.b16 %v802
    %v3549 = vunpack.c.h.b16 %v802
    %v3550 = vunpack.c.l.b16 %v803
    %v3551 = vunpack.c.h.b16 %v803
    %v3552 = vunpack.c.l.b16 %v804
    %v3553 = vunpack.c.h.b16 %v804
    %v3554 = vunpack.c.l.b16 %v805
    %v3555 = vunpack.c.h.b16 %v805
    %v3556 = vunpack.c.l.b16 %v806
    %v3557 = vunpack.c.h.b16 %v806
    %v3558 = vunpack.c.l.b16 %v807
    %v3559 = vunpack.c.h.b16 %v807
    %v3560 = vunpack.c.l.b16 %v808
    %v3561 = vunpack.c.h.b16 %v808
    %v3562 = vunpack.c.l.b16 %v809
    %v3563 = vunpack.c.h.b16 %v809
    %v3564 = vunpack.c.l.b16 %v810
    %v3565 = vunpack.c.h.b16 %v810
    %v3566 = vunpack.c.l.b16 %v811
    %v3567 = vunpack.c.h.b16 %v811
    %v3568 = vunpack.c.l.b16 %v812
    %v3569 = vunpack.c.h.b16 %v812
    %v3570 = vunpack.c.l.b16 %v813
    %v3571 = vunpack.c.h.b16 %v813
    %v3572 = vunpack.c.l.b16 %v814
    %v3573 = vunpack.c.h.b16 %v814
    %v3574 = vunpack.c.l.b16 %v815
    %v3575 = vunpack.c.h.b16 %v815
    %v3576 = vunpack.c.l.b16 %v816
    %v3577 = vunpack.c.h.b16 %v816
    %v3578 = vunpack.c.l.b16 %v817
    %v3579 = vunpack.c.h.b16 %v817
    %v3580 = vunpack.c.l.b16 %v818
    %v3581 = vunpack.c.h.b16 %v818
    %v3582 = vunpack.c.l.b16 %v819
    %v3583 = vunpack.c.h.b16 %v819
    %v3584 = vunpack.c.l.b16 %v820
    %v3585 = vunpack.c.h.b16 %v820
    %v3586 = vunpack.c.l.b16 %v821
    %v3587 = vunpack.c.h.b16 %v821
    %v3588 = vunpack.c.l.b16 %v822
    %v3589 = vunpack.c.h.b16 %v822
    %v3590 = vunpack.c.l.b16 %v823
    %v3591 = vunpack.c.h.b16 %v823
    %v3592 = vunpack.c.l.b16 %v824
    %v3593 = vunpack.c.h.b16 %v824
    %v3594 = vunpack.c.l.b16 %v825
    %v3595 = vunpack.c.h.b16 %v825
    %v3596 = vunpack.c.l.b16 %v826
    %v3597 = vunpack.c.h.b16 %v826
    %v3598 = vunpack.c.l.b16 %v827
    %v3599 = vunpack.c.h.b16 %v827
    %v3600 = vunpack.c.l.b16 %v828
    %v3601 = vunpack.c.h.b16 %v828
    %v3602 = vunpack.c.l.b16 %v829
    %v3603 = vunpack.c.h.b16 %v829
    %v3604 = vunpack.c.l.b16 %v830
    %v3605 = vunpack.c.h.b16 %v830
    %v3606 = vunpack.c.l.b16 %v831
    %v3607 = vunpack.c.h.b16 %v831
    %v3608 = vunpack.c.l.b16 %v832
    %v3609 = vunpack.c.h.b16 %v832
    %v3610 = vunpack.c.l.b16 %v833
    %v3611 = vunpack.c.h.b16 %v833
    %v3612 = vunpack.c.l.b16 %v834
    %v3613 = vunpack.c.h.b16 %v834
    %v3614 = vunpack.c.l.b16 %v835
    %v3615 = vunpack.c.h.b16 %v835
    %v3616 = vunpack.c.l.b16 %v836
    %v3617 = vunpack.c.h.b16 %v836
    %v3618 = vunpack.c.l.b16 %v837
    %v3619 = vunpack.c.h.b16 %v837
    %v3620 = vunpack.c.l.b16 %v838
    %v3621 = vunpack.c.h.b16 %v838
    %v3622 = vunpack.c.l.b16 %v839
    %v3623 = vunpack.c.h.b16 %v839
    %v3624 = vunpack.c.l.b16 %v840
    %v3625 = vunpack.c.h.b16 %v840
    %v3626 = vunpack.c.l.b16 %v841
    %v3627 = vunpack.c.h.b16 %v841
    %v3628 = vunpack.c.l.b16 %v842
    %v3629 = vunpack.c.h.b16 %v842
    %v3630 = vunpack.c.l.b16 %v843
    %v3631 = vunpack.c.h.b16 %v843
    %v3632 = vunpack.c.l.b16 %v844
    %v3633 = vunpack.c.h.b16 %v844
    %v3634 = vunpack.c.l.b16 %v845
    %v3635 = vunpack.c.h.b16 %v845
    %v3636 = vunpack.c.l.b16 %v846
    %v3637 = vunpack.c.h.b16 %v846
    %v3638 = vunpack.c.l.b16 %v847
    %v3639 = vunpack.c.h.b16 %v847
    %v3640 = vunpack.c.l.b16 %v848
    %v3641 = vunpack.c.h.b16 %v848
    %v3642 = vunpack.c.l.b16 %v849
    %v3643 = vunpack.c.h.b16 %v849
    %v3644 = vunpack.c.l.b16 %v850
    %v3645 = vunpack.c.h.b16 %v850
    %v3646 = vunpack.c.l.b16 %v851
    %v3647 = vunpack.c.h.b16 %v851
    %v3648 = vunpack.c.l.b16 %v852
    %v3649 = vunpack.c.h.b16 %v852
    %v3650 = vunpack.c.l.b16 %v853
    %v3651 = vunpack.c.h.b16 %v853
    %v3652 = vunpack.c.l.b16 %v854
    %v3653 = vunpack.c.h.b16 %v854
    %v3654 = vunpack.c.l.b16 %v855
    %v3655 = vunpack.c.h.b16 %v855
    %v3656 = vunpack.c.l.b16 %v856
    %v3657 = vunpack.c.h.b16 %v856
    %v3658 = vunpack.c.l.b16 %v857
    %v3659 = vunpack.c.h.b16 %v857
    %v3660 = vunpack.c.l.b16 %v858
    %v3661 = vunpack.c.h.b16 %v858
    %v3662 = vunpack.c.l.b16 %v859
    %v3663 = vunpack.c.h.b16 %v859
    %v3664 = vunpack.c.l.b16 %v860
    %v3665 = vunpack.c.h.b16 %v860
    %v3666 = vunpack.c.l.b16 %v861
    %v3667 = vunpack.c.h.b16 %v861
    %v3668 = vunpack.c.l.b16 %v862
    %v3669 = vunpack.c.h.b16 %v862
    %v3670 = vunpack.c.l.b16 %v863
    %v3671 = vunpack.c.h.b16 %v863
    %v3672 = vunpack.c.l.b16 %v864
    %v3673 = vunpack.c.h.b16 %v864
    %v3674 = vunpack.c.l.b16 %v865
    %v3675 = vunpack.c.h.b16 %v865
    %v3676 = vunpack.c.l.b16 %v866
    %v3677 = vunpack.c.h.b16 %v866
    %v3678 = vunpack.c.l.b16 %v867
    %v3679 = vunpack.c.h.b16 %v867
    %v3680 = vunpack.c.l.b16 %v868
    %v3681 = vunpack.c.h.b16 %v868
    %v3682 = vunpack.c.l.b16 %v869
    %v3683 = vunpack.c.h.b16 %v869
    %v3684 = vunpack.c.l.b16 %v870
    %v3685 = vunpack.c.h.b16 %v870
    %v3686 = vunpack.c.l.b16 %v871
    %v3687 = vunpack.c.h.b16 %v871
    %v3688 = vunpack.c.l.b16 %v872
    %v3689 = vunpack.c.h.b16 %v872
    %v3690 = vunpack.c.l.b16 %v873
    %v3691 = vunpack.c.h.b16 %v873
    %v3692 = vunpack.c.l.b16 %v874
    %v3693 = vunpack.c.h.b16 %v874
    %v3694 = vunpack.c.l.b16 %v875
    %v3695 = vunpack.c.h.b16 %v875
    %v3696 = vunpack.c.l.b16 %v876
    %v3697 = vunpack.c.h.b16 %v876
    %v3698 = vunpack.c.l.b16 %v877
    %v3699 = vunpack.c.h.b16 %v877
    %v3700 = vunpack.c.l.b16 %v878
    %v3701 = vunpack.c.h.b16 %v878
    %v3702 = vunpack.c.l.b16 %v879
    %v3703 = vunpack.c.h.b16 %v879
    %v3704 = vunpack.c.l.b16 %v880
    %v3705 = vunpack.c.h.b16 %v880
    %v3706 = vunpack.c.l.b16 %v881
    %v3707 = vunpack.c.h.b16 %v881
    %v3708 = vunpack.c.l.b16 %v882
    %v3709 = vunpack.c.h.b16 %v882
    %v3710 = vunpack.c.l.b16 %v883
    %v3711 = vunpack.c.h.b16 %v883
    %v3712 = vunpack.c.l.b16 %v884
    %v3713 = vunpack.c.h.b16 %v884
    %v3714 = vunpack.c.l.b16 %v885
    %v3715 = vunpack.c.h.b16 %v885
    %v3716 = vunpack.c.l.b16 %v886
    %v3717 = vunpack.c.h.b16 %v886
    %v3718 = vunpack.c.l.b16 %v887
    %v3719 = vunpack.c.h.b16 %v887
    %v3720 = vunpack.c.l.b16 %v888
    %v3721 = vunpack.c.h.b16 %v888
    %v3722 = vunpack.c.l.b16 %v889
    %v3723 = vunpack.c.h.b16 %v889
    %v3724 = vunpack.c.l.b16 %v890
    %v3725 = vunpack.c.h.b16 %v890
    %v3726 = vunpack.c.l.b16 %v891
    %v3727 = vunpack.c.h.b16 %v891
    %v3728 = vunpack.c.l.b16 %v892
    %v3729 = vunpack.c.h.b16 %v892
    %v3730 = vunpack.c.l.b16 %v893
    %v3731 = vunpack.c.h.b16 %v893
    %v3732 = vunpack.c.l.b16 %v894
    %v3733 = vunpack.c.h.b16 %v894
    %v3734 = vunpack.c.l.b16 %v895
    %v3735 = vunpack.c.h.b16 %v895
    %v3736 = vunpack.c.l.b16 %v896
    %v3737 = vunpack.c.h.b16 %v896
    %v3738 = vunpack.c.l.b16 %v897
    %v3739 = vunpack.c.h.b16 %v897
    %v3740 = vunpack.c.l.b16 %v898
    %v3741 = vunpack.c.h.b16 %v898
    %v3742 = vunpack.c.l.b16 %v899
    %v3743 = vunpack.c.h.b16 %v899
    %v3744 = vunpack.c.l.b16 %v900
    %v3745 = vunpack.c.h.b16 %v900
    %v3746 = vunpack.c.l.b16 %v901
    %v3747 = vunpack.c.h.b16 %v901
    %v3748 = vunpack.c.l.b16 %v902
    %v3749 = vunpack.c.h.b16 %v902
    %v3750 = vunpack.c.l.b16 %v903
    %v3751 = vunpack.c.h.b16 %v903
    %v3752 = vunpack.c.l.b16 %v904
    %v3753 = vunpack.c.h.b16 %v904
    %v3754 = vunpack.c.l.b16 %v905
    %v3755 = vunpack.c.h.b16 %v905
    %v3756 = vunpack.c.l.b16 %v906
    %v3757 = vunpack.c.h.b16 %v906
    %v3758 = vunpack.c.l.b16 %v907
    %v3759 = vunpack.c.h.b16 %v907
    %v3760 = vunpack.c.l.b16 %v908
    %v3761 = vunpack.c.h.b16 %v908
    %v3762 = vunpack.c.l.b16 %v909
    %v3763 = vunpack.c.h.b16 %v909
    %v3764 = vunpack.c.l.b16 %v910
    %v3765 = vunpack.c.h.b16 %v910
    %v3766 = vunpack.c.l.b16 %v911
    %v3767 = vunpack.c.h.b16 %v911
    %v3768 = vunpack.c.l.b16 %v912
    %v3769 = vunpack.c.h.b16 %v912
    %v3770 = vunpack.c.l.b16 %v913
    %v3771 = vunpack.c.h.b16 %v913
    %v3772 = vunpack.c.l.b16 %v914
    %v3773 = vunpack.c.h.b16 %v914
    %v3774 = vunpack.c.l.b16 %v915
    %v3775 = vunpack.c.h.b16 %v915
    %v3776 = vunpack.c.l.b16 %v916
    %v3777 = vunpack.c.h.b16 %v916
    %v3778 = vunpack.c.l.b16 %v917
    %v3779 = vunpack.c.h.b16 %v917
    %v3780 = vunpack.c.l.b16 %v918
    %v3781 = vunpack.c.h.b16 %v918
    %v3782 = vunpack.c.l.b16 %v919
    %v3783 = vunpack.c.h.b16 %v919
    %v3784 = vunpack.c.l.b16 %v920
    %v3785 = vunpack.c.h.b16 %v920
    %v3786 = vunpack.c.l.b16 %v921
    %v3787 = vunpack.c.h.b16 %v921
    %v3788 = vunpack.c.l.b16 %v922
    %v3789 = vunpack.c.h.b16 %v922
    %v3790 = vunpack.c.l.b16 %v923
    %v3791 = vunpack.c.h.b16 %v923
    %v3792 = vunpack.c.l.b16 %v924
    %v3793 = vunpack.c.h.b16 %v924
    %v3794 = vunpack.c.l.b16 %v925
    %v3795 = vunpack.c.h.b16 %v925
    %v3796 = vunpack.c.l.b16 %v926
    %v3797 = vunpack.c.h.b16 %v926
    %v3798 = vunpack.c.l.b16 %v927
    %v3799 = vunpack.c.h.b16 %v927
    %v3800 = vunpack.c.l.b16 %v928
    %v3801 = vunpack.c.h.b16 %v928
    %v3802 = vunpack.c.l.b16 %v929
    %v3803 = vunpack.c.h.b16 %v929
    %v3804 = vunpack.c.l.b16 %v930
    %v3805 = vunpack.c.h.b16 %v930
    %v3806 = vunpack.c.l.b16 %v931
    %v3807 = vunpack.c.h.b16 %v931
    %v3808 = vunpack.c.l.b16 %v932
    %v3809 = vunpack.c.h.b16 %v932
    %v3810 = vunpack.c.l.b16 %v933
    %v3811 = vunpack.c.h.b16 %v933
    %v3812 = vunpack.c.l.b16 %v934
    %v3813 = vunpack.c.h.b16 %v934
    %v3814 = vunpack.c.l.b16 %v935
    %v3815 = vunpack.c.h.b16 %v935
    %v3816 = vunpack.c.l.b16 %v936
    %v3817 = vunpack.c.h.b16 %v936
    %v3818 = vunpack.c.l.b16 %v937
    %v3819 = vunpack.c.h.b16 %v937
    %v3820 = vunpack.c.l.b16 %v938
    %v3821 = vunpack.c.h.b16 %v938
    %v3822 = vunpack.c.l.b16 %v939
    %v3823 = vunpack.c.h.b16 %v939
    %v3824 = vunpack.c.l.b16 %v940
    %v3825 = vunpack.c.h.b16 %v940
    %v3826 = vunpack.c.l.b16 %v941
    %v3827 = vunpack.c.h.b16 %v941
    %v3828 = vunpack.c.l.b16 %v942
    %v3829 = vunpack.c.h.b16 %v942
    %v3830 = vunpack.c.l.b16 %v943
    %v3831 = vunpack.c.h.b16 %v943
    %v3832 = vunpack.c.l.b16 %v944
    %v3833 = vunpack.c.h.b16 %v944
    %v3834 = vunpack.c.l.b16 %v945
    %v3835 = vunpack.c.h.b16 %v945
    %v3836 = vunpack.c.l.b16 %v946
    %v3837 = vunpack.c.h.b16 %v946
    %v3838 = vunpack.c.l.b16 %v947
    %v3839 = vunpack.c.h.b16 %v947
    %v3840 = vunpack.c.l.b16 %v948
    %v3841 = vunpack.c.h.b16 %v948
    %v3842 = vunpack.c.l.b16 %v949
    %v3843 = vunpack.c.h.b16 %v949
    %v3844 = vunpack.c.l.b16 %v950
    %v3845 = vunpack.c.h.b16 %v950
    %v3846 = vunpack.c.l.b16 %v951
    %v3847 = vunpack.c.h.b16 %v951
    %v3848 = vunpack.c.l.b16 %v952
    %v3849 = vunpack.c.h.b16 %v952
    %v3850 = vunpack.c.l.b16 %v953
    %v3851 = vunpack.c.h.b16 %v953
    %v3852 = vunpack.c.l.b16 %v954
    %v3853 = vunpack.c.h.b16 %v954
    %v3854 = vunpack.c.l.b16 %v955
    %v3855 = vunpack.c.h.b16 %v955
    %v3856 = vunpack.c.l.b16 %v956
    %v3857 = vunpack.c.h.b16 %v956
    %v3858 = vunpack.c.l.b16 %v957
    %v3859 = vunpack.c.h.b16 %v957
    %v3860 = vunpack.c.l.b16 %v958
    %v3861 = vunpack.c.h.b16 %v958
    %v3862 = vunpack.c.l.b16 %v959
    %v3863 = vunpack.c.h.b16 %v959
    %v3864 = vunpack.c.l.b16 %v960
    %v3865 = vunpack.c.h.b16 %v960
    %v3866 = vunpack.c.l.b16 %v961
    %v3867 = vunpack.c.h.b16 %v961
    %v3868 = vunpack.c.l.b16 %v962
    %v3869 = vunpack.c.h.b16 %v962
    %v3870 = vunpack.c.l.b16 %v963
    %v3871 = vunpack.c.h.b16 %v963
    %v3872 = vunpack.c.l.b16 %v964
    %v3873 = vunpack.c.h.b16 %v964
    %v3874 = vunpack.c.l.b16 %v965
    %v3875 = vunpack.c.h.b16 %v965
    %v3876 = vunpack.c.l.b16 %v966
    %v3877 = vunpack.c.h.b16 %v966
    %v3878 = vunpack.c.l.b16 %v967
    %v3879 = vunpack.c.h.b16 %v967
    %v3880 = vunpack.c.l.b16 %v968
    %v3881 = vunpack.c.h.b16 %v968
    %v3882 = vunpack.c.l.b16 %v969
    %v3883 = vunpack.c.h.b16 %v969
    %v3884 = vunpack.c.l.b16 %v970
    %v3885 = vunpack.c.h.b16 %v970
    %v3886 = vunpack.c.l.b16 %v971
    %v3887 = vunpack.c.h.b16 %v971
    %v3888 = vunpack.c.l.b16 %v972
    %v3889 = vunpack.c.h.b16 %v972
    %v3890 = vunpack.c.l.b16 %v973
    %v3891 = vunpack.c.h.b16 %v973
    %v3892 = vunpack.c.l.b16 %v974
    %v3893 = vunpack.c.h.b16 %v974
    %v3894 = vunpack.c.l.b16 %v975
    %v3895 = vunpack.c.h.b16 %v975
    %v3896 = vunpack.c.l.b16 %v976
    %v3897 = vunpack.c.h.b16 %v976
    %v3898 = vunpack.c.l.b16 %v977
    %v3899 = vunpack.c.h.b16 %v977
    %v3900 = vunpack.c.l.b16 %v978
    %v3901 = vunpack.c.h.b16 %v978
    %v3902 = vunpack.c.l.b16 %v979
    %v3903 = vunpack.c.h.b16 %v979
    %v3904 = vunpack.c.l.b16 %v980
    %v3905 = vunpack.c.h.b16 %v980
    %v3906 = vunpack.c.l.b16 %v981
    %v3907 = vunpack.c.h.b16 %v981
    %v3908 = vunpack.c.l.b16 %v982
    %v3909 = vunpack.c.h.b16 %v982
    %v3910 = vunpack.c.l.b16 %v983
    %v3911 = vunpack.c.h.b16 %v983
    %v3912 = vunpack.c.l.b16 %v984
    %v3913 = vunpack.c.h.b16 %v984
    %v3914 = vunpack.c.l.b16 %v985
    %v3915 = vunpack.c.h.b16 %v985
    %v3916 = vunpack.c.l.b16 %v986
    %v3917 = vunpack.c.h.b16 %v986
    %v3918 = vunpack.c.l.b16 %v987
    %v3919 = vunpack.c.h.b16 %v987
    %v3920 = vunpack.c.l.b16 %v988
    %v3921 = vunpack.c.h.b16 %v988
    %v3922 = vunpack.c.l.b16 %v989
    %v3923 = vunpack.c.h.b16 %v989
    %v3924 = vunpack.c.l.b16 %v990
    %v3925 = vunpack.c.h.b16 %v990
    %v3926 = vunpack.c.l.b16 %v991
    %v3927 = vunpack.c.h.b16 %v991
    %v3928 = vunpack.c.l.b16 %v992
    %v3929 = vunpack.c.h.b16 %v992
    %v3930 = vunpack.c.l.b16 %v993
    %v3931 = vunpack.c.h.b16 %v993
    %v3932 = vunpack.c.l.b16 %v994
    %v3933 = vunpack.c.h.b16 %v994
    %v3934 = vunpack.c.l.b16 %v995
    %v3935 = vunpack.c.h.b16 %v995
    %v3936 = vunpack.c.l.b16 %v996
    %v3937 = vunpack.c.h.b16 %v996
    %v3938 = vunpack.c.l.b16 %v997
    %v3939 = vunpack.c.h.b16 %v997
    %v3940 = vunpack.c.l.b16 %v998
    %v3941 = vunpack.c.h.b16 %v998
    %v3942 = vunpack.c.l.b16 %v999
    %v3943 = vunpack.c.h.b16 %v999
    %v3944 = vunpack.c.l.b16 %v1000
    %v3945 = vunpack.c.h.b16 %v1000
    %v3946 = vunpack.c.l.b16 %v1001
    %v3947 = vunpack.c.h.b16 %v1001
    %v3948 = vunpack.c.l.b16 %v1002
    %v3949 = vunpack.c.h.b16 %v1002
    %v3950 = vunpack.c.l.b16 %v1003
    %v3951 = vunpack.c.h.b16 %v1003
    %v3952 = vunpack.c.l.b16 %v1004
    %v3953 = vunpack.c.h.b16 %v1004
    %v3954 = vunpack.c.l.b16 %v1005
    %v3955 = vunpack.c.h.b16 %v1005
    %v3956 = vunpack.c.l.b16 %v1006
    %v3957 = vunpack.c.h.b16 %v1006
    %v3958 = vunpack.c.l.b16 %v1007
    %v3959 = vunpack.c.h.b16 %v1007
    %v3960 = vunpack.c.l.b16 %v1008
    %v3961 = vunpack.c.h.b16 %v1008
    %v3962 = vunpack.c.l.b16 %v1009
    %v3963 = vunpack.c.h.b16 %v1009
    %v3964 = vunpack.c.l.b16 %v1010
    %v3965 = vunpack.c.h.b16 %v1010
    %v3966 = vunpack.c.l.b16 %v1011
    %v3967 = vunpack.c.h.b16 %v1011
    %v3968 = vunpack.c.l.b16 %v1012
    %v3969 = vunpack.c.h.b16 %v1012
    %v3970 = vunpack.c.l.b16 %v1013
    %v3971 = vunpack.c.h.b16 %v1013
    %v3972 = vunpack.c.l.b16 %v1014
    %v3973 = vunpack.c.h.b16 %v1014
    %v3974 = vunpack.c.l.b16 %v1015
    %v3975 = vunpack.c.h.b16 %v1015
    %v3976 = vunpack.c.l.b16 %v1016
    %v3977 = vunpack.c.h.b16 %v1016
    %v3978 = vunpack.c.l.b16 %v1017
    %v3979 = vunpack.c.h.b16 %v1017
    %v3980 = vunpack.c.l.b16 %v1018
    %v3981 = vunpack.c.h.b16 %v1018
    %v3982 = vunpack.c.l.b16 %v1019
    %v3983 = vunpack.c.h.b16 %v1019
    %v3984 = vunpack.c.l.b16 %v1020
    %v3985 = vunpack.c.h.b16 %v1020
    %v3986 = vunpack.c.l.b16 %v1021
    %v3987 = vunpack.c.h.b16 %v1021
    %v3988 = vunpack.c.l.b16 %v1022
    %v3989 = vunpack.c.h.b16 %v1022
    %v3990 = vunpack.c.l.b16 %v1023
    %v3991 = vunpack.c.h.b16 %v1023
    %v3992 = vunpack.c.l.b16 %v1024
    %v3993 = vunpack.c.h.b16 %v1024
    %v3994 = vunpack.c.l.b16 %v1025
    %v3995 = vunpack.c.h.b16 %v1025
    %v3996 = vunpack.c.l.b16 %v1026
    %v3997 = vunpack.c.h.b16 %v1026
    %v3998 = vunpack.c.l.b16 %v1027
    %v3999 = vunpack.c.h.b16 %v1027
    %v4000 = vunpack.c.l.b16 %v1028
    %v4001 = vunpack.c.h.b16 %v1028
    %v4002 = vunpack.c.l.b16 %v1029
    %v4003 = vunpack.c.h.b16 %v1029
    %v4004 = vunpack.c.l.b16 %v1030
    %v4005 = vunpack.c.h.b16 %v1030
    %v4006 = vunpack.c.l.b16 %v1031
    %v4007 = vunpack.c.h.b16 %v1031
    %v4008 = vunpack.c.l.b16 %v1032
    %v4009 = vunpack.c.h.b16 %v1032
    %v4010 = vunpack.c.l.b16 %v1033
    %v4011 = vunpack.c.h.b16 %v1033
    %v4012 = vunpack.c.l.b16 %v1034
    %v4013 = vunpack.c.h.b16 %v1034
    %v4014 = vunpack.c.l.b16 %v1035
    %v4015 = vunpack.c.h.b16 %v1035
    %v4016 = vunpack.c.l.b16 %v1036
    %v4017 = vunpack.c.h.b16 %v1036
    %v4018 = vunpack.c.l.b16 %v1037
    %v4019 = vunpack.c.h.b16 %v1037
    %v4020 = vunpack.c.l.b16 %v1038
    %v4021 = vunpack.c.h.b16 %v1038
    %v4022 = vunpack.c.l.b16 %v1039
    %v4023 = vunpack.c.h.b16 %v1039
    %v4024 = vunpack.c.l.b16 %v1040
    %v4025 = vunpack.c.h.b16 %v1040
    %v4026 = vunpack.c.l.b16 %v1041
    %v4027 = vunpack.c.h.b16 %v1041
    %v4028 = vunpack.c.l.b16 %v1042
    %v4029 = vunpack.c.h.b16 %v1042
    %v4030 = vunpack.c.l.b16 %v1043
    %v4031 = vunpack.c.h.b16 %v1043
    %v4032 = vunpack.c.l.b16 %v1044
    %v4033 = vunpack.c.h.b16 %v1044
    %v4034 = vunpack.c.l.b16 %v1045
    %v4035 = vunpack.c.h.b16 %v1045
    %v4036 = vunpack.c.l.b16 %v1046
    %v4037 = vunpack.c.h.b16 %v1046
    %v4038 = vunpack.c.l.b16 %v1047
    %v4039 = vunpack.c.h.b16 %v1047
    %v4040 = vunpack.c.l.b16 %v1048
    %v4041 = vunpack.c.h.b16 %v1048
    %v4042 = vunpack.c.l.b16 %v1049
    %v4043 = vunpack.c.h.b16 %v1049
    %v4044 = vunpack.c.l.b16 %v1050
    %v4045 = vunpack.c.h.b16 %v1050
    %v4046 = vunpack.c.l.b16 %v1051
    %v4047 = vunpack.c.h.b16 %v1051
    %v4048 = vunpack.c.l.b16 %v1052
    %v4049 = vunpack.c.h.b16 %v1052
    %v4050 = vunpack.c.l.b16 %v1053
    %v4051 = vunpack.c.h.b16 %v1053
    %v4052 = vunpack.c.l.b16 %v1054
    %v4053 = vunpack.c.h.b16 %v1054
    %v4054 = vunpack.c.l.b16 %v1055
    %v4055 = vunpack.c.h.b16 %v1055
    %v4056 = vunpack.c.l.b16 %v1056
    %v4057 = vunpack.c.h.b16 %v1056
    %v4058 = vunpack.c.l.b16 %v1057
    %v4059 = vunpack.c.h.b16 %v1057
    %v4060 = vunpack.c.l.b16 %v1058
    %v4061 = vunpack.c.h.b16 %v1058
    %v4062 = vunpack.c.l.b16 %v1059
    %v4063 = vunpack.c.h.b16 %v1059
    %v4064 = vunpack.c.l.b16 %v1060
    %v4065 = vunpack.c.h.b16 %v1060
    %v4066 = vunpack.c.l.b16 %v1061
    %v4067 = vunpack.c.h.b16 %v1061
    %v4068 = vunpack.c.l.b16 %v1062
    %v4069 = vunpack.c.h.b16 %v1062
    %v4070 = vunpack.c.l.b16 %v1063
    %v4071 = vunpack.c.h.b16 %v1063
    %v4072 = vunpack.c.l.b16 %v1064
    %v4073 = vunpack.c.h.b16 %v1064
    %v4074 = vunpack.c.l.b16 %v1065
    %v4075 = vunpack.c.h.b16 %v1065
    %v4076 = vunpack.c.l.b16 %v1066
    %v4077 = vunpack.c.h.b16 %v1066
    %v4078 = vunpack.c.l.b16 %v1067
    %v4079 = vunpack.c.h.b16 %v1067
    %v4080 = vunpack.c.l.b16 %v1068
    %v4081 = vunpack.c.h.b16 %v1068
    %v4082 = vunpack.c.l.b16 %v1069
    %v4083 = vunpack.c.h.b16 %v1069
    %v4084 = vunpack.c.l.b16 %v1070
    %v4085 = vunpack.c.h.b16 %v1070
    %v4086 = vunpack.c.l.b16 %v1071
    %v4087 = vunpack.c.h.b16 %v1071
    %v4088 = vunpack.c.l.b16 %v1072
    %v4089 = vunpack.c.h.b16 %v1072
    %v4090 = vunpack.c.l.b16 %v1073
    %v4091 = vunpack.c.h.b16 %v1073
    %v4092 = vunpack.c.l.b16 %v1074
    %v4093 = vunpack.c.h.b16 %v1074
    %v4094 = vunpack.c.l.b16 %v1075
    %v4095 = vunpack.c.h.b16 %v1075
    %v4096 = vunpack.c.l.b16 %v1076
    %v4097 = vunpack.c.h.b16 %v1076
    %v4098 = vunpack.c.l.b16 %v1077
    %v4099 = vunpack.c.h.b16 %v1077
    %v4100 = vunpack.c.l.b16 %v1078
    %v4101 = vunpack.c.h.b16 %v1078
    %v4102 = vunpack.c.l.b16 %v1079
    %v4103 = vunpack.c.h.b16 %v1079
    %v4104 = vunpack.c.l.b16 %v1080
    %v4105 = vunpack.c.h.b16 %v1080
    %v4106 = vunpack.c.l.b16 %v1081
    %v4107 = vunpack.c.h.b16 %v1081
    %v4108 = vunpack.c.l.b16 %v1082
    %v4109 = vunpack.c.h.b16 %v1082
    %v4110 = vunpack.c.l.b16 %v1083
    %v4111 = vunpack.c.h.b16 %v1083
    %v4112 = vunpack.c.l.b16 %v1084
    %v4113 = vunpack.c.h.b16 %v1084
    %v4114 = vunpack.c.l.b16 %v1085
    %v4115 = vunpack.c.h.b16 %v1085
    %v4116 = vunpack.c.l.b16 %v1086
    %v4117 = vunpack.c.h.b16 %v1086
    %v4118 = vunpack.c.l.b16 %v1087
    %v4119 = vunpack.c.h.b16 %v1087
    %v4120 = vunpack.c.l.b16 %v1088
    %v4121 = vunpack.c.h.b16 %v1088
    %v4122 = vunpack.c.l.b16 %v1089
    %v4123 = vunpack.c.h.b16 %v1089
    %v4124 = vunpack.c.l.b16 %v1090
    %v4125 = vunpack.c.h.b16 %v1090
    %v4126 = vunpack.c.l.b16 %v1091
    %v4127 = vunpack.c.h.b16 %v1091
    %v4128 = vunpack.c.l.b16 %v1092
    %v4129 = vunpack.c.h.b16 %v1092
    %v4130 = vunpack.c.l.b16 %v1093
    %v4131 = vunpack.c.h.b16 %v1093
    %v4132 = vunpack.c.l.b16 %v1094
    %v4133 = vunpack.c.h.b16 %v1094
    %v4134 = vunpack.c.l.b16 %v1095
    %v4135 = vunpack.c.h.b16 %v1095
    %v4136 = vunpack.c.l.b16 %v1096
    %v4137 = vunpack.c.h.b16 %v1096
    %v4138 = vunpack.c.l.b16 %v1097
    %v4139 = vunpack.c.h.b16 %v1097
    %v4140 = vunpack.c.l.b16 %v1098
    %v4141 = vunpack.c.h.b16 %v1098
    %v4142 = vunpack.c.l.b16 %v1099
    %v4143 = vunpack.c.h.b16 %v1099
    %v4144 = vunpack.c.l.b16 %v1100
    %v4145 = vunpack.c.h.b16 %v1100
    %v4146 = vunpack.c.l.b16 %v1101
    %v4147 = vunpack.c.h.b16 %v1101
    %v4148 = vunpack.c.l.b16 %v1102
    %v4149 = vunpack.c.h.b16 %v1102
    %v4150 = vunpack.c.l.b16 %v1103
    %v4151 = vunpack.c.h.b16 %v1103
    %v4152 = vunpack.c.l.b16 %v1104
    %v4153 = vunpack.c.h.b16 %v1104
    %v4154 = vunpack.c.l.b16 %v1105
    %v4155 = vunpack.c.h.b16 %v1105
    %v4156 = vunpack.c.l.b16 %v1106
    %v4157 = vunpack.c.h.b16 %v1106
    %v4158 = vunpack.c.l.b16 %v1107
    %v4159 = vunpack.c.h.b16 %v1107
    %v4160 = vunpack.c.l.b16 %v1108
    %v4161 = vunpack.c.h.b16 %v1108
    %v4162 = vunpack.c.l.b16 %v1109
    %v4163 = vunpack.c.h.b16 %v1109
    %v4164 = vunpack.c.l.b16 %v1110
    %v4165 = vunpack.c.h.b16 %v1110
    %v4166 = vunpack.c.l.b16 %v1111
    %v4167 = vunpack.c.h.b16 %v1111
    %v4168 = vunpack.c.l.b16 %v1112
    %v4169 = vunpack.c.h.b16 %v1112
    %v4170 = vunpack.c.l.b16 %v1113
    %v4171 = vunpack.c.h.b16 %v1113
    %v4172 = vunpack.c.l.b16 %v1114
    %v4173 = vunpack.c.h.b16 %v1114
    %v4174 = vunpack.c.l.b16 %v1115
    %v4175 = vunpack.c.h.b16 %v1115
    %v4176 = vunpack.c.l.b16 %v1116
    %v4177 = vunpack.c.h.b16 %v1116
    %v4178 = vunpack.c.l.b16 %v1117
    %v4179 = vunpack.c.h.b16 %v1117
    %v4180 = vunpack.c.l.b16 %v1118
    %v4181 = vunpack.c.h.b16 %v1118
    %v4182 = vunpack.c.l.b16 %v1119
    %v4183 = vunpack.c.h.b16 %v1119
    %v4184 = vunpack.c.l.b16 %v1120
    %v4185 = vunpack.c.h.b16 %v1120
    %v4186 = vunpack.c.l.b16 %v1121
    %v4187 = vunpack.c.h.b16 %v1121
    %v4188 = vunpack.c.l.b16 %v1122
    %v4189 = vunpack.c.h.b16 %v1122
    %v4190 = vunpack.c.l.b16 %v1123
    %v4191 = vunpack.c.h.b16 %v1123
    %v4192 = vunpack.c.l.b16 %v1124
    %v4193 = vunpack.c.h.b16 %v1124
    %v4194 = vunpack.c.l.b16 %v1125
    %v4195 = vunpack.c.h.b16 %v1125
    %v4196 = vunpack.c.l.b16 %v1126
    %v4197 = vunpack.c.h.b16 %v1126
    %v4198 = vunpack.c.l.b16 %v1127
    %v4199 = vunpack.c.h.b16 %v1127
    %v4200 = vpack.c.b16 %v2160, %v2152
    %v4201 = vpack.c.b16 %v2161, %v2153
    %v4202 = vpack.c.b16 %v2162, %v2154
    %v4203 = vpack.c.b16 %v2163, %v2155
    %v4204 = vpack.c.b16 %v2164, %v2156
    %v4205 = vpack.c.b16 %v2165, %v2157
    %v4206 = vpack.c.b16 %v2166, %v2158
    %v4207 = vpack.c.b16 %v2167, %v2159
    %v4208 = vpack.c.b16 %v2176, %v2168
    %v4209 = vpack.c.b16 %v2177, %v2169
    %v4210 = vpack.c.b16 %v2178, %v2170
    %v4211 = vpack.c.b16 %v2179, %v2171
    %v4212 = vpack.c.b16 %v2180, %v2172
    %v4213 = vpack.c.b16 %v2181, %v2173
    %v4214 = vpack.c.b16 %v2182, %v2174
    %v4215 = vpack.c.b16 %v2183, %v2175
    %v4216 = vpack.c.b16 %v2192, %v2184
    %v4217 = vpack.c.b16 %v2193, %v2185
    %v4218 = vpack.c.b16 %v2194, %v2186
    %v4219 = vpack.c.b16 %v2195, %v2187
    %v4220 = vpack.c.b16 %v2196, %v2188
    %v4221 = vpack.c.b16 %v2197, %v2189
    %v4222 = vpack.c.b16 %v2198, %v2190
    %v4223 = vpack.c.b16 %v2199, %v2191
    %v4224 = vpack.c.b16 %v2208, %v2200
    %v4225 = vpack.c.b16 %v2209, %v2201
    %v4226 = vpack.c.b16 %v2210, %v2202
    %v4227 = vpack.c.b16 %v2211, %v2203
    %v4228 = vpack.c.b16 %v2212, %v2204
    %v4229 = vpack.c.b16 %v2213, %v2205
    %v4230 = vpack.c.b16 %v2214, %v2206
    %v4231 = vpack.c.b16 %v2215, %v2207
    %v4232 = vpack.c.b16 %v2224, %v2216
    %v4233 = vpack.c.b16 %v2225, %v2217
    %v4234 = vpack.c.b16 %v2226, %v2218
    %v4235 = vpack.c.b16 %v2227, %v2219
    %v4236 = vpack.c.b16 %v2228, %v2220
    %v4237 = vpack.c.b16 %v2229, %v2221
    %v4238 = vpack.c.b16 %v2230, %v2222
    %v4239 = vpack.c.b16 %v2231, %v2223
    %v4240 = vpack.c.b16 %v2240, %v2232
    %v4241 = vpack.c.b16 %v2241, %v2233
    %v4242 = vpack.c.b16 %v2242, %v2234
    %v4243 = vpack.c.b16 %v2243, %v2235
    %v4244 = vpack.c.b16 %v2244, %v2236
    %v4245 = vpack.c.b16 %v2245, %v2237
    %v4246 = vpack.c.b16 %v2246, %v2238
    %v4247 = vpack.c.b16 %v2247, %v2239
    %v4248 = vpack.c.b16 %v2256, %v2248
    %v4249 = vpack.c.b16 %v2257, %v2249
    %v4250 = vpack.c.b16 %v2258, %v2250
    %v4251 = vpack.c.b16 %v2259, %v2251
    %v4252 = vpack.c.b16 %v2260, %v2252
    %v4253 = vpack.c.b16 %v2261, %v2253
    %v4254 = vpack.c.b16 %v2262, %v2254
    %v4255 = vpack.c.b16 %v2263, %v2255
    %v4256 = vpack.c.b16 %v2272, %v2264
    %v4257 = vpack.c.b16 %v2273, %v2265
    %v4258 = vpack.c.b16 %v2274, %v2266
    %v4259 = vpack.c.b16 %v2275, %v2267
    %v4260 = vpack.c.b16 %v2276, %v2268
    %v4261 = vpack.c.b16 %v2277, %v2269
    %v4262 = vpack.c.b16 %v2278, %v2270
    %v4263 = vpack.c.b16 %v2279, %v2271
    %v4264 = vpack.c.b16 %v2288, %v2280
    %v4265 = vpack.c.b16 %v2289, %v2281
    %v4266 = vpack.c.b16 %v2290, %v2282
    %v4267 = vpack.c.b16 %v2291, %v2283
    %v4268 = vpack.c.b16 %v2292, %v2284
    %v4269 = vpack.c.b16 %v2293, %v2285
    %v4270 = vpack.c.b16 %v2294, %v2286
    %v4271 = vpack.c.b16 %v2295, %v2287
    %v4272 = vpack.c.b16 %v2304, %v2296
    %v4273 = vpack.c.b16 %v2305, %v2297
    %v4274 = vpack.c.b16 %v2306, %v2298
    %v4275 = vpack.c.b16 %v2307, %v2299
    %v4276 = vpack.c.b16 %v2308, %v2300
    %v4277 = vpack.c.b16 %v2309, %v2301
    %v4278 = vpack.c.b16 %v2310, %v2302
    %v4279 = vpack.c.b16 %v2311, %v2303
    %v4280 = vpack.c.b16 %v2320, %v2312
    %v4281 = vpack.c.b16 %v2321, %v2313
    %v4282 = vpack.c.b16 %v2322, %v2314
    %v4283 = vpack.c.b16 %v2323, %v2315
    %v4284 = vpack.c.b16 %v2324, %v2316
    %v4285 = vpack.c.b16 %v2325, %v2317
    %v4286 = vpack.c.b16 %v2326, %v2318
    %v4287 = vpack.c.b16 %v2327, %v2319
    %v4288 = vpack.c.b16 %v2336, %v2328
    %v4289 = vpack.c.b16 %v2337, %v2329
    %v4290 = vpack.c.b16 %v2338, %v2330
    %v4291 = vpack.c.b16 %v2339, %v2331
    %v4292 = vpack.c.b16 %v2340, %v2332
    %v4293 = vpack.c.b16 %v2341, %v2333
    %v4294 = vpack.c.b16 %v2342, %v2334
    %v4295 = vpack.c.b16 %v2343, %v2335
    %v4296 = vpack.c.b16 %v2352, %v2344
    %v4297 = vpack.c.b16 %v2353, %v2345
    %v4298 = vpack.c.b16 %v2354, %v2346
    %v4299 = vpack.c.b16 %v2355, %v2347
    %v4300 = vpack.c.b16 %v2356, %v2348
    %v4301 = vpack.c.b16 %v2357, %v2349
    %v4302 = vpack.c.b16 %v2358, %v2350
    %v4303 = vpack.c.b16 %v2359, %v2351
    %v4304 = vpack.c.b16 %v2368, %v2360
    %v4305 = vpack.c.b16 %v2369, %v2361
    %v4306 = vpack.c.b16 %v2370, %v2362
    %v4307 = vpack.c.b16 %v2371, %v2363
    %v4308 = vpack.c.b16 %v2372, %v2364
    %v4309 = vpack.c.b16 %v2373, %v2365
    %v4310 = vpack.c.b16 %v2374, %v2366
    %v4311 = vpack.c.b16 %v2375, %v2367
    %v4312 = vpack.c.b16 %v2384, %v2376
    %v4313 = vpack.c.b16 %v2385, %v2377
    %v4314 = vpack.c.b16 %v2386, %v2378
    %v4315 = vpack.c.b16 %v2387, %v2379
    %v4316 = vpack.c.b16 %v2388, %v2380
    %v4317 = vpack.c.b16 %v2389, %v2381
    %v4318 = vpack.c.b16 %v2390, %v2382
    %v4319 = vpack.c.b16 %v2391, %v2383
    %v4320 = vpack.c.b16 %v2400, %v2392
    %v4321 = vpack.c.b16 %v2401, %v2393
    %v4322 = vpack.c.b16 %v2402, %v2394
    %v4323 = vpack.c.b16 %v2403, %v2395
    %v4324 = vpack.c.b16 %v2404, %v2396
    %v4325 = vpack.c.b16 %v2405, %v2397
    %v4326 = vpack.c.b16 %v2406, %v2398
    %v4327 = vpack.c.b16 %v2407, %v2399
    %v4328 = vpack.c.b16 %v2416, %v2408
    %v4329 = vpack.c.b16 %v2417, %v2409
    %v4330 = vpack.c.b16 %v2418, %v2410
    %v4331 = vpack.c.b16 %v2419, %v2411
    %v4332 = vpack.c.b16 %v2420, %v2412
    %v4333 = vpack.c.b16 %v2421, %v2413
    %v4334 = vpack.c.b16 %v2422, %v2414
    %v4335 = vpack.c.b16 %v2423, %v2415
    %v4336 = vpack.c.b16 %v2432, %v2424
    %v4337 = vpack.c.b16 %v2433, %v2425
    %v4338 = vpack.c.b16 %v2434, %v2426
    %v4339 = vpack.c.b16 %v2435, %v2427
    %v4340 = vpack.c.b16 %v2436, %v2428
    %v4341 = vpack.c.b16 %v2437, %v2429
    %v4342 = vpack.c.b16 %v2438, %v2430
    %v4343 = vpack.c.b16 %v2439, %v2431
    %v4344 = vpack.c.b16 %v2448, %v2440
    %v4345 = vpack.c.b16 %v2449, %v2441
    %v4346 = vpack.c.b16 %v2450, %v2442
    %v4347 = vpack.c.b16 %v2451, %v2443
    %v4348 = vpack.c.b16 %v2452, %v2444
    %v4349 = vpack.c.b16 %v2453, %v2445
    %v4350 = vpack.c.b16 %v2454, %v2446
    %v4351 = vpack.c.b16 %v2455, %v2447
    %v4352 = vpack.c.b16 %v2464, %v2456
    %v4353 = vpack.c.b16 %v2465, %v2457
    %v4354 = vpack.c.b16 %v2466, %v2458
    %v4355 = vpack.c.b16 %v2467, %v2459
    %v4356 = vpack.c.b16 %v2468, %v2460
    %v4357 = vpack.c.b16 %v2469, %v2461
    %v4358 = vpack.c.b16 %v2470, %v2462
    %v4359 = vpack.c.b16 %v2471, %v2463
    %v4360 = vpack.c.b16 %v2480, %v2472
    %v4361 = vpack.c.b16 %v2481, %v2473
    %v4362 = vpack.c.b16 %v2482, %v2474
    %v4363 = vpack.c.b16 %v2483, %v2475
    %v4364 = vpack.c.b16 %v2484, %v2476
    %v4365 = vpack.c.b16 %v2485, %v2477
    %v4366 = vpack.c.b16 %v2486, %v2478
    %v4367 = vpack.c.b16 %v2487, %v2479
    %v4368 = vpack.c.b16 %v2496, %v2488
    %v4369 = vpack.c.b16 %v2497, %v2489
    %v4370 = vpack.c.b16 %v2498, %v2490
    %v4371 = vpack.c.b16 %v2499, %v2491
    %v4372 = vpack.c.b16 %v2500, %v2492
    %v4373 = vpack.c.b16 %v2501, %v2493
    %v4374 = vpack.c.b16 %v2502, %v2494
    %v4375 = vpack.c.b16 %v2503, %v2495
    %v4376 = vpack.c.b16 %v2512, %v2504
    %v4377 = vpack.c.b16 %v2513, %v2505
    %v4378 = vpack.c.b16 %v2514, %v2506
    %v4379 = vpack.c.b16 %v2515, %v2507
    %v4380 = vpack.c.b16 %v2516, %v2508
    %v4381 = vpack.c.b16 %v2517, %v2509
    %v4382 = vpack.c.b16 %v2518, %v2510
    %v4383 = vpack.c.b16 %v2519, %v2511
    %v4384 = vpack.c.b16 %v2528, %v2520
    %v4385 = vpack.c.b16 %v2529, %v2521
    %v4386 = vpack.c.b16 %v2530, %v2522
    %v4387 = vpack.c.b16 %v2531, %v2523
    %v4388 = vpack.c.b16 %v2532, %v2524
    %v4389 = vpack.c.b16 %v2533, %v2525
    %v4390 = vpack.c.b16 %v2534, %v2526
    %v4391 = vpack.c.b16 %v2535, %v2527
    %v4392 = vpack.c.b16 %v2544, %v2536
    %v4393 = vpack.c.b16 %v2545, %v2537
    %v4394 = vpack.c.b16 %v2546, %v2538
    %v4395 = vpack.c.b16 %v2547, %v2539
    %v4396 = vpack.c.b16 %v2548, %v2540
    %v4397 = vpack.c.b16 %v2549, %v2541
    %v4398 = vpack.c.b16 %v2550, %v2542
    %v4399 = vpack.c.b16 %v2551, %v2543
    %v4400 = vpack.c.b16 %v2560, %v2552
    %v4401 = vpack.c.b16 %v2561, %v2553
    %v4402 = vpack.c.b16 %v2562, %v2554
    %v4403 = vpack.c.b16 %v2563, %v2555
    %v4404 = vpack.c.b16 %v2564, %v2556
    %v4405 = vpack.c.b16 %v2565, %v2557
    %v4406 = vpack.c.b16 %v2566, %v2558
    %v4407 = vpack.c.b16 %v2567, %v2559
    %v4408 = vpack.c.b16 %v2576, %v2568
    %v4409 = vpack.c.b16 %v2577, %v2569
    %v4410 = vpack.c.b16 %v2578, %v2570
    %v4411 = vpack.c.b16 %v2579, %v2571
    %v4412 = vpack.c.b16 %v2580, %v2572
    %v4413 = vpack.c.b16 %v2581, %v2573
    %v4414 = vpack.c.b16 %v2582, %v2574
    %v4415 = vpack.c.b16 %v2583, %v2575
    %v4416 = vpack.c.b16 %v2592, %v2584
    %v4417 = vpack.c.b16 %v2593, %v2585
    %v4418 = vpack.c.b16 %v2594, %v2586
    %v4419 = vpack.c.b16 %v2595, %v2587
    %v4420 = vpack.c.b16 %v2596, %v2588
    %v4421 = vpack.c.b16 %v2597, %v2589
    %v4422 = vpack.c.b16 %v2598, %v2590
    %v4423 = vpack.c.b16 %v2599, %v2591
    %v4424 = vpack.c.b16 %v2608, %v2600
    %v4425 = vpack.c.b16 %v2609, %v2601
    %v4426 = vpack.c.b16 %v2610, %v2602
    %v4427 = vpack.c.b16 %v2611, %v2603
    %v4428 = vpack.c.b16 %v2612, %v2604
    %v4429 = vpack.c.b16 %v2613, %v2605
    %v4430 = vpack.c.b16 %v2614, %v2606
    %v4431 = vpack.c.b16 %v2615, %v2607
    %v4432 = vpack.c.b16 %v2624, %v2616
    %v4433 = vpack.c.b16 %v2625, %v2617
    %v4434 = vpack.c.b16 %v2626, %v2618
    %v4435 = vpack.c.b16 %v2627, %v2619
    %v4436 = vpack.c.b16 %v2628, %v2620
    %v4437 = vpack.c.b16 %v2629, %v2621
    %v4438 = vpack.c.b16 %v2630, %v2622
    %v4439 = vpack.c.b16 %v2631, %v2623
    %v4440 = vpack.c.b16 %v2640, %v2632
    %v4441 = vpack.c.b16 %v2641, %v2633
    %v4442 = vpack.c.b16 %v2642, %v2634
    %v4443 = vpack.c.b16 %v2643, %v2635
    %v4444 = vpack.c.b16 %v2644, %v2636
    %v4445 = vpack.c.b16 %v2645, %v2637
    %v4446 = vpack.c.b16 %v2646, %v2638
    %v4447 = vpack.c.b16 %v2647, %v2639
    %v4448 = vpack.c.b16 %v2656, %v2648
    %v4449 = vpack.c.b16 %v2657, %v2649
    %v4450 = vpack.c.b16 %v2658, %v2650
    %v4451 = vpack.c.b16 %v2659, %v2651
    %v4452 = vpack.c.b16 %v2660, %v2652
    %v4453 = vpack.c.b16 %v2661, %v2653
    %v4454 = vpack.c.b16 %v2662, %v2654
    %v4455 = vpack.c.b16 %v2663, %v2655
    %v4456 = vpack.c.b16 %v2672, %v2664
    %v4457 = vpack.c.b16 %v2673, %v2665
    %v4458 = vpack.c.b16 %v2674, %v2666
    %v4459 = vpack.c.b16 %v2675, %v2667
    %v4460 = vpack.c.b16 %v2676, %v2668
    %v4461 = vpack.c.b16 %v2677, %v2669
    %v4462 = vpack.c.b16 %v2678, %v2670
    %v4463 = vpack.c.b16 %v2679, %v2671
    %v4464 = vpack.c.b16 %v2688, %v2680
    %v4465 = vpack.c.b16 %v2689, %v2681
    %v4466 = vpack.c.b16 %v2690, %v2682
    %v4467 = vpack.c.b16 %v2691, %v2683
    %v4468 = vpack.c.b16 %v2692, %v2684
    %v4469 = vpack.c.b16 %v2693, %v2685
    %v4470 = vpack.c.b16 %v2694, %v2686
    %v4471 = vpack.c.b16 %v2695, %v2687
    %v4472 = vpack.c.b16 %v2704, %v2696
    %v4473 = vpack.c.b16 %v2705, %v2697
    %v4474 = vpack.c.b16 %v2706, %v2698
    %v4475 = vpack.c.b16 %v2707, %v2699
    %v4476 = vpack.c.b16 %v2708, %v2700
    %v4477 = vpack.c.b16 %v2709, %v2701
    %v4478 = vpack.c.b16 %v2710, %v2702
    %v4479 = vpack.c.b16 %v2711, %v2703
    %v4480 = vpack.c.b16 %v2720, %v2712
    %v4481 = vpack.c.b16 %v2721, %v2713
    %v4482 = vpack.c.b16 %v2722, %v2714
    %v4483 = vpack.c.b16 %v2723, %v2715
    %v4484 = vpack.c.b16 %v2724, %v2716
    %v4485 = vpack.c.b16 %v2725, %v2717
    %v4486 = vpack.c.b16 %v2726, %v2718
    %v4487 = vpack.c.b16 %v2727, %v2719
    %v4488 = vpack.c.b16 %v2736, %v2728
    %v4489 = vpack.c.b16 %v2737, %v2729
    %v4490 = vpack.c.b16 %v2738, %v2730
    %v4491 = vpack.c.b16 %v2739, %v2731
    %v4492 = vpack.c.b16 %v2740, %v2732
    %v4493 = vpack.c.b16 %v2741, %v2733
    %v4494 = vpack.c.b16 %v2742, %v2734
    %v4495 = vpack.c.b16 %v2743, %v2735
    %v4496 = vpack.c.b16 %v2752, %v2744
    %v4497 = vpack.c.b16 %v2753, %v2745
    %v4498 = vpack.c.b16 %v2754, %v2746
    %v4499 = vpack.c.b16 %v2755, %v2747
    %v4500 = vpack.c.b16 %v2756, %v2748
    %v4501 = vpack.c.b16 %v2757, %v2749
    %v4502 = vpack.c.b16 %v2758, %v2750
    %v4503 = vpack.c.b16 %v2759, %v2751
    %v4504 = vpack.c.b16 %v2768, %v2760
    %v4505 = vpack.c.b16 %v2769, %v2761
    %v4506 = vpack.c.b16 %v2770, %v2762
    %v4507 = vpack.c.b16 %v2771, %v2763
    %v4508 = vpack.c.b16 %v2772, %v2764
    %v4509 = vpack.c.b16 %v2773, %v2765
    %v4510 = vpack.c.b16 %v2774, %v2766
    %v4511 = vpack.c.b16 %v2775, %v2767
    %v4512 = vpack.c.b16 %v2784, %v2776
    %v4513 = vpack.c.b16 %v2785, %v2777
    %v4514 = vpack.c.b16 %v2786, %v2778
    %v4515 = vpack.c.b16 %v2787, %v2779
    %v4516 = vpack.c.b16 %v2788, %v2780
    %v4517 = vpack.c.b16 %v2789, %v2781
    %v4518 = vpack.c.b16 %v2790, %v2782
    %v4519 = vpack.c.b16 %v2791, %v2783
    %v4520 = vpack.c.b16 %v2800, %v2792
    %v4521 = vpack.c.b16 %v2801, %v2793
    %v4522 = vpack.c.b16 %v2802, %v2794
    %v4523 = vpack.c.b16 %v2803, %v2795
    %v4524 = vpack.c.b16 %v2804, %v2796
    %v4525 = vpack.c.b16 %v2805, %v2797
    %v4526 = vpack.c.b16 %v2806, %v2798
    %v4527 = vpack.c.b16 %v2807, %v2799
    %v4528 = vpack.c.b16 %v2816, %v2808
    %v4529 = vpack.c.b16 %v2817, %v2809
    %v4530 = vpack.c.b16 %v2818, %v2810
    %v4531 = vpack.c.b16 %v2819, %v2811
    %v4532 = vpack.c.b16 %v2820, %v2812
    %v4533 = vpack.c.b16 %v2821, %v2813
    %v4534 = vpack.c.b16 %v2822, %v2814
    %v4535 = vpack.c.b16 %v2823, %v2815
    %v4536 = vpack.c.b16 %v2832, %v2824
    %v4537 = vpack.c.b16 %v2833, %v2825
    %v4538 = vpack.c.b16 %v2834, %v2826
    %v4539 = vpack.c.b16 %v2835, %v2827
    %v4540 = vpack.c.b16 %v2836, %v2828
    %v4541 = vpack.c.b16 %v2837, %v2829
    %v4542 = vpack.c.b16 %v2838, %v2830
    %v4543 = vpack.c.b16 %v2839, %v2831
    %v4544 = vpack.c.b16 %v2848, %v2840
    %v4545 = vpack.c.b16 %v2849, %v2841
    %v4546 = vpack.c.b16 %v2850, %v2842
    %v4547 = vpack.c.b16 %v2851, %v2843
    %v4548 = vpack.c.b16 %v2852, %v2844
    %v4549 = vpack.c.b16 %v2853, %v2845
    %v4550 = vpack.c.b16 %v2854, %v2846
    %v4551 = vpack.c.b16 %v2855, %v2847
    %v4552 = vpack.c.b16 %v2864, %v2856
    %v4553 = vpack.c.b16 %v2865, %v2857
    %v4554 = vpack.c.b16 %v2866, %v2858
    %v4555 = vpack.c.b16 %v2867, %v2859
    %v4556 = vpack.c.b16 %v2868, %v2860
    %v4557 = vpack.c.b16 %v2869, %v2861
    %v4558 = vpack.c.b16 %v2870, %v2862
    %v4559 = vpack.c.b16 %v2871, %v2863
    %v4560 = vpack.c.b16 %v2880, %v2872
    %v4561 = vpack.c.b16 %v2881, %v2873
    %v4562 = vpack.c.b16 %v2882, %v2874
    %v4563 = vpack.c.b16 %v2883, %v2875
    %v4564 = vpack.c.b16 %v2884, %v2876
    %v4565 = vpack.c.b16 %v2885, %v2877
    %v4566 = vpack.c.b16 %v2886, %v2878
    %v4567 = vpack.c.b16 %v2887, %v2879
    %v4568 = vpack.c.b16 %v2896, %v2888
    %v4569 = vpack.c.b16 %v2897, %v2889
    %v4570 = vpack.c.b16 %v2898, %v2890
    %v4571 = vpack.c.b16 %v2899, %v2891
    %v4572 = vpack.c.b16 %v2900, %v2892
    %v4573 = vpack.c.b16 %v2901, %v2893
    %v4574 = vpack.c.b16 %v2902, %v2894
    %v4575 = vpack.c.b16 %v2903, %v2895
    %v4576 = vpack.c.b16 %v2912, %v2904
    %v4577 = vpack.c.b16 %v2913, %v2905
    %v4578 = vpack.c.b16 %v2914, %v2906
    %v4579 = vpack.c.b16 %v2915, %v2907
    %v4580 = vpack.c.b16 %v2916, %v2908
    %v4581 = vpack.c.b16 %v2917, %v2909
    %v4582 = vpack.c.b16 %v2918, %v2910
    %v4583 = vpack.c.b16 %v2919, %v2911
    %v4584 = vpack.c.b16 %v2928, %v2920
    %v4585 = vpack.c.b16 %v2929, %v2921
    %v4586 = vpack.c.b16 %v2930, %v2922
    %v4587 = vpack.c.b16 %v2931, %v2923
    %v4588 = vpack.c.b16 %v2932, %v2924
    %v4589 = vpack.c.b16 %v2933, %v2925
    %v4590 = vpack.c.b16 %v2934, %v2926
    %v4591 = vpack.c.b16 %v2935, %v2927
    %v4592 = vpack.c.b16 %v2944, %v2936
    %v4593 = vpack.c.b16 %v2945, %v2937
    %v4594 = vpack.c.b16 %v2946, %v2938
    %v4595 = vpack.c.b16 %v2947, %v2939
    %v4596 = vpack.c.b16 %v2948, %v2940
    %v4597 = vpack.c.b16 %v2949, %v2941
    %v4598 = vpack.c.b16 %v2950, %v2942
    %v4599 = vpack.c.b16 %v2951, %v2943
    %v4600 = vpack.c.b16 %v2960, %v2952
    %v4601 = vpack.c.b16 %v2961, %v2953
    %v4602 = vpack.c.b16 %v2962, %v2954
    %v4603 = vpack.c.b16 %v2963, %v2955
    %v4604 = vpack.c.b16 %v2964, %v2956
    %v4605 = vpack.c.b16 %v2965, %v2957
    %v4606 = vpack.c.b16 %v2966, %v2958
    %v4607 = vpack.c.b16 %v2967, %v2959
    %v4608 = vpack.c.b16 %v2976, %v2968
    %v4609 = vpack.c.b16 %v2977, %v2969
    %v4610 = vpack.c.b16 %v2978, %v2970
    %v4611 = vpack.c.b16 %v2979, %v2971
    %v4612 = vpack.c.b16 %v2980, %v2972
    %v4613 = vpack.c.b16 %v2981, %v2973
    %v4614 = vpack.c.b16 %v2982, %v2974
    %v4615 = vpack.c.b16 %v2983, %v2975
    %v4616 = vpack.c.b16 %v2992, %v2984
    %v4617 = vpack.c.b16 %v2993, %v2985
    %v4618 = vpack.c.b16 %v2994, %v2986
    %v4619 = vpack.c.b16 %v2995, %v2987
    %v4620 = vpack.c.b16 %v2996, %v2988
    %v4621 = vpack.c.b16 %v2997, %v2989
    %v4622 = vpack.c.b16 %v2998, %v2990
    %v4623 = vpack.c.b16 %v2999, %v2991
    %v4624 = vpack.c.b16 %v3008, %v3000
    %v4625 = vpack.c.b16 %v3009, %v3001
    %v4626 = vpack.c.b16 %v3010, %v3002
    %v4627 = vpack.c.b16 %v3011, %v3003
    %v4628 = vpack.c.b16 %v3012, %v3004
    %v4629 = vpack.c.b16 %v3013, %v3005
    %v4630 = vpack.c.b16 %v3014, %v3006
    %v4631 = vpack.c.b16 %v3015, %v3007
    %v4632 = vpack.c.b16 %v3024, %v3016
    %v4633 = vpack.c.b16 %v3025, %v3017
    %v4634 = vpack.c.b16 %v3026, %v3018
    %v4635 = vpack.c.b16 %v3027, %v3019
    %v4636 = vpack.c.b16 %v3028, %v3020
    %v4637 = vpack.c.b16 %v3029, %v3021
    %v4638 = vpack.c.b16 %v3030, %v3022
    %v4639 = vpack.c.b16 %v3031, %v3023
    %v4640 = vpack.c.b16 %v3040, %v3032
    %v4641 = vpack.c.b16 %v3041, %v3033
    %v4642 = vpack.c.b16 %v3042, %v3034
    %v4643 = vpack.c.b16 %v3043, %v3035
    %v4644 = vpack.c.b16 %v3044, %v3036
    %v4645 = vpack.c.b16 %v3045, %v3037
    %v4646 = vpack.c.b16 %v3046, %v3038
    %v4647 = vpack.c.b16 %v3047, %v3039
    %v4648 = vpack.c.b16 %v3056, %v3048
    %v4649 = vpack.c.b16 %v3057, %v3049
    %v4650 = vpack.c.b16 %v3058, %v3050
    %v4651 = vpack.c.b16 %v3059, %v3051
    %v4652 = vpack.c.b16 %v3060, %v3052
    %v4653 = vpack.c.b16 %v3061, %v3053
    %v4654 = vpack.c.b16 %v3062, %v3054
    %v4655 = vpack.c.b16 %v3063, %v3055
    %v4656 = vpack.c.b16 %v3072, %v3064
    %v4657 = vpack.c.b16 %v3073, %v3065
    %v4658 = vpack.c.b16 %v3074, %v3066
    %v4659 = vpack.c.b16 %v3075, %v3067
    %v4660 = vpack.c.b16 %v3076, %v3068
    %v4661 = vpack.c.b16 %v3077, %v3069
    %v4662 = vpack.c.b16 %v3078, %v3070
    %v4663 = vpack.c.b16 %v3079, %v3071
    %v4664 = vpack.c.b16 %v3088, %v3080
    %v4665 = vpack.c.b16 %v3089, %v3081
    %v4666 = vpack.c.b16 %v3090, %v3082
    %v4667 = vpack.c.b16 %v3091, %v3083
    %v4668 = vpack.c.b16 %v3092, %v3084
    %v4669 = vpack.c.b16 %v3093, %v3085
    %v4670 = vpack.c.b16 %v3094, %v3086
    %v4671 = vpack.c.b16 %v3095, %v3087
    %v4672 = vpack.c.b16 %v3104, %v3096
    %v4673 = vpack.c.b16 %v3105, %v3097
    %v4674 = vpack.c.b16 %v3106, %v3098
    %v4675 = vpack.c.b16 %v3107, %v3099
    %v4676 = vpack.c.b16 %v3108, %v3100
    %v4677 = vpack.c.b16 %v3109, %v3101
    %v4678 = vpack.c.b16 %v3110, %v3102
    %v4679 = vpack.c.b16 %v3111, %v3103
    %v4680 = vpack.c.b16 %v3120, %v3112
    %v4681 = vpack.c.b16 %v3121, %v3113
    %v4682 = vpack.c.b16 %v3122, %v3114
    %v4683 = vpack.c.b16 %v3123, %v3115
    %v4684 = vpack.c.b16 %v3124, %v3116
    %v4685 = vpack.c.b16 %v3125, %v3117
    %v4686 = vpack.c.b16 %v3126, %v3118
    %v4687 = vpack.c.b16 %v3127, %v3119
    %v4688 = vpack.c.b16 %v3136, %v3128
    %v4689 = vpack.c.b16 %v3137, %v3129
    %v4690 = vpack.c.b16 %v3138, %v3130
    %v4691 = vpack.c.b16 %v3139, %v3131
    %v4692 = vpack.c.b16 %v3140, %v3132
    %v4693 = vpack.c.b16 %v3141, %v3133
    %v4694 = vpack.c.b16 %v3142, %v3134
    %v4695 = vpack.c.b16 %v3143, %v3135
    %v4696 = vpack.c.b16 %v3152, %v3144
    %v4697 = vpack.c.b16 %v3153, %v3145
    %v4698 = vpack.c.b16 %v3154, %v3146
    %v4699 = vpack.c.b16 %v3155, %v3147
    %v4700 = vpack.c.b16 %v3156, %v3148
    %v4701 = vpack.c.b16 %v3157, %v3149
    %v4702 = vpack.c.b16 %v3158, %v3150
    %v4703 = vpack.c.b16 %v3159, %v3151
    %v4704 = vpack.c.b16 %v3168, %v3160
    %v4705 = vpack.c.b16 %v3169, %v3161
    %v4706 = vpack.c.b16 %v3170, %v3162
    %v4707 = vpack.c.b16 %v3171, %v3163
    %v4708 = vpack.c.b16 %v3172, %v3164
    %v4709 = vpack.c.b16 %v3173, %v3165
    %v4710 = vpack.c.b16 %v3174, %v3166
    %v4711 = vpack.c.b16 %v3175, %v3167
    %v4712 = vpack.c.b16 %v3184, %v3176
    %v4713 = vpack.c.b16 %v3185, %v3177
    %v4714 = vpack.c.b16 %v3186, %v3178
    %v4715 = vpack.c.b16 %v3187, %v3179
    %v4716 = vpack.c.b16 %v3188, %v3180
    %v4717 = vpack.c.b16 %v3189, %v3181
    %v4718 = vpack.c.b16 %v3190, %v3182
    %v4719 = vpack.c.b16 %v3191, %v3183
    %v4720 = vpack.c.b16 %v3200, %v3192
    %v4721 = vpack.c.b16 %v3201, %v3193
    %v4722 = vpack.c.b16 %v3202, %v3194
    %v4723 = vpack.c.b16 %v3203, %v3195
    %v4724 = vpack.c.b16 %v3204, %v3196
    %v4725 = vpack.c.b16 %v3205, %v3197
    %v4726 = vpack.c.b16 %v3206, %v3198
    %v4727 = vpack.c.b16 %v3207, %v3199
    %v4728 = vpack.c.b16 %v3216, %v3208
    %v4729 = vpack.c.b16 %v3217, %v3209
    %v4730 = vpack.c.b16 %v3218, %v3210
    %v4731 = vpack.c.b16 %v3219, %v3211
    %v4732 = vpack.c.b16 %v3220, %v3212
    %v4733 = vpack.c.b16 %v3221, %v3213
    %v4734 = vpack.c.b16 %v3222, %v3214
    %v4735 = vpack.c.b16 %v3223, %v3215
    %v4736 = vpack.c.b16 %v3232, %v3224
    %v4737 = vpack.c.b16 %v3233, %v3225
    %v4738 = vpack.c.b16 %v3234, %v3226
    %v4739 = vpack.c.b16 %v3235, %v3227
    %v4740 = vpack.c.b16 %v3236, %v3228
    %v4741 = vpack.c.b16 %v3237, %v3229
    %v4742 = vpack.c.b16 %v3238, %v3230
    %v4743 = vpack.c.b16 %v3239, %v3231
    %v4744 = vpack.c.b16 %v3248, %v3240
    %v4745 = vpack.c.b16 %v3249, %v3241
    %v4746 = vpack.c.b16 %v3250, %v3242
    %v4747 = vpack.c.b16 %v3251, %v3243
    %v4748 = vpack.c.b16 %v3252, %v3244
    %v4749 = vpack.c.b16 %v3253, %v3245
    %v4750 = vpack.c.b16 %v3254, %v3246
    %v4751 = vpack.c.b16 %v3255, %v3247
    %v4752 = vpack.c.b16 %v3264, %v3256
    %v4753 = vpack.c.b16 %v3265, %v3257
    %v4754 = vpack.c.b16 %v3266, %v3258
    %v4755 = vpack.c.b16 %v3267, %v3259
    %v4756 = vpack.c.b16 %v3268, %v3260
    %v4757 = vpack.c.b16 %v3269, %v3261
    %v4758 = vpack.c.b16 %v3270, %v3262
    %v4759 = vpack.c.b16 %v3271, %v3263
    %v4760 = vpack.c.b16 %v3280, %v3272
    %v4761 = vpack.c.b16 %v3281, %v3273
    %v4762 = vpack.c.b16 %v3282, %v3274
    %v4763 = vpack.c.b16 %v3283, %v3275
    %v4764 = vpack.c.b16 %v3284, %v3276
    %v4765 = vpack.c.b16 %v3285, %v3277
    %v4766 = vpack.c.b16 %v3286, %v3278
    %v4767 = vpack.c.b16 %v3287, %v3279
    %v4768 = vpack.c.b16 %v3296, %v3288
    %v4769 = vpack.c.b16 %v3297, %v3289
    %v4770 = vpack.c.b16 %v3298, %v3290
    %v4771 = vpack.c.b16 %v3299, %v3291
    %v4772 = vpack.c.b16 %v3300, %v3292
    %v4773 = vpack.c.b16 %v3301, %v3293
    %v4774 = vpack.c.b16 %v3302, %v3294
    %v4775 = vpack.c.b16 %v3303, %v3295
    %v4776 = vpack.c.b16 %v3312, %v3304
    %v4777 = vpack.c.b16 %v3313, %v3305
    %v4778 = vpack.c.b16 %v3314, %v3306
    %v4779 = vpack.c.b16 %v3315, %v3307
    %v4780 = vpack.c.b16 %v3316, %v3308
    %v4781 = vpack.c.b16 %v3317, %v3309
    %v4782 = vpack.c.b16 %v3318, %v3310
    %v4783 = vpack.c.b16 %v3319, %v3311
    %v4784 = vpack.c.b16 %v3328, %v3320
    %v4785 = vpack.c.b16 %v3329, %v3321
    %v4786 = vpack.c.b16 %v3330, %v3322
    %v4787 = vpack.c.b16 %v3331, %v3323
    %v4788 = vpack.c.b16 %v3332, %v3324
    %v4789 = vpack.c.b16 %v3333, %v3325
    %v4790 = vpack.c.b16 %v3334, %v3326
    %v4791 = vpack.c.b16 %v3335, %v3327
    %v4792 = vpack.c.b16 %v3344, %v3336
    %v4793 = vpack.c.b16 %v3345, %v3337
    %v4794 = vpack.c.b16 %v3346, %v3338
    %v4795 = vpack.c.b16 %v3347, %v3339
    %v4796 = vpack.c.b16 %v3348, %v3340
    %v4797 = vpack.c.b16 %v3349, %v3341
    %v4798 = vpack.c.b16 %v3350, %v3342
    %v4799 = vpack.c.b16 %v3351, %v3343
    %v4800 = vpack.c.b16 %v3360, %v3352
    %v4801 = vpack.c.b16 %v3361, %v3353
    %v4802 = vpack.c.b16 %v3362, %v3354
    %v4803 = vpack.c.b16 %v3363, %v3355
    %v4804 = vpack.c.b16 %v3364, %v3356
    %v4805 = vpack.c.b16 %v3365, %v3357
    %v4806 = vpack.c.b16 %v3366, %v3358
    %v4807 = vpack.c.b16 %v3367, %v3359
    %v4808 = vpack.c.b16 %v3376, %v3368
    %v4809 = vpack.c.b16 %v3377, %v3369
    %v4810 = vpack.c.b16 %v3378, %v3370
    %v4811 = vpack.c.b16 %v3379, %v3371
    %v4812 = vpack.c.b16 %v3380, %v3372
    %v4813 = vpack.c.b16 %v3381, %v3373
    %v4814 = vpack.c.b16 %v3382, %v3374
    %v4815 = vpack.c.b16 %v3383, %v3375
    %v4816 = vpack.c.b16 %v3392, %v3384
    %v4817 = vpack.c.b16 %v3393, %v3385
    %v4818 = vpack.c.b16 %v3394, %v3386
    %v4819 = vpack.c.b16 %v3395, %v3387
    %v4820 = vpack.c.b16 %v3396, %v3388
    %v4821 = vpack.c.b16 %v3397, %v3389
    %v4822 = vpack.c.b16 %v3398, %v3390
    %v4823 = vpack.c.b16 %v3399, %v3391
    %v4824 = vpack.c.b16 %v3408, %v3400
    %v4825 = vpack.c.b16 %v3409, %v3401
    %v4826 = vpack.c.b16 %v3410, %v3402
    %v4827 = vpack.c.b16 %v3411, %v3403
    %v4828 = vpack.c.b16 %v3412, %v3404
    %v4829 = vpack.c.b16 %v3413, %v3405
    %v4830 = vpack.c.b16 %v3414, %v3406
    %v4831 = vpack.c.b16 %v3415, %v3407
    %v4832 = vpack.c.b16 %v3424, %v3416
    %v4833 = vpack.c.b16 %v3425, %v3417
    %v4834 = vpack.c.b16 %v3426, %v3418
    %v4835 = vpack.c.b16 %v3427, %v3419
    %v4836 = vpack.c.b16 %v3428, %v3420
    %v4837 = vpack.c.b16 %v3429, %v3421
    %v4838 = vpack.c.b16 %v3430, %v3422
    %v4839 = vpack.c.b16 %v3431, %v3423
    %v4840 = vpack.c.b16 %v3440, %v3432
    %v4841 = vpack.c.b16 %v3441, %v3433
    %v4842 = vpack.c.b16 %v3442, %v3434
    %v4843 = vpack.c.b16 %v3443, %v3435
    %v4844 = vpack.c.b16 %v3444, %v3436
    %v4845 = vpack.c.b16 %v3445, %v3437
    %v4846 = vpack.c.b16 %v3446, %v3438
    %v4847 = vpack.c.b16 %v3447, %v3439
    %v4848 = vpack.c.b16 %v3456, %v3448
    %v4849 = vpack.c.b16 %v3457, %v3449
    %v4850 = vpack.c.b16 %v3458, %v3450
    %v4851 = vpack.c.b16 %v3459, %v3451
    %v4852 = vpack.c.b16 %v3460, %v3452
    %v4853 = vpack.c.b16 %v3461, %v3453
    %v4854 = vpack.c.b16 %v3462, %v3454
    %v4855 = vpack.c.b16 %v3463, %v3455
    %v4856 = vpack.c.b16 %v3472, %v3464
    %v4857 = vpack.c.b16 %v3473, %v3465
    %v4858 = vpack.c.b16 %v3474, %v3466
    %v4859 = vpack.c.b16 %v3475, %v3467
    %v4860 = vpack.c.b16 %v3476, %v3468
    %v4861 = vpack.c.b16 %v3477, %v3469
    %v4862 = vpack.c.b16 %v3478, %v3470
    %v4863 = vpack.c.b16 %v3479, %v3471
    %v4864 = vpack.c.b16 %v3488, %v3480
    %v4865 = vpack.c.b16 %v3489, %v3481
    %v4866 = vpack.c.b16 %v3490, %v3482
    %v4867 = vpack.c.b16 %v3491, %v3483
    %v4868 = vpack.c.b16 %v3492, %v3484
    %v4869 = vpack.c.b16 %v3493, %v3485
    %v4870 = vpack.c.b16 %v3494, %v3486
    %v4871 = vpack.c.b16 %v3495, %v3487
    %v4872 = vpack.c.b16 %v3504, %v3496
    %v4873 = vpack.c.b16 %v3505, %v3497
    %v4874 = vpack.c.b16 %v3506, %v3498
    %v4875 = vpack.c.b16 %v3507, %v3499
    %v4876 = vpack.c.b16 %v3508, %v3500
    %v4877 = vpack.c.b16 %v3509, %v3501
    %v4878 = vpack.c.b16 %v3510, %v3502
    %v4879 = vpack.c.b16 %v3511, %v3503
    %v4880 = vpack.c.b16 %v3520, %v3512
    %v4881 = vpack.c.b16 %v3521, %v3513
    %v4882 = vpack.c.b16 %v3522, %v3514
    %v4883 = vpack.c.b16 %v3523, %v3515
    %v4884 = vpack.c.b16 %v3524, %v3516
    %v4885 = vpack.c.b16 %v3525, %v3517
    %v4886 = vpack.c.b16 %v3526, %v3518
    %v4887 = vpack.c.b16 %v3527, %v3519
    %v4888 = vpack.c.b16 %v3536, %v3528
    %v4889 = vpack.c.b16 %v3537, %v3529
    %v4890 = vpack.c.b16 %v3538, %v3530
    %v4891 = vpack.c.b16 %v3539, %v3531
    %v4892 = vpack.c.b16 %v3540, %v3532
    %v4893 = vpack.c.b16 %v3541, %v3533
    %v4894 = vpack.c.b16 %v3542, %v3534
    %v4895 = vpack.c.b16 %v3543, %v3535
    %v4896 = vpack.c.b16 %v3552, %v3544
    %v4897 = vpack.c.b16 %v3553, %v3545
    %v4898 = vpack.c.b16 %v3554, %v3546
    %v4899 = vpack.c.b16 %v3555, %v3547
    %v4900 = vpack.c.b16 %v3556, %v3548
    %v4901 = vpack.c.b16 %v3557, %v3549
    %v4902 = vpack.c.b16 %v3558, %v3550
    %v4903 = vpack.c.b16 %v3559, %v3551
    %v4904 = vpack.c.b16 %v3568, %v3560
    %v4905 = vpack.c.b16 %v3569, %v3561
    %v4906 = vpack.c.b16 %v3570, %v3562
    %v4907 = vpack.c.b16 %v3571, %v3563
    %v4908 = vpack.c.b16 %v3572, %v3564
    %v4909 = vpack.c.b16 %v3573, %v3565
    %v4910 = vpack.c.b16 %v3574, %v3566
    %v4911 = vpack.c.b16 %v3575, %v3567
    %v4912 = vpack.c.b16 %v3584, %v3576
    %v4913 = vpack.c.b16 %v3585, %v3577
    %v4914 = vpack.c.b16 %v3586, %v3578
    %v4915 = vpack.c.b16 %v3587, %v3579
    %v4916 = vpack.c.b16 %v3588, %v3580
    %v4917 = vpack.c.b16 %v3589, %v3581
    %v4918 = vpack.c.b16 %v3590, %v3582
    %v4919 = vpack.c.b16 %v3591, %v3583
    %v4920 = vpack.c.b16 %v3600, %v3592
    %v4921 = vpack.c.b16 %v3601, %v3593
    %v4922 = vpack.c.b16 %v3602, %v3594
    %v4923 = vpack.c.b16 %v3603, %v3595
    %v4924 = vpack.c.b16 %v3604, %v3596
    %v4925 = vpack.c.b16 %v3605, %v3597
    %v4926 = vpack.c.b16 %v3606, %v3598
    %v4927 = vpack.c.b16 %v3607, %v3599
    %v4928 = vpack.c.b16 %v3616, %v3608
    %v4929 = vpack.c.b16 %v3617, %v3609
    %v4930 = vpack.c.b16 %v3618, %v3610
    %v4931 = vpack.c.b16 %v3619, %v3611
    %v4932 = vpack.c.b16 %v3620, %v3612
    %v4933 = vpack.c.b16 %v3621, %v3613
    %v4934 = vpack.c.b16 %v3622, %v3614
    %v4935 = vpack.c.b16 %v3623, %v3615
    %v4936 = vpack.c.b16 %v3632, %v3624
    %v4937 = vpack.c.b16 %v3633, %v3625
    %v4938 = vpack.c.b16 %v3634, %v3626
    %v4939 = vpack.c.b16 %v3635, %v3627
    %v4940 = vpack.c.b16 %v3636, %v3628
    %v4941 = vpack.c.b16 %v3637, %v3629
    %v4942 = vpack.c.b16 %v3638, %v3630
    %v4943 = vpack.c.b16 %v3639, %v3631
    %v4944 = vpack.c.b16 %v3648, %v3640
    %v4945 = vpack.c.b16 %v3649, %v3641
    %v4946 = vpack.c.b16 %v3650, %v3642
    %v4947 = vpack.c.b16 %v3651, %v3643
    %v4948 = vpack.c.b16 %v3652, %v3644
    %v4949 = vpack.c.b16 %v3653, %v3645
    %v4950 = vpack.c.b16 %v3654, %v3646
    %v4951 = vpack.c.b16 %v3655, %v3647
    %v4952 = vpack.c.b16 %v3664, %v3656
    %v4953 = vpack.c.b16 %v3665, %v3657
    %v4954 = vpack.c.b16 %v3666, %v3658
    %v4955 = vpack.c.b16 %v3667, %v3659
    %v4956 = vpack.c.b16 %v3668, %v3660
    %v4957 = vpack.c.b16 %v3669, %v3661
    %v4958 = vpack.c.b16 %v3670, %v3662
    %v4959 = vpack.c.b16 %v3671, %v3663
    %v4960 = vpack.c.b16 %v3680, %v3672
    %v4961 = vpack.c.b16 %v3681, %v3673
    %v4962 = vpack.c.b16 %v3682, %v3674
    %v4963 = vpack.c.b16 %v3683, %v3675
    %v4964 = vpack.c.b16 %v3684, %v3676
    %v4965 = vpack.c.b16 %v3685, %v3677
    %v4966 = vpack.c.b16 %v3686, %v3678
    %v4967 = vpack.c.b16 %v3687, %v3679
    %v4968 = vpack.c.b16 %v3696, %v3688
    %v4969 = vpack.c.b16 %v3697, %v3689
    %v4970 = vpack.c.b16 %v3698, %v3690
    %v4971 = vpack.c.b16 %v3699, %v3691
    %v4972 = vpack.c.b16 %v3700, %v3692
    %v4973 = vpack.c.b16 %v3701, %v3693
    %v4974 = vpack.c.b16 %v3702, %v3694
    %v4975 = vpack.c.b16 %v3703, %v3695
    %v4976 = vpack.c.b16 %v3712, %v3704
    %v4977 = vpack.c.b16 %v3713, %v3705
    %v4978 = vpack.c.b16 %v3714, %v3706
    %v4979 = vpack.c.b16 %v3715, %v3707
    %v4980 = vpack.c.b16 %v3716, %v3708
    %v4981 = vpack.c.b16 %v3717, %v3709
    %v4982 = vpack.c.b16 %v3718, %v3710
    %v4983 = vpack.c.b16 %v3719, %v3711
    %v4984 = vpack.c.b16 %v3728, %v3720
    %v4985 = vpack.c.b16 %v3729, %v3721
    %v4986 = vpack.c.b16 %v3730, %v3722
    %v4987 = vpack.c.b16 %v3731, %v3723
    %v4988 = vpack.c.b16 %v3732, %v3724
    %v4989 = vpack.c.b16 %v3733, %v3725
    %v4990 = vpack.c.b16 %v3734, %v3726
    %v4991 = vpack.c.b16 %v3735, %v3727
    %v4992 = vpack.c.b16 %v3744, %v3736
    %v4993 = vpack.c.b16 %v3745, %v3737
    %v4994 = vpack.c.b16 %v3746, %v3738
    %v4995 = vpack.c.b16 %v3747, %v3739
    %v4996 = vpack.c.b16 %v3748, %v3740
    %v4997 = vpack.c.b16 %v3749, %v3741
    %v4998 = vpack.c.b16 %v3750, %v3742
    %v4999 = vpack.c.b16 %v3751, %v3743
    %v5000 = vpack.c.b16 %v3760, %v3752
    %v5001 = vpack.c.b16 %v3761, %v3753
    %v5002 = vpack.c.b16 %v3762, %v3754
    %v5003 = vpack.c.b16 %v3763, %v3755
    %v5004 = vpack.c.b16 %v3764, %v3756
    %v5005 = vpack.c.b16 %v3765, %v3757
    %v5006 = vpack.c.b16 %v3766, %v3758
    %v5007 = vpack.c.b16 %v3767, %v3759
    %v5008 = vpack.c.b16 %v3776, %v3768
    %v5009 = vpack.c.b16 %v3777, %v3769
    %v5010 = vpack.c.b16 %v3778, %v3770
    %v5011 = vpack.c.b16 %v3779, %v3771
    %v5012 = vpack.c.b16 %v3780, %v3772
    %v5013 = vpack.c.b16 %v3781, %v3773
    %v5014 = vpack.c.b16 %v3782, %v3774
    %v5015 = vpack.c.b16 %v3783, %v3775
    %v5016 = vpack.c.b16 %v3792, %v3784
    %v5017 = vpack.c.b16 %v3793, %v3785
    %v5018 = vpack.c.b16 %v3794, %v3786
    %v5019 = vpack.c.b16 %v3795, %v3787
    %v5020 = vpack.c.b16 %v3796, %v3788
    %v5021 = vpack.c.b16 %v3797, %v3789
    %v5022 = vpack.c.b16 %v3798, %v3790
    %v5023 = vpack.c.b16 %v3799, %v3791
    %v5024 = vpack.c.b16 %v3808, %v3800
    %v5025 = vpack.c.b16 %v3809, %v3801
    %v5026 = vpack.c.b16 %v3810, %v3802
    %v5027 = vpack.c.b16 %v3811, %v3803
    %v5028 = vpack.c.b16 %v3812, %v3804
    %v5029 = vpack.c.b16 %v3813, %v3805
    %v5030 = vpack.c.b16 %v3814, %v3806
    %v5031 = vpack.c.b16 %v3815, %v3807
    %v5032 = vpack.c.b16 %v3824, %v3816
    %v5033 = vpack.c.b16 %v3825, %v3817
    %v5034 = vpack.c.b16 %v3826, %v3818
    %v5035 = vpack.c.b16 %v3827, %v3819
    %v5036 = vpack.c.b16 %v3828, %v3820
    %v5037 = vpack.c.b16 %v3829, %v3821
    %v5038 = vpack.c.b16 %v3830, %v3822
    %v5039 = vpack.c.b16 %v3831, %v3823
    %v5040 = vpack.c.b16 %v3840, %v3832
    %v5041 = vpack.c.b16 %v3841, %v3833
    %v5042 = vpack.c.b16 %v3842, %v3834
    %v5043 = vpack.c.b16 %v3843, %v3835
    %v5044 = vpack.c.b16 %v3844, %v3836
    %v5045 = vpack.c.b16 %v3845, %v3837
    %v5046 = vpack.c.b16 %v3846, %v3838
    %v5047 = vpack.c.b16 %v3847, %v3839
    %v5048 = vpack.c.b16 %v3856, %v3848
    %v5049 = vpack.c.b16 %v3857, %v3849
    %v5050 = vpack.c.b16 %v3858, %v3850
    %v5051 = vpack.c.b16 %v3859, %v3851
    %v5052 = vpack.c.b16 %v3860, %v3852
    %v5053 = vpack.c.b16 %v3861, %v3853
    %v5054 = vpack.c.b16 %v3862, %v3854
    %v5055 = vpack.c.b16 %v3863, %v3855
    %v5056 = vpack.c.b16 %v3872, %v3864
    %v5057 = vpack.c.b16 %v3873, %v3865
    %v5058 = vpack.c.b16 %v3874, %v3866
    %v5059 = vpack.c.b16 %v3875, %v3867
    %v5060 = vpack.c.b16 %v3876, %v3868
    %v5061 = vpack.c.b16 %v3877, %v3869
    %v5062 = vpack.c.b16 %v3878, %v3870
    %v5063 = vpack.c.b16 %v3879, %v3871
    %v5064 = vpack.c.b16 %v3888, %v3880
    %v5065 = vpack.c.b16 %v3889, %v3881
    %v5066 = vpack.c.b16 %v3890, %v3882
    %v5067 = vpack.c.b16 %v3891, %v3883
    %v5068 = vpack.c.b16 %v3892, %v3884
    %v5069 = vpack.c.b16 %v3893, %v3885
    %v5070 = vpack.c.b16 %v3894, %v3886
    %v5071 = vpack.c.b16 %v3895, %v3887
    %v5072 = vpack.c.b16 %v3904, %v3896
    %v5073 = vpack.c.b16 %v3905, %v3897
    %v5074 = vpack.c.b16 %v3906, %v3898
    %v5075 = vpack.c.b16 %v3907, %v3899
    %v5076 = vpack.c.b16 %v3908, %v3900
    %v5077 = vpack.c.b16 %v3909, %v3901
    %v5078 = vpack.c.b16 %v3910, %v3902
    %v5079 = vpack.c.b16 %v3911, %v3903
    %v5080 = vpack.c.b16 %v3920, %v3912
    %v5081 = vpack.c.b16 %v3921, %v3913
    %v5082 = vpack.c.b16 %v3922, %v3914
    %v5083 = vpack.c.b16 %v3923, %v3915
    %v5084 = vpack.c.b16 %v3924, %v3916
    %v5085 = vpack.c.b16 %v3925, %v3917
    %v5086 = vpack.c.b16 %v3926, %v3918
    %v5087 = vpack.c.b16 %v3927, %v3919
    %v5088 = vpack.c.b16 %v3936, %v3928
    %v5089 = vpack.c.b16 %v3937, %v3929
    %v5090 = vpack.c.b16 %v3938, %v3930
    %v5091 = vpack.c.b16 %v3939, %v3931
    %v5092 = vpack.c.b16 %v3940, %v3932
    %v5093 = vpack.c.b16 %v3941, %v3933
    %v5094 = vpack.c.b16 %v3942, %v3934
    %v5095 = vpack.c.b16 %v3943, %v3935
    %v5096 = vpack.c.b16 %v3952, %v3944
    %v5097 = vpack.c.b16 %v3953, %v3945
    %v5098 = vpack.c.b16 %v3954, %v3946
    %v5099 = vpack.c.b16 %v3955, %v3947
    %v5100 = vpack.c.b16 %v3956, %v3948
    %v5101 = vpack.c.b16 %v3957, %v3949
    %v5102 = vpack.c.b16 %v3958, %v3950
    %v5103 = vpack.c.b16 %v3959, %v3951
    %v5104 = vpack.c.b16 %v3968, %v3960
    %v5105 = vpack.c.b16 %v3969, %v3961
    %v5106 = vpack.c.b16 %v3970, %v3962
    %v5107 = vpack.c.b16 %v3971, %v3963
    %v5108 = vpack.c.b16 %v3972, %v3964
    %v5109 = vpack.c.b16 %v3973, %v3965
    %v5110 = vpack.c.b16 %v3974, %v3966
    %v5111 = vpack.c.b16 %v3975, %v3967
    %v5112 = vpack.c.b16 %v3984, %v3976
    %v5113 = vpack.c.b16 %v3985, %v3977
    %v5114 = vpack.c.b16 %v3986, %v3978
    %v5115 = vpack.c.b16 %v3987, %v3979
    %v5116 = vpack.c.b16 %v3988, %v3980
    %v5117 = vpack.c.b16 %v3989, %v3981
    %v5118 = vpack.c.b16 %v3990, %v3982
    %v5119 = vpack.c.b16 %v3991, %v3983
    %v5120 = vpack.c.b16 %v4000, %v3992
    %v5121 = vpack.c.b16 %v4001, %v3993
    %v5122 = vpack.c.b16 %v4002, %v3994
    %v5123 = vpack.c.b16 %v4003, %v3995
    %v5124 = vpack.c.b16 %v4004, %v3996
    %v5125 = vpack.c.b16 %v4005, %v3997
    %v5126 = vpack.c.b16 %v4006, %v3998
    %v5127 = vpack.c.b16 %v4007, %v3999
    %v5128 = vpack.c.b16 %v4016, %v4008
    %v5129 = vpack.c.b16 %v4017, %v4009
    %v5130 = vpack.c.b16 %v4018, %v4010
    %v5131 = vpack.c.b16 %v4019, %v4011
    %v5132 = vpack.c.b16 %v4020, %v4012
    %v5133 = vpack.c.b16 %v4021, %v4013
    %v5134 = vpack.c.b16 %v4022, %v4014
    %v5135 = vpack.c.b16 %v4023, %v4015
    %v5136 = vpack.c.b16 %v4032, %v4024
    %v5137 = vpack.c.b16 %v4033, %v4025
    %v5138 = vpack.c.b16 %v4034, %v4026
    %v5139 = vpack.c.b16 %v4035, %v4027
    %v5140 = vpack.c.b16 %v4036, %v4028
    %v5141 = vpack.c.b16 %v4037, %v4029
    %v5142 = vpack.c.b16 %v4038, %v4030
    %v5143 = vpack.c.b16 %v4039, %v4031
    %v5144 = vpack.c.b16 %v4048, %v4040
    %v5145 = vpack.c.b16 %v4049, %v4041
    %v5146 = vpack.c.b16 %v4050, %v4042
    %v5147 = vpack.c.b16 %v4051, %v4043
    %v5148 = vpack.c.b16 %v4052, %v4044
    %v5149 = vpack.c.b16 %v4053, %v4045
    %v5150 = vpack.c.b16 %v4054, %v4046
    %v5151 = vpack.c.b16 %v4055, %v4047
    %v5152 = vpack.c.b16 %v4064, %v4056
    %v5153 = vpack.c.b16 %v4065, %v4057
    %v5154 = vpack.c.b16 %v4066, %v4058
    %v5155 = vpack.c.b16 %v4067, %v4059
    %v5156 = vpack.c.b16 %v4068, %v4060
    %v5157 = vpack.c.b16 %v4069, %v4061
    %v5158 = vpack.c.b16 %v4070, %v4062
    %v5159 = vpack.c.b16 %v4071, %v4063
    %v5160 = vpack.c.b16 %v4080, %v4072
    %v5161 = vpack.c.b16 %v4081, %v4073
    %v5162 = vpack.c.b16 %v4082, %v4074
    %v5163 = vpack.c.b16 %v4083, %v4075
    %v5164 = vpack.c.b16 %v4084, %v4076
    %v5165 = vpack.c.b16 %v4085, %v4077
    %v5166 = vpack.c.b16 %v4086, %v4078
    %v5167 = vpack.c.b16 %v4087, %v4079
    %v5168 = vpack.c.b16 %v4096, %v4088
    %v5169 = vpack.c.b16 %v4097, %v4089
    %v5170 = vpack.c.b16 %v4098, %v4090
    %v5171 = vpack.c.b16 %v4099, %v4091
    %v5172 = vpack.c.b16 %v4100, %v4092
    %v5173 = vpack.c.b16 %v4101, %v4093
    %v5174 = vpack.c.b16 %v4102, %v4094
    %v5175 = vpack.c.b16 %v4103, %v4095
    %v5176 = vpack.c.b16 %v4112, %v4104
    %v5177 = vpack.c.b16 %v4113, %v4105
    %v5178 = vpack.c.b16 %v4114, %v4106
    %v5179 = vpack.c.b16 %v4115, %v4107
    %v5180 = vpack.c.b16 %v4116, %v4108
    %v5181 = vpack.c.b16 %v4117, %v4109
    %v5182 = vpack.c.b16 %v4118, %v4110
    %v5183 = vpack.c.b16 %v4119, %v4111
    %v5184 = vpack.c.b16 %v4128, %v4120
    %v5185 = vpack.c.b16 %v4129, %v4121
    %v5186 = vpack.c.b16 %v4130, %v4122
    %v5187 = vpack.c.b16 %v4131, %v4123
    %v5188 = vpack.c.b16 %v4132, %v4124
    %v5189 = vpack.c.b16 %v4133, %v4125
    %v5190 = vpack.c.b16 %v4134, %v4126
    %v5191 = vpack.c.b16 %v4135, %v4127
    %v5192 = vpack.c.b16 %v4144, %v4136
    %v5193 = vpack.c.b16 %v4145, %v4137
    %v5194 = vpack.c.b16 %v4146, %v4138
    %v5195 = vpack.c.b16 %v4147, %v4139
    %v5196 = vpack.c.b16 %v4148, %v4140
    %v5197 = vpack.c.b16 %v4149, %v4141
    %v5198 = vpack.c.b16 %v4150, %v4142
    %v5199 = vpack.c.b16 %v4151, %v4143
    %v5200 = vpack.c.b16 %v4160, %v4152
    %v5201 = vpack.c.b16 %v4161, %v4153
    %v5202 = vpack.c.b16 %v4162, %v4154
    %v5203 = vpack.c.b16 %v4163, %v4155
    %v5204 = vpack.c.b16 %v4164, %v4156
    %v5205 = vpack.c.b16 %v4165, %v4157
    %v5206 = vpack.c.b16 %v4166, %v4158
    %v5207 = vpack.c.b16 %v4167, %v4159
    %v5208 = vpack.c.b16 %v4176, %v4168
    %v5209 = vpack.c.b16 %v4177, %v4169
    %v5210 = vpack.c.b16 %v4178, %v4170
    %v5211 = vpack.c.b16 %v4179, %v4171
    %v5212 = vpack.c.b16 %v4180, %v4172
    %v5213 = vpack.c.b16 %v4181, %v4173
    %v5214 = vpack.c.b16 %v4182, %v4174
    %v5215 = vpack.c.b16 %v4183, %v4175
    %v5216 = vpack.c.b16 %v4192, %v4184
    %v5217 = vpack.c.b16 %v4193, %v4185
    %v5218 = vpack.c.b16 %v4194, %v4186
    %v5219 = vpack.c.b16 %v4195, %v4187
    %v5220 = vpack.c.b16 %v4196, %v4188
    %v5221 = vpack.c.b16 %v4197, %v4189
    %v5222 = vpack.c.b16 %v4198, %v4190
    %v5223 = vpack.c.b16 %v4199, %v4191
    %6248 = vmatprep.subr.bf16.mxu0 %v4201
    %6249 = vmatpush1.bf16.msra.mxu0 %v4200
    %6250 = vmatprep.subr.bf16.mxu0 %v4209
    %6251 = vmatpush1.bf16.msra.mxu0 %v4208
    %6252 = vmatprep.subr.bf16.mxu0 %v4217
    %6253 = vmatpush1.bf16.msra.mxu0 %v4216
    %6254 = vmatprep.subr.bf16.mxu0 %v4225
    %6255 = vmatpush1.bf16.msra.mxu0 %v4224
    %6256 = vmatprep.subr.bf16.mxu0 %v4233
    %6257 = vmatpush1.bf16.msra.mxu0 %v4232
    %6258 = vmatprep.subr.bf16.mxu0 %v4241
    %6259 = vmatpush1.bf16.msra.mxu0 %v4240
    %6260 = vmatprep.subr.bf16.mxu0 %v4249
    %6261 = vmatpush1.bf16.msra.mxu0 %v4248
    %6262 = vmatprep.subr.bf16.mxu0 %v4257
    %6263 = vmatpush1.bf16.msra.mxu0 %v4256
    %6264 = vmatprep.subr.bf16.mxu0 %v4265
    %6265 = vmatpush1.bf16.msra.mxu0 %v4264
    %6266 = vmatprep.subr.bf16.mxu0 %v4273
    %6267 = vmatpush1.bf16.msra.mxu0 %v4272
    %6268 = vmatprep.subr.bf16.mxu0 %v4281
    %6269 = vmatpush1.bf16.msra.mxu0 %v4280
    %6270 = vmatprep.subr.bf16.mxu0 %v4289
    %6271 = vmatpush1.bf16.msra.mxu0 %v4288
    %6272 = vmatprep.subr.bf16.mxu0 %v4297
    %6273 = vmatpush1.bf16.msra.mxu0 %v4296
    %6274 = vmatprep.subr.bf16.mxu0 %v4305
    %6275 = vmatpush1.bf16.msra.mxu0 %v4304
    %6276 = vmatprep.subr.bf16.mxu0 %v4313
    %6277 = vmatpush1.bf16.msra.mxu0 %v4312
    %6278 = vmatprep.subr.bf16.mxu0 %v4321
    %6279 = vmatpush1.bf16.msra.mxu0 %v4320
    %6280 = vmatprep.mubr.bf16.mxu0 %v89
    %6281 = vmatmul.mubr.bf16.gmra.mrb[0].mxu0 %v88
    %v6282 = vpop.f32.mrb[0].mxu0
    %v6283 = vadd.f32 0.0, %v6282
    %v6284 = vpop.f32.mrb[0].mxu0
    %v6285 = vadd.f32 0.0, %v6284
    %v6286 = vpop.f32.mrb[0].mxu0
    %v6287 = vpop.f32.mrb[0].mxu0
    %6288 = vdwg.mxu0
    %6289 = vmatprep.subr.bf16.mxu0 %v4329
    %6290 = vmatpush1.bf16.msra.mxu0 %v4328
    %6291 = vmatprep.subr.bf16.mxu0 %v4337
    %6292 = vmatpush1.bf16.msra.mxu0 %v4336
    %6293 = vmatprep.subr.bf16.mxu0 %v4345
    %6294 = vmatpush1.bf16.msra.mxu0 %v4344
    %6295 = vmatprep.subr.bf16.mxu0 %v4353
    %6296 = vmatpush1.bf16.msra.mxu0 %v4352
    %6297 = vmatprep.subr.bf16.mxu0 %v4361
    %6298 = vmatpush1.bf16.msra.mxu0 %v4360
    %6299 = vmatprep.subr.bf16.mxu0 %v4369
    %6300 = vmatpush1.bf16.msra.mxu0 %v4368
    %6301 = vmatprep.subr.bf16.mxu0 %v4377
    %6302 = vmatpush1.bf16.msra.mxu0 %v4376
    %6303 = vmatprep.subr.bf16.mxu0 %v4385
    %6304 = vmatpush1.bf16.msra.mxu0 %v4384
    %6305 = vmatprep.subr.bf16.mxu0 %v4393
    %6306 = vmatpush1.bf16.msra.mxu0 %v4392
    %6307 = vmatprep.subr.bf16.mxu0 %v4401
    %6308 = vmatpush1.bf16.msra.mxu0 %v4400
    %6309 = vmatprep.subr.bf16.mxu0 %v4409
    %6310 = vmatpush1.bf16.msra.mxu0 %v4408
    %6311 = vmatprep.subr.bf16.mxu0 %v4417
    %6312 = vmatpush1.bf16.msra.mxu0 %v4416
    %6313 = vmatprep.subr.bf16.mxu0 %v4425
    %6314 = vmatpush1.bf16.msra.mxu0 %v4424
    %6315 = vmatprep.subr.bf16.mxu0 %v4433
    %6316 = vmatpush1.bf16.msra.mxu0 %v4432
    %6317 = vmatprep.subr.bf16.mxu0 %v4441
    %6318 = vmatpush1.bf16.msra.mxu0 %v4440
    %6319 = vmatprep.subr.bf16.mxu0 %v4449
    %6320 = vmatpush1.bf16.msra.mxu0 %v4448
    %6321 = vmatprep.mubr.bf16.mxu0 %v91
    %6322 = vmatmul.mubr.bf16.gmra.mrb[0].mxu0 %v90
    %v6323 = vpop.f32.mrb[0].mxu0
    %v6324 = vadd.f32 %v6283, %v6323
    %v6325 = vpop.f32.mrb[0].mxu0
    %v6326 = vadd.f32 %v6285, %v6325
    %v6327 = vpop.f32.mrb[0].mxu0
    %v6328 = vpop.f32.mrb[0].mxu0
    %6329 = vdwg.mxu0
    %6330 = vmatprep.subr.bf16.mxu0 %v4457
    %6331 = vmatpush1.bf16.msra.mxu0 %v4456
    %6332 = vmatprep.subr.bf16.mxu0 %v4465
    %6333 = vmatpush1.bf16.msra.mxu0 %v4464
    %6334 = vmatprep.subr.bf16.mxu0 %v4473
    %6335 = vmatpush1.bf16.msra.mxu0 %v4472
    %6336 = vmatprep.subr.bf16.mxu0 %v4481
    %6337 = vmatpush1.bf16.msra.mxu0 %v4480
    %6338 = vmatprep.subr.bf16.mxu0 %v4489
    %6339 = vmatpush1.bf16.msra.mxu0 %v4488
    %6340 = vmatprep.subr.bf16.mxu0 %v4497
    %6341 = vmatpush1.bf16.msra.mxu0 %v4496
    %6342 = vmatprep.subr.bf16.mxu0 %v4505
    %6343 = vmatpush1.bf16.msra.mxu0 %v4504
    %6344 = vmatprep.subr.bf16.mxu0 %v4513
    %6345 = vmatpush1.bf16.msra.mxu0 %v4512
    %6346 = vmatprep.subr.bf16.mxu0 %v4521
    %6347 = vmatpush1.bf16.msra.mxu0 %v4520
    %6348 = vmatprep.subr.bf16.mxu0 %v4529
    %6349 = vmatpush1.bf16.msra.mxu0 %v4528
    %6350 = vmatprep.subr.bf16.mxu0 %v4537
    %6351 = vmatpush1.bf16.msra.mxu0 %v4536
    %6352 = vmatprep.subr.bf16.mxu0 %v4545
    %6353 = vmatpush1.bf16.msra.mxu0 %v4544
    %6354 = vmatprep.subr.bf16.mxu0 %v4553
    %6355 = vmatpush1.bf16.msra.mxu0 %v4552
    %6356 = vmatprep.subr.bf16.mxu0 %v4561
    %6357 = vmatpush1.bf16.msra.mxu0 %v4560
    %6358 = vmatprep.subr.bf16.mxu0 %v4569
    %6359 = vmatpush1.bf16.msra.mxu0 %v4568
    %6360 = vmatprep.subr.bf16.mxu0 %v4577
    %6361 = vmatpush1.bf16.msra.mxu0 %v4576
    %6362 = vmatprep.mubr.bf16.mxu0 %v93
    %6363 = vmatmul.mubr.bf16.gmra.mrb[0].mxu0 %v92
    %v6364 = vpop.f32.mrb[0].mxu0
    %v6365 = vadd.f32 %v6324, %v6364
    %v6366 = vpop.f32.mrb[0].mxu0
    %v6367 = vadd.f32 %v6326, %v6366
    %v6368 = vpop.f32.mrb[0].mxu0
    %v6369 = vpop.f32.mrb[0].mxu0
    %6370 = vdwg.mxu0
    %6371 = vmatprep.subr.bf16.mxu0 %v4585
    %6372 = vmatpush1.bf16.msra.mxu0 %v4584
    %6373 = vmatprep.subr.bf16.mxu0 %v4593
    %6374 = vmatpush1.bf16.msra.mxu0 %v4592
    %6375 = vmatprep.subr.bf16.mxu0 %v4601
    %6376 = vmatpush1.bf16.msra.mxu0 %v4600
    %6377 = vmatprep.subr.bf16.mxu0 %v4609
    %6378 = vmatpush1.bf16.msra.mxu0 %v4608
    %6379 = vmatprep.subr.bf16.mxu0 %v4617
    %6380 = vmatpush1.bf16.msra.mxu0 %v4616
    %6381 = vmatprep.subr.bf16.mxu0 %v4625
    %6382 = vmatpush1.bf16.msra.mxu0 %v4624
    %6383 = vmatprep.subr.bf16.mxu0 %v4633
    %6384 = vmatpush1.bf16.msra.mxu0 %v4632
    %6385 = vmatprep.subr.bf16.mxu0 %v4641
    %6386 = vmatpush1.bf16.msra.mxu0 %v4640
    %6387 = vmatprep.subr.bf16.mxu0 %v4649
    %6388 = vmatpush1.bf16.msra.mxu0 %v4648
    %6389 = vmatprep.subr.bf16.mxu0 %v4657
    %6390 = vmatpush1.bf16.msra.mxu0 %v4656
    %6391 = vmatprep.subr.bf16.mxu0 %v4665
    %6392 = vmatpush1.bf16.msra.mxu0 %v4664
    %6393 = vmatprep.subr.bf16.mxu0 %v4673
    %6394 = vmatpush1.bf16.msra.mxu0 %v4672
    %6395 = vmatprep.subr.bf16.mxu0 %v4681
    %6396 = vmatpush1.bf16.msra.mxu0 %v4680
    %6397 = vmatprep.subr.bf16.mxu0 %v4689
    %6398 = vmatpush1.bf16.msra.mxu0 %v4688
    %6399 = vmatprep.subr.bf16.mxu0 %v4697
    %6400 = vmatpush1.bf16.msra.mxu0 %v4696
    %6401 = vmatprep.subr.bf16.mxu0 %v4705
    %6402 = vmatpush1.bf16.msra.mxu0 %v4704
    %6403 = vmatprep.mubr.bf16.mxu0 %v95
    %6404 = vmatmul.mubr.bf16.gmra.mrb[0].mxu0 %v94
    %v6405 = vpop.f32.mrb[0].mxu0
    %v6406 = vadd.f32 %v6365, %v6405
    %v6407 = vpop.f32.mrb[0].mxu0
    %v6408 = vadd.f32 %v6367, %v6407
    %v6409 = vpop.f32.mrb[0].mxu0
    %v6410 = vpop.f32.mrb[0].mxu0
    %6411 = vdwg.mxu0
    %6412 = vmatprep.subr.bf16.mxu0 %v4713
    %6413 = vmatpush1.bf16.msra.mxu0 %v4712
    %6414 = vmatprep.subr.bf16.mxu0 %v4721
    %6415 = vmatpush1.bf16.msra.mxu0 %v4720
    %6416 = vmatprep.subr.bf16.mxu0 %v4729
    %6417 = vmatpush1.bf16.msra.mxu0 %v4728
    %6418 = vmatprep.subr.bf16.mxu0 %v4737
    %6419 = vmatpush1.bf16.msra.mxu0 %v4736
    %6420 = vmatprep.subr.bf16.mxu0 %v4745
    %6421 = vmatpush1.bf16.msra.mxu0 %v4744
    %6422 = vmatprep.subr.bf16.mxu0 %v4753
    %6423 = vmatpush1.bf16.msra.mxu0 %v4752
    %6424 = vmatprep.subr.bf16.mxu0 %v4761
    %6425 = vmatpush1.bf16.msra.mxu0 %v4760
    %6426 = vmatprep.subr.bf16.mxu0 %v4769
    %6427 = vmatpush1.bf16.msra.mxu0 %v4768
    %6428 = vmatprep.subr.bf16.mxu0 %v4777
    %6429 = vmatpush1.bf16.msra.mxu0 %v4776
    %6430 = vmatprep.subr.bf16.mxu0 %v4785
    %6431 = vmatpush1.bf16.msra.mxu0 %v4784
    %6432 = vmatprep.subr.bf16.mxu0 %v4793
    %6433 = vmatpush1.bf16.msra.mxu0 %v4792
    %6434 = vmatprep.subr.bf16.mxu0 %v4801
    %6435 = vmatpush1.bf16.msra.mxu0 %v4800
    %6436 = vmatprep.subr.bf16.mxu0 %v4809
    %6437 = vmatpush1.bf16.msra.mxu0 %v4808
    %6438 = vmatprep.subr.bf16.mxu0 %v4817
    %6439 = vmatpush1.bf16.msra.mxu0 %v4816
    %6440 = vmatprep.subr.bf16.mxu0 %v4825
    %6441 = vmatpush1.bf16.msra.mxu0 %v4824
    %6442 = vmatprep.subr.bf16.mxu0 %v4833
    %6443 = vmatpush1.bf16.msra.mxu0 %v4832
    %6444 = vmatprep.mubr.bf16.mxu0 %v97
    %6445 = vmatmul.mubr.bf16.gmra.mrb[0].mxu0 %v96
    %v6446 = vpop.f32.mrb[0].mxu0
    %v6447 = vadd.f32 %v6406, %v6446
    %v6448 = vpop.f32.mrb[0].mxu0
    %v6449 = vadd.f32 %v6408, %v6448
    %v6450 = vpop.f32.mrb[0].mxu0
    %v6451 = vpop.f32.mrb[0].mxu0
    %6452 = vdwg.mxu0
    %6453 = vmatprep.subr.bf16.mxu0 %v4841
    %6454 = vmatpush1.bf16.msra.mxu0 %v4840
    %6455 = vmatprep.subr.bf16.mxu0 %v4849
    %6456 = vmatpush1.bf16.msra.mxu0 %v4848
    %6457 = vmatprep.subr.bf16.mxu0 %v4857
    %6458 = vmatpush1.bf16.msra.mxu0 %v4856
    %6459 = vmatprep.subr.bf16.mxu0 %v4865
    %6460 = vmatpush1.bf16.msra.mxu0 %v4864
    %6461 = vmatprep.subr.bf16.mxu0 %v4873
    %6462 = vmatpush1.bf16.msra.mxu0 %v4872
    %6463 = vmatprep.subr.bf16.mxu0 %v4881
    %6464 = vmatpush1.bf16.msra.mxu0 %v4880
    %6465 = vmatprep.subr.bf16.mxu0 %v4889
    %6466 = vmatpush1.bf16.msra.mxu0 %v4888
    %6467 = vmatprep.subr.bf16.mxu0 %v4897
    %6468 = vmatpush1.bf16.msra.mxu0 %v4896
    %6469 = vmatprep.subr.bf16.mxu0 %v4905
    %6470 = vmatpush1.bf16.msra.mxu0 %v4904
    %6471 = vmatprep.subr.bf16.mxu0 %v4913
    %6472 = vmatpush1.bf16.msra.mxu0 %v4912
    %6473 = vmatprep.subr.bf16.mxu0 %v4921
    %6474 = vmatpush1.bf16.msra.mxu0 %v4920
    %6475 = vmatprep.subr.bf16.mxu0 %v4929
    %6476 = vmatpush1.bf16.msra.mxu0 %v4928
    %6477 = vmatprep.subr.bf16.mxu0 %v4937
    %6478 = vmatpush1.bf16.msra.mxu0 %v4936
    %6479 = vmatprep.subr.bf16.mxu0 %v4945
    %6480 = vmatpush1.bf16.msra.mxu0 %v4944
    %6481 = vmatprep.subr.bf16.mxu0 %v4953
    %6482 = vmatpush1.bf16.msra.mxu0 %v4952
    %6483 = vmatprep.subr.bf16.mxu0 %v4961
    %6484 = vmatpush1.bf16.msra.mxu0 %v4960
    %6485 = vmatprep.mubr.bf16.mxu0 %v99
    %6486 = vmatmul.mubr.bf16.gmra.mrb[0].mxu0 %v98
    %v6487 = vpop.f32.mrb[0].mxu0
    %v6488 = vadd.f32 %v6447, %v6487
    %v6489 = vpop.f32.mrb[0].mxu0
    %v6490 = vadd.f32 %v6449, %v6489
    %v6491 = vpop.f32.mrb[0].mxu0
    %v6492 = vpop.f32.mrb[0].mxu0
    %6493 = vdwg.mxu0
    %6494 = vmatprep.subr.bf16.mxu0 %v4969
    %6495 = vmatpush1.bf16.msra.mxu0 %v4968
    %6496 = vmatprep.subr.bf16.mxu0 %v4977
    %6497 = vmatpush1.bf16.msra.mxu0 %v4976
    %6498 = vmatprep.subr.bf16.mxu0 %v4985
    %6499 = vmatpush1.bf16.msra.mxu0 %v4984
    %6500 = vmatprep.subr.bf16.mxu0 %v4993
    %6501 = vmatpush1.bf16.msra.mxu0 %v4992
    %6502 = vmatprep.subr.bf16.mxu0 %v5001
    %6503 = vmatpush1.bf16.msra.mxu0 %v5000
    %6504 = vmatprep.subr.bf16.mxu0 %v5009
    %6505 = vmatpush1.bf16.msra.mxu0 %v5008
    %6506 = vmatprep.subr.bf16.mxu0 %v5017
    %6507 = vmatpush1.bf16.msra.mxu0 %v5016
    %6508 = vmatprep.subr.bf16.mxu0 %v5025
    %6509 = vmatpush1.bf16.msra.mxu0 %v5024
    %6510 = vmatprep.subr.bf16.mxu0 %v5033
    %6511 = vmatpush1.bf16.msra.mxu0 %v5032
    %6512 = vmatprep.subr.bf16.mxu0 %v5041
    %6513 = vmatpush1.bf16.msra.mxu0 %v5040
    %6514 = vmatprep.subr.bf16.mxu0 %v5049
    %6515 = vmatpush1.bf16.msra.mxu0 %v5048
    %6516 = vmatprep.subr.bf16.mxu0 %v5057
    %6517 = vmatpush1.bf16.msra.mxu0 %v5056
    %6518 = vmatprep.subr.bf16.mxu0 %v5065
    %6519 = vmatpush1.bf16.msra.mxu0 %v5064
    %6520 = vmatprep.subr.bf16.mxu0 %v5073
    %6521 = vmatpush1.bf16.msra.mxu0 %v5072
    %6522 = vmatprep.subr.bf16.mxu0 %v5081
    %6523 = vmatpush1.bf16.msra.mxu0 %v5080
    %6524 = vmatprep.subr.bf16.mxu0 %v5089
    %6525 = vmatpush1.bf16.msra.mxu0 %v5088
    %6526 = vmatprep.mubr.bf16.mxu0 %v101
    %6527 = vmatmul.mubr.bf16.gmra.mrb[0].mxu0 %v100
    %v6528 = vpop.f32.mrb[0].mxu0
    %v6529 = vadd.f32 %v6488, %v6528
    %v6530 = vpop.f32.mrb[0].mxu0
    %v6531 = vadd.f32 %v6490, %v6530
    %v6532 = vpop.f32.mrb[0].mxu0
    %v6533 = vpop.f32.mrb[0].mxu0
    %6534 = vdwg.mxu0
    %6535 = vmatprep.subr.bf16.mxu0 %v5097
    %6536 = vmatpush1.bf16.msra.mxu0 %v5096
    %6537 = vmatprep.subr.bf16.mxu0 %v5105
    %6538 = vmatpush1.bf16.msra.mxu0 %v5104
    %6539 = vmatprep.subr.bf16.mxu0 %v5113
    %6540 = vmatpush1.bf16.msra.mxu0 %v5112
    %6541 = vmatprep.subr.bf16.mxu0 %v5121
    %6542 = vmatpush1.bf16.msra.mxu0 %v5120
    %6543 = vmatprep.subr.bf16.mxu0 %v5129
    %6544 = vmatpush1.bf16.msra.mxu0 %v5128
    %6545 = vmatprep.subr.bf16.mxu0 %v5137
    %6546 = vmatpush1.bf16.msra.mxu0 %v5136
    %6547 = vmatprep.subr.bf16.mxu0 %v5145
    %6548 = vmatpush1.bf16.msra.mxu0 %v5144
    %6549 = vmatprep.subr.bf16.mxu0 %v5153
    %6550 = vmatpush1.bf16.msra.mxu0 %v5152
    %6551 = vmatprep.subr.bf16.mxu0 %v5161
    %6552 = vmatpush1.bf16.msra.mxu0 %v5160
    %6553 = vmatprep.subr.bf16.mxu0 %v5169
    %6554 = vmatpush1.bf16.msra.mxu0 %v5168
    %6555 = vmatprep.subr.bf16.mxu0 %v5177
    %6556 = vmatpush1.bf16.msra.mxu0 %v5176
    %6557 = vmatprep.subr.bf16.mxu0 %v5185
    %6558 = vmatpush1.bf16.msra.mxu0 %v5184
    %6559 = vmatprep.subr.bf16.mxu0 %v5193
    %6560 = vmatpush1.bf16.msra.mxu0 %v5192
    %6561 = vmatprep.subr.bf16.mxu0 %v5201
    %6562 = vmatpush1.bf16.msra.mxu0 %v5200
    %6563 = vmatprep.subr.bf16.mxu0 %v5209
    %6564 = vmatpush1.bf16.msra.mxu0 %v5208
    %6565 = vmatprep.subr.bf16.mxu0 %v5217
    %6566 = vmatpush1.bf16.msra.mxu0 %v5216
    %6567 = vmatprep.mubr.bf16.mxu0 %v103
    %6568 = vmatmul.mubr.bf16.gmra.mrb[0].mxu0 %v102
    %v6569 = vpop.f32.mrb[0].mxu0
    %v6570 = vadd.f32 %v6529, %v6569
    %v6571 = vpop.f32.mrb[0].mxu0
    %v6572 = vadd.f32 %v6531, %v6571
    %v6573 = vpop.f32.mrb[0].mxu0
    %v6574 = vpop.f32.mrb[0].mxu0
    %6575 = vdwg.mxu0
    %6576 = vmatprep.subr.bf16.mxu0 %v4203
    %6577 = vmatpush1.bf16.msra.mxu0 %v4202
    %6578 = vmatprep.subr.bf16.mxu0 %v4211
    %6579 = vmatpush1.bf16.msra.mxu0 %v4210
    %6580 = vmatprep.subr.bf16.mxu0 %v4219
    %6581 = vmatpush1.bf16.msra.mxu0 %v4218
    %6582 = vmatprep.subr.bf16.mxu0 %v4227
    %6583 = vmatpush1.bf16.msra.mxu0 %v4226
    %6584 = vmatprep.subr.bf16.mxu0 %v4235
    %6585 = vmatpush1.bf16.msra.mxu0 %v4234
    %6586 = vmatprep.subr.bf16.mxu0 %v4243
    %6587 = vmatpush1.bf16.msra.mxu0 %v4242
    %6588 = vmatprep.subr.bf16.mxu0 %v4251
    %6589 = vmatpush1.bf16.msra.mxu0 %v4250
    %6590 = vmatprep.subr.bf16.mxu0 %v4259
    %6591 = vmatpush1.bf16.msra.mxu0 %v4258
    %6592 = vmatprep.subr.bf16.mxu0 %v4267
    %6593 = vmatpush1.bf16.msra.mxu0 %v4266
    %6594 = vmatprep.subr.bf16.mxu0 %v4275
    %6595 = vmatpush1.bf16.msra.mxu0 %v4274
    %6596 = vmatprep.subr.bf16.mxu0 %v4283
    %6597 = vmatpush1.bf16.msra.mxu0 %v4282
    %6598 = vmatprep.subr.bf16.mxu0 %v4291
    %6599 = vmatpush1.bf16.msra.mxu0 %v4290
    %6600 = vmatprep.subr.bf16.mxu0 %v4299
    %6601 = vmatpush1.bf16.msra.mxu0 %v4298
    %6602 = vmatprep.subr.bf16.mxu0 %v4307
    %6603 = vmatpush1.bf16.msra.mxu0 %v4306
    %6604 = vmatprep.subr.bf16.mxu0 %v4315
    %6605 = vmatpush1.bf16.msra.mxu0 %v4314
    %6606 = vmatprep.subr.bf16.mxu0 %v4323
    %6607 = vmatpush1.bf16.msra.mxu0 %v4322
    %6608 = vmatprep.mubr.bf16.mxu0 %v89
    %6609 = vmatmul.mubr.bf16.gmra.mrb[0].mxu0 %v88
    %v6610 = vpop.f32.mrb[0].mxu0
    %v6611 = vadd.f32 0.0, %v6610
    %v6612 = vpop.f32.mrb[0].mxu0
    %v6613 = vadd.f32 0.0, %v6612
    %v6614 = vpop.f32.mrb[0].mxu0
    %v6615 = vpop.f32.mrb[0].mxu0
    %6616 = vdwg.mxu0
    %6617 = vmatprep.subr.bf16.mxu0 %v4331
    %6618 = vmatpush1.bf16.msra.mxu0 %v4330
    %6619 = vmatprep.subr.bf16.mxu0 %v4339
    %6620 = vmatpush1.bf16.msra.mxu0 %v4338
    %6621 = vmatprep.subr.bf16.mxu0 %v4347
    %6622 = vmatpush1.bf16.msra.mxu0 %v4346
    %6623 = vmatprep.subr.bf16.mxu0 %v4355
    %6624 = vmatpush1.bf16.msra.mxu0 %v4354
    %6625 = vmatprep.subr.bf16.mxu0 %v4363
    %6626 = vmatpush1.bf16.msra.mxu0 %v4362
    %6627 = vmatprep.subr.bf16.mxu0 %v4371
    %6628 = vmatpush1.bf16.msra.mxu0 %v4370
    %6629 = vmatprep.subr.bf16.mxu0 %v4379
    %6630 = vmatpush1.bf16.msra.mxu0 %v4378
    %6631 = vmatprep.subr.bf16.mxu0 %v4387
    %6632 = vmatpush1.bf16.msra.mxu0 %v4386
    %6633 = vmatprep.subr.bf16.mxu0 %v4395
    %6634 = vmatpush1.bf16.msra.mxu0 %v4394
    %6635 = vmatprep.subr.bf16.mxu0 %v4403
    %6636 = vmatpush1.bf16.msra.mxu0 %v4402
    %6637 = vmatprep.subr.bf16.mxu0 %v4411
    %6638 = vmatpush1.bf16.msra.mxu0 %v4410
    %6639 = vmatprep.subr.bf16.mxu0 %v4419
    %6640 = vmatpush1.bf16.msra.mxu0 %v4418
    %6641 = vmatprep.subr.bf16.mxu0 %v4427
    %6642 = vmatpush1.bf16.msra.mxu0 %v4426
    %6643 = vmatprep.subr.bf16.mxu0 %v4435
    %6644 = vmatpush1.bf16.msra.mxu0 %v4434
    %6645 = vmatprep.subr.bf16.mxu0 %v4443
    %6646 = vmatpush1.bf16.msra.mxu0 %v4442
    %6647 = vmatprep.subr.bf16.mxu0 %v4451
    %6648 = vmatpush1.bf16.msra.mxu0 %v4450
    %6649 = vmatprep.mubr.bf16.mxu0 %v91
    %6650 = vmatmul.mubr.bf16.gmra.mrb[0].mxu0 %v90
    %v6651 = vpop.f32.mrb[0].mxu0
    %v6652 = vadd.f32 %v6611, %v6651
    %v6653 = vpop.f32.mrb[0].mxu0
    %v6654 = vadd.f32 %v6613, %v6653
    %v6655 = vpop.f32.mrb[0].mxu0
    %v6656 = vpop.f32.mrb[0].mxu0
    %6657 = vdwg.mxu0
    %6658 = vmatprep.subr.bf16.mxu0 %v4459
    %6659 = vmatpush1.bf16.msra.mxu0 %v4458
    %6660 = vmatprep.subr.bf16.mxu0 %v4467
    %6661 = vmatpush1.bf16.msra.mxu0 %v4466
    %6662 = vmatprep.subr.bf16.mxu0 %v4475
    %6663 = vmatpush1.bf16.msra.mxu0 %v4474
    %6664 = vmatprep.subr.bf16.mxu0 %v4483
    %6665 = vmatpush1.bf16.msra.mxu0 %v4482
    %6666 = vmatprep.subr.bf16.mxu0 %v4491
    %6667 = vmatpush1.bf16.msra.mxu0 %v4490
    %6668 = vmatprep.subr.bf16.mxu0 %v4499
    %6669 = vmatpush1.bf16.msra.mxu0 %v4498
    %6670 = vmatprep.subr.bf16.mxu0 %v4507
    %6671 = vmatpush1.bf16.msra.mxu0 %v4506
    %6672 = vmatprep.subr.bf16.mxu0 %v4515
    %6673 = vmatpush1.bf16.msra.mxu0 %v4514
    %6674 = vmatprep.subr.bf16.mxu0 %v4523
    %6675 = vmatpush1.bf16.msra.mxu0 %v4522
    %6676 = vmatprep.subr.bf16.mxu0 %v4531
    %6677 = vmatpush1.bf16.msra.mxu0 %v4530
    %6678 = vmatprep.subr.bf16.mxu0 %v4539
    %6679 = vmatpush1.bf16.msra.mxu0 %v4538
    %6680 = vmatprep.subr.bf16.mxu0 %v4547
    %6681 = vmatpush1.bf16.msra.mxu0 %v4546
    %6682 = vmatprep.subr.bf16.mxu0 %v4555
    %6683 = vmatpush1.bf16.msra.mxu0 %v4554
    %6684 = vmatprep.subr.bf16.mxu0 %v4563
    %6685 = vmatpush1.bf16.msra.mxu0 %v4562
    %6686 = vmatprep.subr.bf16.mxu0 %v4571
    %6687 = vmatpush1.bf16.msra.mxu0 %v4570
    %6688 = vmatprep.subr.bf16.mxu0 %v4579
    %6689 = vmatpush1.bf16.msra.mxu0 %v4578
    %6690 = vmatprep.mubr.bf16.mxu0 %v93
    %6691 = vmatmul.mubr.bf16.gmra.mrb[0].mxu0 %v92
    %v6692 = vpop.f32.mrb[0].mxu0
    %v6693 = vadd.f32 %v6652, %v6692
    %v6694 = vpop.f32.mrb[0].mxu0
    %v6695 = vadd.f32 %v6654, %v6694
    %v6696 = vpop.f32.mrb[0].mxu0
    %v6697 = vpop.f32.mrb[0].mxu0
    %6698 = vdwg.mxu0
    %6699 = vmatprep.subr.bf16.mxu0 %v4587
    %6700 = vmatpush1.bf16.msra.mxu0 %v4586
    %6701 = vmatprep.subr.bf16.mxu0 %v4595
    %6702 = vmatpush1.bf16.msra.mxu0 %v4594
    %6703 = vmatprep.subr.bf16.mxu0 %v4603
    %6704 = vmatpush1.bf16.msra.mxu0 %v4602
    %6705 = vmatprep.subr.bf16.mxu0 %v4611
    %6706 = vmatpush1.bf16.msra.mxu0 %v4610
    %6707 = vmatprep.subr.bf16.mxu0 %v4619
    %6708 = vmatpush1.bf16.msra.mxu0 %v4618
    %6709 = vmatprep.subr.bf16.mxu0 %v4627
    %6710 = vmatpush1.bf16.msra.mxu0 %v4626
    %6711 = vmatprep.subr.bf16.mxu0 %v4635
    %6712 = vmatpush1.bf16.msra.mxu0 %v4634
    %6713 = vmatprep.subr.bf16.mxu0 %v4643
    %6714 = vmatpush1.bf16.msra.mxu0 %v4642
    %6715 = vmatprep.subr.bf16.mxu0 %v4651
    %6716 = vmatpush1.bf16.msra.mxu0 %v4650
    %6717 = vmatprep.subr.bf16.mxu0 %v4659
    %6718 = vmatpush1.bf16.msra.mxu0 %v4658
    %6719 = vmatprep.subr.bf16.mxu0 %v4667
    %6720 = vmatpush1.bf16.msra.mxu0 %v4666
    %6721 = vmatprep.subr.bf16.mxu0 %v4675
    %6722 = vmatpush1.bf16.msra.mxu0 %v4674
    %6723 = vmatprep.subr.bf16.mxu0 %v4683
    %6724 = vmatpush1.bf16.msra.mxu0 %v4682
    %6725 = vmatprep.subr.bf16.mxu0 %v4691
    %6726 = vmatpush1.bf16.msra.mxu0 %v4690
    %6727 = vmatprep.subr.bf16.mxu0 %v4699
    %6728 = vmatpush1.bf16.msra.mxu0 %v4698
    %6729 = vmatprep.subr.bf16.mxu0 %v4707
    %6730 = vmatpush1.bf16.msra.mxu0 %v4706
    %6731 = vmatprep.mubr.bf16.mxu0 %v95
    %6732 = vmatmul.mubr.bf16.gmra.mrb[0].mxu0 %v94
    %v6733 = vpop.f32.mrb[0].mxu0
    %v6734 = vadd.f32 %v6693, %v6733
    %v6735 = vpop.f32.mrb[0].mxu0
    %v6736 = vadd.f32 %v6695, %v6735
    %v6737 = vpop.f32.mrb[0].mxu0
    %v6738 = vpop.f32.mrb[0].mxu0
    %6739 = vdwg.mxu0
    %6740 = vmatprep.subr.bf16.mxu0 %v4715
    %6741 = vmatpush1.bf16.msra.mxu0 %v4714
    %6742 = vmatprep.subr.bf16.mxu0 %v4723
    %6743 = vmatpush1.bf16.msra.mxu0 %v4722
    %6744 = vmatprep.subr.bf16.mxu0 %v4731
    %6745 = vmatpush1.bf16.msra.mxu0 %v4730
    %6746 = vmatprep.subr.bf16.mxu0 %v4739
    %6747 = vmatpush1.bf16.msra.mxu0 %v4738
    %6748 = vmatprep.subr.bf16.mxu0 %v4747
    %6749 = vmatpush1.bf16.msra.mxu0 %v4746
    %6750 = vmatprep.subr.bf16.mxu0 %v4755
    %6751 = vmatpush1.bf16.msra.mxu0 %v4754
    %6752 = vmatprep.subr.bf16.mxu0 %v4763
    %6753 = vmatpush1.bf16.msra.mxu0 %v4762
    %6754 = vmatprep.subr.bf16.mxu0 %v4771
    %6755 = vmatpush1.bf16.msra.mxu0 %v4770
    %6756 = vmatprep.subr.bf16.mxu0 %v4779
    %6757 = vmatpush1.bf16.msra.mxu0 %v4778
    %6758 = vmatprep.subr.bf16.mxu0 %v4787
    %6759 = vmatpush1.bf16.msra.mxu0 %v4786
    %6760 = vmatprep.subr.bf16.mxu0 %v4795
    %6761 = vmatpush1.bf16.msra.mxu0 %v4794
    %6762 = vmatprep.subr.bf16.mxu0 %v4803
    %6763 = vmatpush1.bf16.msra.mxu0 %v4802
    %6764 = vmatprep.subr.bf16.mxu0 %v4811
    %6765 = vmatpush1.bf16.msra.mxu0 %v4810
    %6766 = vmatprep.subr.bf16.mxu0 %v4819
    %6767 = vmatpush1.bf16.msra.mxu0 %v4818
    %6768 = vmatprep.subr.bf16.mxu0 %v4827
    %6769 = vmatpush1.bf16.msra.mxu0 %v4826
    %6770 = vmatprep.subr.bf16.mxu0 %v4835
    %6771 = vmatpush1.bf16.msra.mxu0 %v4834
    %6772 = vmatprep.mubr.bf16.mxu0 %v97
    %6773 = vmatmul.mubr.bf16.gmra.mrb[0].mxu0 %v96
    %v6774 = vpop.f32.mrb[0].mxu0
    %v6775 = vadd.f32 %v6734, %v6774
    %v6776 = vpop.f32.mrb[0].mxu0
    %v6777 = vadd.f32 %v6736, %v6776
    %v6778 = vpop.f32.mrb[0].mxu0
    %v6779 = vpop.f32.mrb[0].mxu0
    %6780 = vdwg.mxu0
    %6781 = vmatprep.subr.bf16.mxu0 %v4843
    %6782 = vmatpush1.bf16.msra.mxu0 %v4842
    %6783 = vmatprep.subr.bf16.mxu0 %v4851
    %6784 = vmatpush1.bf16.msra.mxu0 %v4850
    %6785 = vmatprep.subr.bf16.mxu0 %v4859
    %6786 = vmatpush1.bf16.msra.mxu0 %v4858
    %6787 = vmatprep.subr.bf16.mxu0 %v4867
    %6788 = vmatpush1.bf16.msra.mxu0 %v4866
    %6789 = vmatprep.subr.bf16.mxu0 %v4875
    %6790 = vmatpush1.bf16.msra.mxu0 %v4874
    %6791 = vmatprep.subr.bf16.mxu0 %v4883
    %6792 = vmatpush1.bf16.msra.mxu0 %v4882
    %6793 = vmatprep.subr.bf16.mxu0 %v4891
    %6794 = vmatpush1.bf16.msra.mxu0 %v4890
    %6795 = vmatprep.subr.bf16.mxu0 %v4899
    %6796 = vmatpush1.bf16.msra.mxu0 %v4898
    %6797 = vmatprep.subr.bf16.mxu0 %v4907
    %6798 = vmatpush1.bf16.msra.mxu0 %v4906
    %6799 = vmatprep.subr.bf16.mxu0 %v4915
    %6800 = vmatpush1.bf16.msra.mxu0 %v4914
    %6801 = vmatprep.subr.bf16.mxu0 %v4923
    %6802 = vmatpush1.bf16.msra.mxu0 %v4922
    %6803 = vmatprep.subr.bf16.mxu0 %v4931
    %6804 = vmatpush1.bf16.msra.mxu0 %v4930
    %6805 = vmatprep.subr.bf16.mxu0 %v4939
    %6806 = vmatpush1.bf16.msra.mxu0 %v4938
    %6807 = vmatprep.subr.bf16.mxu0 %v4947
    %6808 = vmatpush1.bf16.msra.mxu0 %v4946
    %6809 = vmatprep.subr.bf16.mxu0 %v4955
    %6810 = vmatpush1.bf16.msra.mxu0 %v4954
    %6811 = vmatprep.subr.bf16.mxu0 %v4963
    %6812 = vmatpush1.bf16.msra.mxu0 %v4962
    %6813 = vmatprep.mubr.bf16.mxu0 %v99
    %6814 = vmatmul.mubr.bf16.gmra.mrb[0].mxu0 %v98
    %v6815 = vpop.f32.mrb[0].mxu0
    %v6816 = vadd.f32 %v6775, %v6815
    %v6817 = vpop.f32.mrb[0].mxu0
    %v6818 = vadd.f32 %v6777, %v6817
    %v6819 = vpop.f32.mrb[0].mxu0
    %v6820 = vpop.f32.mrb[0].mxu0
    %6821 = vdwg.mxu0
    %6822 = vmatprep.subr.bf16.mxu0 %v4971
    %6823 = vmatpush1.bf16.msra.mxu0 %v4970
    %6824 = vmatprep.subr.bf16.mxu0 %v4979
    %6825 = vmatpush1.bf16.msra.mxu0 %v4978
    %6826 = vmatprep.subr.bf16.mxu0 %v4987
    %6827 = vmatpush1.bf16.msra.mxu0 %v4986
    %6828 = vmatprep.subr.bf16.mxu0 %v4995
    %6829 = vmatpush1.bf16.msra.mxu0 %v4994
    %6830 = vmatprep.subr.bf16.mxu0 %v5003
    %6831 = vmatpush1.bf16.msra.mxu0 %v5002
    %6832 = vmatprep.subr.bf16.mxu0 %v5011
    %6833 = vmatpush1.bf16.msra.mxu0 %v5010
    %6834 = vmatprep.subr.bf16.mxu0 %v5019
    %6835 = vmatpush1.bf16.msra.mxu0 %v5018
    %6836 = vmatprep.subr.bf16.mxu0 %v5027
    %6837 = vmatpush1.bf16.msra.mxu0 %v5026
    %6838 = vmatprep.subr.bf16.mxu0 %v5035
    %6839 = vmatpush1.bf16.msra.mxu0 %v5034
    %6840 = vmatprep.subr.bf16.mxu0 %v5043
    %6841 = vmatpush1.bf16.msra.mxu0 %v5042
    %6842 = vmatprep.subr.bf16.mxu0 %v5051
    %6843 = vmatpush1.bf16.msra.mxu0 %v5050
    %6844 = vmatprep.subr.bf16.mxu0 %v5059
    %6845 = vmatpush1.bf16.msra.mxu0 %v5058
    %6846 = vmatprep.subr.bf16.mxu0 %v5067
    %6847 = vmatpush1.bf16.msra.mxu0 %v5066
    %6848 = vmatprep.subr.bf16.mxu0 %v5075
    %6849 = vmatpush1.bf16.msra.mxu0 %v5074
    %6850 = vmatprep.subr.bf16.mxu0 %v5083
    %6851 = vmatpush1.bf16.msra.mxu0 %v5082
    %6852 = vmatprep.subr.bf16.mxu0 %v5091
    %6853 = vmatpush1.bf16.msra.mxu0 %v5090
    %6854 = vmatprep.mubr.bf16.mxu0 %v101
    %6855 = vmatmul.mubr.bf16.gmra.mrb[0].mxu0 %v100
    %v6856 = vpop.f32.mrb[0].mxu0
    %v6857 = vadd.f32 %v6816, %v6856
    %v6858 = vpop.f32.mrb[0].mxu0
    %v6859 = vadd.f32 %v6818, %v6858
    %v6860 = vpop.f32.mrb[0].mxu0
    %v6861 = vpop.f32.mrb[0].mxu0
    %6862 = vdwg.mxu0
    %6863 = vmatprep.subr.bf16.mxu0 %v5099
    %6864 = vmatpush1.bf16.msra.mxu0 %v5098
    %6865 = vmatprep.subr.bf16.mxu0 %v5107
    %6866 = vmatpush1.bf16.msra.mxu0 %v5106
    %6867 = vmatprep.subr.bf16.mxu0 %v5115
    %6868 = vmatpush1.bf16.msra.mxu0 %v5114
    %6869 = vmatprep.subr.bf16.mxu0 %v5123
    %6870 = vmatpush1.bf16.msra.mxu0 %v5122
    %6871 = vmatprep.subr.bf16.mxu0 %v5131
    %6872 = vmatpush1.bf16.msra.mxu0 %v5130
    %6873 = vmatprep.subr.bf16.mxu0 %v5139
    %6874 = vmatpush1.bf16.msra.mxu0 %v5138
    %6875 = vmatprep.subr.bf16.mxu0 %v5147
    %6876 = vmatpush1.bf16.msra.mxu0 %v5146
    %6877 = vmatprep.subr.bf16.mxu0 %v5155
    %6878 = vmatpush1.bf16.msra.mxu0 %v5154
    %6879 = vmatprep.subr.bf16.mxu0 %v5163
    %6880 = vmatpush1.bf16.msra.mxu0 %v5162
    %6881 = vmatprep.subr.bf16.mxu0 %v5171
    %6882 = vmatpush1.bf16.msra.mxu0 %v5170
    %6883 = vmatprep.subr.bf16.mxu0 %v5179
    %6884 = vmatpush1.bf16.msra.mxu0 %v5178
    %6885 = vmatprep.subr.bf16.mxu0 %v5187
    %6886 = vmatpush1.bf16.msra.mxu0 %v5186
    %6887 = vmatprep.subr.bf16.mxu0 %v5195
    %6888 = vmatpush1.bf16.msra.mxu0 %v5194
    %6889 = vmatprep.subr.bf16.mxu0 %v5203
    %6890 = vmatpush1.bf16.msra.mxu0 %v5202
    %6891 = vmatprep.subr.bf16.mxu0 %v5211
    %6892 = vmatpush1.bf16.msra.mxu0 %v5210
    %6893 = vmatprep.subr.bf16.mxu0 %v5219
    %6894 = vmatpush1.bf16.msra.mxu0 %v5218
    %6895 = vmatprep.mubr.bf16.mxu0 %v103
    %6896 = vmatmul.mubr.bf16.gmra.mrb[0].mxu0 %v102
    %v6897 = vpop.f32.mrb[0].mxu0
    %v6898 = vadd.f32 %v6857, %v6897
    %v6899 = vpop.f32.mrb[0].mxu0
    %v6900 = vadd.f32 %v6859, %v6899
    %v6901 = vpop.f32.mrb[0].mxu0
    %v6902 = vpop.f32.mrb[0].mxu0
    %6903 = vdwg.mxu0
    %6904 = vmatprep.subr.bf16.mxu0 %v4205
    %6905 = vmatpush1.bf16.msra.mxu0 %v4204
    %6906 = vmatprep.subr.bf16.mxu0 %v4213
    %6907 = vmatpush1.bf16.msra.mxu0 %v4212
    %6908 = vmatprep.subr.bf16.mxu0 %v4221
    %6909 = vmatpush1.bf16.msra.mxu0 %v4220
    %6910 = vmatprep.subr.bf16.mxu0 %v4229
    %6911 = vmatpush1.bf16.msra.mxu0 %v4228
    %6912 = vmatprep.subr.bf16.mxu0 %v4237
    %6913 = vmatpush1.bf16.msra.mxu0 %v4236
    %6914 = vmatprep.subr.bf16.mxu0 %v4245
    %6915 = vmatpush1.bf16.msra.mxu0 %v4244
    %6916 = vmatprep.subr.bf16.mxu0 %v4253
    %6917 = vmatpush1.bf16.msra.mxu0 %v4252
    %6918 = vmatprep.subr.bf16.mxu0 %v4261
    %6919 = vmatpush1.bf16.msra.mxu0 %v4260
    %6920 = vmatprep.subr.bf16.mxu0 %v4269
    %6921 = vmatpush1.bf16.msra.mxu0 %v4268
    %6922 = vmatprep.subr.bf16.mxu0 %v4277
    %6923 = vmatpush1.bf16.msra.mxu0 %v4276
    %6924 = vmatprep.subr.bf16.mxu0 %v4285
    %6925 = vmatpush1.bf16.msra.mxu0 %v4284
    %6926 = vmatprep.subr.bf16.mxu0 %v4293
    %6927 = vmatpush1.bf16.msra.mxu0 %v4292
    %6928 = vmatprep.subr.bf16.mxu0 %v4301
    %6929 = vmatpush1.bf16.msra.mxu0 %v4300
    %6930 = vmatprep.subr.bf16.mxu0 %v4309
    %6931 = vmatpush1.bf16.msra.mxu0 %v4308
    %6932 = vmatprep.subr.bf16.mxu0 %v4317
    %6933 = vmatpush1.bf16.msra.mxu0 %v4316
    %6934 = vmatprep.subr.bf16.mxu0 %v4325
    %6935 = vmatpush1.bf16.msra.mxu0 %v4324
    %6936 = vmatprep.mubr.bf16.mxu0 %v89
    %6937 = vmatmul.mubr.bf16.gmra.mrb[0].mxu0 %v88
    %v6938 = vpop.f32.mrb[0].mxu0
    %v6939 = vadd.f32 0.0, %v6938
    %v6940 = vpop.f32.mrb[0].mxu0
    %v6941 = vadd.f32 0.0, %v6940
    %v6942 = vpop.f32.mrb[0].mxu0
    %v6943 = vpop.f32.mrb[0].mxu0
    %6944 = vdwg.mxu0
    %6945 = vmatprep.subr.bf16.mxu0 %v4333
    %6946 = vmatpush1.bf16.msra.mxu0 %v4332
    %6947 = vmatprep.subr.bf16.mxu0 %v4341
    %6948 = vmatpush1.bf16.msra.mxu0 %v4340
    %6949 = vmatprep.subr.bf16.mxu0 %v4349
    %6950 = vmatpush1.bf16.msra.mxu0 %v4348
    %6951 = vmatprep.subr.bf16.mxu0 %v4357
    %6952 = vmatpush1.bf16.msra.mxu0 %v4356
    %6953 = vmatprep.subr.bf16.mxu0 %v4365
    %6954 = vmatpush1.bf16.msra.mxu0 %v4364
    %6955 = vmatprep.subr.bf16.mxu0 %v4373
    %6956 = vmatpush1.bf16.msra.mxu0 %v4372
    %6957 = vmatprep.subr.bf16.mxu0 %v4381
    %6958 = vmatpush1.bf16.msra.mxu0 %v4380
    %6959 = vmatprep.subr.bf16.mxu0 %v4389
    %6960 = vmatpush1.bf16.msra.mxu0 %v4388
    %6961 = vmatprep.subr.bf16.mxu0 %v4397
    %6962 = vmatpush1.bf16.msra.mxu0 %v4396
    %6963 = vmatprep.subr.bf16.mxu0 %v4405
    %6964 = vmatpush1.bf16.msra.mxu0 %v4404
    %6965 = vmatprep.subr.bf16.mxu0 %v4413
    %6966 = vmatpush1.bf16.msra.mxu0 %v4412
    %6967 = vmatprep.subr.bf16.mxu0 %v4421
    %6968 = vmatpush1.bf16.msra.mxu0 %v4420
    %6969 = vmatprep.subr.bf16.mxu0 %v4429
    %6970 = vmatpush1.bf16.msra.mxu0 %v4428
    %6971 = vmatprep.subr.bf16.mxu0 %v4437
    %6972 = vmatpush1.bf16.msra.mxu0 %v4436
    %6973 = vmatprep.subr.bf16.mxu0 %v4445
    %6974 = vmatpush1.bf16.msra.mxu0 %v4444
    %6975 = vmatprep.subr.bf16.mxu0 %v4453
    %6976 = vmatpush1.bf16.msra.mxu0 %v4452
    %6977 = vmatprep.mubr.bf16.mxu0 %v91
    %6978 = vmatmul.mubr.bf16.gmra.mrb[0].mxu0 %v90
    %v6979 = vpop.f32.mrb[0].mxu0
    %v6980 = vadd.f32 %v6939, %v6979
    %v6981 = vpop.f32.mrb[0].mxu0
    %v6982 = vadd.f32 %v6941, %v6981
    %v6983 = vpop.f32.mrb[0].mxu0
    %v6984 = vpop.f32.mrb[0].mxu0
    %6985 = vdwg.mxu0
    %6986 = vmatprep.subr.bf16.mxu0 %v4461
    %6987 = vmatpush1.bf16.msra.mxu0 %v4460
    %6988 = vmatprep.subr.bf16.mxu0 %v4469
    %6989 = vmatpush1.bf16.msra.mxu0 %v4468
    %6990 = vmatprep.subr.bf16.mxu0 %v4477
    %6991 = vmatpush1.bf16.msra.mxu0 %v4476
    %6992 = vmatprep.subr.bf16.mxu0 %v4485
    %6993 = vmatpush1.bf16.msra.mxu0 %v4484
    %6994 = vmatprep.subr.bf16.mxu0 %v4493
    %6995 = vmatpush1.bf16.msra.mxu0 %v4492
    %6996 = vmatprep.subr.bf16.mxu0 %v4501
    %6997 = vmatpush1.bf16.msra.mxu0 %v4500
    %6998 = vmatprep.subr.bf16.mxu0 %v4509
    %6999 = vmatpush1.bf16.msra.mxu0 %v4508
    %7000 = vmatprep.subr.bf16.mxu0 %v4517
    %7001 = vmatpush1.bf16.msra.mxu0 %v4516
    %7002 = vmatprep.subr.bf16.mxu0 %v4525
    %7003 = vmatpush1.bf16.msra.mxu0 %v4524
    %7004 = vmatprep.subr.bf16.mxu0 %v4533
    %7005 = vmatpush1.bf16.msra.mxu0 %v4532
    %7006 = vmatprep.subr.bf16.mxu0 %v4541
    %7007 = vmatpush1.bf16.msra.mxu0 %v4540
    %7008 = vmatprep.subr.bf16.mxu0 %v4549
    %7009 = vmatpush1.bf16.msra.mxu0 %v4548
    %7010 = vmatprep.subr.bf16.mxu0 %v4557
    %7011 = vmatpush1.bf16.msra.mxu0 %v4556
    %7012 = vmatprep.subr.bf16.mxu0 %v4565
    %7013 = vmatpush1.bf16.msra.mxu0 %v4564
    %7014 = vmatprep.subr.bf16.mxu0 %v4573
    %7015 = vmatpush1.bf16.msra.mxu0 %v4572
    %7016 = vmatprep.subr.bf16.mxu0 %v4581
    %7017 = vmatpush1.bf16.msra.mxu0 %v4580
    %7018 = vmatprep.mubr.bf16.mxu0 %v93
    %7019 = vmatmul.mubr.bf16.gmra.mrb[0].mxu0 %v92
    %v7020 = vpop.f32.mrb[0].mxu0
    %v7021 = vadd.f32 %v6980, %v7020
    %v7022 = vpop.f32.mrb[0].mxu0
    %v7023 = vadd.f32 %v6982, %v7022
    %v7024 = vpop.f32.mrb[0].mxu0
    %v7025 = vpop.f32.mrb[0].mxu0
    %7026 = vdwg.mxu0
    %7027 = vmatprep.subr.bf16.mxu0 %v4589
    %7028 = vmatpush1.bf16.msra.mxu0 %v4588
    %7029 = vmatprep.subr.bf16.mxu0 %v4597
    %7030 = vmatpush1.bf16.msra.mxu0 %v4596
    %7031 = vmatprep.subr.bf16.mxu0 %v4605
    %7032 = vmatpush1.bf16.msra.mxu0 %v4604
    %7033 = vmatprep.subr.bf16.mxu0 %v4613
    %7034 = vmatpush1.bf16.msra.mxu0 %v4612
    %7035 = vmatprep.subr.bf16.mxu0 %v4621
    %7036 = vmatpush1.bf16.msra.mxu0 %v4620
    %7037 = vmatprep.subr.bf16.mxu0 %v4629
    %7038 = vmatpush1.bf16.msra.mxu0 %v4628
    %7039 = vmatprep.subr.bf16.mxu0 %v4637
    %7040 = vmatpush1.bf16.msra.mxu0 %v4636
    %7041 = vmatprep.subr.bf16.mxu0 %v4645
    %7042 = vmatpush1.bf16.msra.mxu0 %v4644
    %7043 = vmatprep.subr.bf16.mxu0 %v4653
    %7044 = vmatpush1.bf16.msra.mxu0 %v4652
    %7045 = vmatprep.subr.bf16.mxu0 %v4661
    %7046 = vmatpush1.bf16.msra.mxu0 %v4660
    %7047 = vmatprep.subr.bf16.mxu0 %v4669
    %7048 = vmatpush1.bf16.msra.mxu0 %v4668
    %7049 = vmatprep.subr.bf16.mxu0 %v4677
    %7050 = vmatpush1.bf16.msra.mxu0 %v4676
    %7051 = vmatprep.subr.bf16.mxu0 %v4685
    %7052 = vmatpush1.bf16.msra.mxu0 %v4684
    %7053 = vmatprep.subr.bf16.mxu0 %v4693
    %7054 = vmatpush1.bf16.msra.mxu0 %v4692
    %7055 = vmatprep.subr.bf16.mxu0 %v4701
    %7056 = vmatpush1.bf16.msra.mxu0 %v4700
    %7057 = vmatprep.subr.bf16.mxu0 %v4709
    %7058 = vmatpush1.bf16.msra.mxu0 %v4708
    %7059 = vmatprep.mubr.bf16.mxu0 %v95
    %7060 = vmatmul.mubr.bf16.gmra.mrb[0].mxu0 %v94
    %v7061 = vpop.f32.mrb[0].mxu0
    %v7062 = vadd.f32 %v7021, %v7061
    %v7063 = vpop.f32.mrb[0].mxu0
    %v7064 = vadd.f32 %v7023, %v7063
    %v7065 = vpop.f32.mrb[0].mxu0
    %v7066 = vpop.f32.mrb[0].mxu0
    %7067 = vdwg.mxu0
    %7068 = vmatprep.subr.bf16.mxu0 %v4717
    %7069 = vmatpush1.bf16.msra.mxu0 %v4716
    %7070 = vmatprep.subr.bf16.mxu0 %v4725
    %7071 = vmatpush1.bf16.msra.mxu0 %v4724
    %7072 = vmatprep.subr.bf16.mxu0 %v4733
    %7073 = vmatpush1.bf16.msra.mxu0 %v4732
    %7074 = vmatprep.subr.bf16.mxu0 %v4741
    %7075 = vmatpush1.bf16.msra.mxu0 %v4740
    %7076 = vmatprep.subr.bf16.mxu0 %v4749
    %7077 = vmatpush1.bf16.msra.mxu0 %v4748
    %7078 = vmatprep.subr.bf16.mxu0 %v4757
    %7079 = vmatpush1.bf16.msra.mxu0 %v4756
    %7080 = vmatprep.subr.bf16.mxu0 %v4765
    %7081 = vmatpush1.bf16.msra.mxu0 %v4764
    %7082 = vmatprep.subr.bf16.mxu0 %v4773
    %7083 = vmatpush1.bf16.msra.mxu0 %v4772
    %7084 = vmatprep.subr.bf16.mxu0 %v4781
    %7085 = vmatpush1.bf16.msra.mxu0 %v4780
    %7086 = vmatprep.subr.bf16.mxu0 %v4789
    %7087 = vmatpush1.bf16.msra.mxu0 %v4788
    %7088 = vmatprep.subr.bf16.mxu0 %v4797
    %7089 = vmatpush1.bf16.msra.mxu0 %v4796
    %7090 = vmatprep.subr.bf16.mxu0 %v4805
    %7091 = vmatpush1.bf16.msra.mxu0 %v4804
    %7092 = vmatprep.subr.bf16.mxu0 %v4813
    %7093 = vmatpush1.bf16.msra.mxu0 %v4812
    %7094 = vmatprep.subr.bf16.mxu0 %v4821
    %7095 = vmatpush1.bf16.msra.mxu0 %v4820
    %7096 = vmatprep.subr.bf16.mxu0 %v4829
    %7097 = vmatpush1.bf16.msra.mxu0 %v4828
    %7098 = vmatprep.subr.bf16.mxu0 %v4837
    %7099 = vmatpush1.bf16.msra.mxu0 %v4836
    %7100 = vmatprep.mubr.bf16.mxu0 %v97
    %7101 = vmatmul.mubr.bf16.gmra.mrb[0].mxu0 %v96
    %v7102 = vpop.f32.mrb[0].mxu0
    %v7103 = vadd.f32 %v7062, %v7102
    %v7104 = vpop.f32.mrb[0].mxu0
    %v7105 = vadd.f32 %v7064, %v7104
    %v7106 = vpop.f32.mrb[0].mxu0
    %v7107 = vpop.f32.mrb[0].mxu0
    %7108 = vdwg.mxu0
    %7109 = vmatprep.subr.bf16.mxu0 %v4845
    %7110 = vmatpush1.bf16.msra.mxu0 %v4844
    %7111 = vmatprep.subr.bf16.mxu0 %v4853
    %7112 = vmatpush1.bf16.msra.mxu0 %v4852
    %7113 = vmatprep.subr.bf16.mxu0 %v4861
    %7114 = vmatpush1.bf16.msra.mxu0 %v4860
    %7115 = vmatprep.subr.bf16.mxu0 %v4869
    %7116 = vmatpush1.bf16.msra.mxu0 %v4868
    %7117 = vmatprep.subr.bf16.mxu0 %v4877
    %7118 = vmatpush1.bf16.msra.mxu0 %v4876
    %7119 = vmatprep.subr.bf16.mxu0 %v4885
    %7120 = vmatpush1.bf16.msra.mxu0 %v4884
    %7121 = vmatprep.subr.bf16.mxu0 %v4893
    %7122 = vmatpush1.bf16.msra.mxu0 %v4892
    %7123 = vmatprep.subr.bf16.mxu0 %v4901
    %7124 = vmatpush1.bf16.msra.mxu0 %v4900
    %7125 = vmatprep.subr.bf16.mxu0 %v4909
    %7126 = vmatpush1.bf16.msra.mxu0 %v4908
    %7127 = vmatprep.subr.bf16.mxu0 %v4917
    %7128 = vmatpush1.bf16.msra.mxu0 %v4916
    %7129 = vmatprep.subr.bf16.mxu0 %v4925
    %7130 = vmatpush1.bf16.msra.mxu0 %v4924
    %7131 = vmatprep.subr.bf16.mxu0 %v4933
    %7132 = vmatpush1.bf16.msra.mxu0 %v4932
    %7133 = vmatprep.subr.bf16.mxu0 %v4941
    %7134 = vmatpush1.bf16.msra.mxu0 %v4940
    %7135 = vmatprep.subr.bf16.mxu0 %v4949
    %7136 = vmatpush1.bf16.msra.mxu0 %v4948
    %7137 = vmatprep.subr.bf16.mxu0 %v4957
    %7138 = vmatpush1.bf16.msra.mxu0 %v4956
    %7139 = vmatprep.subr.bf16.mxu0 %v4965
    %7140 = vmatpush1.bf16.msra.mxu0 %v4964
    %7141 = vmatprep.mubr.bf16.mxu0 %v99
    %7142 = vmatmul.mubr.bf16.gmra.mrb[0].mxu0 %v98
    %v7143 = vpop.f32.mrb[0].mxu0
    %v7144 = vadd.f32 %v7103, %v7143
    %v7145 = vpop.f32.mrb[0].mxu0
    %v7146 = vadd.f32 %v7105, %v7145
    %v7147 = vpop.f32.mrb[0].mxu0
    %v7148 = vpop.f32.mrb[0].mxu0
    %7149 = vdwg.mxu0
    %7150 = vmatprep.subr.bf16.mxu0 %v4973
    %7151 = vmatpush1.bf16.msra.mxu0 %v4972
    %7152 = vmatprep.subr.bf16.mxu0 %v4981
    %7153 = vmatpush1.bf16.msra.mxu0 %v4980
    %7154 = vmatprep.subr.bf16.mxu0 %v4989
    %7155 = vmatpush1.bf16.msra.mxu0 %v4988
    %7156 = vmatprep.subr.bf16.mxu0 %v4997
    %7157 = vmatpush1.bf16.msra.mxu0 %v4996
    %7158 = vmatprep.subr.bf16.mxu0 %v5005
    %7159 = vmatpush1.bf16.msra.mxu0 %v5004
    %7160 = vmatprep.subr.bf16.mxu0 %v5013
    %7161 = vmatpush1.bf16.msra.mxu0 %v5012
    %7162 = vmatprep.subr.bf16.mxu0 %v5021
    %7163 = vmatpush1.bf16.msra.mxu0 %v5020
    %7164 = vmatprep.subr.bf16.mxu0 %v5029
    %7165 = vmatpush1.bf16.msra.mxu0 %v5028
    %7166 = vmatprep.subr.bf16.mxu0 %v5037
    %7167 = vmatpush1.bf16.msra.mxu0 %v5036
    %7168 = vmatprep.subr.bf16.mxu0 %v5045
    %7169 = vmatpush1.bf16.msra.mxu0 %v5044
    %7170 = vmatprep.subr.bf16.mxu0 %v5053
    %7171 = vmatpush1.bf16.msra.mxu0 %v5052
    %7172 = vmatprep.subr.bf16.mxu0 %v5061
    %7173 = vmatpush1.bf16.msra.mxu0 %v5060
    %7174 = vmatprep.subr.bf16.mxu0 %v5069
    %7175 = vmatpush1.bf16.msra.mxu0 %v5068
    %7176 = vmatprep.subr.bf16.mxu0 %v5077
    %7177 = vmatpush1.bf16.msra.mxu0 %v5076
    %7178 = vmatprep.subr.bf16.mxu0 %v5085
    %7179 = vmatpush1.bf16.msra.mxu0 %v5084
    %7180 = vmatprep.subr.bf16.mxu0 %v5093
    %7181 = vmatpush1.bf16.msra.mxu0 %v5092
    %7182 = vmatprep.mubr.bf16.mxu0 %v101
    %7183 = vmatmul.mubr.bf16.gmra.mrb[0].mxu0 %v100
    %v7184 = vpop.f32.mrb[0].mxu0
    %v7185 = vadd.f32 %v7144, %v7184
    %v7186 = vpop.f32.mrb[0].mxu0
    %v7187 = vadd.f32 %v7146, %v7186
    %v7188 = vpop.f32.mrb[0].mxu0
    %v7189 = vpop.f32.mrb[0].mxu0
    %7190 = vdwg.mxu0
    %7191 = vmatprep.subr.bf16.mxu0 %v5101
    %7192 = vmatpush1.bf16.msra.mxu0 %v5100
    %7193 = vmatprep.subr.bf16.mxu0 %v5109
    %7194 = vmatpush1.bf16.msra.mxu0 %v5108
    %7195 = vmatprep.subr.bf16.mxu0 %v5117
    %7196 = vmatpush1.bf16.msra.mxu0 %v5116
    %7197 = vmatprep.subr.bf16.mxu0 %v5125
    %7198 = vmatpush1.bf16.msra.mxu0 %v5124
    %7199 = vmatprep.subr.bf16.mxu0 %v5133
    %7200 = vmatpush1.bf16.msra.mxu0 %v5132
    %7201 = vmatprep.subr.bf16.mxu0 %v5141
    %7202 = vmatpush1.bf16.msra.mxu0 %v5140
    %7203 = vmatprep.subr.bf16.mxu0 %v5149
    %7204 = vmatpush1.bf16.msra.mxu0 %v5148
    %7205 = vmatprep.subr.bf16.mxu0 %v5157
    %7206 = vmatpush1.bf16.msra.mxu0 %v5156
    %7207 = vmatprep.subr.bf16.mxu0 %v5165
    %7208 = vmatpush1.bf16.msra.mxu0 %v5164
    %7209 = vmatprep.subr.bf16.mxu0 %v5173
    %7210 = vmatpush1.bf16.msra.mxu0 %v5172
    %7211 = vmatprep.subr.bf16.mxu0 %v5181
    %7212 = vmatpush1.bf16.msra.mxu0 %v5180
    %7213 = vmatprep.subr.bf16.mxu0 %v5189
    %7214 = vmatpush1.bf16.msra.mxu0 %v5188
    %7215 = vmatprep.subr.bf16.mxu0 %v5197
    %7216 = vmatpush1.bf16.msra.mxu0 %v5196
    %7217 = vmatprep.subr.bf16.mxu0 %v5205
    %7218 = vmatpush1.bf16.msra.mxu0 %v5204
    %7219 = vmatprep.subr.bf16.mxu0 %v5213
    %7220 = vmatpush1.bf16.msra.mxu0 %v5212
    %7221 = vmatprep.subr.bf16.mxu0 %v5221
    %7222 = vmatpush1.bf16.msra.mxu0 %v5220
    %7223 = vmatprep.mubr.bf16.mxu0 %v103
    %7224 = vmatmul.mubr.bf16.gmra.mrb[0].mxu0 %v102
    %v7225 = vpop.f32.mrb[0].mxu0
    %v7226 = vadd.f32 %v7185, %v7225
    %v7227 = vpop.f32.mrb[0].mxu0
    %v7228 = vadd.f32 %v7187, %v7227
    %v7229 = vpop.f32.mrb[0].mxu0
    %v7230 = vpop.f32.mrb[0].mxu0
    %7231 = vdwg.mxu0
    %7232 = vmatprep.subr.bf16.mxu0 %v4207
    %7233 = vmatpush1.bf16.msra.mxu0 %v4206
    %7234 = vmatprep.subr.bf16.mxu0 %v4215
    %7235 = vmatpush1.bf16.msra.mxu0 %v4214
    %7236 = vmatprep.subr.bf16.mxu0 %v4223
    %7237 = vmatpush1.bf16.msra.mxu0 %v4222
    %7238 = vmatprep.subr.bf16.mxu0 %v4231
    %7239 = vmatpush1.bf16.msra.mxu0 %v4230
    %7240 = vmatprep.subr.bf16.mxu0 %v4239
    %7241 = vmatpush1.bf16.msra.mxu0 %v4238
    %7242 = vmatprep.subr.bf16.mxu0 %v4247
    %7243 = vmatpush1.bf16.msra.mxu0 %v4246
    %7244 = vmatprep.subr.bf16.mxu0 %v4255
    %7245 = vmatpush1.bf16.msra.mxu0 %v4254
    %7246 = vmatprep.subr.bf16.mxu0 %v4263
    %7247 = vmatpush1.bf16.msra.mxu0 %v4262
    %7248 = vmatprep.subr.bf16.mxu0 %v4271
    %7249 = vmatpush1.bf16.msra.mxu0 %v4270
    %7250 = vmatprep.subr.bf16.mxu0 %v4279
    %7251 = vmatpush1.bf16.msra.mxu0 %v4278
    %7252 = vmatprep.subr.bf16.mxu0 %v4287
    %7253 = vmatpush1.bf16.msra.mxu0 %v4286
    %7254 = vmatprep.subr.bf16.mxu0 %v4295
    %7255 = vmatpush1.bf16.msra.mxu0 %v4294
    %7256 = vmatprep.subr.bf16.mxu0 %v4303
    %7257 = vmatpush1.bf16.msra.mxu0 %v4302
    %7258 = vmatprep.subr.bf16.mxu0 %v4311
    %7259 = vmatpush1.bf16.msra.mxu0 %v4310
    %7260 = vmatprep.subr.bf16.mxu0 %v4319
    %7261 = vmatpush1.bf16.msra.mxu0 %v4318
    %7262 = vmatprep.subr.bf16.mxu0 %v4327
    %7263 = vmatpush1.bf16.msra.mxu0 %v4326
    %7264 = vmatprep.mubr.bf16.mxu0 %v89
    %7265 = vmatmul.mubr.bf16.gmra.mrb[0].mxu0 %v88
    %v7266 = vpop.f32.mrb[0].mxu0
    %v7267 = vadd.f32 0.0, %v7266
    %v7268 = vpop.f32.mrb[0].mxu0
    %v7269 = vadd.f32 0.0, %v7268
    %v7270 = vpop.f32.mrb[0].mxu0
    %v7271 = vpop.f32.mrb[0].mxu0
    %7272 = vdwg.mxu0
    %7273 = vmatprep.subr.bf16.mxu0 %v4335
    %7274 = vmatpush1.bf16.msra.mxu0 %v4334
    %7275 = vmatprep.subr.bf16.mxu0 %v4343
    %7276 = vmatpush1.bf16.msra.mxu0 %v4342
    %7277 = vmatprep.subr.bf16.mxu0 %v4351
    %7278 = vmatpush1.bf16.msra.mxu0 %v4350
    %7279 = vmatprep.subr.bf16.mxu0 %v4359
    %7280 = vmatpush1.bf16.msra.mxu0 %v4358
    %7281 = vmatprep.subr.bf16.mxu0 %v4367
    %7282 = vmatpush1.bf16.msra.mxu0 %v4366
    %7283 = vmatprep.subr.bf16.mxu0 %v4375
    %7284 = vmatpush1.bf16.msra.mxu0 %v4374
    %7285 = vmatprep.subr.bf16.mxu0 %v4383
    %7286 = vmatpush1.bf16.msra.mxu0 %v4382
    %7287 = vmatprep.subr.bf16.mxu0 %v4391
    %7288 = vmatpush1.bf16.msra.mxu0 %v4390
    %7289 = vmatprep.subr.bf16.mxu0 %v4399
    %7290 = vmatpush1.bf16.msra.mxu0 %v4398
    %7291 = vmatprep.subr.bf16.mxu0 %v4407
    %7292 = vmatpush1.bf16.msra.mxu0 %v4406
    %7293 = vmatprep.subr.bf16.mxu0 %v4415
    %7294 = vmatpush1.bf16.msra.mxu0 %v4414
    %7295 = vmatprep.subr.bf16.mxu0 %v4423
    %7296 = vmatpush1.bf16.msra.mxu0 %v4422
    %7297 = vmatprep.subr.bf16.mxu0 %v4431
    %7298 = vmatpush1.bf16.msra.mxu0 %v4430
    %7299 = vmatprep.subr.bf16.mxu0 %v4439
    %7300 = vmatpush1.bf16.msra.mxu0 %v4438
    %7301 = vmatprep.subr.bf16.mxu0 %v4447
    %7302 = vmatpush1.bf16.msra.mxu0 %v4446
    %7303 = vmatprep.subr.bf16.mxu0 %v4455
    %7304 = vmatpush1.bf16.msra.mxu0 %v4454
    %7305 = vmatprep.mubr.bf16.mxu0 %v91
    %7306 = vmatmul.mubr.bf16.gmra.mrb[0].mxu0 %v90
    %v7307 = vpop.f32.mrb[0].mxu0
    %v7308 = vadd.f32 %v7267, %v7307
    %v7309 = vpop.f32.mrb[0].mxu0
    %v7310 = vadd.f32 %v7269, %v7309
    %v7311 = vpop.f32.mrb[0].mxu0
    %v7312 = vpop.f32.mrb[0].mxu0
    %7313 = vdwg.mxu0
    %7314 = vmatprep.subr.bf16.mxu0 %v4463
    %7315 = vmatpush1.bf16.msra.mxu0 %v4462
    %7316 = vmatprep.subr.bf16.mxu0 %v4471
    %7317 = vmatpush1.bf16.msra.mxu0 %v4470
    %7318 = vmatprep.subr.bf16.mxu0 %v4479
    %7319 = vmatpush1.bf16.msra.mxu0 %v4478
    %7320 = vmatprep.subr.bf16.mxu0 %v4487
    %7321 = vmatpush1.bf16.msra.mxu0 %v4486
    %7322 = vmatprep.subr.bf16.mxu0 %v4495
    %7323 = vmatpush1.bf16.msra.mxu0 %v4494
    %7324 = vmatprep.subr.bf16.mxu0 %v4503
    %7325 = vmatpush1.bf16.msra.mxu0 %v4502
    %7326 = vmatprep.subr.bf16.mxu0 %v4511
    %7327 = vmatpush1.bf16.msra.mxu0 %v4510
    %7328 = vmatprep.subr.bf16.mxu0 %v4519
    %7329 = vmatpush1.bf16.msra.mxu0 %v4518
    %7330 = vmatprep.subr.bf16.mxu0 %v4527
    %7331 = vmatpush1.bf16.msra.mxu0 %v4526
    %7332 = vmatprep.subr.bf16.mxu0 %v4535
    %7333 = vmatpush1.bf16.msra.mxu0 %v4534
    %7334 = vmatprep.subr.bf16.mxu0 %v4543
    %7335 = vmatpush1.bf16.msra.mxu0 %v4542
    %7336 = vmatprep.subr.bf16.mxu0 %v4551
    %7337 = vmatpush1.bf16.msra.mxu0 %v4550
    %7338 = vmatprep.subr.bf16.mxu0 %v4559
    %7339 = vmatpush1.bf16.msra.mxu0 %v4558
    %7340 = vmatprep.subr.bf16.mxu0 %v4567
    %7341 = vmatpush1.bf16.msra.mxu0 %v4566
    %7342 = vmatprep.subr.bf16.mxu0 %v4575
    %7343 = vmatpush1.bf16.msra.mxu0 %v4574
    %7344 = vmatprep.subr.bf16.mxu0 %v4583
    %7345 = vmatpush1.bf16.msra.mxu0 %v4582
    %7346 = vmatprep.mubr.bf16.mxu0 %v93
    %7347 = vmatmul.mubr.bf16.gmra.mrb[0].mxu0 %v92
    %v7348 = vpop.f32.mrb[0].mxu0
    %v7349 = vadd.f32 %v7308, %v7348
    %v7350 = vpop.f32.mrb[0].mxu0
    %v7351 = vadd.f32 %v7310, %v7350
    %v7352 = vpop.f32.mrb[0].mxu0
    %v7353 = vpop.f32.mrb[0].mxu0
    %7354 = vdwg.mxu0
    %7355 = vmatprep.subr.bf16.mxu0 %v4591
    %7356 = vmatpush1.bf16.msra.mxu0 %v4590
    %7357 = vmatprep.subr.bf16.mxu0 %v4599
    %7358 = vmatpush1.bf16.msra.mxu0 %v4598
    %7359 = vmatprep.subr.bf16.mxu0 %v4607
    %7360 = vmatpush1.bf16.msra.mxu0 %v4606
    %7361 = vmatprep.subr.bf16.mxu0 %v4615
    %7362 = vmatpush1.bf16.msra.mxu0 %v4614
    %7363 = vmatprep.subr.bf16.mxu0 %v4623
    %7364 = vmatpush1.bf16.msra.mxu0 %v4622
    %7365 = vmatprep.subr.bf16.mxu0 %v4631
    %7366 = vmatpush1.bf16.msra.mxu0 %v4630
    %7367 = vmatprep.subr.bf16.mxu0 %v4639
    %7368 = vmatpush1.bf16.msra.mxu0 %v4638
    %7369 = vmatprep.subr.bf16.mxu0 %v4647
    %7370 = vmatpush1.bf16.msra.mxu0 %v4646
    %7371 = vmatprep.subr.bf16.mxu0 %v4655
    %7372 = vmatpush1.bf16.msra.mxu0 %v4654
    %7373 = vmatprep.subr.bf16.mxu0 %v4663
    %7374 = vmatpush1.bf16.msra.mxu0 %v4662
    %7375 = vmatprep.subr.bf16.mxu0 %v4671
    %7376 = vmatpush1.bf16.msra.mxu0 %v4670
    %7377 = vmatprep.subr.bf16.mxu0 %v4679
    %7378 = vmatpush1.bf16.msra.mxu0 %v4678
    %7379 = vmatprep.subr.bf16.mxu0 %v4687
    %7380 = vmatpush1.bf16.msra.mxu0 %v4686
    %7381 = vmatprep.subr.bf16.mxu0 %v4695
    %7382 = vmatpush1.bf16.msra.mxu0 %v4694
    %7383 = vmatprep.subr.bf16.mxu0 %v4703
    %7384 = vmatpush1.bf16.msra.mxu0 %v4702
    %7385 = vmatprep.subr.bf16.mxu0 %v4711
    %7386 = vmatpush1.bf16.msra.mxu0 %v4710
    %7387 = vmatprep.mubr.bf16.mxu0 %v95
    %7388 = vmatmul.mubr.bf16.gmra.mrb[0].mxu0 %v94
    %v7389 = vpop.f32.mrb[0].mxu0
    %v7390 = vadd.f32 %v7349, %v7389
    %v7391 = vpop.f32.mrb[0].mxu0
    %v7392 = vadd.f32 %v7351, %v7391
    %v7393 = vpop.f32.mrb[0].mxu0
    %v7394 = vpop.f32.mrb[0].mxu0
    %7395 = vdwg.mxu0
    %7396 = vmatprep.subr.bf16.mxu0 %v4719
    %7397 = vmatpush1.bf16.msra.mxu0 %v4718
    %7398 = vmatprep.subr.bf16.mxu0 %v4727
    %7399 = vmatpush1.bf16.msra.mxu0 %v4726
    %7400 = vmatprep.subr.bf16.mxu0 %v4735
    %7401 = vmatpush1.bf16.msra.mxu0 %v4734
    %7402 = vmatprep.subr.bf16.mxu0 %v4743
    %7403 = vmatpush1.bf16.msra.mxu0 %v4742
    %7404 = vmatprep.subr.bf16.mxu0 %v4751
    %7405 = vmatpush1.bf16.msra.mxu0 %v4750
    %7406 = vmatprep.subr.bf16.mxu0 %v4759
    %7407 = vmatpush1.bf16.msra.mxu0 %v4758
    %7408 = vmatprep.subr.bf16.mxu0 %v4767
    %7409 = vmatpush1.bf16.msra.mxu0 %v4766
    %7410 = vmatprep.subr.bf16.mxu0 %v4775
    %7411 = vmatpush1.bf16.msra.mxu0 %v4774
    %7412 = vmatprep.subr.bf16.mxu0 %v4783
    %7413 = vmatpush1.bf16.msra.mxu0 %v4782
    %7414 = vmatprep.subr.bf16.mxu0 %v4791
    %7415 = vmatpush1.bf16.msra.mxu0 %v4790
    %7416 = vmatprep.subr.bf16.mxu0 %v4799
    %7417 = vmatpush1.bf16.msra.mxu0 %v4798
    %7418 = vmatprep.subr.bf16.mxu0 %v4807
    %7419 = vmatpush1.bf16.msra.mxu0 %v4806
    %7420 = vmatprep.subr.bf16.mxu0 %v4815
    %7421 = vmatpush1.bf16.msra.mxu0 %v4814
    %7422 = vmatprep.subr.bf16.mxu0 %v4823
    %7423 = vmatpush1.bf16.msra.mxu0 %v4822
    %7424 = vmatprep.subr.bf16.mxu0 %v4831
    %7425 = vmatpush1.bf16.msra.mxu0 %v4830
    %7426 = vmatprep.subr.bf16.mxu0 %v4839
    %7427 = vmatpush1.bf16.msra.mxu0 %v4838
    %7428 = vmatprep.mubr.bf16.mxu0 %v97
    %7429 = vmatmul.mubr.bf16.gmra.mrb[0].mxu0 %v96
    %v7430 = vpop.f32.mrb[0].mxu0
    %v7431 = vadd.f32 %v7390, %v7430
    %v7432 = vpop.f32.mrb[0].mxu0
    %v7433 = vadd.f32 %v7392, %v7432
    %v7434 = vpop.f32.mrb[0].mxu0
    %v7435 = vpop.f32.mrb[0].mxu0
    %7436 = vdwg.mxu0
    %7437 = vmatprep.subr.bf16.mxu0 %v4847
    %7438 = vmatpush1.bf16.msra.mxu0 %v4846
    %7439 = vmatprep.subr.bf16.mxu0 %v4855
    %7440 = vmatpush1.bf16.msra.mxu0 %v4854
    %7441 = vmatprep.subr.bf16.mxu0 %v4863
    %7442 = vmatpush1.bf16.msra.mxu0 %v4862
    %7443 = vmatprep.subr.bf16.mxu0 %v4871
    %7444 = vmatpush1.bf16.msra.mxu0 %v4870
    %7445 = vmatprep.subr.bf16.mxu0 %v4879
    %7446 = vmatpush1.bf16.msra.mxu0 %v4878
    %7447 = vmatprep.subr.bf16.mxu0 %v4887
    %7448 = vmatpush1.bf16.msra.mxu0 %v4886
    %7449 = vmatprep.subr.bf16.mxu0 %v4895
    %7450 = vmatpush1.bf16.msra.mxu0 %v4894
    %7451 = vmatprep.subr.bf16.mxu0 %v4903
    %7452 = vmatpush1.bf16.msra.mxu0 %v4902
    %7453 = vmatprep.subr.bf16.mxu0 %v4911
    %7454 = vmatpush1.bf16.msra.mxu0 %v4910
    %7455 = vmatprep.subr.bf16.mxu0 %v4919
    %7456 = vmatpush1.bf16.msra.mxu0 %v4918
    %7457 = vmatprep.subr.bf16.mxu0 %v4927
    %7458 = vmatpush1.bf16.msra.mxu0 %v4926
    %7459 = vmatprep.subr.bf16.mxu0 %v4935
    %7460 = vmatpush1.bf16.msra.mxu0 %v4934
    %7461 = vmatprep.subr.bf16.mxu0 %v4943
    %7462 = vmatpush1.bf16.msra.mxu0 %v4942
    %7463 = vmatprep.subr.bf16.mxu0 %v4951
    %7464 = vmatpush1.bf16.msra.mxu0 %v4950
    %7465 = vmatprep.subr.bf16.mxu0 %v4959
    %7466 = vmatpush1.bf16.msra.mxu0 %v4958
    %7467 = vmatprep.subr.bf16.mxu0 %v4967
    %7468 = vmatpush1.bf16.msra.mxu0 %v4966
    %7469 = vmatprep.mubr.bf16.mxu0 %v99
    %7470 = vmatmul.mubr.bf16.gmra.mrb[0].mxu0 %v98
    %v7471 = vpop.f32.mrb[0].mxu0
    %v7472 = vadd.f32 %v7431, %v7471
    %v7473 = vpop.f32.mrb[0].mxu0
    %v7474 = vadd.f32 %v7433, %v7473
    %v7475 = vpop.f32.mrb[0].mxu0
    %v7476 = vpop.f32.mrb[0].mxu0
    %7477 = vdwg.mxu0
    %7478 = vmatprep.subr.bf16.mxu0 %v4975
    %7479 = vmatpush1.bf16.msra.mxu0 %v4974
    %7480 = vmatprep.subr.bf16.mxu0 %v4983
    %7481 = vmatpush1.bf16.msra.mxu0 %v4982
    %7482 = vmatprep.subr.bf16.mxu0 %v4991
    %7483 = vmatpush1.bf16.msra.mxu0 %v4990
    %7484 = vmatprep.subr.bf16.mxu0 %v4999
    %7485 = vmatpush1.bf16.msra.mxu0 %v4998
    %7486 = vmatprep.subr.bf16.mxu0 %v5007
    %7487 = vmatpush1.bf16.msra.mxu0 %v5006
    %7488 = vmatprep.subr.bf16.mxu0 %v5015
    %7489 = vmatpush1.bf16.msra.mxu0 %v5014
    %7490 = vmatprep.subr.bf16.mxu0 %v5023
    %7491 = vmatpush1.bf16.msra.mxu0 %v5022
    %7492 = vmatprep.subr.bf16.mxu0 %v5031
    %7493 = vmatpush1.bf16.msra.mxu0 %v5030
    %7494 = vmatprep.subr.bf16.mxu0 %v5039
    %7495 = vmatpush1.bf16.msra.mxu0 %v5038
    %7496 = vmatprep.subr.bf16.mxu0 %v5047
    %7497 = vmatpush1.bf16.msra.mxu0 %v5046
    %7498 = vmatprep.subr.bf16.mxu0 %v5055
    %7499 = vmatpush1.bf16.msra.mxu0 %v5054
    %7500 = vmatprep.subr.bf16.mxu0 %v5063
    %7501 = vmatpush1.bf16.msra.mxu0 %v5062
    %7502 = vmatprep.subr.bf16.mxu0 %v5071
    %7503 = vmatpush1.bf16.msra.mxu0 %v5070
    %7504 = vmatprep.subr.bf16.mxu0 %v5079
    %7505 = vmatpush1.bf16.msra.mxu0 %v5078
    %7506 = vmatprep.subr.bf16.mxu0 %v5087
    %7507 = vmatpush1.bf16.msra.mxu0 %v5086
    %7508 = vmatprep.subr.bf16.mxu0 %v5095
    %7509 = vmatpush1.bf16.msra.mxu0 %v5094
    %7510 = vmatprep.mubr.bf16.mxu0 %v101
    %7511 = vmatmul.mubr.bf16.gmra.mrb[0].mxu0 %v100
    %v7512 = vpop.f32.mrb[0].mxu0
    %v7513 = vadd.f32 %v7472, %v7512
    %v7514 = vpop.f32.mrb[0].mxu0
    %v7515 = vadd.f32 %v7474, %v7514
    %v7516 = vpop.f32.mrb[0].mxu0
    %v7517 = vpop.f32.mrb[0].mxu0
    %7518 = vdwg.mxu0
    %7519 = vmatprep.subr.bf16.mxu0 %v5103
    %7520 = vmatpush1.bf16.msra.mxu0 %v5102
    %7521 = vmatprep.subr.bf16.mxu0 %v5111
    %7522 = vmatpush1.bf16.msra.mxu0 %v5110
    %7523 = vmatprep.subr.bf16.mxu0 %v5119
    %7524 = vmatpush1.bf16.msra.mxu0 %v5118
    %7525 = vmatprep.subr.bf16.mxu0 %v5127
    %7526 = vmatpush1.bf16.msra.mxu0 %v5126
    %7527 = vmatprep.subr.bf16.mxu0 %v5135
    %7528 = vmatpush1.bf16.msra.mxu0 %v5134
    %7529 = vmatprep.subr.bf16.mxu0 %v5143
    %7530 = vmatpush1.bf16.msra.mxu0 %v5142
    %7531 = vmatprep.subr.bf16.mxu0 %v5151
    %7532 = vmatpush1.bf16.msra.mxu0 %v5150
    %7533 = vmatprep.subr.bf16.mxu0 %v5159
    %7534 = vmatpush1.bf16.msra.mxu0 %v5158
    %7535 = vmatprep.subr.bf16.mxu0 %v5167
    %7536 = vmatpush1.bf16.msra.mxu0 %v5166
    %7537 = vmatprep.subr.bf16.mxu0 %v5175
    %7538 = vmatpush1.bf16.msra.mxu0 %v5174
    %7539 = vmatprep.subr.bf16.mxu0 %v5183
    %7540 = vmatpush1.bf16.msra.mxu0 %v5182
    %7541 = vmatprep.subr.bf16.mxu0 %v5191
    %7542 = vmatpush1.bf16.msra.mxu0 %v5190
    %7543 = vmatprep.subr.bf16.mxu0 %v5199
    %7544 = vmatpush1.bf16.msra.mxu0 %v5198
    %7545 = vmatprep.subr.bf16.mxu0 %v5207
    %7546 = vmatpush1.bf16.msra.mxu0 %v5206
    %7547 = vmatprep.subr.bf16.mxu0 %v5215
    %7548 = vmatpush1.bf16.msra.mxu0 %v5214
    %7549 = vmatprep.subr.bf16.mxu0 %v5223
    %7550 = vmatpush1.bf16.msra.mxu0 %v5222
    %7551 = vmatprep.mubr.bf16.mxu0 %v103
    %7552 = vmatmul.mubr.bf16.gmra.mrb[0].mxu0 %v102
    %v7553 = vpop.f32.mrb[0].mxu0
    %v7554 = vadd.f32 %v7513, %v7553
    %v7555 = vpop.f32.mrb[0].mxu0
    %v7556 = vadd.f32 %v7515, %v7555
    %v7557 = vpop.f32.mrb[0].mxu0
    %v7558 = vpop.f32.mrb[0].mxu0
    %7559 = vdwg.mxu0
    %v7560 = vmax.f32 %v6570, 0.0
    %v7561 = vmax.f32 %v6572, 0.0
    %v7562 = vmax.f32 %v6898, 0.0
    %v7563 = vmax.f32 %v6900, 0.0
    %v7564 = vmax.f32 %v7226, 0.0
    %v7565 = vmax.f32 %v7228, 0.0
    %v7566 = vmax.f32 %v7554, 0.0
    %v7567 = vmax.f32 %v7556, 0.0
    %v7568 = vpack.c.bf16 %v7560, %v7560
    %v7569 = vpack.c.bf16 %v7561, %v7561
    %v7570 = vpack.c.bf16 %v7562, %v7562
    %v7571 = vpack.c.bf16 %v7563, %v7563
    %v7572 = vpack.c.bf16 %v7564, %v7564
    %v7573 = vpack.c.bf16 %v7565, %v7565
    %v7574 = vpack.c.bf16 %v7566, %v7566
    %v7575 = vpack.c.bf16 %v7567, %v7567
    %v7576 = vld [vmem:[#allocation7] sm:$0xff]
    %v7577 = vld [vmem:[#allocation7 + $0x8] sm:$0xff]
    %v7578 = vld [vmem:[#allocation7 + $0x10] sm:$0xff]
    %v7579 = vld [vmem:[#allocation7 + $0x18] sm:$0xff]
    %v7580 = vld [vmem:[#allocation7 + $0x20] sm:$0xff]
    %v7581 = vld [vmem:[#allocation7 + $0x28] sm:$0xff]
    %v7582 = vld [vmem:[#allocation7 + $0x30] sm:$0xff]
    %v7583 = vld [vmem:[#allocation7 + $0x38] sm:$0xff]
    %v7584 = vld [vmem:[#allocation7 + $0x40] sm:$0xff]
    %v7585 = vld [vmem:[#allocation7 + $0x48] sm:$0xff]
    %v7586 = vld [vmem:[#allocation7 + $0x50] sm:$0xff]
    %v7587 = vld [vmem:[#allocation7 + $0x58] sm:$0xff]
    %v7588 = vld [vmem:[#allocation7 + $0x60] sm:$0xff]
    %v7589 = vld [vmem:[#allocation7 + $0x68] sm:$0xff]
    %v7590 = vld [vmem:[#allocation7 + $0x70] sm:$0xff]
    %v7591 = vld [vmem:[#allocation7 + $0x78] sm:$0xff]
    %v7592 = vld [vmem:[#allocation7 + $0x80] sm:$0xff]
    %v7593 = vld [vmem:[#allocation7 + $0x88] sm:$0xff]
    %v7594 = vld [vmem:[#allocation7 + $0x90] sm:$0xff]
    %v7595 = vld [vmem:[#allocation7 + $0x98] sm:$0xff]
    %v7596 = vld [vmem:[#allocation7 + $0xa0] sm:$0xff]
    %v7597 = vld [vmem:[#allocation7 + $0xa8] sm:$0xff]
    %v7598 = vld [vmem:[#allocation7 + $0xb0] sm:$0xff]
    %v7599 = vld [vmem:[#allocation7 + $0xb8] sm:$0xff]
    %v7600 = vld [vmem:[#allocation7 + $0xc0] sm:$0xff]
    %v7601 = vld [vmem:[#allocation7 + $0xc8] sm:$0xff]
    %v7602 = vld [vmem:[#allocation7 + $0xd0] sm:$0xff]
    %v7603 = vld [vmem:[#allocation7 + $0xd8] sm:$0xff]
    %v7604 = vld [vmem:[#allocation7 + $0xe0] sm:$0xff]
    %v7605 = vld [vmem:[#allocation7 + $0xe8] sm:$0xff]
    %v7606 = vld [vmem:[#allocation7 + $0xf0] sm:$0xff]
    %v7607 = vld [vmem:[#allocation7 + $0xf8] sm:$0xff]
    %v7608 = vld [vmem:[#allocation7 + $0x100] sm:$0xff]
    %v7609 = vld [vmem:[#allocation7 + $0x108] sm:$0xff]
    %v7610 = vld [vmem:[#allocation7 + $0x110] sm:$0xff]
    %v7611 = vld [vmem:[#allocation7 + $0x118] sm:$0xff]
    %v7612 = vld [vmem:[#allocation7 + $0x120] sm:$0xff]
    %v7613 = vld [vmem:[#allocation7 + $0x128] sm:$0xff]
    %v7614 = vld [vmem:[#allocation7 + $0x130] sm:$0xff]
    %v7615 = vld [vmem:[#allocation7 + $0x138] sm:$0xff]
    %v7616 = vld [vmem:[#allocation7 + $0x140] sm:$0xff]
    %v7617 = vld [vmem:[#allocation7 + $0x148] sm:$0xff]
    %v7618 = vld [vmem:[#allocation7 + $0x150] sm:$0xff]
    %v7619 = vld [vmem:[#allocation7 + $0x158] sm:$0xff]
    %v7620 = vld [vmem:[#allocation7 + $0x160] sm:$0xff]
    %v7621 = vld [vmem:[#allocation7 + $0x168] sm:$0xff]
    %v7622 = vld [vmem:[#allocation7 + $0x170] sm:$0xff]
    %v7623 = vld [vmem:[#allocation7 + $0x178] sm:$0xff]
    %v7624 = vld [vmem:[#allocation7 + $0x180] sm:$0xff]
    %v7625 = vld [vmem:[#allocation7 + $0x188] sm:$0xff]
    %v7626 = vld [vmem:[#allocation7 + $0x190] sm:$0xff]
    %v7627 = vld [vmem:[#allocation7 + $0x198] sm:$0xff]
    %v7628 = vld [vmem:[#allocation7 + $0x1a0] sm:$0xff]
    %v7629 = vld [vmem:[#allocation7 + $0x1a8] sm:$0xff]
    %v7630 = vld [vmem:[#allocation7 + $0x1b0] sm:$0xff]
    %v7631 = vld [vmem:[#allocation7 + $0x1b8] sm:$0xff]
    %v7632 = vld [vmem:[#allocation7 + $0x1c0] sm:$0xff]
    %v7633 = vld [vmem:[#allocation7 + $0x1c8] sm:$0xff]
    %v7634 = vld [vmem:[#allocation7 + $0x1d0] sm:$0xff]
    %v7635 = vld [vmem:[#allocation7 + $0x1d8] sm:$0xff]
    %v7636 = vld [vmem:[#allocation7 + $0x1e0] sm:$0xff]
    %v7637 = vld [vmem:[#allocation7 + $0x1e8] sm:$0xff]
    %v7638 = vld [vmem:[#allocation7 + $0x1f0] sm:$0xff]
    %v7639 = vld [vmem:[#allocation7 + $0x1f8] sm:$0xff]
    %v7640 = vld [vmem:[#allocation7 + $0x200] sm:$0xff]
    %v7641 = vld [vmem:[#allocation7 + $0x208] sm:$0xff]
    %v7642 = vld [vmem:[#allocation7 + $0x210] sm:$0xff]
    %v7643 = vld [vmem:[#allocation7 + $0x218] sm:$0xff]
    %v7644 = vld [vmem:[#allocation7 + $0x220] sm:$0xff]
    %v7645 = vld [vmem:[#allocation7 + $0x228] sm:$0xff]
    %v7646 = vld [vmem:[#allocation7 + $0x230] sm:$0xff]
    %v7647 = vld [vmem:[#allocation7 + $0x238] sm:$0xff]
    %v7648 = vld [vmem:[#allocation7 + $0x240] sm:$0xff]
    %v7649 = vld [vmem:[#allocation7 + $0x248] sm:$0xff]
    %v7650 = vld [vmem:[#allocation7 + $0x250] sm:$0xff]
    %v7651 = vld [vmem:[#allocation7 + $0x258] sm:$0xff]
    %v7652 = vld [vmem:[#allocation7 + $0x260] sm:$0xff]
    %v7653 = vld [vmem:[#allocation7 + $0x268] sm:$0xff]
    %v7654 = vld [vmem:[#allocation7 + $0x270] sm:$0xff]
    %v7655 = vld [vmem:[#allocation7 + $0x278] sm:$0xff]
    %v7656 = vld [vmem:[#allocation7 + $0x280] sm:$0xff]
    %v7657 = vld [vmem:[#allocation7 + $0x288] sm:$0xff]
    %v7658 = vld [vmem:[#allocation7 + $0x290] sm:$0xff]
    %v7659 = vld [vmem:[#allocation7 + $0x298] sm:$0xff]
    %v7660 = vld [vmem:[#allocation7 + $0x2a0] sm:$0xff]
    %v7661 = vld [vmem:[#allocation7 + $0x2a8] sm:$0xff]
    %v7662 = vld [vmem:[#allocation7 + $0x2b0] sm:$0xff]
    %v7663 = vld [vmem:[#allocation7 + $0x2b8] sm:$0xff]
    %v7664 = vld [vmem:[#allocation7 + $0x2c0] sm:$0xff]
    %v7665 = vld [vmem:[#allocation7 + $0x2c8] sm:$0xff]
    %v7666 = vld [vmem:[#allocation7 + $0x2d0] sm:$0xff]
    %v7667 = vld [vmem:[#allocation7 + $0x2d8] sm:$0xff]
    %v7668 = vld [vmem:[#allocation7 + $0x2e0] sm:$0xff]
    %v7669 = vld [vmem:[#allocation7 + $0x2e8] sm:$0xff]
    %v7670 = vld [vmem:[#allocation7 + $0x2f0] sm:$0xff]
    %v7671 = vld [vmem:[#allocation7 + $0x2f8] sm:$0xff]
    %v7672 = vld [vmem:[#allocation7 + $0x300] sm:$0xff]
    %v7673 = vld [vmem:[#allocation7 + $0x308] sm:$0xff]
    %v7674 = vld [vmem:[#allocation7 + $0x310] sm:$0xff]
    %v7675 = vld [vmem:[#allocation7 + $0x318] sm:$0xff]
    %v7676 = vld [vmem:[#allocation7 + $0x320] sm:$0xff]
    %v7677 = vld [vmem:[#allocation7 + $0x328] sm:$0xff]
    %v7678 = vld [vmem:[#allocation7 + $0x330] sm:$0xff]
    %v7679 = vld [vmem:[#allocation7 + $0x338] sm:$0xff]
    %v7680 = vld [vmem:[#allocation7 + $0x340] sm:$0xff]
    %v7681 = vld [vmem:[#allocation7 + $0x348] sm:$0xff]
    %v7682 = vld [vmem:[#allocation7 + $0x350] sm:$0xff]
    %v7683 = vld [vmem:[#allocation7 + $0x358] sm:$0xff]
    %v7684 = vld [vmem:[#allocation7 + $0x360] sm:$0xff]
    %v7685 = vld [vmem:[#allocation7 + $0x368] sm:$0xff]
    %v7686 = vld [vmem:[#allocation7 + $0x370] sm:$0xff]
    %v7687 = vld [vmem:[#allocation7 + $0x378] sm:$0xff]
    %v7688 = vld [vmem:[#allocation7 + $0x380] sm:$0xff]
    %v7689 = vld [vmem:[#allocation7 + $0x388] sm:$0xff]
    %v7690 = vld [vmem:[#allocation7 + $0x390] sm:$0xff]
    %v7691 = vld [vmem:[#allocation7 + $0x398] sm:$0xff]
    %v7692 = vld [vmem:[#allocation7 + $0x3a0] sm:$0xff]
    %v7693 = vld [vmem:[#allocation7 + $0x3a8] sm:$0xff]
    %v7694 = vld [vmem:[#allocation7 + $0x3b0] sm:$0xff]
    %v7695 = vld [vmem:[#allocation7 + $0x3b8] sm:$0xff]
    %v7696 = vld [vmem:[#allocation7 + $0x3c0] sm:$0xff]
    %v7697 = vld [vmem:[#allocation7 + $0x3c8] sm:$0xff]
    %v7698 = vld [vmem:[#allocation7 + $0x3d0] sm:$0xff]
    %v7699 = vld [vmem:[#allocation7 + $0x3d8] sm:$0xff]
    %v7700 = vld [vmem:[#allocation7 + $0x3e0] sm:$0xff]
    %v7701 = vld [vmem:[#allocation7 + $0x3e8] sm:$0xff]
    %v7702 = vld [vmem:[#allocation7 + $0x3f0] sm:$0xff]
    %v7703 = vld [vmem:[#allocation7 + $0x3f8] sm:$0xff]
    %v7832 = vunpack.c.l.b16 %v7576
    %v7833 = vunpack.c.h.b16 %v7576
    %v7834 = vunpack.c.l.b16 %v7577
    %v7835 = vunpack.c.h.b16 %v7577
    %v7836 = vunpack.c.l.b16 %v7578
    %v7837 = vunpack.c.h.b16 %v7578
    %v7838 = vunpack.c.l.b16 %v7579
    %v7839 = vunpack.c.h.b16 %v7579
    %v7840 = vunpack.c.l.b16 %v7580
    %v7841 = vunpack.c.h.b16 %v7580
    %v7842 = vunpack.c.l.b16 %v7581
    %v7843 = vunpack.c.h.b16 %v7581
    %v7844 = vunpack.c.l.b16 %v7582
    %v7845 = vunpack.c.h.b16 %v7582
    %v7846 = vunpack.c.l.b16 %v7583
    %v7847 = vunpack.c.h.b16 %v7583
    %v7848 = vunpack.c.l.b16 %v7584
    %v7849 = vunpack.c.h.b16 %v7584
    %v7850 = vunpack.c.l.b16 %v7585
    %v7851 = vunpack.c.h.b16 %v7585
    %v7852 = vunpack.c.l.b16 %v7586
    %v7853 = vunpack.c.h.b16 %v7586
    %v7854 = vunpack.c.l.b16 %v7587
    %v7855 = vunpack.c.h.b16 %v7587
    %v7856 = vunpack.c.l.b16 %v7588
    %v7857 = vunpack.c.h.b16 %v7588
    %v7858 = vunpack.c.l.b16 %v7589
    %v7859 = vunpack.c.h.b16 %v7589
    %v7860 = vunpack.c.l.b16 %v7590
    %v7861 = vunpack.c.h.b16 %v7590
    %v7862 = vunpack.c.l.b16 %v7591
    %v7863 = vunpack.c.h.b16 %v7591
    %v7864 = vunpack.c.l.b16 %v7592
    %v7865 = vunpack.c.h.b16 %v7592
    %v7866 = vunpack.c.l.b16 %v7593
    %v7867 = vunpack.c.h.b16 %v7593
    %v7868 = vunpack.c.l.b16 %v7594
    %v7869 = vunpack.c.h.b16 %v7594
    %v7870 = vunpack.c.l.b16 %v7595
    %v7871 = vunpack.c.h.b16 %v7595
    %v7872 = vunpack.c.l.b16 %v7596
    %v7873 = vunpack.c.h.b16 %v7596
    %v7874 = vunpack.c.l.b16 %v7597
    %v7875 = vunpack.c.h.b16 %v7597
    %v7876 = vunpack.c.l.b16 %v7598
    %v7877 = vunpack.c.h.b16 %v7598
    %v7878 = vunpack.c.l.b16 %v7599
    %v7879 = vunpack.c.h.b16 %v7599
    %v7880 = vunpack.c.l.b16 %v7600
    %v7881 = vunpack.c.h.b16 %v7600
    %v7882 = vunpack.c.l.b16 %v7601
    %v7883 = vunpack.c.h.b16 %v7601
    %v7884 = vunpack.c.l.b16 %v7602
    %v7885 = vunpack.c.h.b16 %v7602
    %v7886 = vunpack.c.l.b16 %v7603
    %v7887 = vunpack.c.h.b16 %v7603
    %v7888 = vunpack.c.l.b16 %v7604
    %v7889 = vunpack.c.h.b16 %v7604
    %v7890 = vunpack.c.l.b16 %v7605
    %v7891 = vunpack.c.h.b16 %v7605
    %v7892 = vunpack.c.l.b16 %v7606
    %v7893 = vunpack.c.h.b16 %v7606
    %v7894 = vunpack.c.l.b16 %v7607
    %v7895 = vunpack.c.h.b16 %v7607
    %v7896 = vunpack.c.l.b16 %v7608
    %v7897 = vunpack.c.h.b16 %v7608
    %v7898 = vunpack.c.l.b16 %v7609
    %v7899 = vunpack.c.h.b16 %v7609
    %v7900 = vunpack.c.l.b16 %v7610
    %v7901 = vunpack.c.h.b16 %v7610
    %v7902 = vunpack.c.l.b16 %v7611
    %v7903 = vunpack.c.h.b16 %v7611
    %v7904 = vunpack.c.l.b16 %v7612
    %v7905 = vunpack.c.h.b16 %v7612
    %v7906 = vunpack.c.l.b16 %v7613
    %v7907 = vunpack.c.h.b16 %v7613
    %v7908 = vunpack.c.l.b16 %v7614
    %v7909 = vunpack.c.h.b16 %v7614
    %v7910 = vunpack.c.l.b16 %v7615
    %v7911 = vunpack.c.h.b16 %v7615
    %v7912 = vunpack.c.l.b16 %v7616
    %v7913 = vunpack.c.h.b16 %v7616
    %v7914 = vunpack.c.l.b16 %v7617
    %v7915 = vunpack.c.h.b16 %v7617
    %v7916 = vunpack.c.l.b16 %v7618
    %v7917 = vunpack.c.h.b16 %v7618
    %v7918 = vunpack.c.l.b16 %v7619
    %v7919 = vunpack.c.h.b16 %v7619
    %v7920 = vunpack.c.l.b16 %v7620
    %v7921 = vunpack.c.h.b16 %v7620
    %v7922 = vunpack.c.l.b16 %v7621
    %v7923 = vunpack.c.h.b16 %v7621
    %v7924 = vunpack.c.l.b16 %v7622
    %v7925 = vunpack.c.h.b16 %v7622
    %v7926 = vunpack.c.l.b16 %v7623
    %v7927 = vunpack.c.h.b16 %v7623
    %v7928 = vunpack.c.l.b16 %v7624
    %v7929 = vunpack.c.h.b16 %v7624
    %v7930 = vunpack.c.l.b16 %v7625
    %v7931 = vunpack.c.h.b16 %v7625
    %v7932 = vunpack.c.l.b16 %v7626
    %v7933 = vunpack.c.h.b16 %v7626
    %v7934 = vunpack.c.l.b16 %v7627
    %v7935 = vunpack.c.h.b16 %v7627
    %v7936 = vunpack.c.l.b16 %v7628
    %v7937 = vunpack.c.h.b16 %v7628
    %v7938 = vunpack.c.l.b16 %v7629
    %v7939 = vunpack.c.h.b16 %v7629
    %v7940 = vunpack.c.l.b16 %v7630
    %v7941 = vunpack.c.h.b16 %v7630
    %v7942 = vunpack.c.l.b16 %v7631
    %v7943 = vunpack.c.h.b16 %v7631
    %v7944 = vunpack.c.l.b16 %v7632
    %v7945 = vunpack.c.h.b16 %v7632
    %v7946 = vunpack.c.l.b16 %v7633
    %v7947 = vunpack.c.h.b16 %v7633
    %v7948 = vunpack.c.l.b16 %v7634
    %v7949 = vunpack.c.h.b16 %v7634
    %v7950 = vunpack.c.l.b16 %v7635
    %v7951 = vunpack.c.h.b16 %v7635
    %v7952 = vunpack.c.l.b16 %v7636
    %v7953 = vunpack.c.h.b16 %v7636
    %v7954 = vunpack.c.l.b16 %v7637
    %v7955 = vunpack.c.h.b16 %v7637
    %v7956 = vunpack.c.l.b16 %v7638
    %v7957 = vunpack.c.h.b16 %v7638
    %v7958 = vunpack.c.l.b16 %v7639
    %v7959 = vunpack.c.h.b16 %v7639
    %v7960 = vunpack.c.l.b16 %v7640
    %v7961 = vunpack.c.h.b16 %v7640
    %v7962 = vunpack.c.l.b16 %v7641
    %v7963 = vunpack.c.h.b16 %v7641
    %v7964 = vunpack.c.l.b16 %v7642
    %v7965 = vunpack.c.h.b16 %v7642
    %v7966 = vunpack.c.l.b16 %v7643
    %v7967 = vunpack.c.h.b16 %v7643
    %v7968 = vunpack.c.l.b16 %v7644
    %v7969 = vunpack.c.h.b16 %v7644
    %v7970 = vunpack.c.l.b16 %v7645
    %v7971 = vunpack.c.h.b16 %v7645
    %v7972 = vunpack.c.l.b16 %v7646
    %v7973 = vunpack.c.h.b16 %v7646
    %v7974 = vunpack.c.l.b16 %v7647
    %v7975 = vunpack.c.h.b16 %v7647
    %v7976 = vunpack.c.l.b16 %v7648
    %v7977 = vunpack.c.h.b16 %v7648
    %v7978 = vunpack.c.l.b16 %v7649
    %v7979 = vunpack.c.h.b16 %v7649
    %v7980 = vunpack.c.l.b16 %v7650
    %v7981 = vunpack.c.h.b16 %v7650
    %v7982 = vunpack.c.l.b16 %v7651
    %v7983 = vunpack.c.h.b16 %v7651
    %v7984 = vunpack.c.l.b16 %v7652
    %v7985 = vunpack.c.h.b16 %v7652
    %v7986 = vunpack.c.l.b16 %v7653
    %v7987 = vunpack.c.h.b16 %v7653
    %v7988 = vunpack.c.l.b16 %v7654
    %v7989 = vunpack.c.h.b16 %v7654
    %v7990 = vunpack.c.l.b16 %v7655
    %v7991 = vunpack.c.h.b16 %v7655
    %v7992 = vunpack.c.l.b16 %v7656
    %v7993 = vunpack.c.h.b16 %v7656
    %v7994 = vunpack.c.l.b16 %v7657
    %v7995 = vunpack.c.h.b16 %v7657
    %v7996 = vunpack.c.l.b16 %v7658
    %v7997 = vunpack.c.h.b16 %v7658
    %v7998 = vunpack.c.l.b16 %v7659
    %v7999 = vunpack.c.h.b16 %v7659
    %v8000 = vunpack.c.l.b16 %v7660
    %v8001 = vunpack.c.h.b16 %v7660
    %v8002 = vunpack.c.l.b16 %v7661
    %v8003 = vunpack.c.h.b16 %v7661
    %v8004 = vunpack.c.l.b16 %v7662
    %v8005 = vunpack.c.h.b16 %v7662
    %v8006 = vunpack.c.l.b16 %v7663
    %v8007 = vunpack.c.h.b16 %v7663
    %v8008 = vunpack.c.l.b16 %v7664
    %v8009 = vunpack.c.h.b16 %v7664
    %v8010 = vunpack.c.l.b16 %v7665
    %v8011 = vunpack.c.h.b16 %v7665
    %v8012 = vunpack.c.l.b16 %v7666
    %v8013 = vunpack.c.h.b16 %v7666
    %v8014 = vunpack.c.l.b16 %v7667
    %v8015 = vunpack.c.h.b16 %v7667
    %v8016 = vunpack.c.l.b16 %v7668
    %v8017 = vunpack.c.h.b16 %v7668
    %v8018 = vunpack.c.l.b16 %v7669
    %v8019 = vunpack.c.h.b16 %v7669
    %v8020 = vunpack.c.l.b16 %v7670
    %v8021 = vunpack.c.h.b16 %v7670
    %v8022 = vunpack.c.l.b16 %v7671
    %v8023 = vunpack.c.h.b16 %v7671
    %v8024 = vunpack.c.l.b16 %v7672
    %v8025 = vunpack.c.h.b16 %v7672
    %v8026 = vunpack.c.l.b16 %v7673
    %v8027 = vunpack.c.h.b16 %v7673
    %v8028 = vunpack.c.l.b16 %v7674
    %v8029 = vunpack.c.h.b16 %v7674
    %v8030 = vunpack.c.l.b16 %v7675
    %v8031 = vunpack.c.h.b16 %v7675
    %v8032 = vunpack.c.l.b16 %v7676
    %v8033 = vunpack.c.h.b16 %v7676
    %v8034 = vunpack.c.l.b16 %v7677
    %v8035 = vunpack.c.h.b16 %v7677
    %v8036 = vunpack.c.l.b16 %v7678
    %v8037 = vunpack.c.h.b16 %v7678
    %v8038 = vunpack.c.l.b16 %v7679
    %v8039 = vunpack.c.h.b16 %v7679
    %v8040 = vunpack.c.l.b16 %v7680
    %v8041 = vunpack.c.h.b16 %v7680
    %v8042 = vunpack.c.l.b16 %v7681
    %v8043 = vunpack.c.h.b16 %v7681
    %v8044 = vunpack.c.l.b16 %v7682
    %v8045 = vunpack.c.h.b16 %v7682
    %v8046 = vunpack.c.l.b16 %v7683
    %v8047 = vunpack.c.h.b16 %v7683
    %v8048 = vunpack.c.l.b16 %v7684
    %v8049 = vunpack.c.h.b16 %v7684
    %v8050 = vunpack.c.l.b16 %v7685
    %v8051 = vunpack.c.h.b16 %v7685
    %v8052 = vunpack.c.l.b16 %v7686
    %v8053 = vunpack.c.h.b16 %v7686
    %v8054 = vunpack.c.l.b16 %v7687
    %v8055 = vunpack.c.h.b16 %v7687
    %v8056 = vunpack.c.l.b16 %v7688
    %v8057 = vunpack.c.h.b16 %v7688
    %v8058 = vunpack.c.l.b16 %v7689
    %v8059 = vunpack.c.h.b16 %v7689
    %v8060 = vunpack.c.l.b16 %v7690
    %v8061 = vunpack.c.h.b16 %v7690
    %v8062 = vunpack.c.l.b16 %v7691
    %v8063 = vunpack.c.h.b16 %v7691
    %v8064 = vunpack.c.l.b16 %v7692
    %v8065 = vunpack.c.h.b16 %v7692
    %v8066 = vunpack.c.l.b16 %v7693
    %v8067 = vunpack.c.h.b16 %v7693
    %v8068 = vunpack.c.l.b16 %v7694
    %v8069 = vunpack.c.h.b16 %v7694
    %v8070 = vunpack.c.l.b16 %v7695
    %v8071 = vunpack.c.h.b16 %v7695
    %v8072 = vunpack.c.l.b16 %v7696
    %v8073 = vunpack.c.h.b16 %v7696
    %v8074 = vunpack.c.l.b16 %v7697
    %v8075 = vunpack.c.h.b16 %v7697
    %v8076 = vunpack.c.l.b16 %v7698
    %v8077 = vunpack.c.h.b16 %v7698
    %v8078 = vunpack.c.l.b16 %v7699
    %v8079 = vunpack.c.h.b16 %v7699
    %v8080 = vunpack.c.l.b16 %v7700
    %v8081 = vunpack.c.h.b16 %v7700
    %v8082 = vunpack.c.l.b16 %v7701
    %v8083 = vunpack.c.h.b16 %v7701
    %v8084 = vunpack.c.l.b16 %v7702
    %v8085 = vunpack.c.h.b16 %v7702
    %v8086 = vunpack.c.l.b16 %v7703
    %v8087 = vunpack.c.h.b16 %v7703
    %v8088 = vpack.c.b16 %v7834, %v7832
    %v8089 = vpack.c.b16 %v7835, %v7833
    %v8090 = vpack.c.b16 %v7838, %v7836
    %v8091 = vpack.c.b16 %v7839, %v7837
    %v8092 = vpack.c.b16 %v7842, %v7840
    %v8093 = vpack.c.b16 %v7843, %v7841
    %v8094 = vpack.c.b16 %v7846, %v7844
    %v8095 = vpack.c.b16 %v7847, %v7845
    %v8096 = vpack.c.b16 %v7850, %v7848
    %v8097 = vpack.c.b16 %v7851, %v7849
    %v8098 = vpack.c.b16 %v7854, %v7852
    %v8099 = vpack.c.b16 %v7855, %v7853
    %v8100 = vpack.c.b16 %v7858, %v7856
    %v8101 = vpack.c.b16 %v7859, %v7857
    %v8102 = vpack.c.b16 %v7862, %v7860
    %v8103 = vpack.c.b16 %v7863, %v7861
    %v8104 = vpack.c.b16 %v7866, %v7864
    %v8105 = vpack.c.b16 %v7867, %v7865
    %v8106 = vpack.c.b16 %v7870, %v7868
    %v8107 = vpack.c.b16 %v7871, %v7869
    %v8108 = vpack.c.b16 %v7874, %v7872
    %v8109 = vpack.c.b16 %v7875, %v7873
    %v8110 = vpack.c.b16 %v7878, %v7876
    %v8111 = vpack.c.b16 %v7879, %v7877
    %v8112 = vpack.c.b16 %v7882, %v7880
    %v8113 = vpack.c.b16 %v7883, %v7881
    %v8114 = vpack.c.b16 %v7886, %v7884
    %v8115 = vpack.c.b16 %v7887, %v7885
    %v8116 = vpack.c.b16 %v7890, %v7888
    %v8117 = vpack.c.b16 %v7891, %v7889
    %v8118 = vpack.c.b16 %v7894, %v7892
    %v8119 = vpack.c.b16 %v7895, %v7893
    %v8120 = vpack.c.b16 %v7898, %v7896
    %v8121 = vpack.c.b16 %v7899, %v7897
    %v8122 = vpack.c.b16 %v7902, %v7900
    %v8123 = vpack.c.b16 %v7903, %v7901
    %v8124 = vpack.c.b16 %v7906, %v7904
    %v8125 = vpack.c.b16 %v7907, %v7905
    %v8126 = vpack.c.b16 %v7910, %v7908
    %v8127 = vpack.c.b16 %v7911, %v7909
    %v8128 = vpack.c.b16 %v7914, %v7912
    %v8129 = vpack.c.b16 %v7915, %v7913
    %v8130 = vpack.c.b16 %v7918, %v7916
    %v8131 = vpack.c.b16 %v7919, %v7917
    %v8132 = vpack.c.b16 %v7922, %v7920
    %v8133 = vpack.c.b16 %v7923, %v7921
    %v8134 = vpack.c.b16 %v7926, %v7924
    %v8135 = vpack.c.b16 %v7927, %v7925
    %v8136 = vpack.c.b16 %v7930, %v7928
    %v8137 = vpack.c.b16 %v7931, %v7929
    %v8138 = vpack.c.b16 %v7934, %v7932
    %v8139 = vpack.c.b16 %v7935, %v7933
    %v8140 = vpack.c.b16 %v7938, %v7936
    %v8141 = vpack.c.b16 %v7939, %v7937
    %v8142 = vpack.c.b16 %v7942, %v7940
    %v8143 = vpack.c.b16 %v7943, %v7941
    %v8144 = vpack.c.b16 %v7946, %v7944
    %v8145 = vpack.c.b16 %v7947, %v7945
    %v8146 = vpack.c.b16 %v7950, %v7948
    %v8147 = vpack.c.b16 %v7951, %v7949
    %v8148 = vpack.c.b16 %v7954, %v7952
    %v8149 = vpack.c.b16 %v7955, %v7953
    %v8150 = vpack.c.b16 %v7958, %v7956
    %v8151 = vpack.c.b16 %v7959, %v7957
    %v8152 = vpack.c.b16 %v7962, %v7960
    %v8153 = vpack.c.b16 %v7963, %v7961
    %v8154 = vpack.c.b16 %v7966, %v7964
    %v8155 = vpack.c.b16 %v7967, %v7965
    %v8156 = vpack.c.b16 %v7970, %v7968
    %v8157 = vpack.c.b16 %v7971, %v7969
    %v8158 = vpack.c.b16 %v7974, %v7972
    %v8159 = vpack.c.b16 %v7975, %v7973
    %v8160 = vpack.c.b16 %v7978, %v7976
    %v8161 = vpack.c.b16 %v7979, %v7977
    %v8162 = vpack.c.b16 %v7982, %v7980
    %v8163 = vpack.c.b16 %v7983, %v7981
    %v8164 = vpack.c.b16 %v7986, %v7984
    %v8165 = vpack.c.b16 %v7987, %v7985
    %v8166 = vpack.c.b16 %v7990, %v7988
    %v8167 = vpack.c.b16 %v7991, %v7989
    %v8168 = vpack.c.b16 %v7994, %v7992
    %v8169 = vpack.c.b16 %v7995, %v7993
    %v8170 = vpack.c.b16 %v7998, %v7996
    %v8171 = vpack.c.b16 %v7999, %v7997
    %v8172 = vpack.c.b16 %v8002, %v8000
    %v8173 = vpack.c.b16 %v8003, %v8001
    %v8174 = vpack.c.b16 %v8006, %v8004
    %v8175 = vpack.c.b16 %v8007, %v8005
    %v8176 = vpack.c.b16 %v8010, %v8008
    %v8177 = vpack.c.b16 %v8011, %v8009
    %v8178 = vpack.c.b16 %v8014, %v8012
    %v8179 = vpack.c.b16 %v8015, %v8013
    %v8180 = vpack.c.b16 %v8018, %v8016
    %v8181 = vpack.c.b16 %v8019, %v8017
    %v8182 = vpack.c.b16 %v8022, %v8020
    %v8183 = vpack.c.b16 %v8023, %v8021
    %v8184 = vpack.c.b16 %v8026, %v8024
    %v8185 = vpack.c.b16 %v8027, %v8025
    %v8186 = vpack.c.b16 %v8030, %v8028
    %v8187 = vpack.c.b16 %v8031, %v8029
    %v8188 = vpack.c.b16 %v8034, %v8032
    %v8189 = vpack.c.b16 %v8035, %v8033
    %v8190 = vpack.c.b16 %v8038, %v8036
    %v8191 = vpack.c.b16 %v8039, %v8037
    %v8192 = vpack.c.b16 %v8042, %v8040
    %v8193 = vpack.c.b16 %v8043, %v8041
    %v8194 = vpack.c.b16 %v8046, %v8044
    %v8195 = vpack.c.b16 %v8047, %v8045
    %v8196 = vpack.c.b16 %v8050, %v8048
    %v8197 = vpack.c.b16 %v8051, %v8049
    %v8198 = vpack.c.b16 %v8054, %v8052
    %v8199 = vpack.c.b16 %v8055, %v8053
    %v8200 = vpack.c.b16 %v8058, %v8056
    %v8201 = vpack.c.b16 %v8059, %v8057
    %v8202 = vpack.c.b16 %v8062, %v8060
    %v8203 = vpack.c.b16 %v8063, %v8061
    %v8204 = vpack.c.b16 %v8066, %v8064
    %v8205 = vpack.c.b16 %v8067, %v8065
    %v8206 = vpack.c.b16 %v8070, %v8068
    %v8207 = vpack.c.b16 %v8071, %v8069
    %v8208 = vpack.c.b16 %v8074, %v8072
    %v8209 = vpack.c.b16 %v8075, %v8073
    %v8210 = vpack.c.b16 %v8078, %v8076
    %v8211 = vpack.c.b16 %v8079, %v8077
    %v8212 = vpack.c.b16 %v8082, %v8080
    %v8213 = vpack.c.b16 %v8083, %v8081
    %v8214 = vpack.c.b16 %v8086, %v8084
    %v8215 = vpack.c.b16 %v8087, %v8085
    %8344 = vmatprep.subr.bf16.mxu0 %v8089
    %8345 = vmatpush1.bf16.msra.mxu0 %v8088
    %8346 = vmatprep.subr.bf16.mxu0 %v8091
    %8347 = vmatpush1.bf16.msra.mxu0 %v8090
    %8348 = vmatprep.subr.bf16.mxu0 %v8093
    %8349 = vmatpush1.bf16.msra.mxu0 %v8092
    %8350 = vmatprep.subr.bf16.mxu0 %v8095
    %8351 = vmatpush1.bf16.msra.mxu0 %v8094
    %8352 = vmatprep.subr.bf16.mxu0 %v8097
    %8353 = vmatpush1.bf16.msra.mxu0 %v8096
    %8354 = vmatprep.subr.bf16.mxu0 %v8099
    %8355 = vmatpush1.bf16.msra.mxu0 %v8098
    %8356 = vmatprep.subr.bf16.mxu0 %v8101
    %8357 = vmatpush1.bf16.msra.mxu0 %v8100
    %8358 = vmatprep.subr.bf16.mxu0 %v8103
    %8359 = vmatpush1.bf16.msra.mxu0 %v8102
    %8360 = vmatprep.subr.bf16.mxu0 %v8105
    %8361 = vmatpush1.bf16.msra.mxu0 %v8104
    %8362 = vmatprep.subr.bf16.mxu0 %v8107
    %8363 = vmatpush1.bf16.msra.mxu0 %v8106
    %8364 = vmatprep.subr.bf16.mxu0 %v8109
    %8365 = vmatpush1.bf16.msra.mxu0 %v8108
    %8366 = vmatprep.subr.bf16.mxu0 %v8111
    %8367 = vmatpush1.bf16.msra.mxu0 %v8110
    %8368 = vmatprep.subr.bf16.mxu0 %v8113
    %8369 = vmatpush1.bf16.msra.mxu0 %v8112
    %8370 = vmatprep.subr.bf16.mxu0 %v8115
    %8371 = vmatpush1.bf16.msra.mxu0 %v8114
    %8372 = vmatprep.subr.bf16.mxu0 %v8117
    %8373 = vmatpush1.bf16.msra.mxu0 %v8116
    %8374 = vmatprep.subr.bf16.mxu0 %v8119
    %8375 = vmatpush1.bf16.msra.mxu0 %v8118
    %8376 = vmatprep.mubr.bf16.mxu0 %v7569
    %8377 = vmatmul.mubr.bf16.gmra.mrb[0].mxu0 %v7568
    %v8378 = vpop.f32.mrb[0].mxu0
    %v8379 = vadd.f32 0.0, %v8378
    %v8380 = vpop.f32.mrb[0].mxu0
    %v8381 = vadd.f32 0.0, %v8380
    %v8382 = vpop.f32.mrb[0].mxu0
    %v8383 = vpop.f32.mrb[0].mxu0
    %8384 = vdwg.mxu0
    %8385 = vmatprep.subr.bf16.mxu0 %v8121
    %8386 = vmatpush1.bf16.msra.mxu0 %v8120
    %8387 = vmatprep.subr.bf16.mxu0 %v8123
    %8388 = vmatpush1.bf16.msra.mxu0 %v8122
    %8389 = vmatprep.subr.bf16.mxu0 %v8125
    %8390 = vmatpush1.bf16.msra.mxu0 %v8124
    %8391 = vmatprep.subr.bf16.mxu0 %v8127
    %8392 = vmatpush1.bf16.msra.mxu0 %v8126
    %8393 = vmatprep.subr.bf16.mxu0 %v8129
    %8394 = vmatpush1.bf16.msra.mxu0 %v8128
    %8395 = vmatprep.subr.bf16.mxu0 %v8131
    %8396 = vmatpush1.bf16.msra.mxu0 %v8130
    %8397 = vmatprep.subr.bf16.mxu0 %v8133
    %8398 = vmatpush1.bf16.msra.mxu0 %v8132
    %8399 = vmatprep.subr.bf16.mxu0 %v8135
    %8400 = vmatpush1.bf16.msra.mxu0 %v8134
    %8401 = vmatprep.subr.bf16.mxu0 %v8137
    %8402 = vmatpush1.bf16.msra.mxu0 %v8136
    %8403 = vmatprep.subr.bf16.mxu0 %v8139
    %8404 = vmatpush1.bf16.msra.mxu0 %v8138
    %8405 = vmatprep.subr.bf16.mxu0 %v8141
    %8406 = vmatpush1.bf16.msra.mxu0 %v8140
    %8407 = vmatprep.subr.bf16.mxu0 %v8143
    %8408 = vmatpush1.bf16.msra.mxu0 %v8142
    %8409 = vmatprep.subr.bf16.mxu0 %v8145
    %8410 = vmatpush1.bf16.msra.mxu0 %v8144
    %8411 = vmatprep.subr.bf16.mxu0 %v8147
    %8412 = vmatpush1.bf16.msra.mxu0 %v8146
    %8413 = vmatprep.subr.bf16.mxu0 %v8149
    %8414 = vmatpush1.bf16.msra.mxu0 %v8148
    %8415 = vmatprep.subr.bf16.mxu0 %v8151
    %8416 = vmatpush1.bf16.msra.mxu0 %v8150
    %8417 = vmatprep.mubr.bf16.mxu0 %v7571
    %8418 = vmatmul.mubr.bf16.gmra.mrb[0].mxu0 %v7570
    %v8419 = vpop.f32.mrb[0].mxu0
    %v8420 = vadd.f32 %v8379, %v8419
    %v8421 = vpop.f32.mrb[0].mxu0
    %v8422 = vadd.f32 %v8381, %v8421
    %v8423 = vpop.f32.mrb[0].mxu0
    %v8424 = vpop.f32.mrb[0].mxu0
    %8425 = vdwg.mxu0
    %8426 = vmatprep.subr.bf16.mxu0 %v8153
    %8427 = vmatpush1.bf16.msra.mxu0 %v8152
    %8428 = vmatprep.subr.bf16.mxu0 %v8155
    %8429 = vmatpush1.bf16.msra.mxu0 %v8154
    %8430 = vmatprep.subr.bf16.mxu0 %v8157
    %8431 = vmatpush1.bf16.msra.mxu0 %v8156
    %8432 = vmatprep.subr.bf16.mxu0 %v8159
    %8433 = vmatpush1.bf16.msra.mxu0 %v8158
    %8434 = vmatprep.subr.bf16.mxu0 %v8161
    %8435 = vmatpush1.bf16.msra.mxu0 %v8160
    %8436 = vmatprep.subr.bf16.mxu0 %v8163
    %8437 = vmatpush1.bf16.msra.mxu0 %v8162
    %8438 = vmatprep.subr.bf16.mxu0 %v8165
    %8439 = vmatpush1.bf16.msra.mxu0 %v8164
    %8440 = vmatprep.subr.bf16.mxu0 %v8167
    %8441 = vmatpush1.bf16.msra.mxu0 %v8166
    %8442 = vmatprep.subr.bf16.mxu0 %v8169
    %8443 = vmatpush1.bf16.msra.mxu0 %v8168
    %8444 = vmatprep.subr.bf16.mxu0 %v8171
    %8445 = vmatpush1.bf16.msra.mxu0 %v8170
    %8446 = vmatprep.subr.bf16.mxu0 %v8173
    %8447 = vmatpush1.bf16.msra.mxu0 %v8172
    %8448 = vmatprep.subr.bf16.mxu0 %v8175
    %8449 = vmatpush1.bf16.msra.mxu0 %v8174
    %8450 = vmatprep.subr.bf16.mxu0 %v8177
    %8451 = vmatpush1.bf16.msra.mxu0 %v8176
    %8452 = vmatprep.subr.bf16.mxu0 %v8179
    %8453 = vmatpush1.bf16.msra.mxu0 %v8178
    %8454 = vmatprep.subr.bf16.mxu0 %v8181
    %8455 = vmatpush1.bf16.msra.mxu0 %v8180
    %8456 = vmatprep.subr.bf16.mxu0 %v8183
    %8457 = vmatpush1.bf16.msra.mxu0 %v8182
    %8458 = vmatprep.mubr.bf16.mxu0 %v7573
    %8459 = vmatmul.mubr.bf16.gmra.mrb[0].mxu0 %v7572
    %v8460 = vpop.f32.mrb[0].mxu0
    %v8461 = vadd.f32 %v8420, %v8460
    %v8462 = vpop.f32.mrb[0].mxu0
    %v8463 = vadd.f32 %v8422, %v8462
    %v8464 = vpop.f32.mrb[0].mxu0
    %v8465 = vpop.f32.mrb[0].mxu0
    %8466 = vdwg.mxu0
    %8467 = vmatprep.subr.bf16.mxu0 %v8185
    %8468 = vmatpush1.bf16.msra.mxu0 %v8184
    %8469 = vmatprep.subr.bf16.mxu0 %v8187
    %8470 = vmatpush1.bf16.msra.mxu0 %v8186
    %8471 = vmatprep.subr.bf16.mxu0 %v8189
    %8472 = vmatpush1.bf16.msra.mxu0 %v8188
    %8473 = vmatprep.subr.bf16.mxu0 %v8191
    %8474 = vmatpush1.bf16.msra.mxu0 %v8190
    %8475 = vmatprep.subr.bf16.mxu0 %v8193
    %8476 = vmatpush1.bf16.msra.mxu0 %v8192
    %8477 = vmatprep.subr.bf16.mxu0 %v8195
    %8478 = vmatpush1.bf16.msra.mxu0 %v8194
    %8479 = vmatprep.subr.bf16.mxu0 %v8197
    %8480 = vmatpush1.bf16.msra.mxu0 %v8196
    %8481 = vmatprep.subr.bf16.mxu0 %v8199
    %8482 = vmatpush1.bf16.msra.mxu0 %v8198
    %8483 = vmatprep.subr.bf16.mxu0 %v8201
    %8484 = vmatpush1.bf16.msra.mxu0 %v8200
    %8485 = vmatprep.subr.bf16.mxu0 %v8203
    %8486 = vmatpush1.bf16.msra.mxu0 %v8202
    %8487 = vmatprep.subr.bf16.mxu0 %v8205
    %8488 = vmatpush1.bf16.msra.mxu0 %v8204
    %8489 = vmatprep.subr.bf16.mxu0 %v8207
    %8490 = vmatpush1.bf16.msra.mxu0 %v8206
    %8491 = vmatprep.subr.bf16.mxu0 %v8209
    %8492 = vmatpush1.bf16.msra.mxu0 %v8208
    %8493 = vmatprep.subr.bf16.mxu0 %v8211
    %8494 = vmatpush1.bf16.msra.mxu0 %v8210
    %8495 = vmatprep.subr.bf16.mxu0 %v8213
    %8496 = vmatpush1.bf16.msra.mxu0 %v8212
    %8497 = vmatprep.subr.bf16.mxu0 %v8215
    %8498 = vmatpush1.bf16.msra.mxu0 %v8214
    %8499 = vmatprep.mubr.bf16.mxu0 %v7575
    %8500 = vmatmul.mubr.bf16.gmra.mrb[0].mxu0 %v7574
    %v8501 = vpop.f32.mrb[0].mxu0
    %v8502 = vadd.f32 %v8461, %v8501
    %v8503 = vpop.f32.mrb[0].mxu0
    %v8504 = vadd.f32 %v8463, %v8503
    %v8505 = vpop.f32.mrb[0].mxu0
    %v8506 = vpop.f32.mrb[0].mxu0
    %8507 = vdwg.mxu0
    %v8508 = vmax.f32 %v8502, 0.0
    %v8509 = vmax.f32 %v8504, 0.0
    %v8510 = vpack.c.bf16 %v8508, %v8508
    %v8511 = vpack.c.bf16 %v8509, %v8509
    %v8512 = vld [vmem:[#allocation8] sm:$0xf]
    %v8513 = vld [vmem:[#allocation8 + $0x4] sm:$0xf]
    %v8514 = vld [vmem:[#allocation8 + $0x8] sm:$0xf]
    %v8515 = vld [vmem:[#allocation8 + $0xc] sm:$0xf]
    %v8516 = vld [vmem:[#allocation8 + $0x10] sm:$0xf]
    %v8517 = vld [vmem:[#allocation8 + $0x14] sm:$0xf]
    %v8518 = vld [vmem:[#allocation8 + $0x18] sm:$0xf]
    %v8519 = vld [vmem:[#allocation8 + $0x1c] sm:$0xf]
    %v8520 = vld [vmem:[#allocation8 + $0x20] sm:$0xf]
    %v8521 = vld [vmem:[#allocation8 + $0x24] sm:$0xf]
    %v8522 = vld [vmem:[#allocation8 + $0x28] sm:$0xf]
    %v8523 = vld [vmem:[#allocation8 + $0x2c] sm:$0xf]
    %v8524 = vld [vmem:[#allocation8 + $0x30] sm:$0xf]
    %v8525 = vld [vmem:[#allocation8 + $0x34] sm:$0xf]
    %v8526 = vld [vmem:[#allocation8 + $0x38] sm:$0xf]
    %v8527 = vld [vmem:[#allocation8 + $0x3c] sm:$0xf]
    %v8528 = vld [vmem:[#allocation8 + $0x40] sm:$0xf]
    %v8529 = vld [vmem:[#allocation8 + $0x44] sm:$0xf]
    %v8530 = vld [vmem:[#allocation8 + $0x48] sm:$0xf]
    %v8531 = vld [vmem:[#allocation8 + $0x4c] sm:$0xf]
    %v8532 = vld [vmem:[#allocation8 + $0x50] sm:$0xf]
    %v8533 = vld [vmem:[#allocation8 + $0x54] sm:$0xf]
    %v8534 = vld [vmem:[#allocation8 + $0x58] sm:$0xf]
    %v8535 = vld [vmem:[#allocation8 + $0x5c] sm:$0xf]
    %v8536 = vld [vmem:[#allocation8 + $0x60] sm:$0xf]
    %v8537 = vld [vmem:[#allocation8 + $0x64] sm:$0xf]
    %v8538 = vld [vmem:[#allocation8 + $0x68] sm:$0xf]
    %v8539 = vld [vmem:[#allocation8 + $0x6c] sm:$0xf]
    %v8540 = vld [vmem:[#allocation8 + $0x70] sm:$0xf]
    %v8541 = vld [vmem:[#allocation8 + $0x74] sm:$0xf]
    %v8542 = vld [vmem:[#allocation8 + $0x78] sm:$0xf]
    %v8543 = vld [vmem:[#allocation8 + $0x7c] sm:$0xf]
    %v8576 = vunpack.c.l.b16 %v8512
    %v8577 = vunpack.c.l.b16 %v8513
    %v8578 = vunpack.c.l.b16 %v8514
    %v8579 = vunpack.c.l.b16 %v8515
    %v8580 = vunpack.c.l.b16 %v8516
    %v8581 = vunpack.c.l.b16 %v8517
    %v8582 = vunpack.c.l.b16 %v8518
    %v8583 = vunpack.c.l.b16 %v8519
    %v8584 = vunpack.c.l.b16 %v8520
    %v8585 = vunpack.c.l.b16 %v8521
    %v8586 = vunpack.c.l.b16 %v8522
    %v8587 = vunpack.c.l.b16 %v8523
    %v8588 = vunpack.c.l.b16 %v8524
    %v8589 = vunpack.c.l.b16 %v8525
    %v8590 = vunpack.c.l.b16 %v8526
    %v8591 = vunpack.c.l.b16 %v8527
    %v8592 = vunpack.c.l.b16 %v8528
    %v8593 = vunpack.c.l.b16 %v8529
    %v8594 = vunpack.c.l.b16 %v8530
    %v8595 = vunpack.c.l.b16 %v8531
    %v8596 = vunpack.c.l.b16 %v8532
    %v8597 = vunpack.c.l.b16 %v8533
    %v8598 = vunpack.c.l.b16 %v8534
    %v8599 = vunpack.c.l.b16 %v8535
    %v8600 = vunpack.c.l.b16 %v8536
    %v8601 = vunpack.c.l.b16 %v8537
    %v8602 = vunpack.c.l.b16 %v8538
    %v8603 = vunpack.c.l.b16 %v8539
    %v8604 = vunpack.c.l.b16 %v8540
    %v8605 = vunpack.c.l.b16 %v8541
    %v8606 = vunpack.c.l.b16 %v8542
    %v8607 = vunpack.c.l.b16 %v8543
    %v8608 = vpack.c.b16 %v8577, %v8576
    %v8609 = vpack.c.b16 %v8579, %v8578
    %v8610 = vpack.c.b16 %v8581, %v8580
    %v8611 = vpack.c.b16 %v8583, %v8582
    %v8612 = vpack.c.b16 %v8585, %v8584
    %v8613 = vpack.c.b16 %v8587, %v8586
    %v8614 = vpack.c.b16 %v8589, %v8588
    %v8615 = vpack.c.b16 %v8591, %v8590
    %v8616 = vpack.c.b16 %v8593, %v8592
    %v8617 = vpack.c.b16 %v8595, %v8594
    %v8618 = vpack.c.b16 %v8597, %v8596
    %v8619 = vpack.c.b16 %v8599, %v8598
    %v8620 = vpack.c.b16 %v8601, %v8600
    %v8621 = vpack.c.b16 %v8603, %v8602
    %v8622 = vpack.c.b16 %v8605, %v8604
    %v8623 = vpack.c.b16 %v8607, %v8606
    %8640 = vmatprep.subr.bf16.mxu0 0
    %8641 = vmatpush1.bf16.msra.mxu0 %v8608
    %8642 = vmatprep.subr.bf16.mxu0 0
    %8643 = vmatpush1.bf16.msra.mxu0 %v8609
    %8644 = vmatprep.subr.bf16.mxu0 0
    %8645 = vmatpush1.bf16.msra.mxu0 %v8610
    %8646 = vmatprep.subr.bf16.mxu0 0
    %8647 = vmatpush1.bf16.msra.mxu0 %v8611
    %8648 = vmatprep.subr.bf16.mxu0 0
    %8649 = vmatpush1.bf16.msra.mxu0 %v8612
    %8650 = vmatprep.subr.bf16.mxu0 0
    %8651 = vmatpush1.bf16.msra.mxu0 %v8613
    %8652 = vmatprep.subr.bf16.mxu0 0
    %8653 = vmatpush1.bf16.msra.mxu0 %v8614
    %8654 = vmatprep.subr.bf16.mxu0 0
    %8655 = vmatpush1.bf16.msra.mxu0 %v8615
    %8656 = vmatprep.subr.bf16.mxu0 0
    %8657 = vmatpush1.bf16.msra.mxu0 %v8616
    %8658 = vmatprep.subr.bf16.mxu0 0
    %8659 = vmatpush1.bf16.msra.mxu0 %v8617
    %8660 = vmatprep.subr.bf16.mxu0 0
    %8661 = vmatpush1.bf16.msra.mxu0 %v8618
    %8662 = vmatprep.subr.bf16.mxu0 0
    %8663 = vmatpush1.bf16.msra.mxu0 %v8619
    %8664 = vmatprep.subr.bf16.mxu0 0
    %8665 = vmatpush1.bf16.msra.mxu0 %v8620
    %8666 = vmatprep.subr.bf16.mxu0 0
    %8667 = vmatpush1.bf16.msra.mxu0 %v8621
    %8668 = vmatprep.subr.bf16.mxu0 0
    %8669 = vmatpush1.bf16.msra.mxu0 %v8622
    %8670 = vmatprep.subr.bf16.mxu0 0
    %8671 = vmatpush1.bf16.msra.mxu0 %v8623
    %8672 = vmatprep.mubr.bf16.mxu0 %v8511
    %8673 = vmatmul.mubr.bf16.gmra.mrb[0].mxu0 %v8510
    %v8674 = vpop.f32.mrb[0].mxu0
    %v8675 = vadd.f32 0.0, %v8674
    %v8676 = vpop.f32.mrb[0].mxu0
    %v8677 = vpop.f32.mrb[0].mxu0
    %v8678 = vpop.f32.mrb[0].mxu0
    %8679 = vdwg.mxu0
    %8680 = vst [vmem:[#allocation10] sm:$0xff] %v8675
    // Predicated region
    $region34: #{tpu_custom_call.1} parent=1 // pred_check
      _
    $region35: #{tpu_custom_call.1} parent=1 // pred_check_branch
      %8682 = sbr.rel (0) target = $region37
    $region36: #{tpu_custom_call.1} parent=1 // pred_region
      %s8684 = ssub.s32 128, 128
      %8685 = vsyncadd [#allocation4], %s8684
      %s8687 = sshll.u32 [#allocation10], 4
      %s8688 = int_to_ptr.vmem [resolvable:$true] %s8687
      %8690 = dma.vmem_to_hbm [thread:$0]  %s8688, 128, %s4, [#allocation4]
    $region37: #{tpu_custom_call.1} parent=1 // pred_fallthru
      _
    // Predicated region
    $region38: #{tpu_custom_call.1} parent=1 // pred_check
      _
    $region39: #{tpu_custom_call.1} parent=1 // pred_check_branch
      %8692 = sbr.rel (0) target = $region41
    $region40: #{tpu_custom_call.1} parent=1 // pred_region
      %8693 = dma.done [#allocation4], 128
    $region41: #{tpu_custom_call.1} parent=1 // pred_fallthru
      _
    %8694 = vsyncpa [#allocation3], 1
    %8695 = vsyncpa [#allocation6], 1
    %8696 = vsyncpa [#allocation9], 1
    %8697 = vsyncpa [#allocation4], 1

</llo_original>
